<compile_context>
chip_gen: v7x
topology: tpu7x:2x2x1
jax: 0.10.0
libtpu: 0.0.40
codegen_flags: <defaults>
</compile_context>

<pallas_src>
import functools

import jax
import jax.numpy as jnp
from jax import lax
from jax.experimental import pallas as pl
from jax.experimental.pallas import tpu as pltpu


def _round_up(x, m):
    return (x + m - 1) // m * m


def _conv3x3_bn_relu(xpad_ref, w_ref, s_ref, b_ref, H, W, compute_dtype):
    """3x3 'same' conv over a padded VMEM tile as 9 shifted MXU matmuls, fused with
    the (inference-mode) BatchNorm affine and ReLU.

    xpad_ref: (H+2, W+2, Cin) f32 padded activations
    w_ref:    (9, Cin, Cout)  compute_dtype weights, taps flattened on leading dim
    s_ref/b_ref: (1, Cout) f32 fused BN scale / bias
    returns:  (H, W, Cout) f32
    """
    cin = xpad_ref.shape[-1]
    cout = w_ref.shape[-1]
    acc = None                                        # accumulate in vregs, not VMEM
    for dy in range(3):                               # static 3x3 taps -> unrolled
        for dx in range(3):
            xs = (xpad_ref[dy:dy + H, dx:dx + W, :]
                  .astype(compute_dtype)              # bf16 MXU inputs
                  .reshape(H * W, cin))
            p = jnp.dot(xs, w_ref[dy * 3 + dx],
                        preferred_element_type=jnp.float32)   # f32 accumulation
            acc = p if acc is None else acc + p
    y = acc * s_ref[...] + b_ref[...]                 # fused BN affine, f32 epilogue
    return jnp.maximum(y, 0.0).reshape(H, W, cout)


def _double_conv_kernel(x_ref, w1_ref, s1_ref, b1_ref, w2_ref, s2_ref, b2_ref,
                        o_ref, xpad1_ref, xpad2_ref, *, compute_dtype):
    H, W, _ = o_ref.shape

    # ---- in-kernel "same" padding of the layer-1 input (replaces wrapper jnp.pad) --
    xpad1_ref[...] = jnp.zeros(xpad1_ref.shape, xpad1_ref.dtype)
    xpad1_ref[1:H + 1, 1:W + 1, :] = x_ref[...].astype(xpad1_ref.dtype)

    # ---- layer 1: Cin -> Cin (output lanes padded to 128); stays in VMEM ----------
    h1 = _conv3x3_bn_relu(xpad1_ref, w1_ref, s1_ref, b1_ref, H, W, compute_dtype)
    xpad2_ref[...] = jnp.zeros(xpad2_ref.shape, xpad2_ref.dtype)
    xpad2_ref[1:H + 1, 1:W + 1, :] = h1.astype(xpad2_ref.dtype)

    # ---- layer 2: Cin -> Cout (lanes padded to 128), lane-dense output store ------
    y2 = _conv3x3_bn_relu(xpad2_ref, w2_ref, s2_ref, b2_ref, H, W, compute_dtype)
    o_ref[...] = y2.astype(o_ref.dtype)


def double_conv_decoder(x_nchw, params, *, compute_dtype=jnp.bfloat16):
    """Forward pass of DoubleConvDecoder (eval-mode BatchNorm).

    x_nchw: (N, Cin, H, W) like the PyTorch module; returns (N, Cout, H, W).
    params: [(w1, s1, b1), (w2, s2, b2)], w in HWIO (3,3,Cin,Cout), (s,b) fused BN.
    """
    (w1, s1, b1), (w2, s2, b2) = params
    N, Cin, H, W = x_nchw.shape
    Cout = w2.shape[-1]
    Cp1 = _round_up(Cin, 128)      # lane-dense intermediate channel width
    Cp2 = _round_up(Cout, 128)     # lane-dense output channel width

    # NCHW -> NHWC (kernel is channel-minor).  In an all-NHWC pipeline these
    # boundary transposes disappear entirely.
    x = jnp.transpose(x_nchw, (0, 2, 3, 1))

    # Zero-pad weights / BN affines to lane-dense channel widths.  Padded output
    # channels compute exact zeros (w=0, scale=1, bias=0, relu(0)=0), so they are
    # inert through layer 2 and are sliced off below.
    w1p = (jnp.zeros((3, 3, Cin, Cp1), compute_dtype)
           .at[:, :, :, :Cin].set(w1.astype(compute_dtype))
           .reshape(9, Cin, Cp1))
    w2p = (jnp.zeros((3, 3, Cp1, Cp2), compute_dtype)
           .at[:, :, :Cin, :Cout].set(w2.astype(compute_dtype))
           .reshape(9, Cp1, Cp2))
    s1p = jnp.ones((1, Cp1), jnp.float32).at[0, :Cin].set(s1.astype(jnp.float32))
    b1p = jnp.zeros((1, Cp1), jnp.float32).at[0, :Cin].set(b1.astype(jnp.float32))
    s2p = jnp.ones((1, Cp2), jnp.float32).at[0, :Cout].set(s2.astype(jnp.float32))
    b2p = jnp.zeros((1, Cp2), jnp.float32).at[0, :Cout].set(b2.astype(jnp.float32))

    kernel = functools.partial(_double_conv_kernel, compute_dtype=compute_dtype)

    out = pl.pallas_call(
        kernel,
        out_shape=jax.ShapeDtypeStruct((N, H, W, Cp2), jnp.float32),
        grid_spec=pltpu.PrefetchScalarGridSpec(
            num_scalar_prefetch=0,
            grid=(N,),
            in_specs=[
                pl.BlockSpec((None, H, W, Cin), lambda n: (n, 0, 0, 0)),
                # constant-index blocks: weights / BN affines DMA'd once, stay
                # resident in VMEM for every grid step
                pl.BlockSpec((9, Cin, Cp1), lambda n: (0, 0, 0)),
                pl.BlockSpec((1, Cp1), lambda n: (0, 0)),
                pl.BlockSpec((1, Cp1), lambda n: (0, 0)),
                pl.BlockSpec((9, Cp1, Cp2), lambda n: (0, 0, 0)),
                pl.BlockSpec((1, Cp2), lambda n: (0, 0)),
                pl.BlockSpec((1, Cp2), lambda n: (0, 0)),
            ],
            out_specs=pl.BlockSpec((None, H, W, Cp2), lambda n: (n, 0, 0, 0)),
            scratch_shapes=[
                pltpu.VMEM((H + 2, W + 2, Cin), jnp.float32),   # padded L1 input
                pltpu.VMEM((H + 2, W + 2, Cp1), jnp.float32),   # padded L1 output
            ],
        ),
        # Batch axis is independent -> "parallel" (both TCs on v7x; no-op v5e/v6e).
        # For production SegNet sizes (C>=256, H,W>=64) add an H-strip grid axis with
        # a 1-row halo and set vmem_limit_bytes against v7x's 64 MiB VMEM.
        compiler_params=pltpu.CompilerParams(dimension_semantics=("parallel",)),
    )(x, w1p, s1p, b1p, w2p, s2p, b2p)

    # slice off the lane padding, NHWC -> NCHW to match the PyTorch module I/O
    return jnp.transpose(out[..., :Cout], (0, 3, 1, 2))


def init_params(key, in_channels, out_channels):
    """Deterministic synthetic parameters matching DoubleConvDecoder.__init__
    (Conv2d 3x3 bias=False + BatchNorm2d with default running stats, eval mode)."""
    ks = jax.random.split(key, 6)
    eps = 1e-5

    def conv_w(k, cin, cout):
        # PyTorch layout (Cout, Cin, KH, KW) -> HWIO (KH, KW, Cin, Cout)
        return jax.random.normal(k, (3, 3, cin, cout), jnp.float32) * 0.1

    def bn(kg, kb, c):
        gamma = 1.0 + 0.1 * jax.random.normal(kg, (c,), jnp.float32)
        beta = 0.1 * jax.random.normal(kb, (c,), jnp.float32)
        running_mean = jnp.zeros((c,), jnp.float32)   # PyTorch defaults
        running_var = jnp.ones((c,), jnp.float32)
        scale = gamma / jnp.sqrt(running_var + eps)
        bias = beta - running_mean * scale
        return scale, bias

    params = []
    chans = [(in_channels, in_channels), (in_channels, out_channels)]
    for i, (ci, co) in enumerate(chans):
        w = conv_w(ks[3 * i], ci, co)
        s, b = bn(ks[3 * i + 1], ks[3 * i + 2], co)
        params.append((w, s, b))
    return params


def _reference(x_nchw, params, compute_dtype=jnp.bfloat16):
    """Pure-JAX reference (lax.conv) with the same bf16-matmul / f32-accumulate
    numerics as the kernel, for correctness checking."""
    x = jnp.transpose(x_nchw, (0, 2, 3, 1))
    for w, s, b in params:
        y = lax.conv_general_dilated(
            x.astype(compute_dtype), w.astype(compute_dtype),
            window_strides=(1, 1), padding="SAME",
            dimension_numbers=("NHWC", "HWIO", "NHWC"),
            preferred_element_type=jnp.float32)
        x = jnp.maximum(y * s.reshape(1, 1, 1, -1) + b.reshape(1, 1, 1, -1), 0.0)
    return jnp.transpose(x, (0, 3, 1, 2))


if __name__ == "__main__":
    key = jax.random.PRNGKey(0)
    k_x, k_p = jax.random.split(key)

    N, Cin, Cout, H, W = 2, 4, 8, 16, 16
    x = jax.random.normal(k_x, (N, Cin, H, W), jnp.float32)   # PyTorch-style NCHW
    params = init_params(k_p, Cin, Cout)

    fwd = jax.jit(lambda xx: double_conv_decoder(xx, params))
    out = jax.block_until_ready(fwd(x))

    ref = jax.block_until_ready(_reference(x, params))
    assert out.shape == (N, Cout, H, W), out.shape
    assert jnp.allclose(out, ref, atol=2e-2, rtol=2e-2), "mismatch vs reference"

    print("KERNEL_OK")
</pallas_src>

<mosaic_0001>
module attributes {stable_mosaic.version = 11 : i64} {
  func.func @_double_conv_kernel(%arg0: i32, %arg1: memref<1x16x16x4xf32, #tpu.memory_space<vmem>>, %arg2: memref<9x4x128xbf16, #tpu.memory_space<vmem>>, %arg3: memref<1x128xf32, #tpu.memory_space<vmem>>, %arg4: memref<1x128xf32, #tpu.memory_space<vmem>>, %arg5: memref<9x128x128xbf16, #tpu.memory_space<vmem>>, %arg6: memref<1x128xf32, #tpu.memory_space<vmem>>, %arg7: memref<1x128xf32, #tpu.memory_space<vmem>>, %arg8: memref<1x16x16x128xf32, #tpu.memory_space<vmem>>, %arg9: memref<18x18x4xf32, #tpu.memory_space<vmem>>, %arg10: memref<18x18x128xf32, #tpu.memory_space<vmem>>) attributes {dimension_semantics = [#tpu.dimension_semantics<parallel>], iteration_bounds = array<i64: 2>, scalar_prefetch = 0 : i64, scratch_operands = 2 : i64, tpu.core_type = #tpu.core_type<tc>, window_params = [{transform_indices = @transform_0, window_bounds = array<i64: 1, 16, 16, 4>}, {pipeline_mode = #tpu.pipeline_mode<synchronous>, transform_indices = @transform_1, window_bounds = array<i64: 9, 4, 128>}, {pipeline_mode = #tpu.pipeline_mode<synchronous>, transform_indices = @transform_2, window_bounds = array<i64: 1, 128>}, {pipeline_mode = #tpu.pipeline_mode<synchronous>, transform_indices = @transform_3, window_bounds = array<i64: 1, 128>}, {pipeline_mode = #tpu.pipeline_mode<synchronous>, transform_indices = @transform_4, window_bounds = array<i64: 9, 128, 128>}, {pipeline_mode = #tpu.pipeline_mode<synchronous>, transform_indices = @transform_5, window_bounds = array<i64: 1, 128>}, {pipeline_mode = #tpu.pipeline_mode<synchronous>, transform_indices = @transform_6, window_bounds = array<i64: 1, 128>}, {transform_indices = @transform_7, window_bounds = array<i64: 1, 16, 16, 128>}]} {
    %cst = arith.constant 0.000000e+00 : f32
    %0 = vector.broadcast %cst : f32 to vector<18x18x4xf32>
    %c0 = arith.constant 0 : index
    %c0_0 = arith.constant 0 : index
    %c0_1 = arith.constant 0 : index
    %1 = vector.load %arg9[%c0, %c0_0, %c0_1] : memref<18x18x4xf32, #tpu.memory_space<vmem>>, vector<18x18x4xf32>
    tpu.vector_store %arg9[%c0, %c0_0, %c0_1], %0 {strides = array<i32>} : memref<18x18x4xf32, #tpu.memory_space<vmem>>, vector<18x18x4xf32>,
    %c0_2 = arith.constant 0 : index
    %c0_3 = arith.constant 0 : index
    %c0_4 = arith.constant 0 : index
    %c0_5 = arith.constant 0 : index
    %2 = vector.load %arg1[%c0_2, %c0_3, %c0_4, %c0_5] : memref<1x16x16x4xf32, #tpu.memory_space<vmem>>, vector<1x16x16x4xf32>
    %3 = vector.shape_cast %2 : vector<1x16x16x4xf32> to vector<16x16x4xf32>
    %c1 = arith.constant 1 : index
    %c1_6 = arith.constant 1 : index
    %c0_7 = arith.constant 0 : index
    %4 = vector.load %arg9[%c1, %c1_6, %c0_7] : memref<18x18x4xf32, #tpu.memory_space<vmem>>, vector<16x16x4xf32>
    tpu.vector_store %arg9[%c1, %c1_6, %c0_7], %3 {strides = array<i32>} : memref<18x18x4xf32, #tpu.memory_space<vmem>>, vector<16x16x4xf32>,
    %c0_8 = arith.constant 0 : index
    %c0_9 = arith.constant 0 : index
    %c0_10 = arith.constant 0 : index
    %5 = vector.load %arg9[%c0_8, %c0_9, %c0_10] : memref<18x18x4xf32, #tpu.memory_space<vmem>>, vector<16x16x4xf32>
    %6 = arith.truncf %5 : vector<16x16x4xf32> to vector<16x16x4xbf16>
    %7 = vector.shape_cast %6 : vector<16x16x4xbf16> to vector<256x4xbf16>
    %c0_11 = arith.constant 0 : index
    %c0_12 = arith.constant 0 : index
    %c0_13 = arith.constant 0 : index
    %8 = vector.load %arg2[%c0_11, %c0_12, %c0_13] : memref<9x4x128xbf16, #tpu.memory_space<vmem>>, vector<1x4x128xbf16>
    %9 = vector.shape_cast %8 : vector<1x4x128xbf16> to vector<4x128xbf16>
    %cst_14 = arith.constant dense<0.000000e+00> : vector<256x128xf32>
    %10 = tpu.matmul %7, %9, %cst_14 {dimension_numbers = #tpu.dot_dimension_numbers<[1], [0], [0], [1], [0, 0, 1, 1], [], []>} : vector<256x4xbf16>, vector<4x128xbf16>, vector<256x128xf32> -> vector<256x128xf32>
    %c0_15 = arith.constant 0 : index
    %c1_16 = arith.constant 1 : index
    %c0_17 = arith.constant 0 : index
    %11 = vector.load %arg9[%c0_15, %c1_16, %c0_17] : memref<18x18x4xf32, #tpu.memory_space<vmem>>, vector<16x16x4xf32>
    %12 = arith.truncf %11 : vector<16x16x4xf32> to vector<16x16x4xbf16>
    %13 = vector.shape_cast %12 : vector<16x16x4xbf16> to vector<256x4xbf16>
    %c1_18 = arith.constant 1 : index
    %c0_19 = arith.constant 0 : index
    %c0_20 = arith.constant 0 : index
    %14 = vector.load %arg2[%c1_18, %c0_19, %c0_20] : memref<9x4x128xbf16, #tpu.memory_space<vmem>>, vector<1x4x128xbf16>
    %15 = vector.shape_cast %14 : vector<1x4x128xbf16> to vector<4x128xbf16>
    %cst_21 = arith.constant dense<0.000000e+00> : vector<256x128xf32>
    %16 = tpu.matmul %13, %15, %cst_21 {dimension_numbers = #tpu.dot_dimension_numbers<[1], [0], [0], [1], [0, 0, 1, 1], [], []>} : vector<256x4xbf16>, vector<4x128xbf16>, vector<256x128xf32> -> vector<256x128xf32>
    %17 = arith.addf %10, %16 : vector<256x128xf32>
    %c0_22 = arith.constant 0 : index
    %c2 = arith.constant 2 : index
    %c0_23 = arith.constant 0 : index
    %18 = vector.load %arg9[%c0_22, %c2, %c0_23] : memref<18x18x4xf32, #tpu.memory_space<vmem>>, vector<16x16x4xf32>
    %19 = arith.truncf %18 : vector<16x16x4xf32> to vector<16x16x4xbf16>
    %20 = vector.shape_cast %19 : vector<16x16x4xbf16> to vector<256x4xbf16>
    %c2_24 = arith.constant 2 : index
    %c0_25 = arith.constant 0 : index
    %c0_26 = arith.constant 0 : index
    %21 = vector.load %arg2[%c2_24, %c0_25, %c0_26] : memref<9x4x128xbf16, #tpu.memory_space<vmem>>, vector<1x4x128xbf16>
    %22 = vector.shape_cast %21 : vector<1x4x128xbf16> to vector<4x128xbf16>
    %cst_27 = arith.constant dense<0.000000e+00> : vector<256x128xf32>
    %23 = tpu.matmul %20, %22, %cst_27 {dimension_numbers = #tpu.dot_dimension_numbers<[1], [0], [0], [1], [0, 0, 1, 1], [], []>} : vector<256x4xbf16>, vector<4x128xbf16>, vector<256x128xf32> -> vector<256x128xf32>
    %24 = arith.addf %17, %23 : vector<256x128xf32>
    %c1_28 = arith.constant 1 : index
    %c0_29 = arith.constant 0 : index
    %c0_30 = arith.constant 0 : index
    %25 = vector.load %arg9[%c1_28, %c0_29, %c0_30] : memref<18x18x4xf32, #tpu.memory_space<vmem>>, vector<16x16x4xf32>
    %26 = arith.truncf %25 : vector<16x16x4xf32> to vector<16x16x4xbf16>
    %27 = vector.shape_cast %26 : vector<16x16x4xbf16> to vector<256x4xbf16>
    %c3 = arith.constant 3 : index
    %c0_31 = arith.constant 0 : index
    %c0_32 = arith.constant 0 : index
    %28 = vector.load %arg2[%c3, %c0_31, %c0_32] : memref<9x4x128xbf16, #tpu.memory_space<vmem>>, vector<1x4x128xbf16>
    %29 = vector.shape_cast %28 : vector<1x4x128xbf16> to vector<4x128xbf16>
    %cst_33 = arith.constant dense<0.000000e+00> : vector<256x128xf32>
    %30 = tpu.matmul %27, %29, %cst_33 {dimension_numbers = #tpu.dot_dimension_numbers<[1], [0], [0], [1], [0, 0, 1, 1], [], []>} : vector<256x4xbf16>, vector<4x128xbf16>, vector<256x128xf32> -> vector<256x128xf32>
    %31 = arith.addf %24, %30 : vector<256x128xf32>
    %c1_34 = arith.constant 1 : index
    %c1_35 = arith.constant 1 : index
    %c0_36 = arith.constant 0 : index
    %32 = vector.load %arg9[%c1_34, %c1_35, %c0_36] : memref<18x18x4xf32, #tpu.memory_space<vmem>>, vector<16x16x4xf32>
    %33 = arith.truncf %32 : vector<16x16x4xf32> to vector<16x16x4xbf16>
    %34 = vector.shape_cast %33 : vector<16x16x4xbf16> to vector<256x4xbf16>
    %c4 = arith.constant 4 : index
    %c0_37 = arith.constant 0 : index
    %c0_38 = arith.constant 0 : index
    %35 = vector.load %arg2[%c4, %c0_37, %c0_38] : memref<9x4x128xbf16, #tpu.memory_space<vmem>>, vector<1x4x128xbf16>
    %36 = vector.shape_cast %35 : vector<1x4x128xbf16> to vector<4x128xbf16>
    %cst_39 = arith.constant dense<0.000000e+00> : vector<256x128xf32>
    %37 = tpu.matmul %34, %36, %cst_39 {dimension_numbers = #tpu.dot_dimension_numbers<[1], [0], [0], [1], [0, 0, 1, 1], [], []>} : vector<256x4xbf16>, vector<4x128xbf16>, vector<256x128xf32> -> vector<256x128xf32>
    %38 = arith.addf %31, %37 : vector<256x128xf32>
    %c1_40 = arith.constant 1 : index
    %c2_41 = arith.constant 2 : index
    %c0_42 = arith.constant 0 : index
    %39 = vector.load %arg9[%c1_40, %c2_41, %c0_42] : memref<18x18x4xf32, #tpu.memory_space<vmem>>, vector<16x16x4xf32>
    %40 = arith.truncf %39 : vector<16x16x4xf32> to vector<16x16x4xbf16>
    %41 = vector.shape_cast %40 : vector<16x16x4xbf16> to vector<256x4xbf16>
    %c5 = arith.constant 5 : index
    %c0_43 = arith.constant 0 : index
    %c0_44 = arith.constant 0 : index
    %42 = vector.load %arg2[%c5, %c0_43, %c0_44] : memref<9x4x128xbf16, #tpu.memory_space<vmem>>, vector<1x4x128xbf16>
    %43 = vector.shape_cast %42 : vector<1x4x128xbf16> to vector<4x128xbf16>
    %cst_45 = arith.constant dense<0.000000e+00> : vector<256x128xf32>
    %44 = tpu.matmul %41, %43, %cst_45 {dimension_numbers = #tpu.dot_dimension_numbers<[1], [0], [0], [1], [0, 0, 1, 1], [], []>} : vector<256x4xbf16>, vector<4x128xbf16>, vector<256x128xf32> -> vector<256x128xf32>
    %45 = arith.addf %38, %44 : vector<256x128xf32>
    %c2_46 = arith.constant 2 : index
    %c0_47 = arith.constant 0 : index
    %c0_48 = arith.constant 0 : index
    %46 = vector.load %arg9[%c2_46, %c0_47, %c0_48] : memref<18x18x4xf32, #tpu.memory_space<vmem>>, vector<16x16x4xf32>
    %47 = arith.truncf %46 : vector<16x16x4xf32> to vector<16x16x4xbf16>
    %48 = vector.shape_cast %47 : vector<16x16x4xbf16> to vector<256x4xbf16>
    %c6 = arith.constant 6 : index
    %c0_49 = arith.constant 0 : index
    %c0_50 = arith.constant 0 : index
    %49 = vector.load %arg2[%c6, %c0_49, %c0_50] : memref<9x4x128xbf16, #tpu.memory_space<vmem>>, vector<1x4x128xbf16>
    %50 = vector.shape_cast %49 : vector<1x4x128xbf16> to vector<4x128xbf16>
    %cst_51 = arith.constant dense<0.000000e+00> : vector<256x128xf32>
    %51 = tpu.matmul %48, %50, %cst_51 {dimension_numbers = #tpu.dot_dimension_numbers<[1], [0], [0], [1], [0, 0, 1, 1], [], []>} : vector<256x4xbf16>, vector<4x128xbf16>, vector<256x128xf32> -> vector<256x128xf32>
    %52 = arith.addf %45, %51 : vector<256x128xf32>
    %c2_52 = arith.constant 2 : index
    %c1_53 = arith.constant 1 : index
    %c0_54 = arith.constant 0 : index
    %53 = vector.load %arg9[%c2_52, %c1_53, %c0_54] : memref<18x18x4xf32, #tpu.memory_space<vmem>>, vector<16x16x4xf32>
    %54 = arith.truncf %53 : vector<16x16x4xf32> to vector<16x16x4xbf16>
    %55 = vector.shape_cast %54 : vector<16x16x4xbf16> to vector<256x4xbf16>
    %c7 = arith.constant 7 : index
    %c0_55 = arith.constant 0 : index
    %c0_56 = arith.constant 0 : index
    %56 = vector.load %arg2[%c7, %c0_55, %c0_56] : memref<9x4x128xbf16, #tpu.memory_space<vmem>>, vector<1x4x128xbf16>
    %57 = vector.shape_cast %56 : vector<1x4x128xbf16> to vector<4x128xbf16>
    %cst_57 = arith.constant dense<0.000000e+00> : vector<256x128xf32>
    %58 = tpu.matmul %55, %57, %cst_57 {dimension_numbers = #tpu.dot_dimension_numbers<[1], [0], [0], [1], [0, 0, 1, 1], [], []>} : vector<256x4xbf16>, vector<4x128xbf16>, vector<256x128xf32> -> vector<256x128xf32>
    %59 = arith.addf %52, %58 : vector<256x128xf32>
    %c2_58 = arith.constant 2 : index
    %c2_59 = arith.constant 2 : index
    %c0_60 = arith.constant 0 : index
    %60 = vector.load %arg9[%c2_58, %c2_59, %c0_60] : memref<18x18x4xf32, #tpu.memory_space<vmem>>, vector<16x16x4xf32>
    %61 = arith.truncf %60 : vector<16x16x4xf32> to vector<16x16x4xbf16>
    %62 = vector.shape_cast %61 : vector<16x16x4xbf16> to vector<256x4xbf16>
    %c8 = arith.constant 8 : index
    %c0_61 = arith.constant 0 : index
    %c0_62 = arith.constant 0 : index
    %63 = vector.load %arg2[%c8, %c0_61, %c0_62] : memref<9x4x128xbf16, #tpu.memory_space<vmem>>, vector<1x4x128xbf16>
    %64 = vector.shape_cast %63 : vector<1x4x128xbf16> to vector<4x128xbf16>
    %cst_63 = arith.constant dense<0.000000e+00> : vector<256x128xf32>
    %65 = tpu.matmul %62, %64, %cst_63 {dimension_numbers = #tpu.dot_dimension_numbers<[1], [0], [0], [1], [0, 0, 1, 1], [], []>} : vector<256x4xbf16>, vector<4x128xbf16>, vector<256x128xf32> -> vector<256x128xf32>
    %66 = arith.addf %59, %65 : vector<256x128xf32>
    %c0_64 = arith.constant 0 : index
    %c0_65 = arith.constant 0 : index
    %67 = vector.load %arg3[%c0_64, %c0_65] : memref<1x128xf32, #tpu.memory_space<vmem>>, vector<1x128xf32>
    %68 = vector.broadcast %67 : vector<1x128xf32> to vector<256x128xf32>
    %69 = arith.mulf %66, %68 : vector<256x128xf32>
    %c0_66 = arith.constant 0 : index
    %c0_67 = arith.constant 0 : index
    %70 = vector.load %arg4[%c0_66, %c0_67] : memref<1x128xf32, #tpu.memory_space<vmem>>, vector<1x128xf32>
    %71 = vector.broadcast %70 : vector<1x128xf32> to vector<256x128xf32>
    %72 = arith.addf %69, %71 : vector<256x128xf32>
    %cst_68 = arith.constant 0.000000e+00 : f32
    %73 = vector.broadcast %cst_68 : f32 to vector<256x128xf32>
    %74 = arith.maximumf %72, %73 : vector<256x128xf32>
    %75 = vector.shape_cast %74 : vector<256x128xf32> to vector<16x16x128xf32>
    %cst_69 = arith.constant 0.000000e+00 : f32
    %76 = vector.broadcast %cst_69 : f32 to vector<18x18x128xf32>
    %c0_70 = arith.constant 0 : index
    %c0_71 = arith.constant 0 : index
    %c0_72 = arith.constant 0 : index
    %77 = vector.load %arg10[%c0_70, %c0_71, %c0_72] : memref<18x18x128xf32, #tpu.memory_space<vmem>>, vector<18x18x128xf32>
    tpu.vector_store %arg10[%c0_70, %c0_71, %c0_72], %76 {strides = array<i32>} : memref<18x18x128xf32, #tpu.memory_space<vmem>>, vector<18x18x128xf32>,
    %c1_73 = arith.constant 1 : index
    %c1_74 = arith.constant 1 : index
    %c0_75 = arith.constant 0 : index
    %78 = vector.load %arg10[%c1_73, %c1_74, %c0_75] : memref<18x18x128xf32, #tpu.memory_space<vmem>>, vector<16x16x128xf32>
    tpu.vector_store %arg10[%c1_73, %c1_74, %c0_75], %75 {strides = array<i32>} : memref<18x18x128xf32, #tpu.memory_space<vmem>>, vector<16x16x128xf32>,
    %c0_76 = arith.constant 0 : index
    %c0_77 = arith.constant 0 : index
    %c0_78 = arith.constant 0 : index
    %79 = vector.load %arg10[%c0_76, %c0_77, %c0_78] : memref<18x18x128xf32, #tpu.memory_space<vmem>>, vector<16x16x128xf32>
    %80 = arith.truncf %79 : vector<16x16x128xf32> to vector<16x16x128xbf16>
    %81 = vector.shape_cast %80 : vector<16x16x128xbf16> to vector<256x128xbf16>
    %c0_79 = arith.constant 0 : index
    %c0_80 = arith.constant 0 : index
    %c0_81 = arith.constant 0 : index
    %82 = vector.load %arg5[%c0_79, %c0_80, %c0_81] : memref<9x128x128xbf16, #tpu.memory_space<vmem>>, vector<1x128x128xbf16>
    %83 = vector.shape_cast %82 : vector<1x128x128xbf16> to vector<128x128xbf16>
    %cst_82 = arith.constant dense<0.000000e+00> : vector<256x128xf32>
    %84 = tpu.matmul %81, %83, %cst_82 {dimension_numbers = #tpu.dot_dimension_numbers<[1], [0], [0], [1], [0, 0, 1, 1], [], []>} : vector<256x128xbf16>, vector<128x128xbf16>, vector<256x128xf32> -> vector<256x128xf32>
    %c0_83 = arith.constant 0 : index
    %c1_84 = arith.constant 1 : index
    %c0_85 = arith.constant 0 : index
    %85 = vector.load %arg10[%c0_83, %c1_84, %c0_85] : memref<18x18x128xf32, #tpu.memory_space<vmem>>, vector<16x16x128xf32>
    %86 = arith.truncf %85 : vector<16x16x128xf32> to vector<16x16x128xbf16>
    %87 = vector.shape_cast %86 : vector<16x16x128xbf16> to vector<256x128xbf16>
    %c1_86 = arith.constant 1 : index
    %c0_87 = arith.constant 0 : index
    %c0_88 = arith.constant 0 : index
    %88 = vector.load %arg5[%c1_86, %c0_87, %c0_88] : memref<9x128x128xbf16, #tpu.memory_space<vmem>>, vector<1x128x128xbf16>
    %89 = vector.shape_cast %88 : vector<1x128x128xbf16> to vector<128x128xbf16>
    %cst_89 = arith.constant dense<0.000000e+00> : vector<256x128xf32>
    %90 = tpu.matmul %87, %89, %cst_89 {dimension_numbers = #tpu.dot_dimension_numbers<[1], [0], [0], [1], [0, 0, 1, 1], [], []>} : vector<256x128xbf16>, vector<128x128xbf16>, vector<256x128xf32> -> vector<256x128xf32>
    %91 = arith.addf %84, %90 : vector<256x128xf32>
    %c0_90 = arith.constant 0 : index
    %c2_91 = arith.constant 2 : index
    %c0_92 = arith.constant 0 : index
    %92 = vector.load %arg10[%c0_90, %c2_91, %c0_92] : memref<18x18x128xf32, #tpu.memory_space<vmem>>, vector<16x16x128xf32>
    %93 = arith.truncf %92 : vector<16x16x128xf32> to vector<16x16x128xbf16>
    %94 = vector.shape_cast %93 : vector<16x16x128xbf16> to vector<256x128xbf16>
    %c2_93 = arith.constant 2 : index
    %c0_94 = arith.constant 0 : index
    %c0_95 = arith.constant 0 : index
    %95 = vector.load %arg5[%c2_93, %c0_94, %c0_95] : memref<9x128x128xbf16, #tpu.memory_space<vmem>>, vector<1x128x128xbf16>
    %96 = vector.shape_cast %95 : vector<1x128x128xbf16> to vector<128x128xbf16>
    %cst_96 = arith.constant dense<0.000000e+00> : vector<256x128xf32>
    %97 = tpu.matmul %94, %96, %cst_96 {dimension_numbers = #tpu.dot_dimension_numbers<[1], [0], [0], [1], [0, 0, 1, 1], [], []>} : vector<256x128xbf16>, vector<128x128xbf16>, vector<256x128xf32> -> vector<256x128xf32>
    %98 = arith.addf %91, %97 : vector<256x128xf32>
    %c1_97 = arith.constant 1 : index
    %c0_98 = arith.constant 0 : index
    %c0_99 = arith.constant 0 : index
    %99 = vector.load %arg10[%c1_97, %c0_98, %c0_99] : memref<18x18x128xf32, #tpu.memory_space<vmem>>, vector<16x16x128xf32>
    %100 = arith.truncf %99 : vector<16x16x128xf32> to vector<16x16x128xbf16>
    %101 = vector.shape_cast %100 : vector<16x16x128xbf16> to vector<256x128xbf16>
    %c3_100 = arith.constant 3 : index
    %c0_101 = arith.constant 0 : index
    %c0_102 = arith.constant 0 : index
    %102 = vector.load %arg5[%c3_100, %c0_101, %c0_102] : memref<9x128x128xbf16, #tpu.memory_space<vmem>>, vector<1x128x128xbf16>
    %103 = vector.shape_cast %102 : vector<1x128x128xbf16> to vector<128x128xbf16>
    %cst_103 = arith.constant dense<0.000000e+00> : vector<256x128xf32>
    %104 = tpu.matmul %101, %103, %cst_103 {dimension_numbers = #tpu.dot_dimension_numbers<[1], [0], [0], [1], [0, 0, 1, 1], [], []>} : vector<256x128xbf16>, vector<128x128xbf16>, vector<256x128xf32> -> vector<256x128xf32>
    %105 = arith.addf %98, %104 : vector<256x128xf32>
    %c1_104 = arith.constant 1 : index
    %c1_105 = arith.constant 1 : index
    %c0_106 = arith.constant 0 : index
    %106 = vector.load %arg10[%c1_104, %c1_105, %c0_106] : memref<18x18x128xf32, #tpu.memory_space<vmem>>, vector<16x16x128xf32>
    %107 = arith.truncf %106 : vector<16x16x128xf32> to vector<16x16x128xbf16>
    %108 = vector.shape_cast %107 : vector<16x16x128xbf16> to vector<256x128xbf16>
    %c4_107 = arith.constant 4 : index
    %c0_108 = arith.constant 0 : index
    %c0_109 = arith.constant 0 : index
    %109 = vector.load %arg5[%c4_107, %c0_108, %c0_109] : memref<9x128x128xbf16, #tpu.memory_space<vmem>>, vector<1x128x128xbf16>
    %110 = vector.shape_cast %109 : vector<1x128x128xbf16> to vector<128x128xbf16>
    %cst_110 = arith.constant dense<0.000000e+00> : vector<256x128xf32>
    %111 = tpu.matmul %108, %110, %cst_110 {dimension_numbers = #tpu.dot_dimension_numbers<[1], [0], [0], [1], [0, 0, 1, 1], [], []>} : vector<256x128xbf16>, vector<128x128xbf16>, vector<256x128xf32> -> vector<256x128xf32>
    %112 = arith.addf %105, %111 : vector<256x128xf32>
    %c1_111 = arith.constant 1 : index
    %c2_112 = arith.constant 2 : index
    %c0_113 = arith.constant 0 : index
    %113 = vector.load %arg10[%c1_111, %c2_112, %c0_113] : memref<18x18x128xf32, #tpu.memory_space<vmem>>, vector<16x16x128xf32>
    %114 = arith.truncf %113 : vector<16x16x128xf32> to vector<16x16x128xbf16>
    %115 = vector.shape_cast %114 : vector<16x16x128xbf16> to vector<256x128xbf16>
    %c5_114 = arith.constant 5 : index
    %c0_115 = arith.constant 0 : index
    %c0_116 = arith.constant 0 : index
    %116 = vector.load %arg5[%c5_114, %c0_115, %c0_116] : memref<9x128x128xbf16, #tpu.memory_space<vmem>>, vector<1x128x128xbf16>
    %117 = vector.shape_cast %116 : vector<1x128x128xbf16> to vector<128x128xbf16>
    %cst_117 = arith.constant dense<0.000000e+00> : vector<256x128xf32>
    %118 = tpu.matmul %115, %117, %cst_117 {dimension_numbers = #tpu.dot_dimension_numbers<[1], [0], [0], [1], [0, 0, 1, 1], [], []>} : vector<256x128xbf16>, vector<128x128xbf16>, vector<256x128xf32> -> vector<256x128xf32>
    %119 = arith.addf %112, %118 : vector<256x128xf32>
    %c2_118 = arith.constant 2 : index
    %c0_119 = arith.constant 0 : index
    %c0_120 = arith.constant 0 : index
    %120 = vector.load %arg10[%c2_118, %c0_119, %c0_120] : memref<18x18x128xf32, #tpu.memory_space<vmem>>, vector<16x16x128xf32>
    %121 = arith.truncf %120 : vector<16x16x128xf32> to vector<16x16x128xbf16>
    %122 = vector.shape_cast %121 : vector<16x16x128xbf16> to vector<256x128xbf16>
    %c6_121 = arith.constant 6 : index
    %c0_122 = arith.constant 0 : index
    %c0_123 = arith.constant 0 : index
    %123 = vector.load %arg5[%c6_121, %c0_122, %c0_123] : memref<9x128x128xbf16, #tpu.memory_space<vmem>>, vector<1x128x128xbf16>
    %124 = vector.shape_cast %123 : vector<1x128x128xbf16> to vector<128x128xbf16>
    %cst_124 = arith.constant dense<0.000000e+00> : vector<256x128xf32>
    %125 = tpu.matmul %122, %124, %cst_124 {dimension_numbers = #tpu.dot_dimension_numbers<[1], [0], [0], [1], [0, 0, 1, 1], [], []>} : vector<256x128xbf16>, vector<128x128xbf16>, vector<256x128xf32> -> vector<256x128xf32>
    %126 = arith.addf %119, %125 : vector<256x128xf32>
    %c2_125 = arith.constant 2 : index
    %c1_126 = arith.constant 1 : index
    %c0_127 = arith.constant 0 : index
    %127 = vector.load %arg10[%c2_125, %c1_126, %c0_127] : memref<18x18x128xf32, #tpu.memory_space<vmem>>, vector<16x16x128xf32>
    %128 = arith.truncf %127 : vector<16x16x128xf32> to vector<16x16x128xbf16>
    %129 = vector.shape_cast %128 : vector<16x16x128xbf16> to vector<256x128xbf16>
    %c7_128 = arith.constant 7 : index
    %c0_129 = arith.constant 0 : index
    %c0_130 = arith.constant 0 : index
    %130 = vector.load %arg5[%c7_128, %c0_129, %c0_130] : memref<9x128x128xbf16, #tpu.memory_space<vmem>>, vector<1x128x128xbf16>
    %131 = vector.shape_cast %130 : vector<1x128x128xbf16> to vector<128x128xbf16>
    %cst_131 = arith.constant dense<0.000000e+00> : vector<256x128xf32>
    %132 = tpu.matmul %129, %131, %cst_131 {dimension_numbers = #tpu.dot_dimension_numbers<[1], [0], [0], [1], [0, 0, 1, 1], [], []>} : vector<256x128xbf16>, vector<128x128xbf16>, vector<256x128xf32> -> vector<256x128xf32>
    %133 = arith.addf %126, %132 : vector<256x128xf32>
    %c2_132 = arith.constant 2 : index
    %c2_133 = arith.constant 2 : index
    %c0_134 = arith.constant 0 : index
    %134 = vector.load %arg10[%c2_132, %c2_133, %c0_134] : memref<18x18x128xf32, #tpu.memory_space<vmem>>, vector<16x16x128xf32>
    %135 = arith.truncf %134 : vector<16x16x128xf32> to vector<16x16x128xbf16>
    %136 = vector.shape_cast %135 : vector<16x16x128xbf16> to vector<256x128xbf16>
    %c8_135 = arith.constant 8 : index
    %c0_136 = arith.constant 0 : index
    %c0_137 = arith.constant 0 : index
    %137 = vector.load %arg5[%c8_135, %c0_136, %c0_137] : memref<9x128x128xbf16, #tpu.memory_space<vmem>>, vector<1x128x128xbf16>
    %138 = vector.shape_cast %137 : vector<1x128x128xbf16> to vector<128x128xbf16>
    %cst_138 = arith.constant dense<0.000000e+00> : vector<256x128xf32>
    %139 = tpu.matmul %136, %138, %cst_138 {dimension_numbers = #tpu.dot_dimension_numbers<[1], [0], [0], [1], [0, 0, 1, 1], [], []>} : vector<256x128xbf16>, vector<128x128xbf16>, vector<256x128xf32> -> vector<256x128xf32>
    %140 = arith.addf %133, %139 : vector<256x128xf32>
    %c0_139 = arith.constant 0 : index
    %c0_140 = arith.constant 0 : index
    %141 = vector.load %arg6[%c0_139, %c0_140] : memref<1x128xf32, #tpu.memory_space<vmem>>, vector<1x128xf32>
    %142 = vector.broadcast %141 : vector<1x128xf32> to vector<256x128xf32>
    %143 = arith.mulf %140, %142 : vector<256x128xf32>
    %c0_141 = arith.constant 0 : index
    %c0_142 = arith.constant 0 : index
    %144 = vector.load %arg7[%c0_141, %c0_142] : memref<1x128xf32, #tpu.memory_space<vmem>>, vector<1x128xf32>
    %145 = vector.broadcast %144 : vector<1x128xf32> to vector<256x128xf32>
    %146 = arith.addf %143, %145 : vector<256x128xf32>
    %cst_143 = arith.constant 0.000000e+00 : f32
    %147 = vector.broadcast %cst_143 : f32 to vector<256x128xf32>
    %148 = arith.maximumf %146, %147 : vector<256x128xf32>
    %149 = vector.shape_cast %148 : vector<256x128xf32> to vector<16x16x128xf32>
    %c0_144 = arith.constant 0 : index
    %c0_145 = arith.constant 0 : index
    %c0_146 = arith.constant 0 : index
    %c0_147 = arith.constant 0 : index
    %150 = vector.load %arg8[%c0_144, %c0_145, %c0_146, %c0_147] : memref<1x16x16x128xf32, #tpu.memory_space<vmem>>, vector<1x16x16x128xf32>
    %151 = vector.shape_cast %150 : vector<1x16x16x128xf32> to vector<16x16x128xf32>
    %152 = vector.shape_cast %149 : vector<16x16x128xf32> to vector<1x16x16x128xf32>
    tpu.vector_store %arg8[%c0_144, %c0_145, %c0_146, %c0_147], %152 {strides = array<i32>} : memref<1x16x16x128xf32, #tpu.memory_space<vmem>>, vector<1x16x16x128xf32>,
    return
  }
  func.func @transform_0(%arg0: i32) -> (i32, i32, i32, i32) {
    %c0_i32 = arith.constant 0 : i32
    %c0_i32_0 = arith.constant 0 : i32
    %c0_i32_1 = arith.constant 0 : i32
    %c0_i32_2 = arith.constant 0 : i32
    return %arg0, %c0_i32, %c0_i32_0, %c0_i32_1 : i32, i32, i32, i32
  }
  func.func @transform_1(%arg0: i32) -> (i32, i32, i32) {
    %c0_i32 = arith.constant 0 : i32
    %c0_i32_0 = arith.constant 0 : i32
    %c0_i32_1 = arith.constant 0 : i32
    %c0_i32_2 = arith.constant 0 : i32
    return %c0_i32, %c0_i32_0, %c0_i32_1 : i32, i32, i32
  }
  func.func @transform_2(%arg0: i32) -> (i32, i32) {
    %c0_i32 = arith.constant 0 : i32
    %c0_i32_0 = arith.constant 0 : i32
    %c0_i32_1 = arith.constant 0 : i32
    return %c0_i32, %c0_i32_0 : i32, i32
  }
  func.func @transform_3(%arg0: i32) -> (i32, i32) {
    %c0_i32 = arith.constant 0 : i32
    %c0_i32_0 = arith.constant 0 : i32
    %c0_i32_1 = arith.constant 0 : i32
    return %c0_i32, %c0_i32_0 : i32, i32
  }
  func.func @transform_4(%arg0: i32) -> (i32, i32, i32) {
    %c0_i32 = arith.constant 0 : i32
    %c0_i32_0 = arith.constant 0 : i32
    %c0_i32_1 = arith.constant 0 : i32
    %c0_i32_2 = arith.constant 0 : i32
    return %c0_i32, %c0_i32_0, %c0_i32_1 : i32, i32, i32
  }
  func.func @transform_5(%arg0: i32) -> (i32, i32) {
    %c0_i32 = arith.constant 0 : i32
    %c0_i32_0 = arith.constant 0 : i32
    %c0_i32_1 = arith.constant 0 : i32
    return %c0_i32, %c0_i32_0 : i32, i32
  }
  func.func @transform_6(%arg0: i32) -> (i32, i32) {
    %c0_i32 = arith.constant 0 : i32
    %c0_i32_0 = arith.constant 0 : i32
    %c0_i32_1 = arith.constant 0 : i32
    return %c0_i32, %c0_i32_0 : i32, i32
  }
  func.func @transform_7(%arg0: i32) -> (i32, i32, i32, i32) {
    %c0_i32 = arith.constant 0 : i32
    %c0_i32_0 = arith.constant 0 : i32
    %c0_i32_1 = arith.constant 0 : i32
    %c0_i32_2 = arith.constant 0 : i32
    return %arg0, %c0_i32, %c0_i32_0, %c0_i32_1 : i32, i32, i32, i32
  }
}

</mosaic_0001>

<llo_original>
// kernel: _lambda_.1
$region0: #{_lambda_.1}
  #allocation0 [shape = 'u32[]', space=smem, size = 0x4, offset = 0x4, fixed_abs, tag = 'smem constant byte address 0x4 - core index']
  #allocation1 [shape = 'u32[144,128]{1,0:T(1,128)}', space=vmem, size = 0x12000, scoped, tag = 'internal scratch']
  #allocation2 [shape = 'f32[18,18,4]{2,1,0:T(8,128)}', space=vmem, size = 0x36000, scoped, tag = 'scratch operand']
  #allocation3 [shape = 'f32[18,18,128]{2,1,0:T(8,128)}', space=vmem, size = 0x36000, scoped, tag = 'scratch operand']
  %s0 = inlined_call_operand.vmem [shape: f32[2,16,16,4], index: 0, kind: input, shape index: {}]
  %s1 = inlined_call_operand.vmem [shape: bf16[9,4,128], index: 1, kind: input, shape index: {}]
  %s2 = inlined_call_operand.vmem [shape: f32[1,128], index: 2, kind: input, shape index: {}]
  %s3 = inlined_call_operand.vmem [shape: f32[1,128], index: 3, kind: input, shape index: {}]
  %s4 = inlined_call_operand.vmem [shape: bf16[9,128,128], index: 4, kind: input, shape index: {}]
  %s5 = inlined_call_operand.vmem [shape: f32[1,128], index: 5, kind: input, shape index: {}]
  %s6 = inlined_call_operand.vmem [shape: f32[1,128], index: 6, kind: input, shape index: {}]
  %s7 = inlined_call_operand.vmem [shape: f32[2,16,16,128], index: 7, kind: output, shape index: {}]
  %s8 = sld [smem:[#allocation0]]
  $region61: #{_lambda_.1} parent=0
    _
  %s10 = ssub.s32 1, %s8
  %s11 = scalar_select 0, %s10, %s8
  loop: start=0, step=1, limit=4
  $region2: #{_lambda_.1} parent=0 // loop_pre_header
    _
  $region3: #{_lambda_.1} parent=0 // loop_header
    %s13 = sphi 0, %s17
    %p14 = scmp.ge.s32.totalorder %s13, 4
    %s23 = sphi 0, %s25
    %s26 = sphi 0, %s23
    %s27 = sphi 0, %s26
    %s43 = sphi 0, %s27
    %s47 = sphi 0, %s47
    %s49 = sphi 0, %s47
    %s50 = sphi 0, %s49
    %s64 = sphi 0, %s50
    %s68 = sphi 0, %s68
    %s70 = sphi 0, %s68
    %s71 = sphi 0, %s70
    %s85 = sphi 0, %s71
    %s89 = sphi 0, %s89
    %s91 = sphi 0, %s89
    %s92 = sphi 0, %s91
    %s106 = sphi 0, %s92
    %s110 = sphi 0, %s110
    %s112 = sphi 0, %s110
    %s113 = sphi 0, %s112
    %s127 = sphi 0, %s113
    %s131 = sphi 0, %s131
    %s133 = sphi 0, %s131
    %s134 = sphi 0, %s133
    %s148 = sphi 0, %s134
    %s152 = sphi 0, %s152
    %s154 = sphi 0, %s152
    %s155 = sphi 0, %s154
    %s169 = sphi 0, %s155
    %s175 = sphi 0, %s177
    %s178 = sphi 0, %s175
    %s179 = sphi 0, %s178
    %s195 = sphi 0, %s179
  $region4: #{_lambda_.1} parent=0 // loop_header_branch
    %16 = sbr.rel (%p14) target = $region8
  $region5: #{_lambda_.1} parent=0 // loop_body
    %s18 = ssub.s32 %s13, 1
    %s19 = ssub.s32 %s13, 2
    %s20 = sadd.s32 %s13, 1
    %s21 = ssub.s32 %s13, %s20
    %p22 = scmp.eq.s32.totalorder %s21, 0
    %s24 = sadd.s32 %s23, 1
    %s25 = scalar_select %p22, %s23, %s24
    %p28 = pneg %p22
    %p29 = scmp.eq.s32.totalorder %s13, 1
    %p30 = por %p28, %p29
    %p31 = scmp.ne.s32.totalorder %s23, %s26
    %p32 = scmp.eq.s32.totalorder %s13, 0
    %p33 = por %p31, %p32
    %p34 = scmp.ne.s32.totalorder %s23, %s26
    %p35 = scmp.eq.s32.totalorder %s18, 1
    %p36 = por %p34, %p35
    %p37 = scmp.ne.s32.totalorder %s26, %s27
    %p38 = scmp.eq.s32.totalorder %s18, 0
    %p39 = por %p37, %p38
    %p40 = scmp.ne.s32.totalorder %s26, %s27
    %p41 = scmp.eq.s32.totalorder %s19, 1
    %p42 = por %p40, %p41
    %p44 = scmp.ne.s32.totalorder %s27, %s43
    %p45 = scmp.eq.s32.totalorder %s19, 0
    %p46 = por %p44, %p45
    %s48 = sadd.s32 %s47, 1
    %p51 = scmp.eq.s32.totalorder %s13, 1
    %p52 = scmp.ne.s32.totalorder %s47, %s49
    %p53 = scmp.eq.s32.totalorder %s13, 0
    %p54 = por %p52, %p53
    %p55 = scmp.ne.s32.totalorder %s47, %s49
    %p56 = scmp.eq.s32.totalorder %s18, 1
    %p57 = por %p55, %p56
    %p58 = scmp.ne.s32.totalorder %s49, %s50
    %p59 = scmp.eq.s32.totalorder %s18, 0
    %p60 = por %p58, %p59
    %p61 = scmp.ne.s32.totalorder %s49, %s50
    %p62 = scmp.eq.s32.totalorder %s19, 1
    %p63 = por %p61, %p62
    %p65 = scmp.ne.s32.totalorder %s50, %s64
    %p66 = scmp.eq.s32.totalorder %s19, 0
    %p67 = por %p65, %p66
    %s69 = sadd.s32 %s68, 1
    %p72 = scmp.eq.s32.totalorder %s13, 1
    %p73 = scmp.ne.s32.totalorder %s68, %s70
    %p74 = scmp.eq.s32.totalorder %s13, 0
    %p75 = por %p73, %p74
    %p76 = scmp.ne.s32.totalorder %s68, %s70
    %p77 = scmp.eq.s32.totalorder %s18, 1
    %p78 = por %p76, %p77
    %p79 = scmp.ne.s32.totalorder %s70, %s71
    %p80 = scmp.eq.s32.totalorder %s18, 0
    %p81 = por %p79, %p80
    %p82 = scmp.ne.s32.totalorder %s70, %s71
    %p83 = scmp.eq.s32.totalorder %s19, 1
    %p84 = por %p82, %p83
    %p86 = scmp.ne.s32.totalorder %s71, %s85
    %p87 = scmp.eq.s32.totalorder %s19, 0
    %p88 = por %p86, %p87
    %s90 = sadd.s32 %s89, 1
    %p93 = scmp.eq.s32.totalorder %s13, 1
    %p94 = scmp.ne.s32.totalorder %s89, %s91
    %p95 = scmp.eq.s32.totalorder %s13, 0
    %p96 = por %p94, %p95
    %p97 = scmp.ne.s32.totalorder %s89, %s91
    %p98 = scmp.eq.s32.totalorder %s18, 1
    %p99 = por %p97, %p98
    %p100 = scmp.ne.s32.totalorder %s91, %s92
    %p101 = scmp.eq.s32.totalorder %s18, 0
    %p102 = por %p100, %p101
    %p103 = scmp.ne.s32.totalorder %s91, %s92
    %p104 = scmp.eq.s32.totalorder %s19, 1
    %p105 = por %p103, %p104
    %p107 = scmp.ne.s32.totalorder %s92, %s106
    %p108 = scmp.eq.s32.totalorder %s19, 0
    %p109 = por %p107, %p108
    %s111 = sadd.s32 %s110, 1
    %p114 = scmp.eq.s32.totalorder %s13, 1
    %p115 = scmp.ne.s32.totalorder %s110, %s112
    %p116 = scmp.eq.s32.totalorder %s13, 0
    %p117 = por %p115, %p116
    %p118 = scmp.ne.s32.totalorder %s110, %s112
    %p119 = scmp.eq.s32.totalorder %s18, 1
    %p120 = por %p118, %p119
    %p121 = scmp.ne.s32.totalorder %s112, %s113
    %p122 = scmp.eq.s32.totalorder %s18, 0
    %p123 = por %p121, %p122
    %p124 = scmp.ne.s32.totalorder %s112, %s113
    %p125 = scmp.eq.s32.totalorder %s19, 1
    %p126 = por %p124, %p125
    %p128 = scmp.ne.s32.totalorder %s113, %s127
    %p129 = scmp.eq.s32.totalorder %s19, 0
    %p130 = por %p128, %p129
    %s132 = sadd.s32 %s131, 1
    %p135 = scmp.eq.s32.totalorder %s13, 1
    %p136 = scmp.ne.s32.totalorder %s131, %s133
    %p137 = scmp.eq.s32.totalorder %s13, 0
    %p138 = por %p136, %p137
    %p139 = scmp.ne.s32.totalorder %s131, %s133
    %p140 = scmp.eq.s32.totalorder %s18, 1
    %p141 = por %p139, %p140
    %p142 = scmp.ne.s32.totalorder %s133, %s134
    %p143 = scmp.eq.s32.totalorder %s18, 0
    %p144 = por %p142, %p143
    %p145 = scmp.ne.s32.totalorder %s133, %s134
    %p146 = scmp.eq.s32.totalorder %s19, 1
    %p147 = por %p145, %p146
    %p149 = scmp.ne.s32.totalorder %s134, %s148
    %p150 = scmp.eq.s32.totalorder %s19, 0
    %p151 = por %p149, %p150
    %s153 = sadd.s32 %s152, 1
    %p156 = scmp.eq.s32.totalorder %s13, 1
    %p157 = scmp.ne.s32.totalorder %s152, %s154
    %p158 = scmp.eq.s32.totalorder %s13, 0
    %p159 = por %p157, %p158
    %p160 = scmp.ne.s32.totalorder %s152, %s154
    %p161 = scmp.eq.s32.totalorder %s18, 1
    %p162 = por %p160, %p161
    %p163 = scmp.ne.s32.totalorder %s154, %s155
    %p164 = scmp.eq.s32.totalorder %s18, 0
    %p165 = por %p163, %p164
    %p166 = scmp.ne.s32.totalorder %s154, %s155
    %p167 = scmp.eq.s32.totalorder %s19, 1
    %p168 = por %p166, %p167
    %p170 = scmp.ne.s32.totalorder %s155, %s169
    %p171 = scmp.eq.s32.totalorder %s19, 0
    %p172 = por %p170, %p171
    %s173 = ssub.s32 %s13, %s20
    %p174 = scmp.eq.s32.totalorder %s173, 0
    %s176 = sadd.s32 %s175, 1
    %s177 = scalar_select %p174, %s175, %s176
    %p180 = pneg %p174
    %p181 = scmp.eq.s32.totalorder %s13, 1
    %p182 = por %p180, %p181
    %p183 = scmp.ne.s32.totalorder %s175, %s178
    %p184 = scmp.eq.s32.totalorder %s13, 0
    %p185 = por %p183, %p184
    %p186 = scmp.ne.s32.totalorder %s175, %s178
    %p187 = scmp.eq.s32.totalorder %s18, 1
    %p188 = por %p186, %p187
    %p189 = scmp.ne.s32.totalorder %s178, %s179
    %p190 = scmp.eq.s32.totalorder %s18, 0
    %p191 = por %p189, %p190
    %p192 = scmp.ne.s32.totalorder %s178, %s179
    %p193 = scmp.eq.s32.totalorder %s19, 1
    %p194 = por %p192, %p193
    %p196 = scmp.ne.s32.totalorder %s179, %s195
    %p197 = scmp.eq.s32.totalorder %s19, 0
    %p198 = por %p196, %p197
    %p199 = scmp.le.s32.totalorder 1, %s13
    %p200 = scmp.lt.s32.totalorder %s13, 3
    %p201 = pnand %p199, %p200
    %p202 = pneg %p201
    // Predicated region
    $region9: #{_lambda_.1} parent=5 // pred_check
      _
    $region10: #{_lambda_.1} parent=5 // pred_check_branch
      %204 = sbr.rel (%p201) target = $region12
    $region11: #{_lambda_.1} parent=5 // pred_region
      %s205 = ssub.s32 %s13, 1
      // Predicated region
      $region13: #{_lambda_.1} parent=11 // pred_check
        %p206 = pneg %p60
      $region14: #{_lambda_.1} parent=11 // pred_check_branch
        %208 = sbr.rel (%p206) target = $region16
      $region15: #{_lambda_.1} parent=11 // pred_region
        _
      $region16: #{_lambda_.1} parent=11 // pred_fallthru
        _
      // Predicated region
      $region17: #{_lambda_.1} parent=11 // pred_check
        %p209 = pneg %p81
      $region18: #{_lambda_.1} parent=11 // pred_check_branch
        %211 = sbr.rel (%p209) target = $region20
      $region19: #{_lambda_.1} parent=11 // pred_region
        _
      $region20: #{_lambda_.1} parent=11 // pred_fallthru
        _
      // Predicated region
      $region21: #{_lambda_.1} parent=11 // pred_check
        %p212 = pneg %p102
      $region22: #{_lambda_.1} parent=11 // pred_check_branch
        %214 = sbr.rel (%p212) target = $region24
      $region23: #{_lambda_.1} parent=11 // pred_region
        _
      $region24: #{_lambda_.1} parent=11 // pred_fallthru
        _
      // Predicated region
      $region25: #{_lambda_.1} parent=11 // pred_check
        %p215 = pneg %p123
      $region26: #{_lambda_.1} parent=11 // pred_check_branch
        %217 = sbr.rel (%p215) target = $region28
      $region27: #{_lambda_.1} parent=11 // pred_region
        _
      $region28: #{_lambda_.1} parent=11 // pred_fallthru
        _
      // Predicated region
      $region29: #{_lambda_.1} parent=11 // pred_check
        %p218 = pneg %p144
      $region30: #{_lambda_.1} parent=11 // pred_check_branch
        %220 = sbr.rel (%p218) target = $region32
      $region31: #{_lambda_.1} parent=11 // pred_region
        _
      $region32: #{_lambda_.1} parent=11 // pred_fallthru
        _
      // Predicated region
      $region33: #{_lambda_.1} parent=11 // pred_check
        %p221 = pneg %p165
      $region34: #{_lambda_.1} parent=11 // pred_check_branch
        %223 = sbr.rel (%p221) target = $region36
      $region35: #{_lambda_.1} parent=11 // pred_region
        _
      $region36: #{_lambda_.1} parent=11 // pred_fallthru
        _
    $region12: #{_lambda_.1} parent=5 // pred_fallthru
      _
    %p224 = scmp.lt.s32.totalorder %s13, 2
    // Predicated region
    $region37: #{_lambda_.1} parent=5 // pred_check
      %p225 = pneg %p224
    $region38: #{_lambda_.1} parent=5 // pred_check_branch
      %227 = sbr.rel (%p225) target = $region40
    $region39: #{_lambda_.1} parent=5 // pred_region
      // Predicated region
      $region41: #{_lambda_.1} parent=39 // pred_check
        %p228 = pneg %p33
      $region42: #{_lambda_.1} parent=39 // pred_check_branch
        %230 = sbr.rel (%p228) target = $region44
      $region43: #{_lambda_.1} parent=39 // pred_region
        %p231 = scmp.lt.s32.totalorder %s13, 1
        %s232 = scalar_select %p231, %s13, 1
        %s233 = smul.addr %s232, 32
        %s234 = smul.addr %s233, 8
        %s235 = scalar_lea.vmem %s0, %s234
      $region44: #{_lambda_.1} parent=39 // pred_fallthru
        _
    $region40: #{_lambda_.1} parent=5 // pred_fallthru
      _
    %p236 = scmp.le.s32.totalorder 1, %s13
    %p237 = scmp.lt.s32.totalorder %s13, 3
    %p238 = pnand %p236, %p237
    %p239 = pneg %p238
    // Predicated region
    $region45: #{_lambda_.1} parent=5 // pred_check
      _
    $region46: #{_lambda_.1} parent=5 // pred_check_branch
      %241 = sbr.rel (%p238) target = $region48
    $region47: #{_lambda_.1} parent=5 // pred_region
      %s242 = ssub.s32 %s13, 1
      %p243 = scmp.lt.s32.totalorder %s18, 1
      %s244 = scalar_select %p243, %s18, 1
      %s245 = smul.addr %s244, 32
      %s246 = smul.addr %s245, 8
      %s247 = scalar_lea.vmem %s0, %s246
      %p248 = pneg %p39
      %p249 = pneg %p36
      %p250 = pneg %p60
      %p251 = pneg %p57
      %p252 = pneg %p81
      %p253 = pneg %p78
      %p254 = pneg %p102
      %p255 = pneg %p99
      %p256 = pneg %p123
      %p257 = pneg %p120
      %p258 = pneg %p144
      %p259 = pneg %p141
      %p260 = pneg %p165
      %p261 = pneg %p162
      %p262 = pneg %p191
      %p263 = pneg %p188
      %p264 = scmp.lt.s32.totalorder %s18, 1
      %s265 = scalar_select %p264, %s18, 1
      %s266 = smul.addr %s265, 32
      %s267 = smul.addr %s266, 8
      %s268 = scalar_lea.vmem %s7, %s267
      %p269 = scmp.lt.s32.totalorder %s18, 1
      %s270 = scalar_select %p269, %s18, 1
      %s271 = smul.addr %s270, 32
      %s272 = smul.addr %s271, 8
      %s273 = scalar_lea.vmem %s0, %s272
      %p274 = scmp.lt.s32.totalorder %s18, 1
      %s275 = scalar_select %p274, %s18, 1
      %s276 = smul.addr %s275, 32
      %s277 = smul.addr %s276, 8
      %s278 = scalar_lea.vmem %s7, %s277
      %vm280 = vcmask 31744
      %281 = vst.msk [vmem:[#allocation2] sm:$0xff] %vm280, 0.0
      %282 = vst.msk [vmem:[#allocation2 + $0x8] sm:$0xff] %vm280, 0.0
      %vm283 = vcmask 25600
      %284 = vst.msk [vmem:[#allocation2 + $0x10] sm:$0x3] %vm283, 0.0
      %285 = vst.msk [vmem:[#allocation2 + $0x18] sm:$0xff] %vm280, 0.0
      %286 = vst.msk [vmem:[#allocation2 + $0x20] sm:$0xff] %vm280, 0.0
      %287 = vst.msk [vmem:[#allocation2 + $0x28] sm:$0x3] %vm283, 0.0
      %288 = vst.msk [vmem:[#allocation2 + $0x30] sm:$0xff] %vm280, 0.0
      %289 = vst.msk [vmem:[#allocation2 + $0x38] sm:$0xff] %vm280, 0.0
      %290 = vst.msk [vmem:[#allocation2 + $0x40] sm:$0x3] %vm283, 0.0
      %291 = vst.msk [vmem:[#allocation2 + $0x48] sm:$0xff] %vm280, 0.0
      %292 = vst.msk [vmem:[#allocation2 + $0x50] sm:$0xff] %vm280, 0.0
      %293 = vst.msk [vmem:[#allocation2 + $0x58] sm:$0x3] %vm283, 0.0
      %294 = vst.msk [vmem:[#allocation2 + $0x60] sm:$0xff] %vm280, 0.0
      %295 = vst.msk [vmem:[#allocation2 + $0x68] sm:$0xff] %vm280, 0.0
      %296 = vst.msk [vmem:[#allocation2 + $0x70] sm:$0x3] %vm283, 0.0
      %297 = vst.msk [vmem:[#allocation2 + $0x78] sm:$0xff] %vm280, 0.0
      %298 = vst.msk [vmem:[#allocation2 + $0x80] sm:$0xff] %vm280, 0.0
      %299 = vst.msk [vmem:[#allocation2 + $0x88] sm:$0x3] %vm283, 0.0
      %300 = vst.msk [vmem:[#allocation2 + $0x90] sm:$0xff] %vm280, 0.0
      %301 = vst.msk [vmem:[#allocation2 + $0x98] sm:$0xff] %vm280, 0.0
      %302 = vst.msk [vmem:[#allocation2 + $0xa0] sm:$0x3] %vm283, 0.0
      %303 = vst.msk [vmem:[#allocation2 + $0xa8] sm:$0xff] %vm280, 0.0
      %304 = vst.msk [vmem:[#allocation2 + $0xb0] sm:$0xff] %vm280, 0.0
      %305 = vst.msk [vmem:[#allocation2 + $0xb8] sm:$0x3] %vm283, 0.0
      %306 = vst.msk [vmem:[#allocation2 + $0xc0] sm:$0xff] %vm280, 0.0
      %307 = vst.msk [vmem:[#allocation2 + $0xc8] sm:$0xff] %vm280, 0.0
      %308 = vst.msk [vmem:[#allocation2 + $0xd0] sm:$0x3] %vm283, 0.0
      %309 = vst.msk [vmem:[#allocation2 + $0xd8] sm:$0xff] %vm280, 0.0
      %310 = vst.msk [vmem:[#allocation2 + $0xe0] sm:$0xff] %vm280, 0.0
      %311 = vst.msk [vmem:[#allocation2 + $0xe8] sm:$0x3] %vm283, 0.0
      %312 = vst.msk [vmem:[#allocation2 + $0xf0] sm:$0xff] %vm280, 0.0
      %313 = vst.msk [vmem:[#allocation2 + $0xf8] sm:$0xff] %vm280, 0.0
      %314 = vst.msk [vmem:[#allocation2 + $0x100] sm:$0x3] %vm283, 0.0
      %315 = vst.msk [vmem:[#allocation2 + $0x108] sm:$0xff] %vm280, 0.0
      %316 = vst.msk [vmem:[#allocation2 + $0x110] sm:$0xff] %vm280, 0.0
      %317 = vst.msk [vmem:[#allocation2 + $0x118] sm:$0x3] %vm283, 0.0
      %318 = vst.msk [vmem:[#allocation2 + $0x120] sm:$0xff] %vm280, 0.0
      %319 = vst.msk [vmem:[#allocation2 + $0x128] sm:$0xff] %vm280, 0.0
      %320 = vst.msk [vmem:[#allocation2 + $0x130] sm:$0x3] %vm283, 0.0
      %321 = vst.msk [vmem:[#allocation2 + $0x138] sm:$0xff] %vm280, 0.0
      %322 = vst.msk [vmem:[#allocation2 + $0x140] sm:$0xff] %vm280, 0.0
      %323 = vst.msk [vmem:[#allocation2 + $0x148] sm:$0x3] %vm283, 0.0
      %324 = vst.msk [vmem:[#allocation2 + $0x150] sm:$0xff] %vm280, 0.0
      %325 = vst.msk [vmem:[#allocation2 + $0x158] sm:$0xff] %vm280, 0.0
      %326 = vst.msk [vmem:[#allocation2 + $0x160] sm:$0x3] %vm283, 0.0
      %327 = vst.msk [vmem:[#allocation2 + $0x168] sm:$0xff] %vm280, 0.0
      %328 = vst.msk [vmem:[#allocation2 + $0x170] sm:$0xff] %vm280, 0.0
      %329 = vst.msk [vmem:[#allocation2 + $0x178] sm:$0x3] %vm283, 0.0
      %330 = vst.msk [vmem:[#allocation2 + $0x180] sm:$0xff] %vm280, 0.0
      %331 = vst.msk [vmem:[#allocation2 + $0x188] sm:$0xff] %vm280, 0.0
      %332 = vst.msk [vmem:[#allocation2 + $0x190] sm:$0x3] %vm283, 0.0
      %333 = vst.msk [vmem:[#allocation2 + $0x198] sm:$0xff] %vm280, 0.0
      %334 = vst.msk [vmem:[#allocation2 + $0x1a0] sm:$0xff] %vm280, 0.0
      %335 = vst.msk [vmem:[#allocation2 + $0x1a8] sm:$0x3] %vm283, 0.0
      %v336 = vld [vmem:[%s273] sm:$0xff]
      %v337 = vld [vmem:[%s273 + $0x8] sm:$0xff]
      %v338 = vld [vmem:[%s273 + $0x10] sm:$0xff]
      %v339 = vld [vmem:[%s273 + $0x18] sm:$0xff]
      %v340 = vld [vmem:[%s273 + $0x20] sm:$0xff]
      %v341 = vld [vmem:[%s273 + $0x28] sm:$0xff]
      %v342 = vld [vmem:[%s273 + $0x30] sm:$0xff]
      %v343 = vld [vmem:[%s273 + $0x38] sm:$0xff]
      %v344 = vld [vmem:[%s273 + $0x40] sm:$0xff]
      %v345 = vld [vmem:[%s273 + $0x48] sm:$0xff]
      %v346 = vld [vmem:[%s273 + $0x50] sm:$0xff]
      %v347 = vld [vmem:[%s273 + $0x58] sm:$0xff]
      %v348 = vld [vmem:[%s273 + $0x60] sm:$0xff]
      %v349 = vld [vmem:[%s273 + $0x68] sm:$0xff]
      %v350 = vld [vmem:[%s273 + $0x70] sm:$0xff]
      %v351 = vld [vmem:[%s273 + $0x78] sm:$0xff]
      %v352 = vld [vmem:[%s273 + $0x80] sm:$0xff]
      %v353 = vld [vmem:[%s273 + $0x88] sm:$0xff]
      %v354 = vld [vmem:[%s273 + $0x90] sm:$0xff]
      %v355 = vld [vmem:[%s273 + $0x98] sm:$0xff]
      %v356 = vld [vmem:[%s273 + $0xa0] sm:$0xff]
      %v357 = vld [vmem:[%s273 + $0xa8] sm:$0xff]
      %v358 = vld [vmem:[%s273 + $0xb0] sm:$0xff]
      %v359 = vld [vmem:[%s273 + $0xb8] sm:$0xff]
      %v360 = vld [vmem:[%s273 + $0xc0] sm:$0xff]
      %v361 = vld [vmem:[%s273 + $0xc8] sm:$0xff]
      %v362 = vld [vmem:[%s273 + $0xd0] sm:$0xff]
      %v363 = vld [vmem:[%s273 + $0xd8] sm:$0xff]
      %v364 = vld [vmem:[%s273 + $0xe0] sm:$0xff]
      %v365 = vld [vmem:[%s273 + $0xe8] sm:$0xff]
      %v366 = vld [vmem:[%s273 + $0xf0] sm:$0xff]
      %v367 = vld [vmem:[%s273 + $0xf8] sm:$0xff]
      %s368 = scalar_lea.vmem [#allocation2], 24
      %369 = vst.msk [vmem:[%s368 + $0x1] sm:$0xff] %vm280, %v336
      %370 = vst.msk [vmem:[%s368 + $0x9] sm:$0xff] %vm280, %v337
      %371 = vst.msk [vmem:[%s368 + $0x19] sm:$0xff] %vm280, %v338
      %372 = vst.msk [vmem:[%s368 + $0x21] sm:$0xff] %vm280, %v339
      %373 = vst.msk [vmem:[%s368 + $0x31] sm:$0xff] %vm280, %v340
      %374 = vst.msk [vmem:[%s368 + $0x39] sm:$0xff] %vm280, %v341
      %375 = vst.msk [vmem:[%s368 + $0x49] sm:$0xff] %vm280, %v342
      %376 = vst.msk [vmem:[%s368 + $0x51] sm:$0xff] %vm280, %v343
      %377 = vst.msk [vmem:[%s368 + $0x61] sm:$0xff] %vm280, %v344
      %378 = vst.msk [vmem:[%s368 + $0x69] sm:$0xff] %vm280, %v345
      %379 = vst.msk [vmem:[%s368 + $0x79] sm:$0xff] %vm280, %v346
      %380 = vst.msk [vmem:[%s368 + $0x81] sm:$0xff] %vm280, %v347
      %381 = vst.msk [vmem:[%s368 + $0x91] sm:$0xff] %vm280, %v348
      %382 = vst.msk [vmem:[%s368 + $0x99] sm:$0xff] %vm280, %v349
      %383 = vst.msk [vmem:[%s368 + $0xa9] sm:$0xff] %vm280, %v350
      %384 = vst.msk [vmem:[%s368 + $0xb1] sm:$0xff] %vm280, %v351
      %385 = vst.msk [vmem:[%s368 + $0xc1] sm:$0xff] %vm280, %v352
      %386 = vst.msk [vmem:[%s368 + $0xc9] sm:$0xff] %vm280, %v353
      %387 = vst.msk [vmem:[%s368 + $0xd9] sm:$0xff] %vm280, %v354
      %388 = vst.msk [vmem:[%s368 + $0xe1] sm:$0xff] %vm280, %v355
      %389 = vst.msk [vmem:[%s368 + $0xf1] sm:$0xff] %vm280, %v356
      %390 = vst.msk [vmem:[%s368 + $0xf9] sm:$0xff] %vm280, %v357
      %391 = vst.msk [vmem:[%s368 + $0x109] sm:$0xff] %vm280, %v358
      %392 = vst.msk [vmem:[%s368 + $0x111] sm:$0xff] %vm280, %v359
      %393 = vst.msk [vmem:[%s368 + $0x121] sm:$0xff] %vm280, %v360
      %394 = vst.msk [vmem:[%s368 + $0x129] sm:$0xff] %vm280, %v361
      %395 = vst.msk [vmem:[%s368 + $0x139] sm:$0xff] %vm280, %v362
      %396 = vst.msk [vmem:[%s368 + $0x141] sm:$0xff] %vm280, %v363
      %397 = vst.msk [vmem:[%s368 + $0x151] sm:$0xff] %vm280, %v364
      %398 = vst.msk [vmem:[%s368 + $0x159] sm:$0xff] %vm280, %v365
      %399 = vst.msk [vmem:[%s368 + $0x169] sm:$0xff] %vm280, %v366
      %400 = vst.msk [vmem:[%s368 + $0x171] sm:$0xff] %vm280, %v367
      %v401 = vld [vmem:[#allocation2] sm:$0xff]
      %v402 = vld [vmem:[#allocation2 + $0x8] sm:$0xff]
      %v403 = vld [vmem:[#allocation2 + $0x18] sm:$0xff]
      %v404 = vld [vmem:[#allocation2 + $0x20] sm:$0xff]
      %v405 = vld [vmem:[#allocation2 + $0x30] sm:$0xff]
      %v406 = vld [vmem:[#allocation2 + $0x38] sm:$0xff]
      %v407 = vld [vmem:[#allocation2 + $0x48] sm:$0xff]
      %v408 = vld [vmem:[#allocation2 + $0x50] sm:$0xff]
      %v409 = vld [vmem:[#allocation2 + $0x60] sm:$0xff]
      %v410 = vld [vmem:[#allocation2 + $0x68] sm:$0xff]
      %v411 = vld [vmem:[#allocation2 + $0x78] sm:$0xff]
      %v412 = vld [vmem:[#allocation2 + $0x80] sm:$0xff]
      %v413 = vld [vmem:[#allocation2 + $0x90] sm:$0xff]
      %v414 = vld [vmem:[#allocation2 + $0x98] sm:$0xff]
      %v415 = vld [vmem:[#allocation2 + $0xa8] sm:$0xff]
      %v416 = vld [vmem:[#allocation2 + $0xb0] sm:$0xff]
      %v417 = vld [vmem:[#allocation2 + $0xc0] sm:$0xff]
      %v418 = vld [vmem:[#allocation2 + $0xc8] sm:$0xff]
      %v419 = vld [vmem:[#allocation2 + $0xd8] sm:$0xff]
      %v420 = vld [vmem:[#allocation2 + $0xe0] sm:$0xff]
      %v421 = vld [vmem:[#allocation2 + $0xf0] sm:$0xff]
      %v422 = vld [vmem:[#allocation2 + $0xf8] sm:$0xff]
      %v423 = vld [vmem:[#allocation2 + $0x108] sm:$0xff]
      %v424 = vld [vmem:[#allocation2 + $0x110] sm:$0xff]
      %v425 = vld [vmem:[#allocation2 + $0x120] sm:$0xff]
      %v426 = vld [vmem:[#allocation2 + $0x128] sm:$0xff]
      %v427 = vld [vmem:[#allocation2 + $0x138] sm:$0xff]
      %v428 = vld [vmem:[#allocation2 + $0x140] sm:$0xff]
      %v429 = vld [vmem:[#allocation2 + $0x150] sm:$0xff]
      %v430 = vld [vmem:[#allocation2 + $0x158] sm:$0xff]
      %v431 = vld [vmem:[#allocation2 + $0x168] sm:$0xff]
      %v432 = vld [vmem:[#allocation2 + $0x170] sm:$0xff]
      %v433 = vpack.c.bf16 %v402, %v401
      %v434 = vpack.c.bf16 %v404, %v403
      %v435 = vpack.c.bf16 %v406, %v405
      %v436 = vpack.c.bf16 %v408, %v407
      %v437 = vpack.c.bf16 %v410, %v409
      %v438 = vpack.c.bf16 %v412, %v411
      %v439 = vpack.c.bf16 %v414, %v413
      %v440 = vpack.c.bf16 %v416, %v415
      %v441 = vpack.c.bf16 %v418, %v417
      %v442 = vpack.c.bf16 %v420, %v419
      %v443 = vpack.c.bf16 %v422, %v421
      %v444 = vpack.c.bf16 %v424, %v423
      %v445 = vpack.c.bf16 %v426, %v425
      %v446 = vpack.c.bf16 %v428, %v427
      %v447 = vpack.c.bf16 %v430, %v429
      %v448 = vpack.c.bf16 %v432, %v431
      %v449 = vld [vmem:[%s1] sm:$0x3]
      %v450 = vld [vmem:[#allocation2 + $0x1] sm:$0xff]
      %v451 = vld [vmem:[#allocation2 + $0x9] sm:$0xff]
      %v452 = vld [vmem:[#allocation2 + $0x19] sm:$0xff]
      %v453 = vld [vmem:[#allocation2 + $0x21] sm:$0xff]
      %v454 = vld [vmem:[#allocation2 + $0x31] sm:$0xff]
      %v455 = vld [vmem:[#allocation2 + $0x39] sm:$0xff]
      %v456 = vld [vmem:[#allocation2 + $0x49] sm:$0xff]
      %v457 = vld [vmem:[#allocation2 + $0x51] sm:$0xff]
      %v458 = vld [vmem:[#allocation2 + $0x61] sm:$0xff]
      %v459 = vld [vmem:[#allocation2 + $0x69] sm:$0xff]
      %v460 = vld [vmem:[#allocation2 + $0x79] sm:$0xff]
      %v461 = vld [vmem:[#allocation2 + $0x81] sm:$0xff]
      %v462 = vld [vmem:[#allocation2 + $0x91] sm:$0xff]
      %v463 = vld [vmem:[#allocation2 + $0x99] sm:$0xff]
      %v464 = vld [vmem:[#allocation2 + $0xa9] sm:$0xff]
      %v465 = vld [vmem:[#allocation2 + $0xb1] sm:$0xff]
      %v466 = vld [vmem:[#allocation2 + $0xc1] sm:$0xff]
      %v467 = vld [vmem:[#allocation2 + $0xc9] sm:$0xff]
      %v468 = vld [vmem:[#allocation2 + $0xd9] sm:$0xff]
      %v469 = vld [vmem:[#allocation2 + $0xe1] sm:$0xff]
      %v470 = vld [vmem:[#allocation2 + $0xf1] sm:$0xff]
      %v471 = vld [vmem:[#allocation2 + $0xf9] sm:$0xff]
      %v472 = vld [vmem:[#allocation2 + $0x109] sm:$0xff]
      %v473 = vld [vmem:[#allocation2 + $0x111] sm:$0xff]
      %v474 = vld [vmem:[#allocation2 + $0x121] sm:$0xff]
      %v475 = vld [vmem:[#allocation2 + $0x129] sm:$0xff]
      %v476 = vld [vmem:[#allocation2 + $0x139] sm:$0xff]
      %v477 = vld [vmem:[#allocation2 + $0x141] sm:$0xff]
      %v478 = vld [vmem:[#allocation2 + $0x151] sm:$0xff]
      %v479 = vld [vmem:[#allocation2 + $0x159] sm:$0xff]
      %v480 = vld [vmem:[#allocation2 + $0x169] sm:$0xff]
      %v481 = vld [vmem:[#allocation2 + $0x171] sm:$0xff]
      %v482 = vpack.c.bf16 %v451, %v450
      %v483 = vpack.c.bf16 %v453, %v452
      %v484 = vpack.c.bf16 %v455, %v454
      %v485 = vpack.c.bf16 %v457, %v456
      %v486 = vpack.c.bf16 %v459, %v458
      %v487 = vpack.c.bf16 %v461, %v460
      %v488 = vpack.c.bf16 %v463, %v462
      %v489 = vpack.c.bf16 %v465, %v464
      %v490 = vpack.c.bf16 %v467, %v466
      %v491 = vpack.c.bf16 %v469, %v468
      %v492 = vpack.c.bf16 %v471, %v470
      %v493 = vpack.c.bf16 %v473, %v472
      %v494 = vpack.c.bf16 %v475, %v474
      %v495 = vpack.c.bf16 %v477, %v476
      %v496 = vpack.c.bf16 %v479, %v478
      %v497 = vpack.c.bf16 %v481, %v480
      %s498 = scalar_lea.vmem %s1, 2
      %v499 = vld [vmem:[%s498] sm:$0x3]
      %v501 = vsel %vm280, %v482, 0
      %v504 = vsel %vm280, %v483, 0
      %v507 = vsel %vm280, %v484, 0
      %v510 = vsel %vm280, %v485, 0
      %v513 = vsel %vm280, %v486, 0
      %v516 = vsel %vm280, %v487, 0
      %v519 = vsel %vm280, %v488, 0
      %v522 = vsel %vm280, %v489, 0
      %v525 = vsel %vm280, %v490, 0
      %v528 = vsel %vm280, %v491, 0
      %v531 = vsel %vm280, %v492, 0
      %v534 = vsel %vm280, %v493, 0
      %v537 = vsel %vm280, %v494, 0
      %v540 = vsel %vm280, %v495, 0
      %v543 = vsel %vm280, %v496, 0
      %v546 = vsel %vm280, %v497, 0
      %vm548 = vcmask 1041408
      %v550 = vsel %vm548, %v499, 0
      %552 = vmatprep.subr.bf16.mxu0 0
      %553 = vmatpush1.bf16.msra.mxu0 %v550
      %554 = vmatprep.subr.bf16.mxu0 0
      %555 = vmatpush1.bf16.msra.mxu0 0
      %556 = vmatprep.subr.bf16.mxu0 0
      %557 = vmatpush1.bf16.msra.mxu0 0
      %558 = vmatprep.subr.bf16.mxu0 0
      %559 = vmatpush1.bf16.msra.mxu0 0
      %560 = vmatprep.subr.bf16.mxu0 0
      %561 = vmatpush1.bf16.msra.mxu0 0
      %562 = vmatprep.subr.bf16.mxu0 0
      %563 = vmatpush1.bf16.msra.mxu0 0
      %564 = vmatprep.subr.bf16.mxu0 0
      %565 = vmatpush1.bf16.msra.mxu0 0
      %566 = vmatprep.subr.bf16.mxu0 0
      %567 = vmatpush1.bf16.msra.mxu0 0
      %568 = vmatprep.subr.bf16.mxu0 0
      %569 = vmatpush1.bf16.msra.mxu0 0
      %570 = vmatprep.subr.bf16.mxu0 0
      %571 = vmatpush1.bf16.msra.mxu0 0
      %572 = vmatprep.subr.bf16.mxu0 0
      %573 = vmatpush1.bf16.msra.mxu0 0
      %574 = vmatprep.subr.bf16.mxu0 0
      %575 = vmatpush1.bf16.msra.mxu0 0
      %576 = vmatprep.subr.bf16.mxu0 0
      %577 = vmatpush1.bf16.msra.mxu0 0
      %578 = vmatprep.subr.bf16.mxu0 0
      %579 = vmatpush1.bf16.msra.mxu0 0
      %580 = vmatprep.subr.bf16.mxu0 0
      %581 = vmatpush1.bf16.msra.mxu0 0
      %582 = vmatprep.subr.bf16.mxu0 0
      %583 = vmatpush1.bf16.msra.mxu0 0
      %584 = vmatprep.mubr.bf16.mxu0 0
      %585 = vmatmul.mubr.bf16.gmra.mrb[0].mxu0 %v501
      %v586 = vpop.f32.mrb[0].mxu0
      %v587 = vadd.f32 0.0, %v586
      %v588 = vpop.f32.mrb[0].mxu0
      %v589 = vpop.f32.mrb[0].mxu0
      %v590 = vadd.f32 0.0, %v589
      %v591 = vpop.f32.mrb[0].mxu0
      %592 = vmatprep.mubr.bf16.mxu0 0
      %593 = vmatmul.mubr.bf16.gmra.mrb[0].mxu0 %v504
      %v594 = vpop.f32.mrb[0].mxu0
      %v595 = vadd.f32 0.0, %v594
      %v596 = vpop.f32.mrb[0].mxu0
      %v597 = vpop.f32.mrb[0].mxu0
      %v598 = vadd.f32 0.0, %v597
      %v599 = vpop.f32.mrb[0].mxu0
      %600 = vmatprep.mubr.bf16.mxu0 0
      %601 = vmatmul.mubr.bf16.gmra.mrb[0].mxu0 %v507
      %v602 = vpop.f32.mrb[0].mxu0
      %v603 = vadd.f32 0.0, %v602
      %v604 = vpop.f32.mrb[0].mxu0
      %v605 = vpop.f32.mrb[0].mxu0
      %v606 = vadd.f32 0.0, %v605
      %v607 = vpop.f32.mrb[0].mxu0
      %608 = vmatprep.mubr.bf16.mxu0 0
      %609 = vmatmul.mubr.bf16.gmra.mrb[0].mxu0 %v510
      %v610 = vpop.f32.mrb[0].mxu0
      %v611 = vadd.f32 0.0, %v610
      %v612 = vpop.f32.mrb[0].mxu0
      %v613 = vpop.f32.mrb[0].mxu0
      %v614 = vadd.f32 0.0, %v613
      %v615 = vpop.f32.mrb[0].mxu0
      %616 = vmatprep.mubr.bf16.mxu0 0
      %617 = vmatmul.mubr.bf16.gmra.mrb[0].mxu0 %v513
      %v618 = vpop.f32.mrb[0].mxu0
      %v619 = vadd.f32 0.0, %v618
      %v620 = vpop.f32.mrb[0].mxu0
      %v621 = vpop.f32.mrb[0].mxu0
      %v622 = vadd.f32 0.0, %v621
      %v623 = vpop.f32.mrb[0].mxu0
      %624 = vmatprep.mubr.bf16.mxu0 0
      %625 = vmatmul.mubr.bf16.gmra.mrb[0].mxu0 %v516
      %v626 = vpop.f32.mrb[0].mxu0
      %v627 = vadd.f32 0.0, %v626
      %v628 = vpop.f32.mrb[0].mxu0
      %v629 = vpop.f32.mrb[0].mxu0
      %v630 = vadd.f32 0.0, %v629
      %v631 = vpop.f32.mrb[0].mxu0
      %632 = vmatprep.mubr.bf16.mxu0 0
      %633 = vmatmul.mubr.bf16.gmra.mrb[0].mxu0 %v519
      %v634 = vpop.f32.mrb[0].mxu0
      %v635 = vadd.f32 0.0, %v634
      %v636 = vpop.f32.mrb[0].mxu0
      %v637 = vpop.f32.mrb[0].mxu0
      %v638 = vadd.f32 0.0, %v637
      %v639 = vpop.f32.mrb[0].mxu0
      %640 = vmatprep.mubr.bf16.mxu0 0
      %641 = vmatmul.mubr.bf16.gmra.mrb[0].mxu0 %v522
      %v642 = vpop.f32.mrb[0].mxu0
      %v643 = vadd.f32 0.0, %v642
      %v644 = vpop.f32.mrb[0].mxu0
      %v645 = vpop.f32.mrb[0].mxu0
      %v646 = vadd.f32 0.0, %v645
      %v647 = vpop.f32.mrb[0].mxu0
      %648 = vmatprep.mubr.bf16.mxu0 0
      %649 = vmatmul.mubr.bf16.gmra.mrb[0].mxu0 %v525
      %v650 = vpop.f32.mrb[0].mxu0
      %v651 = vadd.f32 0.0, %v650
      %v652 = vpop.f32.mrb[0].mxu0
      %v653 = vpop.f32.mrb[0].mxu0
      %v654 = vadd.f32 0.0, %v653
      %v655 = vpop.f32.mrb[0].mxu0
      %656 = vmatprep.mubr.bf16.mxu0 0
      %657 = vmatmul.mubr.bf16.gmra.mrb[0].mxu0 %v528
      %v658 = vpop.f32.mrb[0].mxu0
      %v659 = vadd.f32 0.0, %v658
      %v660 = vpop.f32.mrb[0].mxu0
      %v661 = vpop.f32.mrb[0].mxu0
      %v662 = vadd.f32 0.0, %v661
      %v663 = vpop.f32.mrb[0].mxu0
      %664 = vmatprep.mubr.bf16.mxu0 0
      %665 = vmatmul.mubr.bf16.gmra.mrb[0].mxu0 %v531
      %v666 = vpop.f32.mrb[0].mxu0
      %v667 = vadd.f32 0.0, %v666
      %v668 = vpop.f32.mrb[0].mxu0
      %v669 = vpop.f32.mrb[0].mxu0
      %v670 = vadd.f32 0.0, %v669
      %v671 = vpop.f32.mrb[0].mxu0
      %672 = vmatprep.mubr.bf16.mxu0 0
      %673 = vmatmul.mubr.bf16.gmra.mrb[0].mxu0 %v534
      %v674 = vpop.f32.mrb[0].mxu0
      %v675 = vadd.f32 0.0, %v674
      %v676 = vpop.f32.mrb[0].mxu0
      %v677 = vpop.f32.mrb[0].mxu0
      %v678 = vadd.f32 0.0, %v677
      %v679 = vpop.f32.mrb[0].mxu0
      %680 = vmatprep.mubr.bf16.mxu0 0
      %681 = vmatmul.mubr.bf16.gmra.mrb[0].mxu0 %v537
      %v682 = vpop.f32.mrb[0].mxu0
      %v683 = vadd.f32 0.0, %v682
      %v684 = vpop.f32.mrb[0].mxu0
      %v685 = vpop.f32.mrb[0].mxu0
      %v686 = vadd.f32 0.0, %v685
      %v687 = vpop.f32.mrb[0].mxu0
      %688 = vmatprep.mubr.bf16.mxu0 0
      %689 = vmatmul.mubr.bf16.gmra.mrb[0].mxu0 %v540
      %v690 = vpop.f32.mrb[0].mxu0
      %v691 = vadd.f32 0.0, %v690
      %v692 = vpop.f32.mrb[0].mxu0
      %v693 = vpop.f32.mrb[0].mxu0
      %v694 = vadd.f32 0.0, %v693
      %v695 = vpop.f32.mrb[0].mxu0
      %696 = vmatprep.mubr.bf16.mxu0 0
      %697 = vmatmul.mubr.bf16.gmra.mrb[0].mxu0 %v543
      %v698 = vpop.f32.mrb[0].mxu0
      %v699 = vadd.f32 0.0, %v698
      %v700 = vpop.f32.mrb[0].mxu0
      %v701 = vpop.f32.mrb[0].mxu0
      %v702 = vadd.f32 0.0, %v701
      %v703 = vpop.f32.mrb[0].mxu0
      %704 = vmatprep.mubr.bf16.mxu0 0
      %705 = vmatmul.mubr.bf16.gmra.mrb[0].mxu0 %v546
      %v706 = vpop.f32.mrb[0].mxu0
      %v707 = vadd.f32 0.0, %v706
      %v708 = vpop.f32.mrb[0].mxu0
      %v709 = vpop.f32.mrb[0].mxu0
      %v710 = vadd.f32 0.0, %v709
      %v711 = vpop.f32.mrb[0].mxu0
      %712 = vdwg.mxu0
      %v714 = vsel %vm280, %v433, 0
      %v717 = vsel %vm280, %v434, 0
      %v720 = vsel %vm280, %v435, 0
      %v723 = vsel %vm280, %v436, 0
      %v726 = vsel %vm280, %v437, 0
      %v729 = vsel %vm280, %v438, 0
      %v732 = vsel %vm280, %v439, 0
      %v735 = vsel %vm280, %v440, 0
      %v738 = vsel %vm280, %v441, 0
      %v741 = vsel %vm280, %v442, 0
      %v744 = vsel %vm280, %v443, 0
      %v747 = vsel %vm280, %v444, 0
      %v750 = vsel %vm280, %v445, 0
      %v753 = vsel %vm280, %v446, 0
      %v756 = vsel %vm280, %v447, 0
      %v759 = vsel %vm280, %v448, 0
      %v762 = vsel %vm548, %v449, 0
      %764 = vmatprep.subr.bf16.mxu0 0
      %765 = vmatpush1.bf16.msra.mxu0 %v762
      %766 = vmatprep.subr.bf16.mxu0 0
      %767 = vmatpush1.bf16.msra.mxu0 0
      %768 = vmatprep.subr.bf16.mxu0 0
      %769 = vmatpush1.bf16.msra.mxu0 0
      %770 = vmatprep.subr.bf16.mxu0 0
      %771 = vmatpush1.bf16.msra.mxu0 0
      %772 = vmatprep.subr.bf16.mxu0 0
      %773 = vmatpush1.bf16.msra.mxu0 0
      %774 = vmatprep.subr.bf16.mxu0 0
      %775 = vmatpush1.bf16.msra.mxu0 0
      %776 = vmatprep.subr.bf16.mxu0 0
      %777 = vmatpush1.bf16.msra.mxu0 0
      %778 = vmatprep.subr.bf16.mxu0 0
      %779 = vmatpush1.bf16.msra.mxu0 0
      %780 = vmatprep.subr.bf16.mxu0 0
      %781 = vmatpush1.bf16.msra.mxu0 0
      %782 = vmatprep.subr.bf16.mxu0 0
      %783 = vmatpush1.bf16.msra.mxu0 0
      %784 = vmatprep.subr.bf16.mxu0 0
      %785 = vmatpush1.bf16.msra.mxu0 0
      %786 = vmatprep.subr.bf16.mxu0 0
      %787 = vmatpush1.bf16.msra.mxu0 0
      %788 = vmatprep.subr.bf16.mxu0 0
      %789 = vmatpush1.bf16.msra.mxu0 0
      %790 = vmatprep.subr.bf16.mxu0 0
      %791 = vmatpush1.bf16.msra.mxu0 0
      %792 = vmatprep.subr.bf16.mxu0 0
      %793 = vmatpush1.bf16.msra.mxu0 0
      %794 = vmatprep.subr.bf16.mxu0 0
      %795 = vmatpush1.bf16.msra.mxu0 0
      %796 = vmatprep.mubr.bf16.mxu0 0
      %797 = vmatmul.mubr.bf16.gmra.mrb[0].mxu0 %v714
      %v798 = vpop.f32.mrb[0].mxu0
      %v799 = vadd.f32 %v587, %v798
      %v800 = vpop.f32.mrb[0].mxu0
      %v801 = vpop.f32.mrb[0].mxu0
      %v802 = vadd.f32 %v590, %v801
      %v803 = vpop.f32.mrb[0].mxu0
      %804 = vmatprep.mubr.bf16.mxu0 0
      %805 = vmatmul.mubr.bf16.gmra.mrb[0].mxu0 %v717
      %v806 = vpop.f32.mrb[0].mxu0
      %v807 = vadd.f32 %v595, %v806
      %v808 = vpop.f32.mrb[0].mxu0
      %v809 = vpop.f32.mrb[0].mxu0
      %v810 = vadd.f32 %v598, %v809
      %v811 = vpop.f32.mrb[0].mxu0
      %812 = vmatprep.mubr.bf16.mxu0 0
      %813 = vmatmul.mubr.bf16.gmra.mrb[0].mxu0 %v720
      %v814 = vpop.f32.mrb[0].mxu0
      %v815 = vadd.f32 %v603, %v814
      %v816 = vpop.f32.mrb[0].mxu0
      %v817 = vpop.f32.mrb[0].mxu0
      %v818 = vadd.f32 %v606, %v817
      %v819 = vpop.f32.mrb[0].mxu0
      %820 = vmatprep.mubr.bf16.mxu0 0
      %821 = vmatmul.mubr.bf16.gmra.mrb[0].mxu0 %v723
      %v822 = vpop.f32.mrb[0].mxu0
      %v823 = vadd.f32 %v611, %v822
      %v824 = vpop.f32.mrb[0].mxu0
      %v825 = vpop.f32.mrb[0].mxu0
      %v826 = vadd.f32 %v614, %v825
      %v827 = vpop.f32.mrb[0].mxu0
      %828 = vmatprep.mubr.bf16.mxu0 0
      %829 = vmatmul.mubr.bf16.gmra.mrb[0].mxu0 %v726
      %v830 = vpop.f32.mrb[0].mxu0
      %v831 = vadd.f32 %v619, %v830
      %v832 = vpop.f32.mrb[0].mxu0
      %v833 = vpop.f32.mrb[0].mxu0
      %v834 = vadd.f32 %v622, %v833
      %v835 = vpop.f32.mrb[0].mxu0
      %836 = vmatprep.mubr.bf16.mxu0 0
      %837 = vmatmul.mubr.bf16.gmra.mrb[0].mxu0 %v729
      %v838 = vpop.f32.mrb[0].mxu0
      %v839 = vadd.f32 %v627, %v838
      %v840 = vpop.f32.mrb[0].mxu0
      %v841 = vpop.f32.mrb[0].mxu0
      %v842 = vadd.f32 %v630, %v841
      %v843 = vpop.f32.mrb[0].mxu0
      %844 = vmatprep.mubr.bf16.mxu0 0
      %845 = vmatmul.mubr.bf16.gmra.mrb[0].mxu0 %v732
      %v846 = vpop.f32.mrb[0].mxu0
      %v847 = vadd.f32 %v635, %v846
      %v848 = vpop.f32.mrb[0].mxu0
      %v849 = vpop.f32.mrb[0].mxu0
      %v850 = vadd.f32 %v638, %v849
      %v851 = vpop.f32.mrb[0].mxu0
      %852 = vmatprep.mubr.bf16.mxu0 0
      %853 = vmatmul.mubr.bf16.gmra.mrb[0].mxu0 %v735
      %v854 = vpop.f32.mrb[0].mxu0
      %v855 = vadd.f32 %v643, %v854
      %v856 = vpop.f32.mrb[0].mxu0
      %v857 = vpop.f32.mrb[0].mxu0
      %v858 = vadd.f32 %v646, %v857
      %v859 = vpop.f32.mrb[0].mxu0
      %860 = vmatprep.mubr.bf16.mxu0 0
      %861 = vmatmul.mubr.bf16.gmra.mrb[0].mxu0 %v738
      %v862 = vpop.f32.mrb[0].mxu0
      %v863 = vadd.f32 %v651, %v862
      %v864 = vpop.f32.mrb[0].mxu0
      %v865 = vpop.f32.mrb[0].mxu0
      %v866 = vadd.f32 %v654, %v865
      %v867 = vpop.f32.mrb[0].mxu0
      %868 = vmatprep.mubr.bf16.mxu0 0
      %869 = vmatmul.mubr.bf16.gmra.mrb[0].mxu0 %v741
      %v870 = vpop.f32.mrb[0].mxu0
      %v871 = vadd.f32 %v659, %v870
      %v872 = vpop.f32.mrb[0].mxu0
      %v873 = vpop.f32.mrb[0].mxu0
      %v874 = vadd.f32 %v662, %v873
      %v875 = vpop.f32.mrb[0].mxu0
      %876 = vmatprep.mubr.bf16.mxu0 0
      %877 = vmatmul.mubr.bf16.gmra.mrb[0].mxu0 %v744
      %v878 = vpop.f32.mrb[0].mxu0
      %v879 = vadd.f32 %v667, %v878
      %v880 = vpop.f32.mrb[0].mxu0
      %v881 = vpop.f32.mrb[0].mxu0
      %v882 = vadd.f32 %v670, %v881
      %v883 = vpop.f32.mrb[0].mxu0
      %884 = vmatprep.mubr.bf16.mxu0 0
      %885 = vmatmul.mubr.bf16.gmra.mrb[0].mxu0 %v747
      %v886 = vpop.f32.mrb[0].mxu0
      %v887 = vadd.f32 %v675, %v886
      %v888 = vpop.f32.mrb[0].mxu0
      %v889 = vpop.f32.mrb[0].mxu0
      %v890 = vadd.f32 %v678, %v889
      %v891 = vpop.f32.mrb[0].mxu0
      %892 = vmatprep.mubr.bf16.mxu0 0
      %893 = vmatmul.mubr.bf16.gmra.mrb[0].mxu0 %v750
      %v894 = vpop.f32.mrb[0].mxu0
      %v895 = vadd.f32 %v683, %v894
      %v896 = vpop.f32.mrb[0].mxu0
      %v897 = vpop.f32.mrb[0].mxu0
      %v898 = vadd.f32 %v686, %v897
      %v899 = vpop.f32.mrb[0].mxu0
      %900 = vmatprep.mubr.bf16.mxu0 0
      %901 = vmatmul.mubr.bf16.gmra.mrb[0].mxu0 %v753
      %v902 = vpop.f32.mrb[0].mxu0
      %v903 = vadd.f32 %v691, %v902
      %v904 = vpop.f32.mrb[0].mxu0
      %v905 = vpop.f32.mrb[0].mxu0
      %v906 = vadd.f32 %v694, %v905
      %v907 = vpop.f32.mrb[0].mxu0
      %908 = vmatprep.mubr.bf16.mxu0 0
      %909 = vmatmul.mubr.bf16.gmra.mrb[0].mxu0 %v756
      %v910 = vpop.f32.mrb[0].mxu0
      %v911 = vadd.f32 %v699, %v910
      %v912 = vpop.f32.mrb[0].mxu0
      %v913 = vpop.f32.mrb[0].mxu0
      %v914 = vadd.f32 %v702, %v913
      %v915 = vpop.f32.mrb[0].mxu0
      %916 = vmatprep.mubr.bf16.mxu0 0
      %917 = vmatmul.mubr.bf16.gmra.mrb[0].mxu0 %v759
      %v918 = vpop.f32.mrb[0].mxu0
      %v919 = vadd.f32 %v707, %v918
      %v920 = vpop.f32.mrb[0].mxu0
      %v921 = vpop.f32.mrb[0].mxu0
      %v922 = vadd.f32 %v710, %v921
      %v923 = vpop.f32.mrb[0].mxu0
      %924 = vdwg.mxu0
      %v925 = vld [vmem:[#allocation2 + $0x2] sm:$0xff]
      %v926 = vld [vmem:[#allocation2 + $0xa] sm:$0xff]
      %v927 = vld [vmem:[#allocation2 + $0x1a] sm:$0xff]
      %v928 = vld [vmem:[#allocation2 + $0x22] sm:$0xff]
      %v929 = vld [vmem:[#allocation2 + $0x32] sm:$0xff]
      %v930 = vld [vmem:[#allocation2 + $0x3a] sm:$0xff]
      %v931 = vld [vmem:[#allocation2 + $0x4a] sm:$0xff]
      %v932 = vld [vmem:[#allocation2 + $0x52] sm:$0xff]
      %v933 = vld [vmem:[#allocation2 + $0x62] sm:$0xff]
      %v934 = vld [vmem:[#allocation2 + $0x6a] sm:$0xff]
      %v935 = vld [vmem:[#allocation2 + $0x7a] sm:$0xff]
      %v936 = vld [vmem:[#allocation2 + $0x82] sm:$0xff]
      %v937 = vld [vmem:[#allocation2 + $0x92] sm:$0xff]
      %v938 = vld [vmem:[#allocation2 + $0x9a] sm:$0xff]
      %v939 = vld [vmem:[#allocation2 + $0xaa] sm:$0xff]
      %v940 = vld [vmem:[#allocation2 + $0xb2] sm:$0xff]
      %v941 = vld [vmem:[#allocation2 + $0xc2] sm:$0xff]
      %v942 = vld [vmem:[#allocation2 + $0xca] sm:$0xff]
      %v943 = vld [vmem:[#allocation2 + $0xda] sm:$0xff]
      %v944 = vld [vmem:[#allocation2 + $0xe2] sm:$0xff]
      %v945 = vld [vmem:[#allocation2 + $0xf2] sm:$0xff]
      %v946 = vld [vmem:[#allocation2 + $0xfa] sm:$0xff]
      %v947 = vld [vmem:[#allocation2 + $0x10a] sm:$0xff]
      %v948 = vld [vmem:[#allocation2 + $0x112] sm:$0xff]
      %v949 = vld [vmem:[#allocation2 + $0x122] sm:$0xff]
      %v950 = vld [vmem:[#allocation2 + $0x12a] sm:$0xff]
      %v951 = vld [vmem:[#allocation2 + $0x13a] sm:$0xff]
      %v952 = vld [vmem:[#allocation2 + $0x142] sm:$0xff]
      %v953 = vld [vmem:[#allocation2 + $0x152] sm:$0xff]
      %v954 = vld [vmem:[#allocation2 + $0x15a] sm:$0xff]
      %v955 = vld [vmem:[#allocation2 + $0x16a] sm:$0xff]
      %v956 = vld [vmem:[#allocation2 + $0x172] sm:$0xff]
      %v957 = vpack.c.bf16 %v926, %v925
      %v958 = vpack.c.bf16 %v928, %v927
      %v959 = vpack.c.bf16 %v930, %v929
      %v960 = vpack.c.bf16 %v932, %v931
      %v961 = vpack.c.bf16 %v934, %v933
      %v962 = vpack.c.bf16 %v936, %v935
      %v963 = vpack.c.bf16 %v938, %v937
      %v964 = vpack.c.bf16 %v940, %v939
      %v965 = vpack.c.bf16 %v942, %v941
      %v966 = vpack.c.bf16 %v944, %v943
      %v967 = vpack.c.bf16 %v946, %v945
      %v968 = vpack.c.bf16 %v948, %v947
      %v969 = vpack.c.bf16 %v950, %v949
      %v970 = vpack.c.bf16 %v952, %v951
      %v971 = vpack.c.bf16 %v954, %v953
      %v972 = vpack.c.bf16 %v956, %v955
      %s973 = scalar_lea.vmem %s1, 4
      %v974 = vld [vmem:[%s973] sm:$0x3]
      %v976 = vsel %vm280, %v957, 0
      %v979 = vsel %vm280, %v958, 0
      %v982 = vsel %vm280, %v959, 0
      %v985 = vsel %vm280, %v960, 0
      %v988 = vsel %vm280, %v961, 0
      %v991 = vsel %vm280, %v962, 0
      %v994 = vsel %vm280, %v963, 0
      %v997 = vsel %vm280, %v964, 0
      %v1000 = vsel %vm280, %v965, 0
      %v1003 = vsel %vm280, %v966, 0
      %v1006 = vsel %vm280, %v967, 0
      %v1009 = vsel %vm280, %v968, 0
      %v1012 = vsel %vm280, %v969, 0
      %v1015 = vsel %vm280, %v970, 0
      %v1018 = vsel %vm280, %v971, 0
      %v1021 = vsel %vm280, %v972, 0
      %v1024 = vsel %vm548, %v974, 0
      %1026 = vmatprep.subr.bf16.mxu0 0
      %1027 = vmatpush1.bf16.msra.mxu0 %v1024
      %1028 = vmatprep.subr.bf16.mxu0 0
      %1029 = vmatpush1.bf16.msra.mxu0 0
      %1030 = vmatprep.subr.bf16.mxu0 0
      %1031 = vmatpush1.bf16.msra.mxu0 0
      %1032 = vmatprep.subr.bf16.mxu0 0
      %1033 = vmatpush1.bf16.msra.mxu0 0
      %1034 = vmatprep.subr.bf16.mxu0 0
      %1035 = vmatpush1.bf16.msra.mxu0 0
      %1036 = vmatprep.subr.bf16.mxu0 0
      %1037 = vmatpush1.bf16.msra.mxu0 0
      %1038 = vmatprep.subr.bf16.mxu0 0
      %1039 = vmatpush1.bf16.msra.mxu0 0
      %1040 = vmatprep.subr.bf16.mxu0 0
      %1041 = vmatpush1.bf16.msra.mxu0 0
      %1042 = vmatprep.subr.bf16.mxu0 0
      %1043 = vmatpush1.bf16.msra.mxu0 0
      %1044 = vmatprep.subr.bf16.mxu0 0
      %1045 = vmatpush1.bf16.msra.mxu0 0
      %1046 = vmatprep.subr.bf16.mxu0 0
      %1047 = vmatpush1.bf16.msra.mxu0 0
      %1048 = vmatprep.subr.bf16.mxu0 0
      %1049 = vmatpush1.bf16.msra.mxu0 0
      %1050 = vmatprep.subr.bf16.mxu0 0
      %1051 = vmatpush1.bf16.msra.mxu0 0
      %1052 = vmatprep.subr.bf16.mxu0 0
      %1053 = vmatpush1.bf16.msra.mxu0 0
      %1054 = vmatprep.subr.bf16.mxu0 0
      %1055 = vmatpush1.bf16.msra.mxu0 0
      %1056 = vmatprep.subr.bf16.mxu0 0
      %1057 = vmatpush1.bf16.msra.mxu0 0
      %1058 = vmatprep.mubr.bf16.mxu0 0
      %1059 = vmatmul.mubr.bf16.gmra.mrb[0].mxu0 %v976
      %v1060 = vpop.f32.mrb[0].mxu0
      %v1061 = vadd.f32 0.0, %v1060
      %v1062 = vpop.f32.mrb[0].mxu0
      %v1063 = vpop.f32.mrb[0].mxu0
      %v1064 = vadd.f32 0.0, %v1063
      %v1065 = vpop.f32.mrb[0].mxu0
      %1066 = vmatprep.mubr.bf16.mxu0 0
      %1067 = vmatmul.mubr.bf16.gmra.mrb[0].mxu0 %v979
      %v1068 = vpop.f32.mrb[0].mxu0
      %v1069 = vadd.f32 0.0, %v1068
      %v1070 = vpop.f32.mrb[0].mxu0
      %v1071 = vpop.f32.mrb[0].mxu0
      %v1072 = vadd.f32 0.0, %v1071
      %v1073 = vpop.f32.mrb[0].mxu0
      %1074 = vmatprep.mubr.bf16.mxu0 0
      %1075 = vmatmul.mubr.bf16.gmra.mrb[0].mxu0 %v982
      %v1076 = vpop.f32.mrb[0].mxu0
      %v1077 = vadd.f32 0.0, %v1076
      %v1078 = vpop.f32.mrb[0].mxu0
      %v1079 = vpop.f32.mrb[0].mxu0
      %v1080 = vadd.f32 0.0, %v1079
      %v1081 = vpop.f32.mrb[0].mxu0
      %1082 = vmatprep.mubr.bf16.mxu0 0
      %1083 = vmatmul.mubr.bf16.gmra.mrb[0].mxu0 %v985
      %v1084 = vpop.f32.mrb[0].mxu0
      %v1085 = vadd.f32 0.0, %v1084
      %v1086 = vpop.f32.mrb[0].mxu0
      %v1087 = vpop.f32.mrb[0].mxu0
      %v1088 = vadd.f32 0.0, %v1087
      %v1089 = vpop.f32.mrb[0].mxu0
      %1090 = vmatprep.mubr.bf16.mxu0 0
      %1091 = vmatmul.mubr.bf16.gmra.mrb[0].mxu0 %v988
      %v1092 = vpop.f32.mrb[0].mxu0
      %v1093 = vadd.f32 0.0, %v1092
      %v1094 = vpop.f32.mrb[0].mxu0
      %v1095 = vpop.f32.mrb[0].mxu0
      %v1096 = vadd.f32 0.0, %v1095
      %v1097 = vpop.f32.mrb[0].mxu0
      %1098 = vmatprep.mubr.bf16.mxu0 0
      %1099 = vmatmul.mubr.bf16.gmra.mrb[0].mxu0 %v991
      %v1100 = vpop.f32.mrb[0].mxu0
      %v1101 = vadd.f32 0.0, %v1100
      %v1102 = vpop.f32.mrb[0].mxu0
      %v1103 = vpop.f32.mrb[0].mxu0
      %v1104 = vadd.f32 0.0, %v1103
      %v1105 = vpop.f32.mrb[0].mxu0
      %1106 = vmatprep.mubr.bf16.mxu0 0
      %1107 = vmatmul.mubr.bf16.gmra.mrb[0].mxu0 %v994
      %v1108 = vpop.f32.mrb[0].mxu0
      %v1109 = vadd.f32 0.0, %v1108
      %v1110 = vpop.f32.mrb[0].mxu0
      %v1111 = vpop.f32.mrb[0].mxu0
      %v1112 = vadd.f32 0.0, %v1111
      %v1113 = vpop.f32.mrb[0].mxu0
      %1114 = vmatprep.mubr.bf16.mxu0 0
      %1115 = vmatmul.mubr.bf16.gmra.mrb[0].mxu0 %v997
      %v1116 = vpop.f32.mrb[0].mxu0
      %v1117 = vadd.f32 0.0, %v1116
      %v1118 = vpop.f32.mrb[0].mxu0
      %v1119 = vpop.f32.mrb[0].mxu0
      %v1120 = vadd.f32 0.0, %v1119
      %v1121 = vpop.f32.mrb[0].mxu0
      %1122 = vmatprep.mubr.bf16.mxu0 0
      %1123 = vmatmul.mubr.bf16.gmra.mrb[0].mxu0 %v1000
      %v1124 = vpop.f32.mrb[0].mxu0
      %v1125 = vadd.f32 0.0, %v1124
      %v1126 = vpop.f32.mrb[0].mxu0
      %v1127 = vpop.f32.mrb[0].mxu0
      %v1128 = vadd.f32 0.0, %v1127
      %v1129 = vpop.f32.mrb[0].mxu0
      %1130 = vmatprep.mubr.bf16.mxu0 0
      %1131 = vmatmul.mubr.bf16.gmra.mrb[0].mxu0 %v1003
      %v1132 = vpop.f32.mrb[0].mxu0
      %v1133 = vadd.f32 0.0, %v1132
      %v1134 = vpop.f32.mrb[0].mxu0
      %v1135 = vpop.f32.mrb[0].mxu0
      %v1136 = vadd.f32 0.0, %v1135
      %v1137 = vpop.f32.mrb[0].mxu0
      %1138 = vmatprep.mubr.bf16.mxu0 0
      %1139 = vmatmul.mubr.bf16.gmra.mrb[0].mxu0 %v1006
      %v1140 = vpop.f32.mrb[0].mxu0
      %v1141 = vadd.f32 0.0, %v1140
      %v1142 = vpop.f32.mrb[0].mxu0
      %v1143 = vpop.f32.mrb[0].mxu0
      %v1144 = vadd.f32 0.0, %v1143
      %v1145 = vpop.f32.mrb[0].mxu0
      %1146 = vmatprep.mubr.bf16.mxu0 0
      %1147 = vmatmul.mubr.bf16.gmra.mrb[0].mxu0 %v1009
      %v1148 = vpop.f32.mrb[0].mxu0
      %v1149 = vadd.f32 0.0, %v1148
      %v1150 = vpop.f32.mrb[0].mxu0
      %v1151 = vpop.f32.mrb[0].mxu0
      %v1152 = vadd.f32 0.0, %v1151
      %v1153 = vpop.f32.mrb[0].mxu0
      %1154 = vmatprep.mubr.bf16.mxu0 0
      %1155 = vmatmul.mubr.bf16.gmra.mrb[0].mxu0 %v1012
      %v1156 = vpop.f32.mrb[0].mxu0
      %v1157 = vadd.f32 0.0, %v1156
      %v1158 = vpop.f32.mrb[0].mxu0
      %v1159 = vpop.f32.mrb[0].mxu0
      %v1160 = vadd.f32 0.0, %v1159
      %v1161 = vpop.f32.mrb[0].mxu0
      %1162 = vmatprep.mubr.bf16.mxu0 0
      %1163 = vmatmul.mubr.bf16.gmra.mrb[0].mxu0 %v1015
      %v1164 = vpop.f32.mrb[0].mxu0
      %v1165 = vadd.f32 0.0, %v1164
      %v1166 = vpop.f32.mrb[0].mxu0
      %v1167 = vpop.f32.mrb[0].mxu0
      %v1168 = vadd.f32 0.0, %v1167
      %v1169 = vpop.f32.mrb[0].mxu0
      %1170 = vmatprep.mubr.bf16.mxu0 0
      %1171 = vmatmul.mubr.bf16.gmra.mrb[0].mxu0 %v1018
      %v1172 = vpop.f32.mrb[0].mxu0
      %v1173 = vadd.f32 0.0, %v1172
      %v1174 = vpop.f32.mrb[0].mxu0
      %v1175 = vpop.f32.mrb[0].mxu0
      %v1176 = vadd.f32 0.0, %v1175
      %v1177 = vpop.f32.mrb[0].mxu0
      %1178 = vmatprep.mubr.bf16.mxu0 0
      %1179 = vmatmul.mubr.bf16.gmra.mrb[0].mxu0 %v1021
      %v1180 = vpop.f32.mrb[0].mxu0
      %v1181 = vadd.f32 0.0, %v1180
      %v1182 = vpop.f32.mrb[0].mxu0
      %v1183 = vpop.f32.mrb[0].mxu0
      %v1184 = vadd.f32 0.0, %v1183
      %v1185 = vpop.f32.mrb[0].mxu0
      %1186 = vdwg.mxu0
      %v1187 = vadd.f32 %v799, %v1061
      %v1188 = vadd.f32 %v802, %v1064
      %v1189 = vadd.f32 %v807, %v1069
      %v1190 = vadd.f32 %v810, %v1072
      %v1191 = vadd.f32 %v815, %v1077
      %v1192 = vadd.f32 %v818, %v1080
      %v1193 = vadd.f32 %v823, %v1085
      %v1194 = vadd.f32 %v826, %v1088
      %v1195 = vadd.f32 %v831, %v1093
      %v1196 = vadd.f32 %v834, %v1096
      %v1197 = vadd.f32 %v839, %v1101
      %v1198 = vadd.f32 %v842, %v1104
      %v1199 = vadd.f32 %v847, %v1109
      %v1200 = vadd.f32 %v850, %v1112
      %v1201 = vadd.f32 %v855, %v1117
      %v1202 = vadd.f32 %v858, %v1120
      %v1203 = vadd.f32 %v863, %v1125
      %v1204 = vadd.f32 %v866, %v1128
      %v1205 = vadd.f32 %v871, %v1133
      %v1206 = vadd.f32 %v874, %v1136
      %v1207 = vadd.f32 %v879, %v1141
      %v1208 = vadd.f32 %v882, %v1144
      %v1209 = vadd.f32 %v887, %v1149
      %v1210 = vadd.f32 %v890, %v1152
      %v1211 = vadd.f32 %v895, %v1157
      %v1212 = vadd.f32 %v898, %v1160
      %v1213 = vadd.f32 %v903, %v1165
      %v1214 = vadd.f32 %v906, %v1168
      %v1215 = vadd.f32 %v911, %v1173
      %v1216 = vadd.f32 %v914, %v1176
      %v1217 = vadd.f32 %v919, %v1181
      %v1218 = vadd.f32 %v922, %v1184
      %v1219 = vld [vmem:[%s368] sm:$0xff]
      %v1220 = vld [vmem:[%s368 + $0x8] sm:$0xff]
      %v1221 = vld [vmem:[%s368 + $0x18] sm:$0xff]
      %v1222 = vld [vmem:[%s368 + $0x20] sm:$0xff]
      %v1223 = vld [vmem:[%s368 + $0x30] sm:$0xff]
      %v1224 = vld [vmem:[%s368 + $0x38] sm:$0xff]
      %v1225 = vld [vmem:[%s368 + $0x48] sm:$0xff]
      %v1226 = vld [vmem:[%s368 + $0x50] sm:$0xff]
      %v1227 = vld [vmem:[%s368 + $0x60] sm:$0xff]
      %v1228 = vld [vmem:[%s368 + $0x68] sm:$0xff]
      %v1229 = vld [vmem:[%s368 + $0x78] sm:$0xff]
      %v1230 = vld [vmem:[%s368 + $0x80] sm:$0xff]
      %v1231 = vld [vmem:[%s368 + $0x90] sm:$0xff]
      %v1232 = vld [vmem:[%s368 + $0x98] sm:$0xff]
      %v1233 = vld [vmem:[%s368 + $0xa8] sm:$0xff]
      %v1234 = vld [vmem:[%s368 + $0xb0] sm:$0xff]
      %v1235 = vld [vmem:[%s368 + $0xc0] sm:$0xff]
      %v1236 = vld [vmem:[%s368 + $0xc8] sm:$0xff]
      %v1237 = vld [vmem:[%s368 + $0xd8] sm:$0xff]
      %v1238 = vld [vmem:[%s368 + $0xe0] sm:$0xff]
      %v1239 = vld [vmem:[%s368 + $0xf0] sm:$0xff]
      %v1240 = vld [vmem:[%s368 + $0xf8] sm:$0xff]
      %v1241 = vld [vmem:[%s368 + $0x108] sm:$0xff]
      %v1242 = vld [vmem:[%s368 + $0x110] sm:$0xff]
      %v1243 = vld [vmem:[%s368 + $0x120] sm:$0xff]
      %v1244 = vld [vmem:[%s368 + $0x128] sm:$0xff]
      %v1245 = vld [vmem:[%s368 + $0x138] sm:$0xff]
      %v1246 = vld [vmem:[%s368 + $0x140] sm:$0xff]
      %v1247 = vld [vmem:[%s368 + $0x150] sm:$0xff]
      %v1248 = vld [vmem:[%s368 + $0x158] sm:$0xff]
      %v1249 = vld [vmem:[%s368 + $0x168] sm:$0xff]
      %v1250 = vld [vmem:[%s368 + $0x170] sm:$0xff]
      %v1251 = vpack.c.bf16 %v1220, %v1219
      %v1252 = vpack.c.bf16 %v1222, %v1221
      %v1253 = vpack.c.bf16 %v1224, %v1223
      %v1254 = vpack.c.bf16 %v1226, %v1225
      %v1255 = vpack.c.bf16 %v1228, %v1227
      %v1256 = vpack.c.bf16 %v1230, %v1229
      %v1257 = vpack.c.bf16 %v1232, %v1231
      %v1258 = vpack.c.bf16 %v1234, %v1233
      %v1259 = vpack.c.bf16 %v1236, %v1235
      %v1260 = vpack.c.bf16 %v1238, %v1237
      %v1261 = vpack.c.bf16 %v1240, %v1239
      %v1262 = vpack.c.bf16 %v1242, %v1241
      %v1263 = vpack.c.bf16 %v1244, %v1243
      %v1264 = vpack.c.bf16 %v1246, %v1245
      %v1265 = vpack.c.bf16 %v1248, %v1247
      %v1266 = vpack.c.bf16 %v1250, %v1249
      %s1267 = scalar_lea.vmem %s1, 6
      %v1268 = vld [vmem:[%s1267] sm:$0x3]
      %v1270 = vsel %vm280, %v1251, 0
      %v1273 = vsel %vm280, %v1252, 0
      %v1276 = vsel %vm280, %v1253, 0
      %v1279 = vsel %vm280, %v1254, 0
      %v1282 = vsel %vm280, %v1255, 0
      %v1285 = vsel %vm280, %v1256, 0
      %v1288 = vsel %vm280, %v1257, 0
      %v1291 = vsel %vm280, %v1258, 0
      %v1294 = vsel %vm280, %v1259, 0
      %v1297 = vsel %vm280, %v1260, 0
      %v1300 = vsel %vm280, %v1261, 0
      %v1303 = vsel %vm280, %v1262, 0
      %v1306 = vsel %vm280, %v1263, 0
      %v1309 = vsel %vm280, %v1264, 0
      %v1312 = vsel %vm280, %v1265, 0
      %v1315 = vsel %vm280, %v1266, 0
      %v1318 = vsel %vm548, %v1268, 0
      %1320 = vmatprep.subr.bf16.mxu0 0
      %1321 = vmatpush1.bf16.msra.mxu0 %v1318
      %1322 = vmatprep.subr.bf16.mxu0 0
      %1323 = vmatpush1.bf16.msra.mxu0 0
      %1324 = vmatprep.subr.bf16.mxu0 0
      %1325 = vmatpush1.bf16.msra.mxu0 0
      %1326 = vmatprep.subr.bf16.mxu0 0
      %1327 = vmatpush1.bf16.msra.mxu0 0
      %1328 = vmatprep.subr.bf16.mxu0 0
      %1329 = vmatpush1.bf16.msra.mxu0 0
      %1330 = vmatprep.subr.bf16.mxu0 0
      %1331 = vmatpush1.bf16.msra.mxu0 0
      %1332 = vmatprep.subr.bf16.mxu0 0
      %1333 = vmatpush1.bf16.msra.mxu0 0
      %1334 = vmatprep.subr.bf16.mxu0 0
      %1335 = vmatpush1.bf16.msra.mxu0 0
      %1336 = vmatprep.subr.bf16.mxu0 0
      %1337 = vmatpush1.bf16.msra.mxu0 0
      %1338 = vmatprep.subr.bf16.mxu0 0
      %1339 = vmatpush1.bf16.msra.mxu0 0
      %1340 = vmatprep.subr.bf16.mxu0 0
      %1341 = vmatpush1.bf16.msra.mxu0 0
      %1342 = vmatprep.subr.bf16.mxu0 0
      %1343 = vmatpush1.bf16.msra.mxu0 0
      %1344 = vmatprep.subr.bf16.mxu0 0
      %1345 = vmatpush1.bf16.msra.mxu0 0
      %1346 = vmatprep.subr.bf16.mxu0 0
      %1347 = vmatpush1.bf16.msra.mxu0 0
      %1348 = vmatprep.subr.bf16.mxu0 0
      %1349 = vmatpush1.bf16.msra.mxu0 0
      %1350 = vmatprep.subr.bf16.mxu0 0
      %1351 = vmatpush1.bf16.msra.mxu0 0
      %1352 = vmatprep.mubr.bf16.mxu0 0
      %1353 = vmatmul.mubr.bf16.gmra.mrb[0].mxu0 %v1270
      %v1354 = vpop.f32.mrb[0].mxu0
      %v1355 = vadd.f32 0.0, %v1354
      %v1356 = vpop.f32.mrb[0].mxu0
      %v1357 = vpop.f32.mrb[0].mxu0
      %v1358 = vadd.f32 0.0, %v1357
      %v1359 = vpop.f32.mrb[0].mxu0
      %1360 = vmatprep.mubr.bf16.mxu0 0
      %1361 = vmatmul.mubr.bf16.gmra.mrb[0].mxu0 %v1273
      %v1362 = vpop.f32.mrb[0].mxu0
      %v1363 = vadd.f32 0.0, %v1362
      %v1364 = vpop.f32.mrb[0].mxu0
      %v1365 = vpop.f32.mrb[0].mxu0
      %v1366 = vadd.f32 0.0, %v1365
      %v1367 = vpop.f32.mrb[0].mxu0
      %1368 = vmatprep.mubr.bf16.mxu0 0
      %1369 = vmatmul.mubr.bf16.gmra.mrb[0].mxu0 %v1276
      %v1370 = vpop.f32.mrb[0].mxu0
      %v1371 = vadd.f32 0.0, %v1370
      %v1372 = vpop.f32.mrb[0].mxu0
      %v1373 = vpop.f32.mrb[0].mxu0
      %v1374 = vadd.f32 0.0, %v1373
      %v1375 = vpop.f32.mrb[0].mxu0
      %1376 = vmatprep.mubr.bf16.mxu0 0
      %1377 = vmatmul.mubr.bf16.gmra.mrb[0].mxu0 %v1279
      %v1378 = vpop.f32.mrb[0].mxu0
      %v1379 = vadd.f32 0.0, %v1378
      %v1380 = vpop.f32.mrb[0].mxu0
      %v1381 = vpop.f32.mrb[0].mxu0
      %v1382 = vadd.f32 0.0, %v1381
      %v1383 = vpop.f32.mrb[0].mxu0
      %1384 = vmatprep.mubr.bf16.mxu0 0
      %1385 = vmatmul.mubr.bf16.gmra.mrb[0].mxu0 %v1282
      %v1386 = vpop.f32.mrb[0].mxu0
      %v1387 = vadd.f32 0.0, %v1386
      %v1388 = vpop.f32.mrb[0].mxu0
      %v1389 = vpop.f32.mrb[0].mxu0
      %v1390 = vadd.f32 0.0, %v1389
      %v1391 = vpop.f32.mrb[0].mxu0
      %1392 = vmatprep.mubr.bf16.mxu0 0
      %1393 = vmatmul.mubr.bf16.gmra.mrb[0].mxu0 %v1285
      %v1394 = vpop.f32.mrb[0].mxu0
      %v1395 = vadd.f32 0.0, %v1394
      %v1396 = vpop.f32.mrb[0].mxu0
      %v1397 = vpop.f32.mrb[0].mxu0
      %v1398 = vadd.f32 0.0, %v1397
      %v1399 = vpop.f32.mrb[0].mxu0
      %1400 = vmatprep.mubr.bf16.mxu0 0
      %1401 = vmatmul.mubr.bf16.gmra.mrb[0].mxu0 %v1288
      %v1402 = vpop.f32.mrb[0].mxu0
      %v1403 = vadd.f32 0.0, %v1402
      %v1404 = vpop.f32.mrb[0].mxu0
      %v1405 = vpop.f32.mrb[0].mxu0
      %v1406 = vadd.f32 0.0, %v1405
      %v1407 = vpop.f32.mrb[0].mxu0
      %1408 = vmatprep.mubr.bf16.mxu0 0
      %1409 = vmatmul.mubr.bf16.gmra.mrb[0].mxu0 %v1291
      %v1410 = vpop.f32.mrb[0].mxu0
      %v1411 = vadd.f32 0.0, %v1410
      %v1412 = vpop.f32.mrb[0].mxu0
      %v1413 = vpop.f32.mrb[0].mxu0
      %v1414 = vadd.f32 0.0, %v1413
      %v1415 = vpop.f32.mrb[0].mxu0
      %1416 = vmatprep.mubr.bf16.mxu0 0
      %1417 = vmatmul.mubr.bf16.gmra.mrb[0].mxu0 %v1294
      %v1418 = vpop.f32.mrb[0].mxu0
      %v1419 = vadd.f32 0.0, %v1418
      %v1420 = vpop.f32.mrb[0].mxu0
      %v1421 = vpop.f32.mrb[0].mxu0
      %v1422 = vadd.f32 0.0, %v1421
      %v1423 = vpop.f32.mrb[0].mxu0
      %1424 = vmatprep.mubr.bf16.mxu0 0
      %1425 = vmatmul.mubr.bf16.gmra.mrb[0].mxu0 %v1297
      %v1426 = vpop.f32.mrb[0].mxu0
      %v1427 = vadd.f32 0.0, %v1426
      %v1428 = vpop.f32.mrb[0].mxu0
      %v1429 = vpop.f32.mrb[0].mxu0
      %v1430 = vadd.f32 0.0, %v1429
      %v1431 = vpop.f32.mrb[0].mxu0
      %1432 = vmatprep.mubr.bf16.mxu0 0
      %1433 = vmatmul.mubr.bf16.gmra.mrb[0].mxu0 %v1300
      %v1434 = vpop.f32.mrb[0].mxu0
      %v1435 = vadd.f32 0.0, %v1434
      %v1436 = vpop.f32.mrb[0].mxu0
      %v1437 = vpop.f32.mrb[0].mxu0
      %v1438 = vadd.f32 0.0, %v1437
      %v1439 = vpop.f32.mrb[0].mxu0
      %1440 = vmatprep.mubr.bf16.mxu0 0
      %1441 = vmatmul.mubr.bf16.gmra.mrb[0].mxu0 %v1303
      %v1442 = vpop.f32.mrb[0].mxu0
      %v1443 = vadd.f32 0.0, %v1442
      %v1444 = vpop.f32.mrb[0].mxu0
      %v1445 = vpop.f32.mrb[0].mxu0
      %v1446 = vadd.f32 0.0, %v1445
      %v1447 = vpop.f32.mrb[0].mxu0
      %1448 = vmatprep.mubr.bf16.mxu0 0
      %1449 = vmatmul.mubr.bf16.gmra.mrb[0].mxu0 %v1306
      %v1450 = vpop.f32.mrb[0].mxu0
      %v1451 = vadd.f32 0.0, %v1450
      %v1452 = vpop.f32.mrb[0].mxu0
      %v1453 = vpop.f32.mrb[0].mxu0
      %v1454 = vadd.f32 0.0, %v1453
      %v1455 = vpop.f32.mrb[0].mxu0
      %1456 = vmatprep.mubr.bf16.mxu0 0
      %1457 = vmatmul.mubr.bf16.gmra.mrb[0].mxu0 %v1309
      %v1458 = vpop.f32.mrb[0].mxu0
      %v1459 = vadd.f32 0.0, %v1458
      %v1460 = vpop.f32.mrb[0].mxu0
      %v1461 = vpop.f32.mrb[0].mxu0
      %v1462 = vadd.f32 0.0, %v1461
      %v1463 = vpop.f32.mrb[0].mxu0
      %1464 = vmatprep.mubr.bf16.mxu0 0
      %1465 = vmatmul.mubr.bf16.gmra.mrb[0].mxu0 %v1312
      %v1466 = vpop.f32.mrb[0].mxu0
      %v1467 = vadd.f32 0.0, %v1466
      %v1468 = vpop.f32.mrb[0].mxu0
      %v1469 = vpop.f32.mrb[0].mxu0
      %v1470 = vadd.f32 0.0, %v1469
      %v1471 = vpop.f32.mrb[0].mxu0
      %1472 = vmatprep.mubr.bf16.mxu0 0
      %1473 = vmatmul.mubr.bf16.gmra.mrb[0].mxu0 %v1315
      %v1474 = vpop.f32.mrb[0].mxu0
      %v1475 = vadd.f32 0.0, %v1474
      %v1476 = vpop.f32.mrb[0].mxu0
      %v1477 = vpop.f32.mrb[0].mxu0
      %v1478 = vadd.f32 0.0, %v1477
      %v1479 = vpop.f32.mrb[0].mxu0
      %1480 = vdwg.mxu0
      %v1481 = vadd.f32 %v1187, %v1355
      %v1482 = vadd.f32 %v1188, %v1358
      %v1483 = vadd.f32 %v1189, %v1363
      %v1484 = vadd.f32 %v1190, %v1366
      %v1485 = vadd.f32 %v1191, %v1371
      %v1486 = vadd.f32 %v1192, %v1374
      %v1487 = vadd.f32 %v1193, %v1379
      %v1488 = vadd.f32 %v1194, %v1382
      %v1489 = vadd.f32 %v1195, %v1387
      %v1490 = vadd.f32 %v1196, %v1390
      %v1491 = vadd.f32 %v1197, %v1395
      %v1492 = vadd.f32 %v1198, %v1398
      %v1493 = vadd.f32 %v1199, %v1403
      %v1494 = vadd.f32 %v1200, %v1406
      %v1495 = vadd.f32 %v1201, %v1411
      %v1496 = vadd.f32 %v1202, %v1414
      %v1497 = vadd.f32 %v1203, %v1419
      %v1498 = vadd.f32 %v1204, %v1422
      %v1499 = vadd.f32 %v1205, %v1427
      %v1500 = vadd.f32 %v1206, %v1430
      %v1501 = vadd.f32 %v1207, %v1435
      %v1502 = vadd.f32 %v1208, %v1438
      %v1503 = vadd.f32 %v1209, %v1443
      %v1504 = vadd.f32 %v1210, %v1446
      %v1505 = vadd.f32 %v1211, %v1451
      %v1506 = vadd.f32 %v1212, %v1454
      %v1507 = vadd.f32 %v1213, %v1459
      %v1508 = vadd.f32 %v1214, %v1462
      %v1509 = vadd.f32 %v1215, %v1467
      %v1510 = vadd.f32 %v1216, %v1470
      %v1511 = vadd.f32 %v1217, %v1475
      %v1512 = vadd.f32 %v1218, %v1478
      %v1513 = vld [vmem:[%s368 + $0x1] sm:$0xff]
      %v1514 = vld [vmem:[%s368 + $0x9] sm:$0xff]
      %v1515 = vld [vmem:[%s368 + $0x19] sm:$0xff]
      %v1516 = vld [vmem:[%s368 + $0x21] sm:$0xff]
      %v1517 = vld [vmem:[%s368 + $0x31] sm:$0xff]
      %v1518 = vld [vmem:[%s368 + $0x39] sm:$0xff]
      %v1519 = vld [vmem:[%s368 + $0x49] sm:$0xff]
      %v1520 = vld [vmem:[%s368 + $0x51] sm:$0xff]
      %v1521 = vld [vmem:[%s368 + $0x61] sm:$0xff]
      %v1522 = vld [vmem:[%s368 + $0x69] sm:$0xff]
      %v1523 = vld [vmem:[%s368 + $0x79] sm:$0xff]
      %v1524 = vld [vmem:[%s368 + $0x81] sm:$0xff]
      %v1525 = vld [vmem:[%s368 + $0x91] sm:$0xff]
      %v1526 = vld [vmem:[%s368 + $0x99] sm:$0xff]
      %v1527 = vld [vmem:[%s368 + $0xa9] sm:$0xff]
      %v1528 = vld [vmem:[%s368 + $0xb1] sm:$0xff]
      %v1529 = vld [vmem:[%s368 + $0xc1] sm:$0xff]
      %v1530 = vld [vmem:[%s368 + $0xc9] sm:$0xff]
      %v1531 = vld [vmem:[%s368 + $0xd9] sm:$0xff]
      %v1532 = vld [vmem:[%s368 + $0xe1] sm:$0xff]
      %v1533 = vld [vmem:[%s368 + $0xf1] sm:$0xff]
      %v1534 = vld [vmem:[%s368 + $0xf9] sm:$0xff]
      %v1535 = vld [vmem:[%s368 + $0x109] sm:$0xff]
      %v1536 = vld [vmem:[%s368 + $0x111] sm:$0xff]
      %v1537 = vld [vmem:[%s368 + $0x121] sm:$0xff]
      %v1538 = vld [vmem:[%s368 + $0x129] sm:$0xff]
      %v1539 = vld [vmem:[%s368 + $0x139] sm:$0xff]
      %v1540 = vld [vmem:[%s368 + $0x141] sm:$0xff]
      %v1541 = vld [vmem:[%s368 + $0x151] sm:$0xff]
      %v1542 = vld [vmem:[%s368 + $0x159] sm:$0xff]
      %v1543 = vld [vmem:[%s368 + $0x169] sm:$0xff]
      %v1544 = vld [vmem:[%s368 + $0x171] sm:$0xff]
      %v1545 = vpack.c.bf16 %v1514, %v1513
      %v1546 = vpack.c.bf16 %v1516, %v1515
      %v1547 = vpack.c.bf16 %v1518, %v1517
      %v1548 = vpack.c.bf16 %v1520, %v1519
      %v1549 = vpack.c.bf16 %v1522, %v1521
      %v1550 = vpack.c.bf16 %v1524, %v1523
      %v1551 = vpack.c.bf16 %v1526, %v1525
      %v1552 = vpack.c.bf16 %v1528, %v1527
      %v1553 = vpack.c.bf16 %v1530, %v1529
      %v1554 = vpack.c.bf16 %v1532, %v1531
      %v1555 = vpack.c.bf16 %v1534, %v1533
      %v1556 = vpack.c.bf16 %v1536, %v1535
      %v1557 = vpack.c.bf16 %v1538, %v1537
      %v1558 = vpack.c.bf16 %v1540, %v1539
      %v1559 = vpack.c.bf16 %v1542, %v1541
      %v1560 = vpack.c.bf16 %v1544, %v1543
      %s1561 = scalar_lea.vmem %s1, 8
      %v1562 = vld [vmem:[%s1561] sm:$0x3]
      %v1564 = vsel %vm280, %v1545, 0
      %v1567 = vsel %vm280, %v1546, 0
      %v1570 = vsel %vm280, %v1547, 0
      %v1573 = vsel %vm280, %v1548, 0
      %v1576 = vsel %vm280, %v1549, 0
      %v1579 = vsel %vm280, %v1550, 0
      %v1582 = vsel %vm280, %v1551, 0
      %v1585 = vsel %vm280, %v1552, 0
      %v1588 = vsel %vm280, %v1553, 0
      %v1591 = vsel %vm280, %v1554, 0
      %v1594 = vsel %vm280, %v1555, 0
      %v1597 = vsel %vm280, %v1556, 0
      %v1600 = vsel %vm280, %v1557, 0
      %v1603 = vsel %vm280, %v1558, 0
      %v1606 = vsel %vm280, %v1559, 0
      %v1609 = vsel %vm280, %v1560, 0
      %v1612 = vsel %vm548, %v1562, 0
      %1614 = vmatprep.subr.bf16.mxu0 0
      %1615 = vmatpush1.bf16.msra.mxu0 %v1612
      %1616 = vmatprep.subr.bf16.mxu0 0
      %1617 = vmatpush1.bf16.msra.mxu0 0
      %1618 = vmatprep.subr.bf16.mxu0 0
      %1619 = vmatpush1.bf16.msra.mxu0 0
      %1620 = vmatprep.subr.bf16.mxu0 0
      %1621 = vmatpush1.bf16.msra.mxu0 0
      %1622 = vmatprep.subr.bf16.mxu0 0
      %1623 = vmatpush1.bf16.msra.mxu0 0
      %1624 = vmatprep.subr.bf16.mxu0 0
      %1625 = vmatpush1.bf16.msra.mxu0 0
      %1626 = vmatprep.subr.bf16.mxu0 0
      %1627 = vmatpush1.bf16.msra.mxu0 0
      %1628 = vmatprep.subr.bf16.mxu0 0
      %1629 = vmatpush1.bf16.msra.mxu0 0
      %1630 = vmatprep.subr.bf16.mxu0 0
      %1631 = vmatpush1.bf16.msra.mxu0 0
      %1632 = vmatprep.subr.bf16.mxu0 0
      %1633 = vmatpush1.bf16.msra.mxu0 0
      %1634 = vmatprep.subr.bf16.mxu0 0
      %1635 = vmatpush1.bf16.msra.mxu0 0
      %1636 = vmatprep.subr.bf16.mxu0 0
      %1637 = vmatpush1.bf16.msra.mxu0 0
      %1638 = vmatprep.subr.bf16.mxu0 0
      %1639 = vmatpush1.bf16.msra.mxu0 0
      %1640 = vmatprep.subr.bf16.mxu0 0
      %1641 = vmatpush1.bf16.msra.mxu0 0
      %1642 = vmatprep.subr.bf16.mxu0 0
      %1643 = vmatpush1.bf16.msra.mxu0 0
      %1644 = vmatprep.subr.bf16.mxu0 0
      %1645 = vmatpush1.bf16.msra.mxu0 0
      %1646 = vmatprep.mubr.bf16.mxu0 0
      %1647 = vmatmul.mubr.bf16.gmra.mrb[0].mxu0 %v1564
      %v1648 = vpop.f32.mrb[0].mxu0
      %v1649 = vadd.f32 0.0, %v1648
      %v1650 = vpop.f32.mrb[0].mxu0
      %v1651 = vpop.f32.mrb[0].mxu0
      %v1652 = vadd.f32 0.0, %v1651
      %v1653 = vpop.f32.mrb[0].mxu0
      %1654 = vmatprep.mubr.bf16.mxu0 0
      %1655 = vmatmul.mubr.bf16.gmra.mrb[0].mxu0 %v1567
      %v1656 = vpop.f32.mrb[0].mxu0
      %v1657 = vadd.f32 0.0, %v1656
      %v1658 = vpop.f32.mrb[0].mxu0
      %v1659 = vpop.f32.mrb[0].mxu0
      %v1660 = vadd.f32 0.0, %v1659
      %v1661 = vpop.f32.mrb[0].mxu0
      %1662 = vmatprep.mubr.bf16.mxu0 0
      %1663 = vmatmul.mubr.bf16.gmra.mrb[0].mxu0 %v1570
      %v1664 = vpop.f32.mrb[0].mxu0
      %v1665 = vadd.f32 0.0, %v1664
      %v1666 = vpop.f32.mrb[0].mxu0
      %v1667 = vpop.f32.mrb[0].mxu0
      %v1668 = vadd.f32 0.0, %v1667
      %v1669 = vpop.f32.mrb[0].mxu0
      %1670 = vmatprep.mubr.bf16.mxu0 0
      %1671 = vmatmul.mubr.bf16.gmra.mrb[0].mxu0 %v1573
      %v1672 = vpop.f32.mrb[0].mxu0
      %v1673 = vadd.f32 0.0, %v1672
      %v1674 = vpop.f32.mrb[0].mxu0
      %v1675 = vpop.f32.mrb[0].mxu0
      %v1676 = vadd.f32 0.0, %v1675
      %v1677 = vpop.f32.mrb[0].mxu0
      %1678 = vmatprep.mubr.bf16.mxu0 0
      %1679 = vmatmul.mubr.bf16.gmra.mrb[0].mxu0 %v1576
      %v1680 = vpop.f32.mrb[0].mxu0
      %v1681 = vadd.f32 0.0, %v1680
      %v1682 = vpop.f32.mrb[0].mxu0
      %v1683 = vpop.f32.mrb[0].mxu0
      %v1684 = vadd.f32 0.0, %v1683
      %v1685 = vpop.f32.mrb[0].mxu0
      %1686 = vmatprep.mubr.bf16.mxu0 0
      %1687 = vmatmul.mubr.bf16.gmra.mrb[0].mxu0 %v1579
      %v1688 = vpop.f32.mrb[0].mxu0
      %v1689 = vadd.f32 0.0, %v1688
      %v1690 = vpop.f32.mrb[0].mxu0
      %v1691 = vpop.f32.mrb[0].mxu0
      %v1692 = vadd.f32 0.0, %v1691
      %v1693 = vpop.f32.mrb[0].mxu0
      %1694 = vmatprep.mubr.bf16.mxu0 0
      %1695 = vmatmul.mubr.bf16.gmra.mrb[0].mxu0 %v1582
      %v1696 = vpop.f32.mrb[0].mxu0
      %v1697 = vadd.f32 0.0, %v1696
      %v1698 = vpop.f32.mrb[0].mxu0
      %v1699 = vpop.f32.mrb[0].mxu0
      %v1700 = vadd.f32 0.0, %v1699
      %v1701 = vpop.f32.mrb[0].mxu0
      %1702 = vmatprep.mubr.bf16.mxu0 0
      %1703 = vmatmul.mubr.bf16.gmra.mrb[0].mxu0 %v1585
      %v1704 = vpop.f32.mrb[0].mxu0
      %v1705 = vadd.f32 0.0, %v1704
      %v1706 = vpop.f32.mrb[0].mxu0
      %v1707 = vpop.f32.mrb[0].mxu0
      %v1708 = vadd.f32 0.0, %v1707
      %v1709 = vpop.f32.mrb[0].mxu0
      %1710 = vmatprep.mubr.bf16.mxu0 0
      %1711 = vmatmul.mubr.bf16.gmra.mrb[0].mxu0 %v1588
      %v1712 = vpop.f32.mrb[0].mxu0
      %v1713 = vadd.f32 0.0, %v1712
      %v1714 = vpop.f32.mrb[0].mxu0
      %v1715 = vpop.f32.mrb[0].mxu0
      %v1716 = vadd.f32 0.0, %v1715
      %v1717 = vpop.f32.mrb[0].mxu0
      %1718 = vmatprep.mubr.bf16.mxu0 0
      %1719 = vmatmul.mubr.bf16.gmra.mrb[0].mxu0 %v1591
      %v1720 = vpop.f32.mrb[0].mxu0
      %v1721 = vadd.f32 0.0, %v1720
      %v1722 = vpop.f32.mrb[0].mxu0
      %v1723 = vpop.f32.mrb[0].mxu0
      %v1724 = vadd.f32 0.0, %v1723
      %v1725 = vpop.f32.mrb[0].mxu0
      %1726 = vmatprep.mubr.bf16.mxu0 0
      %1727 = vmatmul.mubr.bf16.gmra.mrb[0].mxu0 %v1594
      %v1728 = vpop.f32.mrb[0].mxu0
      %v1729 = vadd.f32 0.0, %v1728
      %v1730 = vpop.f32.mrb[0].mxu0
      %v1731 = vpop.f32.mrb[0].mxu0
      %v1732 = vadd.f32 0.0, %v1731
      %v1733 = vpop.f32.mrb[0].mxu0
      %1734 = vmatprep.mubr.bf16.mxu0 0
      %1735 = vmatmul.mubr.bf16.gmra.mrb[0].mxu0 %v1597
      %v1736 = vpop.f32.mrb[0].mxu0
      %v1737 = vadd.f32 0.0, %v1736
      %v1738 = vpop.f32.mrb[0].mxu0
      %v1739 = vpop.f32.mrb[0].mxu0
      %v1740 = vadd.f32 0.0, %v1739
      %v1741 = vpop.f32.mrb[0].mxu0
      %1742 = vmatprep.mubr.bf16.mxu0 0
      %1743 = vmatmul.mubr.bf16.gmra.mrb[0].mxu0 %v1600
      %v1744 = vpop.f32.mrb[0].mxu0
      %v1745 = vadd.f32 0.0, %v1744
      %v1746 = vpop.f32.mrb[0].mxu0
      %v1747 = vpop.f32.mrb[0].mxu0
      %v1748 = vadd.f32 0.0, %v1747
      %v1749 = vpop.f32.mrb[0].mxu0
      %1750 = vmatprep.mubr.bf16.mxu0 0
      %1751 = vmatmul.mubr.bf16.gmra.mrb[0].mxu0 %v1603
      %v1752 = vpop.f32.mrb[0].mxu0
      %v1753 = vadd.f32 0.0, %v1752
      %v1754 = vpop.f32.mrb[0].mxu0
      %v1755 = vpop.f32.mrb[0].mxu0
      %v1756 = vadd.f32 0.0, %v1755
      %v1757 = vpop.f32.mrb[0].mxu0
      %1758 = vmatprep.mubr.bf16.mxu0 0
      %1759 = vmatmul.mubr.bf16.gmra.mrb[0].mxu0 %v1606
      %v1760 = vpop.f32.mrb[0].mxu0
      %v1761 = vadd.f32 0.0, %v1760
      %v1762 = vpop.f32.mrb[0].mxu0
      %v1763 = vpop.f32.mrb[0].mxu0
      %v1764 = vadd.f32 0.0, %v1763
      %v1765 = vpop.f32.mrb[0].mxu0
      %1766 = vmatprep.mubr.bf16.mxu0 0
      %1767 = vmatmul.mubr.bf16.gmra.mrb[0].mxu0 %v1609
      %v1768 = vpop.f32.mrb[0].mxu0
      %v1769 = vadd.f32 0.0, %v1768
      %v1770 = vpop.f32.mrb[0].mxu0
      %v1771 = vpop.f32.mrb[0].mxu0
      %v1772 = vadd.f32 0.0, %v1771
      %v1773 = vpop.f32.mrb[0].mxu0
      %1774 = vdwg.mxu0
      %v1775 = vadd.f32 %v1481, %v1649
      %v1776 = vadd.f32 %v1482, %v1652
      %v1777 = vadd.f32 %v1483, %v1657
      %v1778 = vadd.f32 %v1484, %v1660
      %v1779 = vadd.f32 %v1485, %v1665
      %v1780 = vadd.f32 %v1486, %v1668
      %v1781 = vadd.f32 %v1487, %v1673
      %v1782 = vadd.f32 %v1488, %v1676
      %v1783 = vadd.f32 %v1489, %v1681
      %v1784 = vadd.f32 %v1490, %v1684
      %v1785 = vadd.f32 %v1491, %v1689
      %v1786 = vadd.f32 %v1492, %v1692
      %v1787 = vadd.f32 %v1493, %v1697
      %v1788 = vadd.f32 %v1494, %v1700
      %v1789 = vadd.f32 %v1495, %v1705
      %v1790 = vadd.f32 %v1496, %v1708
      %v1791 = vadd.f32 %v1497, %v1713
      %v1792 = vadd.f32 %v1498, %v1716
      %v1793 = vadd.f32 %v1499, %v1721
      %v1794 = vadd.f32 %v1500, %v1724
      %v1795 = vadd.f32 %v1501, %v1729
      %v1796 = vadd.f32 %v1502, %v1732
      %v1797 = vadd.f32 %v1503, %v1737
      %v1798 = vadd.f32 %v1504, %v1740
      %v1799 = vadd.f32 %v1505, %v1745
      %v1800 = vadd.f32 %v1506, %v1748
      %v1801 = vadd.f32 %v1507, %v1753
      %v1802 = vadd.f32 %v1508, %v1756
      %v1803 = vadd.f32 %v1509, %v1761
      %v1804 = vadd.f32 %v1510, %v1764
      %v1805 = vadd.f32 %v1511, %v1769
      %v1806 = vadd.f32 %v1512, %v1772
      %v1807 = vld [vmem:[%s368 + $0x2] sm:$0xff]
      %v1808 = vld [vmem:[%s368 + $0xa] sm:$0xff]
      %v1809 = vld [vmem:[%s368 + $0x1a] sm:$0xff]
      %v1810 = vld [vmem:[%s368 + $0x22] sm:$0xff]
      %v1811 = vld [vmem:[%s368 + $0x32] sm:$0xff]
      %v1812 = vld [vmem:[%s368 + $0x3a] sm:$0xff]
      %v1813 = vld [vmem:[%s368 + $0x4a] sm:$0xff]
      %v1814 = vld [vmem:[%s368 + $0x52] sm:$0xff]
      %v1815 = vld [vmem:[%s368 + $0x62] sm:$0xff]
      %v1816 = vld [vmem:[%s368 + $0x6a] sm:$0xff]
      %v1817 = vld [vmem:[%s368 + $0x7a] sm:$0xff]
      %v1818 = vld [vmem:[%s368 + $0x82] sm:$0xff]
      %v1819 = vld [vmem:[%s368 + $0x92] sm:$0xff]
      %v1820 = vld [vmem:[%s368 + $0x9a] sm:$0xff]
      %v1821 = vld [vmem:[%s368 + $0xaa] sm:$0xff]
      %v1822 = vld [vmem:[%s368 + $0xb2] sm:$0xff]
      %v1823 = vld [vmem:[%s368 + $0xc2] sm:$0xff]
      %v1824 = vld [vmem:[%s368 + $0xca] sm:$0xff]
      %v1825 = vld [vmem:[%s368 + $0xda] sm:$0xff]
      %v1826 = vld [vmem:[%s368 + $0xe2] sm:$0xff]
      %v1827 = vld [vmem:[%s368 + $0xf2] sm:$0xff]
      %v1828 = vld [vmem:[%s368 + $0xfa] sm:$0xff]
      %v1829 = vld [vmem:[%s368 + $0x10a] sm:$0xff]
      %v1830 = vld [vmem:[%s368 + $0x112] sm:$0xff]
      %v1831 = vld [vmem:[%s368 + $0x122] sm:$0xff]
      %v1832 = vld [vmem:[%s368 + $0x12a] sm:$0xff]
      %v1833 = vld [vmem:[%s368 + $0x13a] sm:$0xff]
      %v1834 = vld [vmem:[%s368 + $0x142] sm:$0xff]
      %v1835 = vld [vmem:[%s368 + $0x152] sm:$0xff]
      %v1836 = vld [vmem:[%s368 + $0x15a] sm:$0xff]
      %v1837 = vld [vmem:[%s368 + $0x16a] sm:$0xff]
      %v1838 = vld [vmem:[%s368 + $0x172] sm:$0xff]
      %v1839 = vpack.c.bf16 %v1808, %v1807
      %v1840 = vpack.c.bf16 %v1810, %v1809
      %v1841 = vpack.c.bf16 %v1812, %v1811
      %v1842 = vpack.c.bf16 %v1814, %v1813
      %v1843 = vpack.c.bf16 %v1816, %v1815
      %v1844 = vpack.c.bf16 %v1818, %v1817
      %v1845 = vpack.c.bf16 %v1820, %v1819
      %v1846 = vpack.c.bf16 %v1822, %v1821
      %v1847 = vpack.c.bf16 %v1824, %v1823
      %v1848 = vpack.c.bf16 %v1826, %v1825
      %v1849 = vpack.c.bf16 %v1828, %v1827
      %v1850 = vpack.c.bf16 %v1830, %v1829
      %v1851 = vpack.c.bf16 %v1832, %v1831
      %v1852 = vpack.c.bf16 %v1834, %v1833
      %v1853 = vpack.c.bf16 %v1836, %v1835
      %v1854 = vpack.c.bf16 %v1838, %v1837
      %s1855 = scalar_lea.vmem %s1, 10
      %v1856 = vld [vmem:[%s1855] sm:$0x3]
      %v1858 = vsel %vm280, %v1839, 0
      %v1861 = vsel %vm280, %v1840, 0
      %v1864 = vsel %vm280, %v1841, 0
      %v1867 = vsel %vm280, %v1842, 0
      %v1870 = vsel %vm280, %v1843, 0
      %v1873 = vsel %vm280, %v1844, 0
      %v1876 = vsel %vm280, %v1845, 0
      %v1879 = vsel %vm280, %v1846, 0
      %v1882 = vsel %vm280, %v1847, 0
      %v1885 = vsel %vm280, %v1848, 0
      %v1888 = vsel %vm280, %v1849, 0
      %v1891 = vsel %vm280, %v1850, 0
      %v1894 = vsel %vm280, %v1851, 0
      %v1897 = vsel %vm280, %v1852, 0
      %v1900 = vsel %vm280, %v1853, 0
      %v1903 = vsel %vm280, %v1854, 0
      %v1906 = vsel %vm548, %v1856, 0
      %1908 = vmatprep.subr.bf16.mxu0 0
      %1909 = vmatpush1.bf16.msra.mxu0 %v1906
      %1910 = vmatprep.subr.bf16.mxu0 0
      %1911 = vmatpush1.bf16.msra.mxu0 0
      %1912 = vmatprep.subr.bf16.mxu0 0
      %1913 = vmatpush1.bf16.msra.mxu0 0
      %1914 = vmatprep.subr.bf16.mxu0 0
      %1915 = vmatpush1.bf16.msra.mxu0 0
      %1916 = vmatprep.subr.bf16.mxu0 0
      %1917 = vmatpush1.bf16.msra.mxu0 0
      %1918 = vmatprep.subr.bf16.mxu0 0
      %1919 = vmatpush1.bf16.msra.mxu0 0
      %1920 = vmatprep.subr.bf16.mxu0 0
      %1921 = vmatpush1.bf16.msra.mxu0 0
      %1922 = vmatprep.subr.bf16.mxu0 0
      %1923 = vmatpush1.bf16.msra.mxu0 0
      %1924 = vmatprep.subr.bf16.mxu0 0
      %1925 = vmatpush1.bf16.msra.mxu0 0
      %1926 = vmatprep.subr.bf16.mxu0 0
      %1927 = vmatpush1.bf16.msra.mxu0 0
      %1928 = vmatprep.subr.bf16.mxu0 0
      %1929 = vmatpush1.bf16.msra.mxu0 0
      %1930 = vmatprep.subr.bf16.mxu0 0
      %1931 = vmatpush1.bf16.msra.mxu0 0
      %1932 = vmatprep.subr.bf16.mxu0 0
      %1933 = vmatpush1.bf16.msra.mxu0 0
      %1934 = vmatprep.subr.bf16.mxu0 0
      %1935 = vmatpush1.bf16.msra.mxu0 0
      %1936 = vmatprep.subr.bf16.mxu0 0
      %1937 = vmatpush1.bf16.msra.mxu0 0
      %1938 = vmatprep.subr.bf16.mxu0 0
      %1939 = vmatpush1.bf16.msra.mxu0 0
      %1940 = vmatprep.mubr.bf16.mxu0 0
      %1941 = vmatmul.mubr.bf16.gmra.mrb[0].mxu0 %v1858
      %v1942 = vpop.f32.mrb[0].mxu0
      %v1943 = vadd.f32 0.0, %v1942
      %v1944 = vpop.f32.mrb[0].mxu0
      %v1945 = vpop.f32.mrb[0].mxu0
      %v1946 = vadd.f32 0.0, %v1945
      %v1947 = vpop.f32.mrb[0].mxu0
      %1948 = vmatprep.mubr.bf16.mxu0 0
      %1949 = vmatmul.mubr.bf16.gmra.mrb[0].mxu0 %v1861
      %v1950 = vpop.f32.mrb[0].mxu0
      %v1951 = vadd.f32 0.0, %v1950
      %v1952 = vpop.f32.mrb[0].mxu0
      %v1953 = vpop.f32.mrb[0].mxu0
      %v1954 = vadd.f32 0.0, %v1953
      %v1955 = vpop.f32.mrb[0].mxu0
      %1956 = vmatprep.mubr.bf16.mxu0 0
      %1957 = vmatmul.mubr.bf16.gmra.mrb[0].mxu0 %v1864
      %v1958 = vpop.f32.mrb[0].mxu0
      %v1959 = vadd.f32 0.0, %v1958
      %v1960 = vpop.f32.mrb[0].mxu0
      %v1961 = vpop.f32.mrb[0].mxu0
      %v1962 = vadd.f32 0.0, %v1961
      %v1963 = vpop.f32.mrb[0].mxu0
      %1964 = vmatprep.mubr.bf16.mxu0 0
      %1965 = vmatmul.mubr.bf16.gmra.mrb[0].mxu0 %v1867
      %v1966 = vpop.f32.mrb[0].mxu0
      %v1967 = vadd.f32 0.0, %v1966
      %v1968 = vpop.f32.mrb[0].mxu0
      %v1969 = vpop.f32.mrb[0].mxu0
      %v1970 = vadd.f32 0.0, %v1969
      %v1971 = vpop.f32.mrb[0].mxu0
      %1972 = vmatprep.mubr.bf16.mxu0 0
      %1973 = vmatmul.mubr.bf16.gmra.mrb[0].mxu0 %v1870
      %v1974 = vpop.f32.mrb[0].mxu0
      %v1975 = vadd.f32 0.0, %v1974
      %v1976 = vpop.f32.mrb[0].mxu0
      %v1977 = vpop.f32.mrb[0].mxu0
      %v1978 = vadd.f32 0.0, %v1977
      %v1979 = vpop.f32.mrb[0].mxu0
      %1980 = vmatprep.mubr.bf16.mxu0 0
      %1981 = vmatmul.mubr.bf16.gmra.mrb[0].mxu0 %v1873
      %v1982 = vpop.f32.mrb[0].mxu0
      %v1983 = vadd.f32 0.0, %v1982
      %v1984 = vpop.f32.mrb[0].mxu0
      %v1985 = vpop.f32.mrb[0].mxu0
      %v1986 = vadd.f32 0.0, %v1985
      %v1987 = vpop.f32.mrb[0].mxu0
      %1988 = vmatprep.mubr.bf16.mxu0 0
      %1989 = vmatmul.mubr.bf16.gmra.mrb[0].mxu0 %v1876
      %v1990 = vpop.f32.mrb[0].mxu0
      %v1991 = vadd.f32 0.0, %v1990
      %v1992 = vpop.f32.mrb[0].mxu0
      %v1993 = vpop.f32.mrb[0].mxu0
      %v1994 = vadd.f32 0.0, %v1993
      %v1995 = vpop.f32.mrb[0].mxu0
      %1996 = vmatprep.mubr.bf16.mxu0 0
      %1997 = vmatmul.mubr.bf16.gmra.mrb[0].mxu0 %v1879
      %v1998 = vpop.f32.mrb[0].mxu0
      %v1999 = vadd.f32 0.0, %v1998
      %v2000 = vpop.f32.mrb[0].mxu0
      %v2001 = vpop.f32.mrb[0].mxu0
      %v2002 = vadd.f32 0.0, %v2001
      %v2003 = vpop.f32.mrb[0].mxu0
      %2004 = vmatprep.mubr.bf16.mxu0 0
      %2005 = vmatmul.mubr.bf16.gmra.mrb[0].mxu0 %v1882
      %v2006 = vpop.f32.mrb[0].mxu0
      %v2007 = vadd.f32 0.0, %v2006
      %v2008 = vpop.f32.mrb[0].mxu0
      %v2009 = vpop.f32.mrb[0].mxu0
      %v2010 = vadd.f32 0.0, %v2009
      %v2011 = vpop.f32.mrb[0].mxu0
      %2012 = vmatprep.mubr.bf16.mxu0 0
      %2013 = vmatmul.mubr.bf16.gmra.mrb[0].mxu0 %v1885
      %v2014 = vpop.f32.mrb[0].mxu0
      %v2015 = vadd.f32 0.0, %v2014
      %v2016 = vpop.f32.mrb[0].mxu0
      %v2017 = vpop.f32.mrb[0].mxu0
      %v2018 = vadd.f32 0.0, %v2017
      %v2019 = vpop.f32.mrb[0].mxu0
      %2020 = vmatprep.mubr.bf16.mxu0 0
      %2021 = vmatmul.mubr.bf16.gmra.mrb[0].mxu0 %v1888
      %v2022 = vpop.f32.mrb[0].mxu0
      %v2023 = vadd.f32 0.0, %v2022
      %v2024 = vpop.f32.mrb[0].mxu0
      %v2025 = vpop.f32.mrb[0].mxu0
      %v2026 = vadd.f32 0.0, %v2025
      %v2027 = vpop.f32.mrb[0].mxu0
      %2028 = vmatprep.mubr.bf16.mxu0 0
      %2029 = vmatmul.mubr.bf16.gmra.mrb[0].mxu0 %v1891
      %v2030 = vpop.f32.mrb[0].mxu0
      %v2031 = vadd.f32 0.0, %v2030
      %v2032 = vpop.f32.mrb[0].mxu0
      %v2033 = vpop.f32.mrb[0].mxu0
      %v2034 = vadd.f32 0.0, %v2033
      %v2035 = vpop.f32.mrb[0].mxu0
      %2036 = vmatprep.mubr.bf16.mxu0 0
      %2037 = vmatmul.mubr.bf16.gmra.mrb[0].mxu0 %v1894
      %v2038 = vpop.f32.mrb[0].mxu0
      %v2039 = vadd.f32 0.0, %v2038
      %v2040 = vpop.f32.mrb[0].mxu0
      %v2041 = vpop.f32.mrb[0].mxu0
      %v2042 = vadd.f32 0.0, %v2041
      %v2043 = vpop.f32.mrb[0].mxu0
      %2044 = vmatprep.mubr.bf16.mxu0 0
      %2045 = vmatmul.mubr.bf16.gmra.mrb[0].mxu0 %v1897
      %v2046 = vpop.f32.mrb[0].mxu0
      %v2047 = vadd.f32 0.0, %v2046
      %v2048 = vpop.f32.mrb[0].mxu0
      %v2049 = vpop.f32.mrb[0].mxu0
      %v2050 = vadd.f32 0.0, %v2049
      %v2051 = vpop.f32.mrb[0].mxu0
      %2052 = vmatprep.mubr.bf16.mxu0 0
      %2053 = vmatmul.mubr.bf16.gmra.mrb[0].mxu0 %v1900
      %v2054 = vpop.f32.mrb[0].mxu0
      %v2055 = vadd.f32 0.0, %v2054
      %v2056 = vpop.f32.mrb[0].mxu0
      %v2057 = vpop.f32.mrb[0].mxu0
      %v2058 = vadd.f32 0.0, %v2057
      %v2059 = vpop.f32.mrb[0].mxu0
      %2060 = vmatprep.mubr.bf16.mxu0 0
      %2061 = vmatmul.mubr.bf16.gmra.mrb[0].mxu0 %v1903
      %v2062 = vpop.f32.mrb[0].mxu0
      %v2063 = vadd.f32 0.0, %v2062
      %v2064 = vpop.f32.mrb[0].mxu0
      %v2065 = vpop.f32.mrb[0].mxu0
      %v2066 = vadd.f32 0.0, %v2065
      %v2067 = vpop.f32.mrb[0].mxu0
      %2068 = vdwg.mxu0
      %v2069 = vadd.f32 %v1775, %v1943
      %v2070 = vadd.f32 %v1776, %v1946
      %v2071 = vadd.f32 %v1777, %v1951
      %v2072 = vadd.f32 %v1778, %v1954
      %v2073 = vadd.f32 %v1779, %v1959
      %v2074 = vadd.f32 %v1780, %v1962
      %v2075 = vadd.f32 %v1781, %v1967
      %v2076 = vadd.f32 %v1782, %v1970
      %v2077 = vadd.f32 %v1783, %v1975
      %v2078 = vadd.f32 %v1784, %v1978
      %v2079 = vadd.f32 %v1785, %v1983
      %v2080 = vadd.f32 %v1786, %v1986
      %v2081 = vadd.f32 %v1787, %v1991
      %v2082 = vadd.f32 %v1788, %v1994
      %v2083 = vadd.f32 %v1789, %v1999
      %v2084 = vadd.f32 %v1790, %v2002
      %v2085 = vadd.f32 %v1791, %v2007
      %v2086 = vadd.f32 %v1792, %v2010
      %v2087 = vadd.f32 %v1793, %v2015
      %v2088 = vadd.f32 %v1794, %v2018
      %v2089 = vadd.f32 %v1795, %v2023
      %v2090 = vadd.f32 %v1796, %v2026
      %v2091 = vadd.f32 %v1797, %v2031
      %v2092 = vadd.f32 %v1798, %v2034
      %v2093 = vadd.f32 %v1799, %v2039
      %v2094 = vadd.f32 %v1800, %v2042
      %v2095 = vadd.f32 %v1801, %v2047
      %v2096 = vadd.f32 %v1802, %v2050
      %v2097 = vadd.f32 %v1803, %v2055
      %v2098 = vadd.f32 %v1804, %v2058
      %v2099 = vadd.f32 %v1805, %v2063
      %v2100 = vadd.f32 %v1806, %v2066
      %s2101 = scalar_lea.vmem [#allocation2], 48
      %v2102 = vld [vmem:[%s2101] sm:$0xff]
      %v2103 = vld [vmem:[%s2101 + $0x8] sm:$0xff]
      %v2104 = vld [vmem:[%s2101 + $0x18] sm:$0xff]
      %v2105 = vld [vmem:[%s2101 + $0x20] sm:$0xff]
      %v2106 = vld [vmem:[%s2101 + $0x30] sm:$0xff]
      %v2107 = vld [vmem:[%s2101 + $0x38] sm:$0xff]
      %v2108 = vld [vmem:[%s2101 + $0x48] sm:$0xff]
      %v2109 = vld [vmem:[%s2101 + $0x50] sm:$0xff]
      %v2110 = vld [vmem:[%s2101 + $0x60] sm:$0xff]
      %v2111 = vld [vmem:[%s2101 + $0x68] sm:$0xff]
      %v2112 = vld [vmem:[%s2101 + $0x78] sm:$0xff]
      %v2113 = vld [vmem:[%s2101 + $0x80] sm:$0xff]
      %v2114 = vld [vmem:[%s2101 + $0x90] sm:$0xff]
      %v2115 = vld [vmem:[%s2101 + $0x98] sm:$0xff]
      %v2116 = vld [vmem:[%s2101 + $0xa8] sm:$0xff]
      %v2117 = vld [vmem:[%s2101 + $0xb0] sm:$0xff]
      %v2118 = vld [vmem:[%s2101 + $0xc0] sm:$0xff]
      %v2119 = vld [vmem:[%s2101 + $0xc8] sm:$0xff]
      %v2120 = vld [vmem:[%s2101 + $0xd8] sm:$0xff]
      %v2121 = vld [vmem:[%s2101 + $0xe0] sm:$0xff]
      %v2122 = vld [vmem:[%s2101 + $0xf0] sm:$0xff]
      %v2123 = vld [vmem:[%s2101 + $0xf8] sm:$0xff]
      %v2124 = vld [vmem:[%s2101 + $0x108] sm:$0xff]
      %v2125 = vld [vmem:[%s2101 + $0x110] sm:$0xff]
      %v2126 = vld [vmem:[%s2101 + $0x120] sm:$0xff]
      %v2127 = vld [vmem:[%s2101 + $0x128] sm:$0xff]
      %v2128 = vld [vmem:[%s2101 + $0x138] sm:$0xff]
      %v2129 = vld [vmem:[%s2101 + $0x140] sm:$0xff]
      %v2130 = vld [vmem:[%s2101 + $0x150] sm:$0xff]
      %v2131 = vld [vmem:[%s2101 + $0x158] sm:$0xff]
      %v2132 = vld [vmem:[%s2101 + $0x168] sm:$0xff]
      %v2133 = vld [vmem:[%s2101 + $0x170] sm:$0xff]
      %v2134 = vpack.c.bf16 %v2103, %v2102
      %v2135 = vpack.c.bf16 %v2105, %v2104
      %v2136 = vpack.c.bf16 %v2107, %v2106
      %v2137 = vpack.c.bf16 %v2109, %v2108
      %v2138 = vpack.c.bf16 %v2111, %v2110
      %v2139 = vpack.c.bf16 %v2113, %v2112
      %v2140 = vpack.c.bf16 %v2115, %v2114
      %v2141 = vpack.c.bf16 %v2117, %v2116
      %v2142 = vpack.c.bf16 %v2119, %v2118
      %v2143 = vpack.c.bf16 %v2121, %v2120
      %v2144 = vpack.c.bf16 %v2123, %v2122
      %v2145 = vpack.c.bf16 %v2125, %v2124
      %v2146 = vpack.c.bf16 %v2127, %v2126
      %v2147 = vpack.c.bf16 %v2129, %v2128
      %v2148 = vpack.c.bf16 %v2131, %v2130
      %v2149 = vpack.c.bf16 %v2133, %v2132
      %s2150 = scalar_lea.vmem %s1, 12
      %v2151 = vld [vmem:[%s2150] sm:$0x3]
      %v2153 = vsel %vm280, %v2134, 0
      %v2156 = vsel %vm280, %v2135, 0
      %v2159 = vsel %vm280, %v2136, 0
      %v2162 = vsel %vm280, %v2137, 0
      %v2165 = vsel %vm280, %v2138, 0
      %v2168 = vsel %vm280, %v2139, 0
      %v2171 = vsel %vm280, %v2140, 0
      %v2174 = vsel %vm280, %v2141, 0
      %v2177 = vsel %vm280, %v2142, 0
      %v2180 = vsel %vm280, %v2143, 0
      %v2183 = vsel %vm280, %v2144, 0
      %v2186 = vsel %vm280, %v2145, 0
      %v2189 = vsel %vm280, %v2146, 0
      %v2192 = vsel %vm280, %v2147, 0
      %v2195 = vsel %vm280, %v2148, 0
      %v2198 = vsel %vm280, %v2149, 0
      %v2201 = vsel %vm548, %v2151, 0
      %2203 = vmatprep.subr.bf16.mxu0 0
      %2204 = vmatpush1.bf16.msra.mxu0 %v2201
      %2205 = vmatprep.subr.bf16.mxu0 0
      %2206 = vmatpush1.bf16.msra.mxu0 0
      %2207 = vmatprep.subr.bf16.mxu0 0
      %2208 = vmatpush1.bf16.msra.mxu0 0
      %2209 = vmatprep.subr.bf16.mxu0 0
      %2210 = vmatpush1.bf16.msra.mxu0 0
      %2211 = vmatprep.subr.bf16.mxu0 0
      %2212 = vmatpush1.bf16.msra.mxu0 0
      %2213 = vmatprep.subr.bf16.mxu0 0
      %2214 = vmatpush1.bf16.msra.mxu0 0
      %2215 = vmatprep.subr.bf16.mxu0 0
      %2216 = vmatpush1.bf16.msra.mxu0 0
      %2217 = vmatprep.subr.bf16.mxu0 0
      %2218 = vmatpush1.bf16.msra.mxu0 0
      %2219 = vmatprep.subr.bf16.mxu0 0
      %2220 = vmatpush1.bf16.msra.mxu0 0
      %2221 = vmatprep.subr.bf16.mxu0 0
      %2222 = vmatpush1.bf16.msra.mxu0 0
      %2223 = vmatprep.subr.bf16.mxu0 0
      %2224 = vmatpush1.bf16.msra.mxu0 0
      %2225 = vmatprep.subr.bf16.mxu0 0
      %2226 = vmatpush1.bf16.msra.mxu0 0
      %2227 = vmatprep.subr.bf16.mxu0 0
      %2228 = vmatpush1.bf16.msra.mxu0 0
      %2229 = vmatprep.subr.bf16.mxu0 0
      %2230 = vmatpush1.bf16.msra.mxu0 0
      %2231 = vmatprep.subr.bf16.mxu0 0
      %2232 = vmatpush1.bf16.msra.mxu0 0
      %2233 = vmatprep.subr.bf16.mxu0 0
      %2234 = vmatpush1.bf16.msra.mxu0 0
      %2235 = vmatprep.mubr.bf16.mxu0 0
      %2236 = vmatmul.mubr.bf16.gmra.mrb[0].mxu0 %v2153
      %v2237 = vpop.f32.mrb[0].mxu0
      %v2238 = vadd.f32 0.0, %v2237
      %v2239 = vpop.f32.mrb[0].mxu0
      %v2240 = vpop.f32.mrb[0].mxu0
      %v2241 = vadd.f32 0.0, %v2240
      %v2242 = vpop.f32.mrb[0].mxu0
      %2243 = vmatprep.mubr.bf16.mxu0 0
      %2244 = vmatmul.mubr.bf16.gmra.mrb[0].mxu0 %v2156
      %v2245 = vpop.f32.mrb[0].mxu0
      %v2246 = vadd.f32 0.0, %v2245
      %v2247 = vpop.f32.mrb[0].mxu0
      %v2248 = vpop.f32.mrb[0].mxu0
      %v2249 = vadd.f32 0.0, %v2248
      %v2250 = vpop.f32.mrb[0].mxu0
      %2251 = vmatprep.mubr.bf16.mxu0 0
      %2252 = vmatmul.mubr.bf16.gmra.mrb[0].mxu0 %v2159
      %v2253 = vpop.f32.mrb[0].mxu0
      %v2254 = vadd.f32 0.0, %v2253
      %v2255 = vpop.f32.mrb[0].mxu0
      %v2256 = vpop.f32.mrb[0].mxu0
      %v2257 = vadd.f32 0.0, %v2256
      %v2258 = vpop.f32.mrb[0].mxu0
      %2259 = vmatprep.mubr.bf16.mxu0 0
      %2260 = vmatmul.mubr.bf16.gmra.mrb[0].mxu0 %v2162
      %v2261 = vpop.f32.mrb[0].mxu0
      %v2262 = vadd.f32 0.0, %v2261
      %v2263 = vpop.f32.mrb[0].mxu0
      %v2264 = vpop.f32.mrb[0].mxu0
      %v2265 = vadd.f32 0.0, %v2264
      %v2266 = vpop.f32.mrb[0].mxu0
      %2267 = vmatprep.mubr.bf16.mxu0 0
      %2268 = vmatmul.mubr.bf16.gmra.mrb[0].mxu0 %v2165
      %v2269 = vpop.f32.mrb[0].mxu0
      %v2270 = vadd.f32 0.0, %v2269
      %v2271 = vpop.f32.mrb[0].mxu0
      %v2272 = vpop.f32.mrb[0].mxu0
      %v2273 = vadd.f32 0.0, %v2272
      %v2274 = vpop.f32.mrb[0].mxu0
      %2275 = vmatprep.mubr.bf16.mxu0 0
      %2276 = vmatmul.mubr.bf16.gmra.mrb[0].mxu0 %v2168
      %v2277 = vpop.f32.mrb[0].mxu0
      %v2278 = vadd.f32 0.0, %v2277
      %v2279 = vpop.f32.mrb[0].mxu0
      %v2280 = vpop.f32.mrb[0].mxu0
      %v2281 = vadd.f32 0.0, %v2280
      %v2282 = vpop.f32.mrb[0].mxu0
      %2283 = vmatprep.mubr.bf16.mxu0 0
      %2284 = vmatmul.mubr.bf16.gmra.mrb[0].mxu0 %v2171
      %v2285 = vpop.f32.mrb[0].mxu0
      %v2286 = vadd.f32 0.0, %v2285
      %v2287 = vpop.f32.mrb[0].mxu0
      %v2288 = vpop.f32.mrb[0].mxu0
      %v2289 = vadd.f32 0.0, %v2288
      %v2290 = vpop.f32.mrb[0].mxu0
      %2291 = vmatprep.mubr.bf16.mxu0 0
      %2292 = vmatmul.mubr.bf16.gmra.mrb[0].mxu0 %v2174
      %v2293 = vpop.f32.mrb[0].mxu0
      %v2294 = vadd.f32 0.0, %v2293
      %v2295 = vpop.f32.mrb[0].mxu0
      %v2296 = vpop.f32.mrb[0].mxu0
      %v2297 = vadd.f32 0.0, %v2296
      %v2298 = vpop.f32.mrb[0].mxu0
      %2299 = vmatprep.mubr.bf16.mxu0 0
      %2300 = vmatmul.mubr.bf16.gmra.mrb[0].mxu0 %v2177
      %v2301 = vpop.f32.mrb[0].mxu0
      %v2302 = vadd.f32 0.0, %v2301
      %v2303 = vpop.f32.mrb[0].mxu0
      %v2304 = vpop.f32.mrb[0].mxu0
      %v2305 = vadd.f32 0.0, %v2304
      %v2306 = vpop.f32.mrb[0].mxu0
      %2307 = vmatprep.mubr.bf16.mxu0 0
      %2308 = vmatmul.mubr.bf16.gmra.mrb[0].mxu0 %v2180
      %v2309 = vpop.f32.mrb[0].mxu0
      %v2310 = vadd.f32 0.0, %v2309
      %v2311 = vpop.f32.mrb[0].mxu0
      %v2312 = vpop.f32.mrb[0].mxu0
      %v2313 = vadd.f32 0.0, %v2312
      %v2314 = vpop.f32.mrb[0].mxu0
      %2315 = vmatprep.mubr.bf16.mxu0 0
      %2316 = vmatmul.mubr.bf16.gmra.mrb[0].mxu0 %v2183
      %v2317 = vpop.f32.mrb[0].mxu0
      %v2318 = vadd.f32 0.0, %v2317
      %v2319 = vpop.f32.mrb[0].mxu0
      %v2320 = vpop.f32.mrb[0].mxu0
      %v2321 = vadd.f32 0.0, %v2320
      %v2322 = vpop.f32.mrb[0].mxu0
      %2323 = vmatprep.mubr.bf16.mxu0 0
      %2324 = vmatmul.mubr.bf16.gmra.mrb[0].mxu0 %v2186
      %v2325 = vpop.f32.mrb[0].mxu0
      %v2326 = vadd.f32 0.0, %v2325
      %v2327 = vpop.f32.mrb[0].mxu0
      %v2328 = vpop.f32.mrb[0].mxu0
      %v2329 = vadd.f32 0.0, %v2328
      %v2330 = vpop.f32.mrb[0].mxu0
      %2331 = vmatprep.mubr.bf16.mxu0 0
      %2332 = vmatmul.mubr.bf16.gmra.mrb[0].mxu0 %v2189
      %v2333 = vpop.f32.mrb[0].mxu0
      %v2334 = vadd.f32 0.0, %v2333
      %v2335 = vpop.f32.mrb[0].mxu0
      %v2336 = vpop.f32.mrb[0].mxu0
      %v2337 = vadd.f32 0.0, %v2336
      %v2338 = vpop.f32.mrb[0].mxu0
      %2339 = vmatprep.mubr.bf16.mxu0 0
      %2340 = vmatmul.mubr.bf16.gmra.mrb[0].mxu0 %v2192
      %v2341 = vpop.f32.mrb[0].mxu0
      %v2342 = vadd.f32 0.0, %v2341
      %v2343 = vpop.f32.mrb[0].mxu0
      %v2344 = vpop.f32.mrb[0].mxu0
      %v2345 = vadd.f32 0.0, %v2344
      %v2346 = vpop.f32.mrb[0].mxu0
      %2347 = vmatprep.mubr.bf16.mxu0 0
      %2348 = vmatmul.mubr.bf16.gmra.mrb[0].mxu0 %v2195
      %v2349 = vpop.f32.mrb[0].mxu0
      %v2350 = vadd.f32 0.0, %v2349
      %v2351 = vpop.f32.mrb[0].mxu0
      %v2352 = vpop.f32.mrb[0].mxu0
      %v2353 = vadd.f32 0.0, %v2352
      %v2354 = vpop.f32.mrb[0].mxu0
      %2355 = vmatprep.mubr.bf16.mxu0 0
      %2356 = vmatmul.mubr.bf16.gmra.mrb[0].mxu0 %v2198
      %v2357 = vpop.f32.mrb[0].mxu0
      %v2358 = vadd.f32 0.0, %v2357
      %v2359 = vpop.f32.mrb[0].mxu0
      %v2360 = vpop.f32.mrb[0].mxu0
      %v2361 = vadd.f32 0.0, %v2360
      %v2362 = vpop.f32.mrb[0].mxu0
      %2363 = vdwg.mxu0
      %v2364 = vadd.f32 %v2069, %v2238
      %v2365 = vadd.f32 %v2070, %v2241
      %v2366 = vadd.f32 %v2071, %v2246
      %v2367 = vadd.f32 %v2072, %v2249
      %v2368 = vadd.f32 %v2073, %v2254
      %v2369 = vadd.f32 %v2074, %v2257
      %v2370 = vadd.f32 %v2075, %v2262
      %v2371 = vadd.f32 %v2076, %v2265
      %v2372 = vadd.f32 %v2077, %v2270
      %v2373 = vadd.f32 %v2078, %v2273
      %v2374 = vadd.f32 %v2079, %v2278
      %v2375 = vadd.f32 %v2080, %v2281
      %v2376 = vadd.f32 %v2081, %v2286
      %v2377 = vadd.f32 %v2082, %v2289
      %v2378 = vadd.f32 %v2083, %v2294
      %v2379 = vadd.f32 %v2084, %v2297
      %v2380 = vadd.f32 %v2085, %v2302
      %v2381 = vadd.f32 %v2086, %v2305
      %v2382 = vadd.f32 %v2087, %v2310
      %v2383 = vadd.f32 %v2088, %v2313
      %v2384 = vadd.f32 %v2089, %v2318
      %v2385 = vadd.f32 %v2090, %v2321
      %v2386 = vadd.f32 %v2091, %v2326
      %v2387 = vadd.f32 %v2092, %v2329
      %v2388 = vadd.f32 %v2093, %v2334
      %v2389 = vadd.f32 %v2094, %v2337
      %v2390 = vadd.f32 %v2095, %v2342
      %v2391 = vadd.f32 %v2096, %v2345
      %v2392 = vadd.f32 %v2097, %v2350
      %v2393 = vadd.f32 %v2098, %v2353
      %v2394 = vadd.f32 %v2099, %v2358
      %v2395 = vadd.f32 %v2100, %v2361
      %v2396 = vld [vmem:[%s2101 + $0x1] sm:$0xff]
      %v2397 = vld [vmem:[%s2101 + $0x9] sm:$0xff]
      %v2398 = vld [vmem:[%s2101 + $0x19] sm:$0xff]
      %v2399 = vld [vmem:[%s2101 + $0x21] sm:$0xff]
      %v2400 = vld [vmem:[%s2101 + $0x31] sm:$0xff]
      %v2401 = vld [vmem:[%s2101 + $0x39] sm:$0xff]
      %v2402 = vld [vmem:[%s2101 + $0x49] sm:$0xff]
      %v2403 = vld [vmem:[%s2101 + $0x51] sm:$0xff]
      %v2404 = vld [vmem:[%s2101 + $0x61] sm:$0xff]
      %v2405 = vld [vmem:[%s2101 + $0x69] sm:$0xff]
      %v2406 = vld [vmem:[%s2101 + $0x79] sm:$0xff]
      %v2407 = vld [vmem:[%s2101 + $0x81] sm:$0xff]
      %v2408 = vld [vmem:[%s2101 + $0x91] sm:$0xff]
      %v2409 = vld [vmem:[%s2101 + $0x99] sm:$0xff]
      %v2410 = vld [vmem:[%s2101 + $0xa9] sm:$0xff]
      %v2411 = vld [vmem:[%s2101 + $0xb1] sm:$0xff]
      %v2412 = vld [vmem:[%s2101 + $0xc1] sm:$0xff]
      %v2413 = vld [vmem:[%s2101 + $0xc9] sm:$0xff]
      %v2414 = vld [vmem:[%s2101 + $0xd9] sm:$0xff]
      %v2415 = vld [vmem:[%s2101 + $0xe1] sm:$0xff]
      %v2416 = vld [vmem:[%s2101 + $0xf1] sm:$0xff]
      %v2417 = vld [vmem:[%s2101 + $0xf9] sm:$0xff]
      %v2418 = vld [vmem:[%s2101 + $0x109] sm:$0xff]
      %v2419 = vld [vmem:[%s2101 + $0x111] sm:$0xff]
      %v2420 = vld [vmem:[%s2101 + $0x121] sm:$0xff]
      %v2421 = vld [vmem:[%s2101 + $0x129] sm:$0xff]
      %v2422 = vld [vmem:[%s2101 + $0x139] sm:$0xff]
      %v2423 = vld [vmem:[%s2101 + $0x141] sm:$0xff]
      %v2424 = vld [vmem:[%s2101 + $0x151] sm:$0xff]
      %v2425 = vld [vmem:[%s2101 + $0x159] sm:$0xff]
      %v2426 = vld [vmem:[%s2101 + $0x169] sm:$0xff]
      %v2427 = vld [vmem:[%s2101 + $0x171] sm:$0xff]
      %v2428 = vpack.c.bf16 %v2397, %v2396
      %v2429 = vpack.c.bf16 %v2399, %v2398
      %v2430 = vpack.c.bf16 %v2401, %v2400
      %v2431 = vpack.c.bf16 %v2403, %v2402
      %v2432 = vpack.c.bf16 %v2405, %v2404
      %v2433 = vpack.c.bf16 %v2407, %v2406
      %v2434 = vpack.c.bf16 %v2409, %v2408
      %v2435 = vpack.c.bf16 %v2411, %v2410
      %v2436 = vpack.c.bf16 %v2413, %v2412
      %v2437 = vpack.c.bf16 %v2415, %v2414
      %v2438 = vpack.c.bf16 %v2417, %v2416
      %v2439 = vpack.c.bf16 %v2419, %v2418
      %v2440 = vpack.c.bf16 %v2421, %v2420
      %v2441 = vpack.c.bf16 %v2423, %v2422
      %v2442 = vpack.c.bf16 %v2425, %v2424
      %v2443 = vpack.c.bf16 %v2427, %v2426
      %s2444 = scalar_lea.vmem %s1, 14
      %v2445 = vld [vmem:[%s2444] sm:$0x3]
      %v2447 = vsel %vm280, %v2428, 0
      %v2450 = vsel %vm280, %v2429, 0
      %v2453 = vsel %vm280, %v2430, 0
      %v2456 = vsel %vm280, %v2431, 0
      %v2459 = vsel %vm280, %v2432, 0
      %v2462 = vsel %vm280, %v2433, 0
      %v2465 = vsel %vm280, %v2434, 0
      %v2468 = vsel %vm280, %v2435, 0
      %v2471 = vsel %vm280, %v2436, 0
      %v2474 = vsel %vm280, %v2437, 0
      %v2477 = vsel %vm280, %v2438, 0
      %v2480 = vsel %vm280, %v2439, 0
      %v2483 = vsel %vm280, %v2440, 0
      %v2486 = vsel %vm280, %v2441, 0
      %v2489 = vsel %vm280, %v2442, 0
      %v2492 = vsel %vm280, %v2443, 0
      %v2495 = vsel %vm548, %v2445, 0
      %2497 = vmatprep.subr.bf16.mxu0 0
      %2498 = vmatpush1.bf16.msra.mxu0 %v2495
      %2499 = vmatprep.subr.bf16.mxu0 0
      %2500 = vmatpush1.bf16.msra.mxu0 0
      %2501 = vmatprep.subr.bf16.mxu0 0
      %2502 = vmatpush1.bf16.msra.mxu0 0
      %2503 = vmatprep.subr.bf16.mxu0 0
      %2504 = vmatpush1.bf16.msra.mxu0 0
      %2505 = vmatprep.subr.bf16.mxu0 0
      %2506 = vmatpush1.bf16.msra.mxu0 0
      %2507 = vmatprep.subr.bf16.mxu0 0
      %2508 = vmatpush1.bf16.msra.mxu0 0
      %2509 = vmatprep.subr.bf16.mxu0 0
      %2510 = vmatpush1.bf16.msra.mxu0 0
      %2511 = vmatprep.subr.bf16.mxu0 0
      %2512 = vmatpush1.bf16.msra.mxu0 0
      %2513 = vmatprep.subr.bf16.mxu0 0
      %2514 = vmatpush1.bf16.msra.mxu0 0
      %2515 = vmatprep.subr.bf16.mxu0 0
      %2516 = vmatpush1.bf16.msra.mxu0 0
      %2517 = vmatprep.subr.bf16.mxu0 0
      %2518 = vmatpush1.bf16.msra.mxu0 0
      %2519 = vmatprep.subr.bf16.mxu0 0
      %2520 = vmatpush1.bf16.msra.mxu0 0
      %2521 = vmatprep.subr.bf16.mxu0 0
      %2522 = vmatpush1.bf16.msra.mxu0 0
      %2523 = vmatprep.subr.bf16.mxu0 0
      %2524 = vmatpush1.bf16.msra.mxu0 0
      %2525 = vmatprep.subr.bf16.mxu0 0
      %2526 = vmatpush1.bf16.msra.mxu0 0
      %2527 = vmatprep.subr.bf16.mxu0 0
      %2528 = vmatpush1.bf16.msra.mxu0 0
      %2529 = vmatprep.mubr.bf16.mxu0 0
      %2530 = vmatmul.mubr.bf16.gmra.mrb[0].mxu0 %v2447
      %v2531 = vpop.f32.mrb[0].mxu0
      %v2532 = vadd.f32 0.0, %v2531
      %v2533 = vpop.f32.mrb[0].mxu0
      %v2534 = vpop.f32.mrb[0].mxu0
      %v2535 = vadd.f32 0.0, %v2534
      %v2536 = vpop.f32.mrb[0].mxu0
      %2537 = vmatprep.mubr.bf16.mxu0 0
      %2538 = vmatmul.mubr.bf16.gmra.mrb[0].mxu0 %v2450
      %v2539 = vpop.f32.mrb[0].mxu0
      %v2540 = vadd.f32 0.0, %v2539
      %v2541 = vpop.f32.mrb[0].mxu0
      %v2542 = vpop.f32.mrb[0].mxu0
      %v2543 = vadd.f32 0.0, %v2542
      %v2544 = vpop.f32.mrb[0].mxu0
      %2545 = vmatprep.mubr.bf16.mxu0 0
      %2546 = vmatmul.mubr.bf16.gmra.mrb[0].mxu0 %v2453
      %v2547 = vpop.f32.mrb[0].mxu0
      %v2548 = vadd.f32 0.0, %v2547
      %v2549 = vpop.f32.mrb[0].mxu0
      %v2550 = vpop.f32.mrb[0].mxu0
      %v2551 = vadd.f32 0.0, %v2550
      %v2552 = vpop.f32.mrb[0].mxu0
      %2553 = vmatprep.mubr.bf16.mxu0 0
      %2554 = vmatmul.mubr.bf16.gmra.mrb[0].mxu0 %v2456
      %v2555 = vpop.f32.mrb[0].mxu0
      %v2556 = vadd.f32 0.0, %v2555
      %v2557 = vpop.f32.mrb[0].mxu0
      %v2558 = vpop.f32.mrb[0].mxu0
      %v2559 = vadd.f32 0.0, %v2558
      %v2560 = vpop.f32.mrb[0].mxu0
      %2561 = vmatprep.mubr.bf16.mxu0 0
      %2562 = vmatmul.mubr.bf16.gmra.mrb[0].mxu0 %v2459
      %v2563 = vpop.f32.mrb[0].mxu0
      %v2564 = vadd.f32 0.0, %v2563
      %v2565 = vpop.f32.mrb[0].mxu0
      %v2566 = vpop.f32.mrb[0].mxu0
      %v2567 = vadd.f32 0.0, %v2566
      %v2568 = vpop.f32.mrb[0].mxu0
      %2569 = vmatprep.mubr.bf16.mxu0 0
      %2570 = vmatmul.mubr.bf16.gmra.mrb[0].mxu0 %v2462
      %v2571 = vpop.f32.mrb[0].mxu0
      %v2572 = vadd.f32 0.0, %v2571
      %v2573 = vpop.f32.mrb[0].mxu0
      %v2574 = vpop.f32.mrb[0].mxu0
      %v2575 = vadd.f32 0.0, %v2574
      %v2576 = vpop.f32.mrb[0].mxu0
      %2577 = vmatprep.mubr.bf16.mxu0 0
      %2578 = vmatmul.mubr.bf16.gmra.mrb[0].mxu0 %v2465
      %v2579 = vpop.f32.mrb[0].mxu0
      %v2580 = vadd.f32 0.0, %v2579
      %v2581 = vpop.f32.mrb[0].mxu0
      %v2582 = vpop.f32.mrb[0].mxu0
      %v2583 = vadd.f32 0.0, %v2582
      %v2584 = vpop.f32.mrb[0].mxu0
      %2585 = vmatprep.mubr.bf16.mxu0 0
      %2586 = vmatmul.mubr.bf16.gmra.mrb[0].mxu0 %v2468
      %v2587 = vpop.f32.mrb[0].mxu0
      %v2588 = vadd.f32 0.0, %v2587
      %v2589 = vpop.f32.mrb[0].mxu0
      %v2590 = vpop.f32.mrb[0].mxu0
      %v2591 = vadd.f32 0.0, %v2590
      %v2592 = vpop.f32.mrb[0].mxu0
      %2593 = vmatprep.mubr.bf16.mxu0 0
      %2594 = vmatmul.mubr.bf16.gmra.mrb[0].mxu0 %v2471
      %v2595 = vpop.f32.mrb[0].mxu0
      %v2596 = vadd.f32 0.0, %v2595
      %v2597 = vpop.f32.mrb[0].mxu0
      %v2598 = vpop.f32.mrb[0].mxu0
      %v2599 = vadd.f32 0.0, %v2598
      %v2600 = vpop.f32.mrb[0].mxu0
      %2601 = vmatprep.mubr.bf16.mxu0 0
      %2602 = vmatmul.mubr.bf16.gmra.mrb[0].mxu0 %v2474
      %v2603 = vpop.f32.mrb[0].mxu0
      %v2604 = vadd.f32 0.0, %v2603
      %v2605 = vpop.f32.mrb[0].mxu0
      %v2606 = vpop.f32.mrb[0].mxu0
      %v2607 = vadd.f32 0.0, %v2606
      %v2608 = vpop.f32.mrb[0].mxu0
      %2609 = vmatprep.mubr.bf16.mxu0 0
      %2610 = vmatmul.mubr.bf16.gmra.mrb[0].mxu0 %v2477
      %v2611 = vpop.f32.mrb[0].mxu0
      %v2612 = vadd.f32 0.0, %v2611
      %v2613 = vpop.f32.mrb[0].mxu0
      %v2614 = vpop.f32.mrb[0].mxu0
      %v2615 = vadd.f32 0.0, %v2614
      %v2616 = vpop.f32.mrb[0].mxu0
      %2617 = vmatprep.mubr.bf16.mxu0 0
      %2618 = vmatmul.mubr.bf16.gmra.mrb[0].mxu0 %v2480
      %v2619 = vpop.f32.mrb[0].mxu0
      %v2620 = vadd.f32 0.0, %v2619
      %v2621 = vpop.f32.mrb[0].mxu0
      %v2622 = vpop.f32.mrb[0].mxu0
      %v2623 = vadd.f32 0.0, %v2622
      %v2624 = vpop.f32.mrb[0].mxu0
      %2625 = vmatprep.mubr.bf16.mxu0 0
      %2626 = vmatmul.mubr.bf16.gmra.mrb[0].mxu0 %v2483
      %v2627 = vpop.f32.mrb[0].mxu0
      %v2628 = vadd.f32 0.0, %v2627
      %v2629 = vpop.f32.mrb[0].mxu0
      %v2630 = vpop.f32.mrb[0].mxu0
      %v2631 = vadd.f32 0.0, %v2630
      %v2632 = vpop.f32.mrb[0].mxu0
      %2633 = vmatprep.mubr.bf16.mxu0 0
      %2634 = vmatmul.mubr.bf16.gmra.mrb[0].mxu0 %v2486
      %v2635 = vpop.f32.mrb[0].mxu0
      %v2636 = vadd.f32 0.0, %v2635
      %v2637 = vpop.f32.mrb[0].mxu0
      %v2638 = vpop.f32.mrb[0].mxu0
      %v2639 = vadd.f32 0.0, %v2638
      %v2640 = vpop.f32.mrb[0].mxu0
      %2641 = vmatprep.mubr.bf16.mxu0 0
      %2642 = vmatmul.mubr.bf16.gmra.mrb[0].mxu0 %v2489
      %v2643 = vpop.f32.mrb[0].mxu0
      %v2644 = vadd.f32 0.0, %v2643
      %v2645 = vpop.f32.mrb[0].mxu0
      %v2646 = vpop.f32.mrb[0].mxu0
      %v2647 = vadd.f32 0.0, %v2646
      %v2648 = vpop.f32.mrb[0].mxu0
      %2649 = vmatprep.mubr.bf16.mxu0 0
      %2650 = vmatmul.mubr.bf16.gmra.mrb[0].mxu0 %v2492
      %v2651 = vpop.f32.mrb[0].mxu0
      %v2652 = vadd.f32 0.0, %v2651
      %v2653 = vpop.f32.mrb[0].mxu0
      %v2654 = vpop.f32.mrb[0].mxu0
      %v2655 = vadd.f32 0.0, %v2654
      %v2656 = vpop.f32.mrb[0].mxu0
      %2657 = vdwg.mxu0
      %v2658 = vadd.f32 %v2364, %v2532
      %v2659 = vadd.f32 %v2365, %v2535
      %v2660 = vadd.f32 %v2366, %v2540
      %v2661 = vadd.f32 %v2367, %v2543
      %v2662 = vadd.f32 %v2368, %v2548
      %v2663 = vadd.f32 %v2369, %v2551
      %v2664 = vadd.f32 %v2370, %v2556
      %v2665 = vadd.f32 %v2371, %v2559
      %v2666 = vadd.f32 %v2372, %v2564
      %v2667 = vadd.f32 %v2373, %v2567
      %v2668 = vadd.f32 %v2374, %v2572
      %v2669 = vadd.f32 %v2375, %v2575
      %v2670 = vadd.f32 %v2376, %v2580
      %v2671 = vadd.f32 %v2377, %v2583
      %v2672 = vadd.f32 %v2378, %v2588
      %v2673 = vadd.f32 %v2379, %v2591
      %v2674 = vadd.f32 %v2380, %v2596
      %v2675 = vadd.f32 %v2381, %v2599
      %v2676 = vadd.f32 %v2382, %v2604
      %v2677 = vadd.f32 %v2383, %v2607
      %v2678 = vadd.f32 %v2384, %v2612
      %v2679 = vadd.f32 %v2385, %v2615
      %v2680 = vadd.f32 %v2386, %v2620
      %v2681 = vadd.f32 %v2387, %v2623
      %v2682 = vadd.f32 %v2388, %v2628
      %v2683 = vadd.f32 %v2389, %v2631
      %v2684 = vadd.f32 %v2390, %v2636
      %v2685 = vadd.f32 %v2391, %v2639
      %v2686 = vadd.f32 %v2392, %v2644
      %v2687 = vadd.f32 %v2393, %v2647
      %v2688 = vadd.f32 %v2394, %v2652
      %v2689 = vadd.f32 %v2395, %v2655
      %v2690 = vld [vmem:[%s2101 + $0x2] sm:$0xff]
      %v2691 = vld [vmem:[%s2101 + $0xa] sm:$0xff]
      %v2692 = vld [vmem:[%s2101 + $0x1a] sm:$0xff]
      %v2693 = vld [vmem:[%s2101 + $0x22] sm:$0xff]
      %v2694 = vld [vmem:[%s2101 + $0x32] sm:$0xff]
      %v2695 = vld [vmem:[%s2101 + $0x3a] sm:$0xff]
      %v2696 = vld [vmem:[%s2101 + $0x4a] sm:$0xff]
      %v2697 = vld [vmem:[%s2101 + $0x52] sm:$0xff]
      %v2698 = vld [vmem:[%s2101 + $0x62] sm:$0xff]
      %v2699 = vld [vmem:[%s2101 + $0x6a] sm:$0xff]
      %v2700 = vld [vmem:[%s2101 + $0x7a] sm:$0xff]
      %v2701 = vld [vmem:[%s2101 + $0x82] sm:$0xff]
      %v2702 = vld [vmem:[%s2101 + $0x92] sm:$0xff]
      %v2703 = vld [vmem:[%s2101 + $0x9a] sm:$0xff]
      %v2704 = vld [vmem:[%s2101 + $0xaa] sm:$0xff]
      %v2705 = vld [vmem:[%s2101 + $0xb2] sm:$0xff]
      %v2706 = vld [vmem:[%s2101 + $0xc2] sm:$0xff]
      %v2707 = vld [vmem:[%s2101 + $0xca] sm:$0xff]
      %v2708 = vld [vmem:[%s2101 + $0xda] sm:$0xff]
      %v2709 = vld [vmem:[%s2101 + $0xe2] sm:$0xff]
      %v2710 = vld [vmem:[%s2101 + $0xf2] sm:$0xff]
      %v2711 = vld [vmem:[%s2101 + $0xfa] sm:$0xff]
      %v2712 = vld [vmem:[%s2101 + $0x10a] sm:$0xff]
      %v2713 = vld [vmem:[%s2101 + $0x112] sm:$0xff]
      %v2714 = vld [vmem:[%s2101 + $0x122] sm:$0xff]
      %v2715 = vld [vmem:[%s2101 + $0x12a] sm:$0xff]
      %v2716 = vld [vmem:[%s2101 + $0x13a] sm:$0xff]
      %v2717 = vld [vmem:[%s2101 + $0x142] sm:$0xff]
      %v2718 = vld [vmem:[%s2101 + $0x152] sm:$0xff]
      %v2719 = vld [vmem:[%s2101 + $0x15a] sm:$0xff]
      %v2720 = vld [vmem:[%s2101 + $0x16a] sm:$0xff]
      %v2721 = vld [vmem:[%s2101 + $0x172] sm:$0xff]
      %v2722 = vpack.c.bf16 %v2691, %v2690
      %v2723 = vpack.c.bf16 %v2693, %v2692
      %v2724 = vpack.c.bf16 %v2695, %v2694
      %v2725 = vpack.c.bf16 %v2697, %v2696
      %v2726 = vpack.c.bf16 %v2699, %v2698
      %v2727 = vpack.c.bf16 %v2701, %v2700
      %v2728 = vpack.c.bf16 %v2703, %v2702
      %v2729 = vpack.c.bf16 %v2705, %v2704
      %v2730 = vpack.c.bf16 %v2707, %v2706
      %v2731 = vpack.c.bf16 %v2709, %v2708
      %v2732 = vpack.c.bf16 %v2711, %v2710
      %v2733 = vpack.c.bf16 %v2713, %v2712
      %v2734 = vpack.c.bf16 %v2715, %v2714
      %v2735 = vpack.c.bf16 %v2717, %v2716
      %v2736 = vpack.c.bf16 %v2719, %v2718
      %v2737 = vpack.c.bf16 %v2721, %v2720
      %s2738 = scalar_lea.vmem %s1, 16
      %v2739 = vld [vmem:[%s2738] sm:$0x3]
      %v2741 = vsel %vm280, %v2722, 0
      %v2744 = vsel %vm280, %v2723, 0
      %v2747 = vsel %vm280, %v2724, 0
      %v2750 = vsel %vm280, %v2725, 0
      %v2753 = vsel %vm280, %v2726, 0
      %v2756 = vsel %vm280, %v2727, 0
      %v2759 = vsel %vm280, %v2728, 0
      %v2762 = vsel %vm280, %v2729, 0
      %v2765 = vsel %vm280, %v2730, 0
      %v2768 = vsel %vm280, %v2731, 0
      %v2771 = vsel %vm280, %v2732, 0
      %v2774 = vsel %vm280, %v2733, 0
      %v2777 = vsel %vm280, %v2734, 0
      %v2780 = vsel %vm280, %v2735, 0
      %v2783 = vsel %vm280, %v2736, 0
      %v2786 = vsel %vm280, %v2737, 0
      %v2789 = vsel %vm548, %v2739, 0
      %2791 = vmatprep.subr.bf16.mxu0 0
      %2792 = vmatpush1.bf16.msra.mxu0 %v2789
      %2793 = vmatprep.subr.bf16.mxu0 0
      %2794 = vmatpush1.bf16.msra.mxu0 0
      %2795 = vmatprep.subr.bf16.mxu0 0
      %2796 = vmatpush1.bf16.msra.mxu0 0
      %2797 = vmatprep.subr.bf16.mxu0 0
      %2798 = vmatpush1.bf16.msra.mxu0 0
      %2799 = vmatprep.subr.bf16.mxu0 0
      %2800 = vmatpush1.bf16.msra.mxu0 0
      %2801 = vmatprep.subr.bf16.mxu0 0
      %2802 = vmatpush1.bf16.msra.mxu0 0
      %2803 = vmatprep.subr.bf16.mxu0 0
      %2804 = vmatpush1.bf16.msra.mxu0 0
      %2805 = vmatprep.subr.bf16.mxu0 0
      %2806 = vmatpush1.bf16.msra.mxu0 0
      %2807 = vmatprep.subr.bf16.mxu0 0
      %2808 = vmatpush1.bf16.msra.mxu0 0
      %2809 = vmatprep.subr.bf16.mxu0 0
      %2810 = vmatpush1.bf16.msra.mxu0 0
      %2811 = vmatprep.subr.bf16.mxu0 0
      %2812 = vmatpush1.bf16.msra.mxu0 0
      %2813 = vmatprep.subr.bf16.mxu0 0
      %2814 = vmatpush1.bf16.msra.mxu0 0
      %2815 = vmatprep.subr.bf16.mxu0 0
      %2816 = vmatpush1.bf16.msra.mxu0 0
      %2817 = vmatprep.subr.bf16.mxu0 0
      %2818 = vmatpush1.bf16.msra.mxu0 0
      %2819 = vmatprep.subr.bf16.mxu0 0
      %2820 = vmatpush1.bf16.msra.mxu0 0
      %2821 = vmatprep.subr.bf16.mxu0 0
      %2822 = vmatpush1.bf16.msra.mxu0 0
      %2823 = vmatprep.mubr.bf16.mxu0 0
      %2824 = vmatmul.mubr.bf16.gmra.mrb[0].mxu0 %v2741
      %v2825 = vpop.f32.mrb[0].mxu0
      %v2826 = vadd.f32 0.0, %v2825
      %v2827 = vpop.f32.mrb[0].mxu0
      %v2828 = vpop.f32.mrb[0].mxu0
      %v2829 = vadd.f32 0.0, %v2828
      %v2830 = vpop.f32.mrb[0].mxu0
      %2831 = vmatprep.mubr.bf16.mxu0 0
      %2832 = vmatmul.mubr.bf16.gmra.mrb[0].mxu0 %v2744
      %v2833 = vpop.f32.mrb[0].mxu0
      %v2834 = vadd.f32 0.0, %v2833
      %v2835 = vpop.f32.mrb[0].mxu0
      %v2836 = vpop.f32.mrb[0].mxu0
      %v2837 = vadd.f32 0.0, %v2836
      %v2838 = vpop.f32.mrb[0].mxu0
      %2839 = vmatprep.mubr.bf16.mxu0 0
      %2840 = vmatmul.mubr.bf16.gmra.mrb[0].mxu0 %v2747
      %v2841 = vpop.f32.mrb[0].mxu0
      %v2842 = vadd.f32 0.0, %v2841
      %v2843 = vpop.f32.mrb[0].mxu0
      %v2844 = vpop.f32.mrb[0].mxu0
      %v2845 = vadd.f32 0.0, %v2844
      %v2846 = vpop.f32.mrb[0].mxu0
      %2847 = vmatprep.mubr.bf16.mxu0 0
      %2848 = vmatmul.mubr.bf16.gmra.mrb[0].mxu0 %v2750
      %v2849 = vpop.f32.mrb[0].mxu0
      %v2850 = vadd.f32 0.0, %v2849
      %v2851 = vpop.f32.mrb[0].mxu0
      %v2852 = vpop.f32.mrb[0].mxu0
      %v2853 = vadd.f32 0.0, %v2852
      %v2854 = vpop.f32.mrb[0].mxu0
      %2855 = vmatprep.mubr.bf16.mxu0 0
      %2856 = vmatmul.mubr.bf16.gmra.mrb[0].mxu0 %v2753
      %v2857 = vpop.f32.mrb[0].mxu0
      %v2858 = vadd.f32 0.0, %v2857
      %v2859 = vpop.f32.mrb[0].mxu0
      %v2860 = vpop.f32.mrb[0].mxu0
      %v2861 = vadd.f32 0.0, %v2860
      %v2862 = vpop.f32.mrb[0].mxu0
      %2863 = vmatprep.mubr.bf16.mxu0 0
      %2864 = vmatmul.mubr.bf16.gmra.mrb[0].mxu0 %v2756
      %v2865 = vpop.f32.mrb[0].mxu0
      %v2866 = vadd.f32 0.0, %v2865
      %v2867 = vpop.f32.mrb[0].mxu0
      %v2868 = vpop.f32.mrb[0].mxu0
      %v2869 = vadd.f32 0.0, %v2868
      %v2870 = vpop.f32.mrb[0].mxu0
      %2871 = vmatprep.mubr.bf16.mxu0 0
      %2872 = vmatmul.mubr.bf16.gmra.mrb[0].mxu0 %v2759
      %v2873 = vpop.f32.mrb[0].mxu0
      %v2874 = vadd.f32 0.0, %v2873
      %v2875 = vpop.f32.mrb[0].mxu0
      %v2876 = vpop.f32.mrb[0].mxu0
      %v2877 = vadd.f32 0.0, %v2876
      %v2878 = vpop.f32.mrb[0].mxu0
      %2879 = vmatprep.mubr.bf16.mxu0 0
      %2880 = vmatmul.mubr.bf16.gmra.mrb[0].mxu0 %v2762
      %v2881 = vpop.f32.mrb[0].mxu0
      %v2882 = vadd.f32 0.0, %v2881
      %v2883 = vpop.f32.mrb[0].mxu0
      %v2884 = vpop.f32.mrb[0].mxu0
      %v2885 = vadd.f32 0.0, %v2884
      %v2886 = vpop.f32.mrb[0].mxu0
      %2887 = vmatprep.mubr.bf16.mxu0 0
      %2888 = vmatmul.mubr.bf16.gmra.mrb[0].mxu0 %v2765
      %v2889 = vpop.f32.mrb[0].mxu0
      %v2890 = vadd.f32 0.0, %v2889
      %v2891 = vpop.f32.mrb[0].mxu0
      %v2892 = vpop.f32.mrb[0].mxu0
      %v2893 = vadd.f32 0.0, %v2892
      %v2894 = vpop.f32.mrb[0].mxu0
      %2895 = vmatprep.mubr.bf16.mxu0 0
      %2896 = vmatmul.mubr.bf16.gmra.mrb[0].mxu0 %v2768
      %v2897 = vpop.f32.mrb[0].mxu0
      %v2898 = vadd.f32 0.0, %v2897
      %v2899 = vpop.f32.mrb[0].mxu0
      %v2900 = vpop.f32.mrb[0].mxu0
      %v2901 = vadd.f32 0.0, %v2900
      %v2902 = vpop.f32.mrb[0].mxu0
      %2903 = vmatprep.mubr.bf16.mxu0 0
      %2904 = vmatmul.mubr.bf16.gmra.mrb[0].mxu0 %v2771
      %v2905 = vpop.f32.mrb[0].mxu0
      %v2906 = vadd.f32 0.0, %v2905
      %v2907 = vpop.f32.mrb[0].mxu0
      %v2908 = vpop.f32.mrb[0].mxu0
      %v2909 = vadd.f32 0.0, %v2908
      %v2910 = vpop.f32.mrb[0].mxu0
      %2911 = vmatprep.mubr.bf16.mxu0 0
      %2912 = vmatmul.mubr.bf16.gmra.mrb[0].mxu0 %v2774
      %v2913 = vpop.f32.mrb[0].mxu0
      %v2914 = vadd.f32 0.0, %v2913
      %v2915 = vpop.f32.mrb[0].mxu0
      %v2916 = vpop.f32.mrb[0].mxu0
      %v2917 = vadd.f32 0.0, %v2916
      %v2918 = vpop.f32.mrb[0].mxu0
      %2919 = vmatprep.mubr.bf16.mxu0 0
      %2920 = vmatmul.mubr.bf16.gmra.mrb[0].mxu0 %v2777
      %v2921 = vpop.f32.mrb[0].mxu0
      %v2922 = vadd.f32 0.0, %v2921
      %v2923 = vpop.f32.mrb[0].mxu0
      %v2924 = vpop.f32.mrb[0].mxu0
      %v2925 = vadd.f32 0.0, %v2924
      %v2926 = vpop.f32.mrb[0].mxu0
      %2927 = vmatprep.mubr.bf16.mxu0 0
      %2928 = vmatmul.mubr.bf16.gmra.mrb[0].mxu0 %v2780
      %v2929 = vpop.f32.mrb[0].mxu0
      %v2930 = vadd.f32 0.0, %v2929
      %v2931 = vpop.f32.mrb[0].mxu0
      %v2932 = vpop.f32.mrb[0].mxu0
      %v2933 = vadd.f32 0.0, %v2932
      %v2934 = vpop.f32.mrb[0].mxu0
      %2935 = vmatprep.mubr.bf16.mxu0 0
      %2936 = vmatmul.mubr.bf16.gmra.mrb[0].mxu0 %v2783
      %v2937 = vpop.f32.mrb[0].mxu0
      %v2938 = vadd.f32 0.0, %v2937
      %v2939 = vpop.f32.mrb[0].mxu0
      %v2940 = vpop.f32.mrb[0].mxu0
      %v2941 = vadd.f32 0.0, %v2940
      %v2942 = vpop.f32.mrb[0].mxu0
      %2943 = vmatprep.mubr.bf16.mxu0 0
      %2944 = vmatmul.mubr.bf16.gmra.mrb[0].mxu0 %v2786
      %v2945 = vpop.f32.mrb[0].mxu0
      %v2946 = vadd.f32 0.0, %v2945
      %v2947 = vpop.f32.mrb[0].mxu0
      %v2948 = vpop.f32.mrb[0].mxu0
      %v2949 = vadd.f32 0.0, %v2948
      %v2950 = vpop.f32.mrb[0].mxu0
      %2951 = vdwg.mxu0
      %v2952 = vadd.f32 %v2658, %v2826
      %v2953 = vadd.f32 %v2659, %v2829
      %v2954 = vadd.f32 %v2660, %v2834
      %v2955 = vadd.f32 %v2661, %v2837
      %v2956 = vadd.f32 %v2662, %v2842
      %v2957 = vadd.f32 %v2663, %v2845
      %v2958 = vadd.f32 %v2664, %v2850
      %v2959 = vadd.f32 %v2665, %v2853
      %v2960 = vadd.f32 %v2666, %v2858
      %v2961 = vadd.f32 %v2667, %v2861
      %v2962 = vadd.f32 %v2668, %v2866
      %v2963 = vadd.f32 %v2669, %v2869
      %v2964 = vadd.f32 %v2670, %v2874
      %v2965 = vadd.f32 %v2671, %v2877
      %v2966 = vadd.f32 %v2672, %v2882
      %v2967 = vadd.f32 %v2673, %v2885
      %v2968 = vadd.f32 %v2674, %v2890
      %v2969 = vadd.f32 %v2675, %v2893
      %v2970 = vadd.f32 %v2676, %v2898
      %v2971 = vadd.f32 %v2677, %v2901
      %v2972 = vadd.f32 %v2678, %v2906
      %v2973 = vadd.f32 %v2679, %v2909
      %v2974 = vadd.f32 %v2680, %v2914
      %v2975 = vadd.f32 %v2681, %v2917
      %v2976 = vadd.f32 %v2682, %v2922
      %v2977 = vadd.f32 %v2683, %v2925
      %v2978 = vadd.f32 %v2684, %v2930
      %v2979 = vadd.f32 %v2685, %v2933
      %v2980 = vadd.f32 %v2686, %v2938
      %v2981 = vadd.f32 %v2687, %v2941
      %v2982 = vadd.f32 %v2688, %v2946
      %v2983 = vadd.f32 %v2689, %v2949
      %v2984 = vld [vmem:[%s2] sm:$0x1]
      %v2986 = vlaneseq
      %v2987 = vshrl.u32 %v2986, 7
      %v2988 = vsub.s32 0, %v2987
      %v2989 = vrot.slane %v2984, %v2988
      %v2991 = vmul.f32 %v2952, %v2989
      %v2992 = vmul.f32 %v2953, %v2989
      %v2993 = vmul.f32 %v2954, %v2989
      %v2994 = vmul.f32 %v2955, %v2989
      %v2995 = vmul.f32 %v2956, %v2989
      %v2996 = vmul.f32 %v2957, %v2989
      %v2997 = vmul.f32 %v2958, %v2989
      %v2998 = vmul.f32 %v2959, %v2989
      %v2999 = vmul.f32 %v2960, %v2989
      %v3000 = vmul.f32 %v2961, %v2989
      %v3001 = vmul.f32 %v2962, %v2989
      %v3002 = vmul.f32 %v2963, %v2989
      %v3003 = vmul.f32 %v2964, %v2989
      %v3004 = vmul.f32 %v2965, %v2989
      %v3005 = vmul.f32 %v2966, %v2989
      %v3006 = vmul.f32 %v2967, %v2989
      %v3007 = vmul.f32 %v2968, %v2989
      %v3008 = vmul.f32 %v2969, %v2989
      %v3009 = vmul.f32 %v2970, %v2989
      %v3010 = vmul.f32 %v2971, %v2989
      %v3011 = vmul.f32 %v2972, %v2989
      %v3012 = vmul.f32 %v2973, %v2989
      %v3013 = vmul.f32 %v2974, %v2989
      %v3014 = vmul.f32 %v2975, %v2989
      %v3015 = vmul.f32 %v2976, %v2989
      %v3016 = vmul.f32 %v2977, %v2989
      %v3017 = vmul.f32 %v2978, %v2989
      %v3018 = vmul.f32 %v2979, %v2989
      %v3019 = vmul.f32 %v2980, %v2989
      %v3020 = vmul.f32 %v2981, %v2989
      %v3021 = vmul.f32 %v2982, %v2989
      %v3022 = vmul.f32 %v2983, %v2989
      %v3023 = vld [vmem:[%s3] sm:$0x1]
      %v3025 = vlaneseq
      %v3026 = vshrl.u32 %v3025, 7
      %v3027 = vsub.s32 0, %v3026
      %v3028 = vrot.slane %v3023, %v3027
      %v3030 = vadd.f32 %v2991, %v3028
      %v3031 = vadd.f32 %v2992, %v3028
      %v3032 = vadd.f32 %v2993, %v3028
      %v3033 = vadd.f32 %v2994, %v3028
      %v3034 = vadd.f32 %v2995, %v3028
      %v3035 = vadd.f32 %v2996, %v3028
      %v3036 = vadd.f32 %v2997, %v3028
      %v3037 = vadd.f32 %v2998, %v3028
      %v3038 = vadd.f32 %v2999, %v3028
      %v3039 = vadd.f32 %v3000, %v3028
      %v3040 = vadd.f32 %v3001, %v3028
      %v3041 = vadd.f32 %v3002, %v3028
      %v3042 = vadd.f32 %v3003, %v3028
      %v3043 = vadd.f32 %v3004, %v3028
      %v3044 = vadd.f32 %v3005, %v3028
      %v3045 = vadd.f32 %v3006, %v3028
      %v3046 = vadd.f32 %v3007, %v3028
      %v3047 = vadd.f32 %v3008, %v3028
      %v3048 = vadd.f32 %v3009, %v3028
      %v3049 = vadd.f32 %v3010, %v3028
      %v3050 = vadd.f32 %v3011, %v3028
      %v3051 = vadd.f32 %v3012, %v3028
      %v3052 = vadd.f32 %v3013, %v3028
      %v3053 = vadd.f32 %v3014, %v3028
      %v3054 = vadd.f32 %v3015, %v3028
      %v3055 = vadd.f32 %v3016, %v3028
      %v3056 = vadd.f32 %v3017, %v3028
      %v3057 = vadd.f32 %v3018, %v3028
      %v3058 = vadd.f32 %v3019, %v3028
      %v3059 = vadd.f32 %v3020, %v3028
      %v3060 = vadd.f32 %v3021, %v3028
      %v3061 = vadd.f32 %v3022, %v3028
      %v3062 = vmax.f32 %v3030, 0.0
      %v3063 = vmax.f32 %v3031, 0.0
      %v3064 = vmax.f32 %v3032, 0.0
      %v3065 = vmax.f32 %v3033, 0.0
      %v3066 = vmax.f32 %v3034, 0.0
      %v3067 = vmax.f32 %v3035, 0.0
      %v3068 = vmax.f32 %v3036, 0.0
      %v3069 = vmax.f32 %v3037, 0.0
      %v3070 = vmax.f32 %v3038, 0.0
      %v3071 = vmax.f32 %v3039, 0.0
      %v3072 = vmax.f32 %v3040, 0.0
      %v3073 = vmax.f32 %v3041, 0.0
      %v3074 = vmax.f32 %v3042, 0.0
      %v3075 = vmax.f32 %v3043, 0.0
      %v3076 = vmax.f32 %v3044, 0.0
      %v3077 = vmax.f32 %v3045, 0.0
      %v3078 = vmax.f32 %v3046, 0.0
      %v3079 = vmax.f32 %v3047, 0.0
      %v3080 = vmax.f32 %v3048, 0.0
      %v3081 = vmax.f32 %v3049, 0.0
      %v3082 = vmax.f32 %v3050, 0.0
      %v3083 = vmax.f32 %v3051, 0.0
      %v3084 = vmax.f32 %v3052, 0.0
      %v3085 = vmax.f32 %v3053, 0.0
      %v3086 = vmax.f32 %v3054, 0.0
      %v3087 = vmax.f32 %v3055, 0.0
      %v3088 = vmax.f32 %v3056, 0.0
      %v3089 = vmax.f32 %v3057, 0.0
      %v3090 = vmax.f32 %v3058, 0.0
      %v3091 = vmax.f32 %v3059, 0.0
      %v3092 = vmax.f32 %v3060, 0.0
      %v3093 = vmax.f32 %v3061, 0.0
      %3094 = vst [vmem:[#allocation3] sm:$0xff] 0.0
      %3095 = vst [vmem:[#allocation3 + $0x8] sm:$0xff] 0.0
      %3096 = vst [vmem:[#allocation3 + $0x10] sm:$0x3] 0.0
      %3097 = vst [vmem:[#allocation3 + $0x18] sm:$0xff] 0.0
      %3098 = vst [vmem:[#allocation3 + $0x20] sm:$0xff] 0.0
      %3099 = vst [vmem:[#allocation3 + $0x28] sm:$0x3] 0.0
      %3100 = vst [vmem:[#allocation3 + $0x30] sm:$0xff] 0.0
      %3101 = vst [vmem:[#allocation3 + $0x38] sm:$0xff] 0.0
      %3102 = vst [vmem:[#allocation3 + $0x40] sm:$0x3] 0.0
      %3103 = vst [vmem:[#allocation3 + $0x48] sm:$0xff] 0.0
      %3104 = vst [vmem:[#allocation3 + $0x50] sm:$0xff] 0.0
      %3105 = vst [vmem:[#allocation3 + $0x58] sm:$0x3] 0.0
      %3106 = vst [vmem:[#allocation3 + $0x60] sm:$0xff] 0.0
      %3107 = vst [vmem:[#allocation3 + $0x68] sm:$0xff] 0.0
      %3108 = vst [vmem:[#allocation3 + $0x70] sm:$0x3] 0.0
      %3109 = vst [vmem:[#allocation3 + $0x78] sm:$0xff] 0.0
      %3110 = vst [vmem:[#allocation3 + $0x80] sm:$0xff] 0.0
      %3111 = vst [vmem:[#allocation3 + $0x88] sm:$0x3] 0.0
      %3112 = vst [vmem:[#allocation3 + $0x90] sm:$0xff] 0.0
      %3113 = vst [vmem:[#allocation3 + $0x98] sm:$0xff] 0.0
      %3114 = vst [vmem:[#allocation3 + $0xa0] sm:$0x3] 0.0
      %3115 = vst [vmem:[#allocation3 + $0xa8] sm:$0xff] 0.0
      %3116 = vst [vmem:[#allocation3 + $0xb0] sm:$0xff] 0.0
      %3117 = vst [vmem:[#allocation3 + $0xb8] sm:$0x3] 0.0
      %3118 = vst [vmem:[#allocation3 + $0xc0] sm:$0xff] 0.0
      %3119 = vst [vmem:[#allocation3 + $0xc8] sm:$0xff] 0.0
      %3120 = vst [vmem:[#allocation3 + $0xd0] sm:$0x3] 0.0
      %3121 = vst [vmem:[#allocation3 + $0xd8] sm:$0xff] 0.0
      %3122 = vst [vmem:[#allocation3 + $0xe0] sm:$0xff] 0.0
      %3123 = vst [vmem:[#allocation3 + $0xe8] sm:$0x3] 0.0
      %3124 = vst [vmem:[#allocation3 + $0xf0] sm:$0xff] 0.0
      %3125 = vst [vmem:[#allocation3 + $0xf8] sm:$0xff] 0.0
      %3126 = vst [vmem:[#allocation3 + $0x100] sm:$0x3] 0.0
      %3127 = vst [vmem:[#allocation3 + $0x108] sm:$0xff] 0.0
      %3128 = vst [vmem:[#allocation3 + $0x110] sm:$0xff] 0.0
      %3129 = vst [vmem:[#allocation3 + $0x118] sm:$0x3] 0.0
      %3130 = vst [vmem:[#allocation3 + $0x120] sm:$0xff] 0.0
      %3131 = vst [vmem:[#allocation3 + $0x128] sm:$0xff] 0.0
      %3132 = vst [vmem:[#allocation3 + $0x130] sm:$0x3] 0.0
      %3133 = vst [vmem:[#allocation3 + $0x138] sm:$0xff] 0.0
      %3134 = vst [vmem:[#allocation3 + $0x140] sm:$0xff] 0.0
      %3135 = vst [vmem:[#allocation3 + $0x148] sm:$0x3] 0.0
      %3136 = vst [vmem:[#allocation3 + $0x150] sm:$0xff] 0.0
      %3137 = vst [vmem:[#allocation3 + $0x158] sm:$0xff] 0.0
      %3138 = vst [vmem:[#allocation3 + $0x160] sm:$0x3] 0.0
      %3139 = vst [vmem:[#allocation3 + $0x168] sm:$0xff] 0.0
      %3140 = vst [vmem:[#allocation3 + $0x170] sm:$0xff] 0.0
      %3141 = vst [vmem:[#allocation3 + $0x178] sm:$0x3] 0.0
      %3142 = vst [vmem:[#allocation3 + $0x180] sm:$0xff] 0.0
      %3143 = vst [vmem:[#allocation3 + $0x188] sm:$0xff] 0.0
      %3144 = vst [vmem:[#allocation3 + $0x190] sm:$0x3] 0.0
      %3145 = vst [vmem:[#allocation3 + $0x198] sm:$0xff] 0.0
      %3146 = vst [vmem:[#allocation3 + $0x1a0] sm:$0xff] 0.0
      %3147 = vst [vmem:[#allocation3 + $0x1a8] sm:$0x3] 0.0
      %s3148 = scalar_lea.vmem [#allocation3], 24
      %3149 = vst [vmem:[%s3148 + $0x1] sm:$0xff] %v3062
      %3150 = vst [vmem:[%s3148 + $0x9] sm:$0xff] %v3063
      %3151 = vst [vmem:[%s3148 + $0x19] sm:$0xff] %v3064
      %3152 = vst [vmem:[%s3148 + $0x21] sm:$0xff] %v3065
      %3153 = vst [vmem:[%s3148 + $0x31] sm:$0xff] %v3066
      %3154 = vst [vmem:[%s3148 + $0x39] sm:$0xff] %v3067
      %3155 = vst [vmem:[%s3148 + $0x49] sm:$0xff] %v3068
      %3156 = vst [vmem:[%s3148 + $0x51] sm:$0xff] %v3069
      %3157 = vst [vmem:[%s3148 + $0x61] sm:$0xff] %v3070
      %3158 = vst [vmem:[%s3148 + $0x69] sm:$0xff] %v3071
      %3159 = vst [vmem:[%s3148 + $0x79] sm:$0xff] %v3072
      %3160 = vst [vmem:[%s3148 + $0x81] sm:$0xff] %v3073
      %3161 = vst [vmem:[%s3148 + $0x91] sm:$0xff] %v3074
      %3162 = vst [vmem:[%s3148 + $0x99] sm:$0xff] %v3075
      %3163 = vst [vmem:[%s3148 + $0xa9] sm:$0xff] %v3076
      %3164 = vst [vmem:[%s3148 + $0xb1] sm:$0xff] %v3077
      %3165 = vst [vmem:[%s3148 + $0xc1] sm:$0xff] %v3078
      %3166 = vst [vmem:[%s3148 + $0xc9] sm:$0xff] %v3079
      %3167 = vst [vmem:[%s3148 + $0xd9] sm:$0xff] %v3080
      %3168 = vst [vmem:[%s3148 + $0xe1] sm:$0xff] %v3081
      %3169 = vst [vmem:[%s3148 + $0xf1] sm:$0xff] %v3082
      %3170 = vst [vmem:[%s3148 + $0xf9] sm:$0xff] %v3083
      %3171 = vst [vmem:[%s3148 + $0x109] sm:$0xff] %v3084
      %3172 = vst [vmem:[%s3148 + $0x111] sm:$0xff] %v3085
      %3173 = vst [vmem:[%s3148 + $0x121] sm:$0xff] %v3086
      %3174 = vst [vmem:[%s3148 + $0x129] sm:$0xff] %v3087
      %3175 = vst [vmem:[%s3148 + $0x139] sm:$0xff] %v3088
      %3176 = vst [vmem:[%s3148 + $0x141] sm:$0xff] %v3089
      %3177 = vst [vmem:[%s3148 + $0x151] sm:$0xff] %v3090
      %3178 = vst [vmem:[%s3148 + $0x159] sm:$0xff] %v3091
      %3179 = vst [vmem:[%s3148 + $0x169] sm:$0xff] %v3092
      %3180 = vst [vmem:[%s3148 + $0x171] sm:$0xff] %v3093
      %v3181 = vld [vmem:[#allocation3] sm:$0xff]
      %v3182 = vld [vmem:[#allocation3 + $0x8] sm:$0xff]
      %v3183 = vld [vmem:[#allocation3 + $0x18] sm:$0xff]
      %v3184 = vld [vmem:[#allocation3 + $0x20] sm:$0xff]
      %v3185 = vld [vmem:[#allocation3 + $0x30] sm:$0xff]
      %v3186 = vld [vmem:[#allocation3 + $0x38] sm:$0xff]
      %v3187 = vld [vmem:[#allocation3 + $0x48] sm:$0xff]
      %v3188 = vld [vmem:[#allocation3 + $0x50] sm:$0xff]
      %v3189 = vld [vmem:[#allocation3 + $0x60] sm:$0xff]
      %v3190 = vld [vmem:[#allocation3 + $0x68] sm:$0xff]
      %v3191 = vld [vmem:[#allocation3 + $0x78] sm:$0xff]
      %v3192 = vld [vmem:[#allocation3 + $0x80] sm:$0xff]
      %v3193 = vld [vmem:[#allocation3 + $0x90] sm:$0xff]
      %v3194 = vld [vmem:[#allocation3 + $0x98] sm:$0xff]
      %v3195 = vld [vmem:[#allocation3 + $0xa8] sm:$0xff]
      %v3196 = vld [vmem:[#allocation3 + $0xb0] sm:$0xff]
      %v3197 = vld [vmem:[#allocation3 + $0xc0] sm:$0xff]
      %v3198 = vld [vmem:[#allocation3 + $0xc8] sm:$0xff]
      %v3199 = vld [vmem:[#allocation3 + $0xd8] sm:$0xff]
      %v3200 = vld [vmem:[#allocation3 + $0xe0] sm:$0xff]
      %v3201 = vld [vmem:[#allocation3 + $0xf0] sm:$0xff]
      %v3202 = vld [vmem:[#allocation3 + $0xf8] sm:$0xff]
      %v3203 = vld [vmem:[#allocation3 + $0x108] sm:$0xff]
      %v3204 = vld [vmem:[#allocation3 + $0x110] sm:$0xff]
      %v3205 = vld [vmem:[#allocation3 + $0x120] sm:$0xff]
      %v3206 = vld [vmem:[#allocation3 + $0x128] sm:$0xff]
      %v3207 = vld [vmem:[#allocation3 + $0x138] sm:$0xff]
      %v3208 = vld [vmem:[#allocation3 + $0x140] sm:$0xff]
      %v3209 = vld [vmem:[#allocation3 + $0x150] sm:$0xff]
      %v3210 = vld [vmem:[#allocation3 + $0x158] sm:$0xff]
      %v3211 = vld [vmem:[#allocation3 + $0x168] sm:$0xff]
      %v3212 = vld [vmem:[#allocation3 + $0x170] sm:$0xff]
      %v3213 = vpack.c.bf16 %v3182, %v3181
      %v3214 = vpack.c.bf16 %v3184, %v3183
      %v3215 = vpack.c.bf16 %v3186, %v3185
      %v3216 = vpack.c.bf16 %v3188, %v3187
      %v3217 = vpack.c.bf16 %v3190, %v3189
      %v3218 = vpack.c.bf16 %v3192, %v3191
      %v3219 = vpack.c.bf16 %v3194, %v3193
      %v3220 = vpack.c.bf16 %v3196, %v3195
      %v3221 = vpack.c.bf16 %v3198, %v3197
      %v3222 = vpack.c.bf16 %v3200, %v3199
      %v3223 = vpack.c.bf16 %v3202, %v3201
      %v3224 = vpack.c.bf16 %v3204, %v3203
      %v3225 = vpack.c.bf16 %v3206, %v3205
      %v3226 = vpack.c.bf16 %v3208, %v3207
      %v3227 = vpack.c.bf16 %v3210, %v3209
      %v3228 = vpack.c.bf16 %v3212, %v3211
      %v3229 = vld [vmem:[%s4] sm:$0xf]
      %v3230 = vld [vmem:[%s4 + $0x4] sm:$0xf]
      %v3231 = vld [vmem:[%s4 + $0x8] sm:$0xf]
      %v3232 = vld [vmem:[%s4 + $0xc] sm:$0xf]
      %v3233 = vld [vmem:[%s4 + $0x10] sm:$0xf]
      %v3234 = vld [vmem:[%s4 + $0x14] sm:$0xf]
      %v3235 = vld [vmem:[%s4 + $0x18] sm:$0xf]
      %v3236 = vld [vmem:[%s4 + $0x1c] sm:$0xf]
      %v3237 = vld [vmem:[%s4 + $0x20] sm:$0xf]
      %v3238 = vld [vmem:[%s4 + $0x24] sm:$0xf]
      %v3239 = vld [vmem:[%s4 + $0x28] sm:$0xf]
      %v3240 = vld [vmem:[%s4 + $0x2c] sm:$0xf]
      %v3241 = vld [vmem:[%s4 + $0x30] sm:$0xf]
      %v3242 = vld [vmem:[%s4 + $0x34] sm:$0xf]
      %v3243 = vld [vmem:[%s4 + $0x38] sm:$0xf]
      %v3244 = vld [vmem:[%s4 + $0x3c] sm:$0xf]
      %v3245 = vld [vmem:[#allocation3 + $0x1] sm:$0xff]
      %v3246 = vld [vmem:[#allocation3 + $0x9] sm:$0xff]
      %v3247 = vld [vmem:[#allocation3 + $0x19] sm:$0xff]
      %v3248 = vld [vmem:[#allocation3 + $0x21] sm:$0xff]
      %v3249 = vld [vmem:[#allocation3 + $0x31] sm:$0xff]
      %v3250 = vld [vmem:[#allocation3 + $0x39] sm:$0xff]
      %v3251 = vld [vmem:[#allocation3 + $0x49] sm:$0xff]
      %v3252 = vld [vmem:[#allocation3 + $0x51] sm:$0xff]
      %v3253 = vld [vmem:[#allocation3 + $0x61] sm:$0xff]
      %v3254 = vld [vmem:[#allocation3 + $0x69] sm:$0xff]
      %v3255 = vld [vmem:[#allocation3 + $0x79] sm:$0xff]
      %v3256 = vld [vmem:[#allocation3 + $0x81] sm:$0xff]
      %v3257 = vld [vmem:[#allocation3 + $0x91] sm:$0xff]
      %v3258 = vld [vmem:[#allocation3 + $0x99] sm:$0xff]
      %v3259 = vld [vmem:[#allocation3 + $0xa9] sm:$0xff]
      %v3260 = vld [vmem:[#allocation3 + $0xb1] sm:$0xff]
      %v3261 = vld [vmem:[#allocation3 + $0xc1] sm:$0xff]
      %v3262 = vld [vmem:[#allocation3 + $0xc9] sm:$0xff]
      %v3263 = vld [vmem:[#allocation3 + $0xd9] sm:$0xff]
      %v3264 = vld [vmem:[#allocation3 + $0xe1] sm:$0xff]
      %v3265 = vld [vmem:[#allocation3 + $0xf1] sm:$0xff]
      %v3266 = vld [vmem:[#allocation3 + $0xf9] sm:$0xff]
      %v3267 = vld [vmem:[#allocation3 + $0x109] sm:$0xff]
      %v3268 = vld [vmem:[#allocation3 + $0x111] sm:$0xff]
      %v3269 = vld [vmem:[#allocation3 + $0x121] sm:$0xff]
      %v3270 = vld [vmem:[#allocation3 + $0x129] sm:$0xff]
      %v3271 = vld [vmem:[#allocation3 + $0x139] sm:$0xff]
      %v3272 = vld [vmem:[#allocation3 + $0x141] sm:$0xff]
      %v3273 = vld [vmem:[#allocation3 + $0x151] sm:$0xff]
      %v3274 = vld [vmem:[#allocation3 + $0x159] sm:$0xff]
      %v3275 = vld [vmem:[#allocation3 + $0x169] sm:$0xff]
      %v3276 = vld [vmem:[#allocation3 + $0x171] sm:$0xff]
      %v3277 = vpack.c.bf16 %v3246, %v3245
      %v3278 = vpack.c.bf16 %v3248, %v3247
      %v3279 = vpack.c.bf16 %v3250, %v3249
      %v3280 = vpack.c.bf16 %v3252, %v3251
      %v3281 = vpack.c.bf16 %v3254, %v3253
      %v3282 = vpack.c.bf16 %v3256, %v3255
      %v3283 = vpack.c.bf16 %v3258, %v3257
      %v3284 = vpack.c.bf16 %v3260, %v3259
      %v3285 = vpack.c.bf16 %v3262, %v3261
      %v3286 = vpack.c.bf16 %v3264, %v3263
      %v3287 = vpack.c.bf16 %v3266, %v3265
      %v3288 = vpack.c.bf16 %v3268, %v3267
      %v3289 = vpack.c.bf16 %v3270, %v3269
      %v3290 = vpack.c.bf16 %v3272, %v3271
      %v3291 = vpack.c.bf16 %v3274, %v3273
      %v3292 = vpack.c.bf16 %v3276, %v3275
      %s3293 = scalar_lea.vmem %s4, 64
      %v3294 = vld [vmem:[%s3293] sm:$0xf]
      %v3295 = vld [vmem:[%s3293 + $0x4] sm:$0xf]
      %v3296 = vld [vmem:[%s3293 + $0x8] sm:$0xf]
      %v3297 = vld [vmem:[%s3293 + $0xc] sm:$0xf]
      %v3298 = vld [vmem:[%s3293 + $0x10] sm:$0xf]
      %v3299 = vld [vmem:[%s3293 + $0x14] sm:$0xf]
      %v3300 = vld [vmem:[%s3293 + $0x18] sm:$0xf]
      %v3301 = vld [vmem:[%s3293 + $0x1c] sm:$0xf]
      %v3302 = vld [vmem:[%s3293 + $0x20] sm:$0xf]
      %v3303 = vld [vmem:[%s3293 + $0x24] sm:$0xf]
      %v3304 = vld [vmem:[%s3293 + $0x28] sm:$0xf]
      %v3305 = vld [vmem:[%s3293 + $0x2c] sm:$0xf]
      %v3306 = vld [vmem:[%s3293 + $0x30] sm:$0xf]
      %v3307 = vld [vmem:[%s3293 + $0x34] sm:$0xf]
      %v3308 = vld [vmem:[%s3293 + $0x38] sm:$0xf]
      %v3309 = vld [vmem:[%s3293 + $0x3c] sm:$0xf]
      %v3326 = vunpack.c.l.b16 %v3294
      %v3327 = vunpack.c.l.b16 %v3295
      %v3328 = vunpack.c.l.b16 %v3296
      %v3329 = vunpack.c.l.b16 %v3297
      %v3330 = vunpack.c.l.b16 %v3298
      %v3331 = vunpack.c.l.b16 %v3299
      %v3332 = vunpack.c.l.b16 %v3300
      %v3333 = vunpack.c.l.b16 %v3301
      %v3334 = vunpack.c.l.b16 %v3302
      %v3335 = vunpack.c.l.b16 %v3303
      %v3336 = vunpack.c.l.b16 %v3304
      %v3337 = vunpack.c.l.b16 %v3305
      %v3338 = vunpack.c.l.b16 %v3306
      %v3339 = vunpack.c.l.b16 %v3307
      %v3340 = vunpack.c.l.b16 %v3308
      %v3341 = vunpack.c.l.b16 %v3309
      %v3342 = vpack.c.b16 %v3327, %v3326
      %v3343 = vpack.c.b16 %v3329, %v3328
      %v3344 = vpack.c.b16 %v3331, %v3330
      %v3345 = vpack.c.b16 %v3333, %v3332
      %v3346 = vpack.c.b16 %v3335, %v3334
      %v3347 = vpack.c.b16 %v3337, %v3336
      %v3348 = vpack.c.b16 %v3339, %v3338
      %v3349 = vpack.c.b16 %v3341, %v3340
      %3358 = vmatprep.subr.bf16.mxu0 0
      %3359 = vmatpush1.bf16.msra.mxu0 %v3342
      %3360 = vmatprep.subr.bf16.mxu0 0
      %3361 = vmatpush1.bf16.msra.mxu0 %v3343
      %3362 = vmatprep.subr.bf16.mxu0 0
      %3363 = vmatpush1.bf16.msra.mxu0 %v3344
      %3364 = vmatprep.subr.bf16.mxu0 0
      %3365 = vmatpush1.bf16.msra.mxu0 %v3345
      %3366 = vmatprep.subr.bf16.mxu0 0
      %3367 = vmatpush1.bf16.msra.mxu0 %v3346
      %3368 = vmatprep.subr.bf16.mxu0 0
      %3369 = vmatpush1.bf16.msra.mxu0 %v3347
      %3370 = vmatprep.subr.bf16.mxu0 0
      %3371 = vmatpush1.bf16.msra.mxu0 %v3348
      %3372 = vmatprep.subr.bf16.mxu0 0
      %3373 = vmatpush1.bf16.msra.mxu0 %v3349
      %3374 = vmatprep.subr.bf16.mxu0 0
      %3375 = vmatpush1.bf16.msra.mxu0 0
      %3376 = vmatprep.subr.bf16.mxu0 0
      %3377 = vmatpush1.bf16.msra.mxu0 0
      %3378 = vmatprep.subr.bf16.mxu0 0
      %3379 = vmatpush1.bf16.msra.mxu0 0
      %3380 = vmatprep.subr.bf16.mxu0 0
      %3381 = vmatpush1.bf16.msra.mxu0 0
      %3382 = vmatprep.subr.bf16.mxu0 0
      %3383 = vmatpush1.bf16.msra.mxu0 0
      %3384 = vmatprep.subr.bf16.mxu0 0
      %3385 = vmatpush1.bf16.msra.mxu0 0
      %3386 = vmatprep.subr.bf16.mxu0 0
      %3387 = vmatpush1.bf16.msra.mxu0 0
      %3388 = vmatprep.subr.bf16.mxu0 0
      %3389 = vmatpush1.bf16.msra.mxu0 0
      %3390 = vmatprep.mubr.bf16.mxu0 0
      %3391 = vmatmul.mubr.bf16.gmra.mrb[0].mxu0 %v3277
      %v3392 = vpop.f32.mrb[0].mxu0
      %v3393 = vadd.f32 0.0, %v3392
      %v3394 = vpop.f32.mrb[0].mxu0
      %v3395 = vpop.f32.mrb[0].mxu0
      %v3396 = vadd.f32 0.0, %v3395
      %v3397 = vpop.f32.mrb[0].mxu0
      %3398 = vmatprep.mubr.bf16.mxu0 0
      %3399 = vmatmul.mubr.bf16.gmra.mrb[0].mxu0 %v3278
      %v3400 = vpop.f32.mrb[0].mxu0
      %v3401 = vadd.f32 0.0, %v3400
      %v3402 = vpop.f32.mrb[0].mxu0
      %v3403 = vpop.f32.mrb[0].mxu0
      %v3404 = vadd.f32 0.0, %v3403
      %v3405 = vpop.f32.mrb[0].mxu0
      %3406 = vmatprep.mubr.bf16.mxu0 0
      %3407 = vmatmul.mubr.bf16.gmra.mrb[0].mxu0 %v3279
      %v3408 = vpop.f32.mrb[0].mxu0
      %v3409 = vadd.f32 0.0, %v3408
      %v3410 = vpop.f32.mrb[0].mxu0
      %v3411 = vpop.f32.mrb[0].mxu0
      %v3412 = vadd.f32 0.0, %v3411
      %v3413 = vpop.f32.mrb[0].mxu0
      %3414 = vmatprep.mubr.bf16.mxu0 0
      %3415 = vmatmul.mubr.bf16.gmra.mrb[0].mxu0 %v3280
      %v3416 = vpop.f32.mrb[0].mxu0
      %v3417 = vadd.f32 0.0, %v3416
      %v3418 = vpop.f32.mrb[0].mxu0
      %v3419 = vpop.f32.mrb[0].mxu0
      %v3420 = vadd.f32 0.0, %v3419
      %v3421 = vpop.f32.mrb[0].mxu0
      %3422 = vmatprep.mubr.bf16.mxu0 0
      %3423 = vmatmul.mubr.bf16.gmra.mrb[0].mxu0 %v3281
      %v3424 = vpop.f32.mrb[0].mxu0
      %v3425 = vadd.f32 0.0, %v3424
      %v3426 = vpop.f32.mrb[0].mxu0
      %v3427 = vpop.f32.mrb[0].mxu0
      %v3428 = vadd.f32 0.0, %v3427
      %v3429 = vpop.f32.mrb[0].mxu0
      %3430 = vmatprep.mubr.bf16.mxu0 0
      %3431 = vmatmul.mubr.bf16.gmra.mrb[0].mxu0 %v3282
      %v3432 = vpop.f32.mrb[0].mxu0
      %v3433 = vadd.f32 0.0, %v3432
      %v3434 = vpop.f32.mrb[0].mxu0
      %v3435 = vpop.f32.mrb[0].mxu0
      %v3436 = vadd.f32 0.0, %v3435
      %v3437 = vpop.f32.mrb[0].mxu0
      %3438 = vmatprep.mubr.bf16.mxu0 0
      %3439 = vmatmul.mubr.bf16.gmra.mrb[0].mxu0 %v3283
      %v3440 = vpop.f32.mrb[0].mxu0
      %v3441 = vadd.f32 0.0, %v3440
      %v3442 = vpop.f32.mrb[0].mxu0
      %v3443 = vpop.f32.mrb[0].mxu0
      %v3444 = vadd.f32 0.0, %v3443
      %v3445 = vpop.f32.mrb[0].mxu0
      %3446 = vmatprep.mubr.bf16.mxu0 0
      %3447 = vmatmul.mubr.bf16.gmra.mrb[0].mxu0 %v3284
      %v3448 = vpop.f32.mrb[0].mxu0
      %v3449 = vadd.f32 0.0, %v3448
      %v3450 = vpop.f32.mrb[0].mxu0
      %v3451 = vpop.f32.mrb[0].mxu0
      %v3452 = vadd.f32 0.0, %v3451
      %v3453 = vpop.f32.mrb[0].mxu0
      %3454 = vmatprep.mubr.bf16.mxu0 0
      %3455 = vmatmul.mubr.bf16.gmra.mrb[0].mxu0 %v3285
      %v3456 = vpop.f32.mrb[0].mxu0
      %v3457 = vadd.f32 0.0, %v3456
      %v3458 = vpop.f32.mrb[0].mxu0
      %v3459 = vpop.f32.mrb[0].mxu0
      %v3460 = vadd.f32 0.0, %v3459
      %v3461 = vpop.f32.mrb[0].mxu0
      %3462 = vmatprep.mubr.bf16.mxu0 0
      %3463 = vmatmul.mubr.bf16.gmra.mrb[0].mxu0 %v3286
      %v3464 = vpop.f32.mrb[0].mxu0
      %v3465 = vadd.f32 0.0, %v3464
      %v3466 = vpop.f32.mrb[0].mxu0
      %v3467 = vpop.f32.mrb[0].mxu0
      %v3468 = vadd.f32 0.0, %v3467
      %v3469 = vpop.f32.mrb[0].mxu0
      %3470 = vmatprep.mubr.bf16.mxu0 0
      %3471 = vmatmul.mubr.bf16.gmra.mrb[0].mxu0 %v3287
      %v3472 = vpop.f32.mrb[0].mxu0
      %v3473 = vadd.f32 0.0, %v3472
      %v3474 = vpop.f32.mrb[0].mxu0
      %v3475 = vpop.f32.mrb[0].mxu0
      %v3476 = vadd.f32 0.0, %v3475
      %v3477 = vpop.f32.mrb[0].mxu0
      %3478 = vmatprep.mubr.bf16.mxu0 0
      %3479 = vmatmul.mubr.bf16.gmra.mrb[0].mxu0 %v3288
      %v3480 = vpop.f32.mrb[0].mxu0
      %v3481 = vadd.f32 0.0, %v3480
      %v3482 = vpop.f32.mrb[0].mxu0
      %v3483 = vpop.f32.mrb[0].mxu0
      %v3484 = vadd.f32 0.0, %v3483
      %v3485 = vpop.f32.mrb[0].mxu0
      %3486 = vmatprep.mubr.bf16.mxu0 0
      %3487 = vmatmul.mubr.bf16.gmra.mrb[0].mxu0 %v3289
      %v3488 = vpop.f32.mrb[0].mxu0
      %v3489 = vadd.f32 0.0, %v3488
      %v3490 = vpop.f32.mrb[0].mxu0
      %v3491 = vpop.f32.mrb[0].mxu0
      %v3492 = vadd.f32 0.0, %v3491
      %v3493 = vpop.f32.mrb[0].mxu0
      %3494 = vmatprep.mubr.bf16.mxu0 0
      %3495 = vmatmul.mubr.bf16.gmra.mrb[0].mxu0 %v3290
      %v3496 = vpop.f32.mrb[0].mxu0
      %v3497 = vadd.f32 0.0, %v3496
      %v3498 = vpop.f32.mrb[0].mxu0
      %v3499 = vpop.f32.mrb[0].mxu0
      %v3500 = vadd.f32 0.0, %v3499
      %v3501 = vpop.f32.mrb[0].mxu0
      %3502 = vmatprep.mubr.bf16.mxu0 0
      %3503 = vmatmul.mubr.bf16.gmra.mrb[0].mxu0 %v3291
      %v3504 = vpop.f32.mrb[0].mxu0
      %v3505 = vadd.f32 0.0, %v3504
      %v3506 = vpop.f32.mrb[0].mxu0
      %v3507 = vpop.f32.mrb[0].mxu0
      %v3508 = vadd.f32 0.0, %v3507
      %v3509 = vpop.f32.mrb[0].mxu0
      %3510 = vmatprep.mubr.bf16.mxu0 0
      %3511 = vmatmul.mubr.bf16.gmra.mrb[0].mxu0 %v3292
      %v3512 = vpop.f32.mrb[0].mxu0
      %v3513 = vadd.f32 0.0, %v3512
      %v3514 = vpop.f32.mrb[0].mxu0
      %v3515 = vpop.f32.mrb[0].mxu0
      %v3516 = vadd.f32 0.0, %v3515
      %v3517 = vpop.f32.mrb[0].mxu0
      %3518 = vdwg.mxu0
      %v3535 = vunpack.c.l.b16 %v3229
      %v3536 = vunpack.c.l.b16 %v3230
      %v3537 = vunpack.c.l.b16 %v3231
      %v3538 = vunpack.c.l.b16 %v3232
      %v3539 = vunpack.c.l.b16 %v3233
      %v3540 = vunpack.c.l.b16 %v3234
      %v3541 = vunpack.c.l.b16 %v3235
      %v3542 = vunpack.c.l.b16 %v3236
      %v3543 = vunpack.c.l.b16 %v3237
      %v3544 = vunpack.c.l.b16 %v3238
      %v3545 = vunpack.c.l.b16 %v3239
      %v3546 = vunpack.c.l.b16 %v3240
      %v3547 = vunpack.c.l.b16 %v3241
      %v3548 = vunpack.c.l.b16 %v3242
      %v3549 = vunpack.c.l.b16 %v3243
      %v3550 = vunpack.c.l.b16 %v3244
      %v3551 = vpack.c.b16 %v3536, %v3535
      %v3552 = vpack.c.b16 %v3538, %v3537
      %v3553 = vpack.c.b16 %v3540, %v3539
      %v3554 = vpack.c.b16 %v3542, %v3541
      %v3555 = vpack.c.b16 %v3544, %v3543
      %v3556 = vpack.c.b16 %v3546, %v3545
      %v3557 = vpack.c.b16 %v3548, %v3547
      %v3558 = vpack.c.b16 %v3550, %v3549
      %3567 = vmatprep.subr.bf16.mxu0 0
      %3568 = vmatpush1.bf16.msra.mxu0 %v3551
      %3569 = vmatprep.subr.bf16.mxu0 0
      %3570 = vmatpush1.bf16.msra.mxu0 %v3552
      %3571 = vmatprep.subr.bf16.mxu0 0
      %3572 = vmatpush1.bf16.msra.mxu0 %v3553
      %3573 = vmatprep.subr.bf16.mxu0 0
      %3574 = vmatpush1.bf16.msra.mxu0 %v3554
      %3575 = vmatprep.subr.bf16.mxu0 0
      %3576 = vmatpush1.bf16.msra.mxu0 %v3555
      %3577 = vmatprep.subr.bf16.mxu0 0
      %3578 = vmatpush1.bf16.msra.mxu0 %v3556
      %3579 = vmatprep.subr.bf16.mxu0 0
      %3580 = vmatpush1.bf16.msra.mxu0 %v3557
      %3581 = vmatprep.subr.bf16.mxu0 0
      %3582 = vmatpush1.bf16.msra.mxu0 %v3558
      %3583 = vmatprep.subr.bf16.mxu0 0
      %3584 = vmatpush1.bf16.msra.mxu0 0
      %3585 = vmatprep.subr.bf16.mxu0 0
      %3586 = vmatpush1.bf16.msra.mxu0 0
      %3587 = vmatprep.subr.bf16.mxu0 0
      %3588 = vmatpush1.bf16.msra.mxu0 0
      %3589 = vmatprep.subr.bf16.mxu0 0
      %3590 = vmatpush1.bf16.msra.mxu0 0
      %3591 = vmatprep.subr.bf16.mxu0 0
      %3592 = vmatpush1.bf16.msra.mxu0 0
      %3593 = vmatprep.subr.bf16.mxu0 0
      %3594 = vmatpush1.bf16.msra.mxu0 0
      %3595 = vmatprep.subr.bf16.mxu0 0
      %3596 = vmatpush1.bf16.msra.mxu0 0
      %3597 = vmatprep.subr.bf16.mxu0 0
      %3598 = vmatpush1.bf16.msra.mxu0 0
      %3599 = vmatprep.mubr.bf16.mxu0 0
      %3600 = vmatmul.mubr.bf16.gmra.mrb[0].mxu0 %v3213
      %v3601 = vpop.f32.mrb[0].mxu0
      %v3602 = vadd.f32 %v3393, %v3601
      %v3603 = vpop.f32.mrb[0].mxu0
      %v3604 = vpop.f32.mrb[0].mxu0
      %v3605 = vadd.f32 %v3396, %v3604
      %v3606 = vpop.f32.mrb[0].mxu0
      %3607 = vmatprep.mubr.bf16.mxu0 0
      %3608 = vmatmul.mubr.bf16.gmra.mrb[0].mxu0 %v3214
      %v3609 = vpop.f32.mrb[0].mxu0
      %v3610 = vadd.f32 %v3401, %v3609
      %v3611 = vpop.f32.mrb[0].mxu0
      %v3612 = vpop.f32.mrb[0].mxu0
      %v3613 = vadd.f32 %v3404, %v3612
      %v3614 = vpop.f32.mrb[0].mxu0
      %3615 = vmatprep.mubr.bf16.mxu0 0
      %3616 = vmatmul.mubr.bf16.gmra.mrb[0].mxu0 %v3215
      %v3617 = vpop.f32.mrb[0].mxu0
      %v3618 = vadd.f32 %v3409, %v3617
      %v3619 = vpop.f32.mrb[0].mxu0
      %v3620 = vpop.f32.mrb[0].mxu0
      %v3621 = vadd.f32 %v3412, %v3620
      %v3622 = vpop.f32.mrb[0].mxu0
      %3623 = vmatprep.mubr.bf16.mxu0 0
      %3624 = vmatmul.mubr.bf16.gmra.mrb[0].mxu0 %v3216
      %v3625 = vpop.f32.mrb[0].mxu0
      %v3626 = vadd.f32 %v3417, %v3625
      %v3627 = vpop.f32.mrb[0].mxu0
      %v3628 = vpop.f32.mrb[0].mxu0
      %v3629 = vadd.f32 %v3420, %v3628
      %v3630 = vpop.f32.mrb[0].mxu0
      %3631 = vmatprep.mubr.bf16.mxu0 0
      %3632 = vmatmul.mubr.bf16.gmra.mrb[0].mxu0 %v3217
      %v3633 = vpop.f32.mrb[0].mxu0
      %v3634 = vadd.f32 %v3425, %v3633
      %v3635 = vpop.f32.mrb[0].mxu0
      %v3636 = vpop.f32.mrb[0].mxu0
      %v3637 = vadd.f32 %v3428, %v3636
      %v3638 = vpop.f32.mrb[0].mxu0
      %3639 = vmatprep.mubr.bf16.mxu0 0
      %3640 = vmatmul.mubr.bf16.gmra.mrb[0].mxu0 %v3218
      %v3641 = vpop.f32.mrb[0].mxu0
      %v3642 = vadd.f32 %v3433, %v3641
      %v3643 = vpop.f32.mrb[0].mxu0
      %v3644 = vpop.f32.mrb[0].mxu0
      %v3645 = vadd.f32 %v3436, %v3644
      %v3646 = vpop.f32.mrb[0].mxu0
      %3647 = vmatprep.mubr.bf16.mxu0 0
      %3648 = vmatmul.mubr.bf16.gmra.mrb[0].mxu0 %v3219
      %v3649 = vpop.f32.mrb[0].mxu0
      %v3650 = vadd.f32 %v3441, %v3649
      %v3651 = vpop.f32.mrb[0].mxu0
      %v3652 = vpop.f32.mrb[0].mxu0
      %v3653 = vadd.f32 %v3444, %v3652
      %v3654 = vpop.f32.mrb[0].mxu0
      %3655 = vmatprep.mubr.bf16.mxu0 0
      %3656 = vmatmul.mubr.bf16.gmra.mrb[0].mxu0 %v3220
      %v3657 = vpop.f32.mrb[0].mxu0
      %v3658 = vadd.f32 %v3449, %v3657
      %v3659 = vpop.f32.mrb[0].mxu0
      %v3660 = vpop.f32.mrb[0].mxu0
      %v3661 = vadd.f32 %v3452, %v3660
      %v3662 = vpop.f32.mrb[0].mxu0
      %3663 = vmatprep.mubr.bf16.mxu0 0
      %3664 = vmatmul.mubr.bf16.gmra.mrb[0].mxu0 %v3221
      %v3665 = vpop.f32.mrb[0].mxu0
      %v3666 = vadd.f32 %v3457, %v3665
      %v3667 = vpop.f32.mrb[0].mxu0
      %v3668 = vpop.f32.mrb[0].mxu0
      %v3669 = vadd.f32 %v3460, %v3668
      %v3670 = vpop.f32.mrb[0].mxu0
      %3671 = vmatprep.mubr.bf16.mxu0 0
      %3672 = vmatmul.mubr.bf16.gmra.mrb[0].mxu0 %v3222
      %v3673 = vpop.f32.mrb[0].mxu0
      %v3674 = vadd.f32 %v3465, %v3673
      %v3675 = vpop.f32.mrb[0].mxu0
      %v3676 = vpop.f32.mrb[0].mxu0
      %v3677 = vadd.f32 %v3468, %v3676
      %v3678 = vpop.f32.mrb[0].mxu0
      %3679 = vmatprep.mubr.bf16.mxu0 0
      %3680 = vmatmul.mubr.bf16.gmra.mrb[0].mxu0 %v3223
      %v3681 = vpop.f32.mrb[0].mxu0
      %v3682 = vadd.f32 %v3473, %v3681
      %v3683 = vpop.f32.mrb[0].mxu0
      %v3684 = vpop.f32.mrb[0].mxu0
      %v3685 = vadd.f32 %v3476, %v3684
      %v3686 = vpop.f32.mrb[0].mxu0
      %3687 = vmatprep.mubr.bf16.mxu0 0
      %3688 = vmatmul.mubr.bf16.gmra.mrb[0].mxu0 %v3224
      %v3689 = vpop.f32.mrb[0].mxu0
      %v3690 = vadd.f32 %v3481, %v3689
      %v3691 = vpop.f32.mrb[0].mxu0
      %v3692 = vpop.f32.mrb[0].mxu0
      %v3693 = vadd.f32 %v3484, %v3692
      %v3694 = vpop.f32.mrb[0].mxu0
      %3695 = vmatprep.mubr.bf16.mxu0 0
      %3696 = vmatmul.mubr.bf16.gmra.mrb[0].mxu0 %v3225
      %v3697 = vpop.f32.mrb[0].mxu0
      %v3698 = vadd.f32 %v3489, %v3697
      %v3699 = vpop.f32.mrb[0].mxu0
      %v3700 = vpop.f32.mrb[0].mxu0
      %v3701 = vadd.f32 %v3492, %v3700
      %v3702 = vpop.f32.mrb[0].mxu0
      %3703 = vmatprep.mubr.bf16.mxu0 0
      %3704 = vmatmul.mubr.bf16.gmra.mrb[0].mxu0 %v3226
      %v3705 = vpop.f32.mrb[0].mxu0
      %v3706 = vadd.f32 %v3497, %v3705
      %v3707 = vpop.f32.mrb[0].mxu0
      %v3708 = vpop.f32.mrb[0].mxu0
      %v3709 = vadd.f32 %v3500, %v3708
      %v3710 = vpop.f32.mrb[0].mxu0
      %3711 = vmatprep.mubr.bf16.mxu0 0
      %3712 = vmatmul.mubr.bf16.gmra.mrb[0].mxu0 %v3227
      %v3713 = vpop.f32.mrb[0].mxu0
      %v3714 = vadd.f32 %v3505, %v3713
      %v3715 = vpop.f32.mrb[0].mxu0
      %v3716 = vpop.f32.mrb[0].mxu0
      %v3717 = vadd.f32 %v3508, %v3716
      %v3718 = vpop.f32.mrb[0].mxu0
      %3719 = vmatprep.mubr.bf16.mxu0 0
      %3720 = vmatmul.mubr.bf16.gmra.mrb[0].mxu0 %v3228
      %v3721 = vpop.f32.mrb[0].mxu0
      %v3722 = vadd.f32 %v3513, %v3721
      %v3723 = vpop.f32.mrb[0].mxu0
      %v3724 = vpop.f32.mrb[0].mxu0
      %v3725 = vadd.f32 %v3516, %v3724
      %v3726 = vpop.f32.mrb[0].mxu0
      %3727 = vdwg.mxu0
      %v3728 = vld [vmem:[#allocation3 + $0x2] sm:$0xff]
      %v3729 = vld [vmem:[#allocation3 + $0xa] sm:$0xff]
      %v3730 = vld [vmem:[#allocation3 + $0x1a] sm:$0xff]
      %v3731 = vld [vmem:[#allocation3 + $0x22] sm:$0xff]
      %v3732 = vld [vmem:[#allocation3 + $0x32] sm:$0xff]
      %v3733 = vld [vmem:[#allocation3 + $0x3a] sm:$0xff]
      %v3734 = vld [vmem:[#allocation3 + $0x4a] sm:$0xff]
      %v3735 = vld [vmem:[#allocation3 + $0x52] sm:$0xff]
      %v3736 = vld [vmem:[#allocation3 + $0x62] sm:$0xff]
      %v3737 = vld [vmem:[#allocation3 + $0x6a] sm:$0xff]
      %v3738 = vld [vmem:[#allocation3 + $0x7a] sm:$0xff]
      %v3739 = vld [vmem:[#allocation3 + $0x82] sm:$0xff]
      %v3740 = vld [vmem:[#allocation3 + $0x92] sm:$0xff]
      %v3741 = vld [vmem:[#allocation3 + $0x9a] sm:$0xff]
      %v3742 = vld [vmem:[#allocation3 + $0xaa] sm:$0xff]
      %v3743 = vld [vmem:[#allocation3 + $0xb2] sm:$0xff]
      %v3744 = vld [vmem:[#allocation3 + $0xc2] sm:$0xff]
      %v3745 = vld [vmem:[#allocation3 + $0xca] sm:$0xff]
      %v3746 = vld [vmem:[#allocation3 + $0xda] sm:$0xff]
      %v3747 = vld [vmem:[#allocation3 + $0xe2] sm:$0xff]
      %v3748 = vld [vmem:[#allocation3 + $0xf2] sm:$0xff]
      %v3749 = vld [vmem:[#allocation3 + $0xfa] sm:$0xff]
      %v3750 = vld [vmem:[#allocation3 + $0x10a] sm:$0xff]
      %v3751 = vld [vmem:[#allocation3 + $0x112] sm:$0xff]
      %v3752 = vld [vmem:[#allocation3 + $0x122] sm:$0xff]
      %v3753 = vld [vmem:[#allocation3 + $0x12a] sm:$0xff]
      %v3754 = vld [vmem:[#allocation3 + $0x13a] sm:$0xff]
      %v3755 = vld [vmem:[#allocation3 + $0x142] sm:$0xff]
      %v3756 = vld [vmem:[#allocation3 + $0x152] sm:$0xff]
      %v3757 = vld [vmem:[#allocation3 + $0x15a] sm:$0xff]
      %v3758 = vld [vmem:[#allocation3 + $0x16a] sm:$0xff]
      %v3759 = vld [vmem:[#allocation3 + $0x172] sm:$0xff]
      %v3760 = vpack.c.bf16 %v3729, %v3728
      %v3761 = vpack.c.bf16 %v3731, %v3730
      %v3762 = vpack.c.bf16 %v3733, %v3732
      %v3763 = vpack.c.bf16 %v3735, %v3734
      %v3764 = vpack.c.bf16 %v3737, %v3736
      %v3765 = vpack.c.bf16 %v3739, %v3738
      %v3766 = vpack.c.bf16 %v3741, %v3740
      %v3767 = vpack.c.bf16 %v3743, %v3742
      %v3768 = vpack.c.bf16 %v3745, %v3744
      %v3769 = vpack.c.bf16 %v3747, %v3746
      %v3770 = vpack.c.bf16 %v3749, %v3748
      %v3771 = vpack.c.bf16 %v3751, %v3750
      %v3772 = vpack.c.bf16 %v3753, %v3752
      %v3773 = vpack.c.bf16 %v3755, %v3754
      %v3774 = vpack.c.bf16 %v3757, %v3756
      %v3775 = vpack.c.bf16 %v3759, %v3758
      %s3776 = scalar_lea.vmem %s4, 128
      %v3777 = vld [vmem:[%s3776] sm:$0xf]
      %v3778 = vld [vmem:[%s3776 + $0x4] sm:$0xf]
      %v3779 = vld [vmem:[%s3776 + $0x8] sm:$0xf]
      %v3780 = vld [vmem:[%s3776 + $0xc] sm:$0xf]
      %v3781 = vld [vmem:[%s3776 + $0x10] sm:$0xf]
      %v3782 = vld [vmem:[%s3776 + $0x14] sm:$0xf]
      %v3783 = vld [vmem:[%s3776 + $0x18] sm:$0xf]
      %v3784 = vld [vmem:[%s3776 + $0x1c] sm:$0xf]
      %v3785 = vld [vmem:[%s3776 + $0x20] sm:$0xf]
      %v3786 = vld [vmem:[%s3776 + $0x24] sm:$0xf]
      %v3787 = vld [vmem:[%s3776 + $0x28] sm:$0xf]
      %v3788 = vld [vmem:[%s3776 + $0x2c] sm:$0xf]
      %v3789 = vld [vmem:[%s3776 + $0x30] sm:$0xf]
      %v3790 = vld [vmem:[%s3776 + $0x34] sm:$0xf]
      %v3791 = vld [vmem:[%s3776 + $0x38] sm:$0xf]
      %v3792 = vld [vmem:[%s3776 + $0x3c] sm:$0xf]
      %v3809 = vunpack.c.l.b16 %v3777
      %v3810 = vunpack.c.l.b16 %v3778
      %v3811 = vunpack.c.l.b16 %v3779
      %v3812 = vunpack.c.l.b16 %v3780
      %v3813 = vunpack.c.l.b16 %v3781
      %v3814 = vunpack.c.l.b16 %v3782
      %v3815 = vunpack.c.l.b16 %v3783
      %v3816 = vunpack.c.l.b16 %v3784
      %v3817 = vunpack.c.l.b16 %v3785
      %v3818 = vunpack.c.l.b16 %v3786
      %v3819 = vunpack.c.l.b16 %v3787
      %v3820 = vunpack.c.l.b16 %v3788
      %v3821 = vunpack.c.l.b16 %v3789
      %v3822 = vunpack.c.l.b16 %v3790
      %v3823 = vunpack.c.l.b16 %v3791
      %v3824 = vunpack.c.l.b16 %v3792
      %v3825 = vpack.c.b16 %v3810, %v3809
      %v3826 = vpack.c.b16 %v3812, %v3811
      %v3827 = vpack.c.b16 %v3814, %v3813
      %v3828 = vpack.c.b16 %v3816, %v3815
      %v3829 = vpack.c.b16 %v3818, %v3817
      %v3830 = vpack.c.b16 %v3820, %v3819
      %v3831 = vpack.c.b16 %v3822, %v3821
      %v3832 = vpack.c.b16 %v3824, %v3823
      %3841 = vmatprep.subr.bf16.mxu0 0
      %3842 = vmatpush1.bf16.msra.mxu0 %v3825
      %3843 = vmatprep.subr.bf16.mxu0 0
      %3844 = vmatpush1.bf16.msra.mxu0 %v3826
      %3845 = vmatprep.subr.bf16.mxu0 0
      %3846 = vmatpush1.bf16.msra.mxu0 %v3827
      %3847 = vmatprep.subr.bf16.mxu0 0
      %3848 = vmatpush1.bf16.msra.mxu0 %v3828
      %3849 = vmatprep.subr.bf16.mxu0 0
      %3850 = vmatpush1.bf16.msra.mxu0 %v3829
      %3851 = vmatprep.subr.bf16.mxu0 0
      %3852 = vmatpush1.bf16.msra.mxu0 %v3830
      %3853 = vmatprep.subr.bf16.mxu0 0
      %3854 = vmatpush1.bf16.msra.mxu0 %v3831
      %3855 = vmatprep.subr.bf16.mxu0 0
      %3856 = vmatpush1.bf16.msra.mxu0 %v3832
      %3857 = vmatprep.subr.bf16.mxu0 0
      %3858 = vmatpush1.bf16.msra.mxu0 0
      %3859 = vmatprep.subr.bf16.mxu0 0
      %3860 = vmatpush1.bf16.msra.mxu0 0
      %3861 = vmatprep.subr.bf16.mxu0 0
      %3862 = vmatpush1.bf16.msra.mxu0 0
      %3863 = vmatprep.subr.bf16.mxu0 0
      %3864 = vmatpush1.bf16.msra.mxu0 0
      %3865 = vmatprep.subr.bf16.mxu0 0
      %3866 = vmatpush1.bf16.msra.mxu0 0
      %3867 = vmatprep.subr.bf16.mxu0 0
      %3868 = vmatpush1.bf16.msra.mxu0 0
      %3869 = vmatprep.subr.bf16.mxu0 0
      %3870 = vmatpush1.bf16.msra.mxu0 0
      %3871 = vmatprep.subr.bf16.mxu0 0
      %3872 = vmatpush1.bf16.msra.mxu0 0
      %3873 = vmatprep.mubr.bf16.mxu0 0
      %3874 = vmatmul.mubr.bf16.gmra.mrb[0].mxu0 %v3760
      %v3875 = vpop.f32.mrb[0].mxu0
      %v3876 = vadd.f32 0.0, %v3875
      %v3877 = vpop.f32.mrb[0].mxu0
      %v3878 = vpop.f32.mrb[0].mxu0
      %v3879 = vadd.f32 0.0, %v3878
      %v3880 = vpop.f32.mrb[0].mxu0
      %3881 = vmatprep.mubr.bf16.mxu0 0
      %3882 = vmatmul.mubr.bf16.gmra.mrb[0].mxu0 %v3761
      %v3883 = vpop.f32.mrb[0].mxu0
      %v3884 = vadd.f32 0.0, %v3883
      %v3885 = vpop.f32.mrb[0].mxu0
      %v3886 = vpop.f32.mrb[0].mxu0
      %v3887 = vadd.f32 0.0, %v3886
      %v3888 = vpop.f32.mrb[0].mxu0
      %3889 = vmatprep.mubr.bf16.mxu0 0
      %3890 = vmatmul.mubr.bf16.gmra.mrb[0].mxu0 %v3762
      %v3891 = vpop.f32.mrb[0].mxu0
      %v3892 = vadd.f32 0.0, %v3891
      %v3893 = vpop.f32.mrb[0].mxu0
      %v3894 = vpop.f32.mrb[0].mxu0
      %v3895 = vadd.f32 0.0, %v3894
      %v3896 = vpop.f32.mrb[0].mxu0
      %3897 = vmatprep.mubr.bf16.mxu0 0
      %3898 = vmatmul.mubr.bf16.gmra.mrb[0].mxu0 %v3763
      %v3899 = vpop.f32.mrb[0].mxu0
      %v3900 = vadd.f32 0.0, %v3899
      %v3901 = vpop.f32.mrb[0].mxu0
      %v3902 = vpop.f32.mrb[0].mxu0
      %v3903 = vadd.f32 0.0, %v3902
      %v3904 = vpop.f32.mrb[0].mxu0
      %3905 = vmatprep.mubr.bf16.mxu0 0
      %3906 = vmatmul.mubr.bf16.gmra.mrb[0].mxu0 %v3764
      %v3907 = vpop.f32.mrb[0].mxu0
      %v3908 = vadd.f32 0.0, %v3907
      %v3909 = vpop.f32.mrb[0].mxu0
      %v3910 = vpop.f32.mrb[0].mxu0
      %v3911 = vadd.f32 0.0, %v3910
      %v3912 = vpop.f32.mrb[0].mxu0
      %3913 = vmatprep.mubr.bf16.mxu0 0
      %3914 = vmatmul.mubr.bf16.gmra.mrb[0].mxu0 %v3765
      %v3915 = vpop.f32.mrb[0].mxu0
      %v3916 = vadd.f32 0.0, %v3915
      %v3917 = vpop.f32.mrb[0].mxu0
      %v3918 = vpop.f32.mrb[0].mxu0
      %v3919 = vadd.f32 0.0, %v3918
      %v3920 = vpop.f32.mrb[0].mxu0
      %3921 = vmatprep.mubr.bf16.mxu0 0
      %3922 = vmatmul.mubr.bf16.gmra.mrb[0].mxu0 %v3766
      %v3923 = vpop.f32.mrb[0].mxu0
      %v3924 = vadd.f32 0.0, %v3923
      %v3925 = vpop.f32.mrb[0].mxu0
      %v3926 = vpop.f32.mrb[0].mxu0
      %v3927 = vadd.f32 0.0, %v3926
      %v3928 = vpop.f32.mrb[0].mxu0
      %3929 = vmatprep.mubr.bf16.mxu0 0
      %3930 = vmatmul.mubr.bf16.gmra.mrb[0].mxu0 %v3767
      %v3931 = vpop.f32.mrb[0].mxu0
      %v3932 = vadd.f32 0.0, %v3931
      %v3933 = vpop.f32.mrb[0].mxu0
      %v3934 = vpop.f32.mrb[0].mxu0
      %v3935 = vadd.f32 0.0, %v3934
      %v3936 = vpop.f32.mrb[0].mxu0
      %3937 = vmatprep.mubr.bf16.mxu0 0
      %3938 = vmatmul.mubr.bf16.gmra.mrb[0].mxu0 %v3768
      %v3939 = vpop.f32.mrb[0].mxu0
      %v3940 = vadd.f32 0.0, %v3939
      %v3941 = vpop.f32.mrb[0].mxu0
      %v3942 = vpop.f32.mrb[0].mxu0
      %v3943 = vadd.f32 0.0, %v3942
      %v3944 = vpop.f32.mrb[0].mxu0
      %3945 = vmatprep.mubr.bf16.mxu0 0
      %3946 = vmatmul.mubr.bf16.gmra.mrb[0].mxu0 %v3769
      %v3947 = vpop.f32.mrb[0].mxu0
      %v3948 = vadd.f32 0.0, %v3947
      %v3949 = vpop.f32.mrb[0].mxu0
      %v3950 = vpop.f32.mrb[0].mxu0
      %v3951 = vadd.f32 0.0, %v3950
      %v3952 = vpop.f32.mrb[0].mxu0
      %3953 = vmatprep.mubr.bf16.mxu0 0
      %3954 = vmatmul.mubr.bf16.gmra.mrb[0].mxu0 %v3770
      %v3955 = vpop.f32.mrb[0].mxu0
      %v3956 = vadd.f32 0.0, %v3955
      %v3957 = vpop.f32.mrb[0].mxu0
      %v3958 = vpop.f32.mrb[0].mxu0
      %v3959 = vadd.f32 0.0, %v3958
      %v3960 = vpop.f32.mrb[0].mxu0
      %3961 = vmatprep.mubr.bf16.mxu0 0
      %3962 = vmatmul.mubr.bf16.gmra.mrb[0].mxu0 %v3771
      %v3963 = vpop.f32.mrb[0].mxu0
      %v3964 = vadd.f32 0.0, %v3963
      %v3965 = vpop.f32.mrb[0].mxu0
      %v3966 = vpop.f32.mrb[0].mxu0
      %v3967 = vadd.f32 0.0, %v3966
      %v3968 = vpop.f32.mrb[0].mxu0
      %3969 = vmatprep.mubr.bf16.mxu0 0
      %3970 = vmatmul.mubr.bf16.gmra.mrb[0].mxu0 %v3772
      %v3971 = vpop.f32.mrb[0].mxu0
      %v3972 = vadd.f32 0.0, %v3971
      %v3973 = vpop.f32.mrb[0].mxu0
      %v3974 = vpop.f32.mrb[0].mxu0
      %v3975 = vadd.f32 0.0, %v3974
      %v3976 = vpop.f32.mrb[0].mxu0
      %3977 = vmatprep.mubr.bf16.mxu0 0
      %3978 = vmatmul.mubr.bf16.gmra.mrb[0].mxu0 %v3773
      %v3979 = vpop.f32.mrb[0].mxu0
      %v3980 = vadd.f32 0.0, %v3979
      %v3981 = vpop.f32.mrb[0].mxu0
      %v3982 = vpop.f32.mrb[0].mxu0
      %v3983 = vadd.f32 0.0, %v3982
      %v3984 = vpop.f32.mrb[0].mxu0
      %3985 = vmatprep.mubr.bf16.mxu0 0
      %3986 = vmatmul.mubr.bf16.gmra.mrb[0].mxu0 %v3774
      %v3987 = vpop.f32.mrb[0].mxu0
      %v3988 = vadd.f32 0.0, %v3987
      %v3989 = vpop.f32.mrb[0].mxu0
      %v3990 = vpop.f32.mrb[0].mxu0
      %v3991 = vadd.f32 0.0, %v3990
      %v3992 = vpop.f32.mrb[0].mxu0
      %3993 = vmatprep.mubr.bf16.mxu0 0
      %3994 = vmatmul.mubr.bf16.gmra.mrb[0].mxu0 %v3775
      %v3995 = vpop.f32.mrb[0].mxu0
      %v3996 = vadd.f32 0.0, %v3995
      %v3997 = vpop.f32.mrb[0].mxu0
      %v3998 = vpop.f32.mrb[0].mxu0
      %v3999 = vadd.f32 0.0, %v3998
      %v4000 = vpop.f32.mrb[0].mxu0
      %4001 = vdwg.mxu0
      %v4002 = vadd.f32 %v3602, %v3876
      %v4003 = vadd.f32 %v3605, %v3879
      %v4004 = vadd.f32 %v3610, %v3884
      %v4005 = vadd.f32 %v3613, %v3887
      %v4006 = vadd.f32 %v3618, %v3892
      %v4007 = vadd.f32 %v3621, %v3895
      %v4008 = vadd.f32 %v3626, %v3900
      %v4009 = vadd.f32 %v3629, %v3903
      %v4010 = vadd.f32 %v3634, %v3908
      %v4011 = vadd.f32 %v3637, %v3911
      %v4012 = vadd.f32 %v3642, %v3916
      %v4013 = vadd.f32 %v3645, %v3919
      %v4014 = vadd.f32 %v3650, %v3924
      %v4015 = vadd.f32 %v3653, %v3927
      %v4016 = vadd.f32 %v3658, %v3932
      %v4017 = vadd.f32 %v3661, %v3935
      %v4018 = vadd.f32 %v3666, %v3940
      %v4019 = vadd.f32 %v3669, %v3943
      %v4020 = vadd.f32 %v3674, %v3948
      %v4021 = vadd.f32 %v3677, %v3951
      %v4022 = vadd.f32 %v3682, %v3956
      %v4023 = vadd.f32 %v3685, %v3959
      %v4024 = vadd.f32 %v3690, %v3964
      %v4025 = vadd.f32 %v3693, %v3967
      %v4026 = vadd.f32 %v3698, %v3972
      %v4027 = vadd.f32 %v3701, %v3975
      %v4028 = vadd.f32 %v3706, %v3980
      %v4029 = vadd.f32 %v3709, %v3983
      %v4030 = vadd.f32 %v3714, %v3988
      %v4031 = vadd.f32 %v3717, %v3991
      %v4032 = vadd.f32 %v3722, %v3996
      %v4033 = vadd.f32 %v3725, %v3999
      %v4034 = vld [vmem:[%s3148] sm:$0xff]
      %v4035 = vld [vmem:[%s3148 + $0x8] sm:$0xff]
      %v4036 = vld [vmem:[%s3148 + $0x18] sm:$0xff]
      %v4037 = vld [vmem:[%s3148 + $0x20] sm:$0xff]
      %v4038 = vld [vmem:[%s3148 + $0x30] sm:$0xff]
      %v4039 = vld [vmem:[%s3148 + $0x38] sm:$0xff]
      %v4040 = vld [vmem:[%s3148 + $0x48] sm:$0xff]
      %v4041 = vld [vmem:[%s3148 + $0x50] sm:$0xff]
      %v4042 = vld [vmem:[%s3148 + $0x60] sm:$0xff]
      %v4043 = vld [vmem:[%s3148 + $0x68] sm:$0xff]
      %v4044 = vld [vmem:[%s3148 + $0x78] sm:$0xff]
      %v4045 = vld [vmem:[%s3148 + $0x80] sm:$0xff]
      %v4046 = vld [vmem:[%s3148 + $0x90] sm:$0xff]
      %v4047 = vld [vmem:[%s3148 + $0x98] sm:$0xff]
      %v4048 = vld [vmem:[%s3148 + $0xa8] sm:$0xff]
      %v4049 = vld [vmem:[%s3148 + $0xb0] sm:$0xff]
      %v4050 = vld [vmem:[%s3148 + $0xc0] sm:$0xff]
      %v4051 = vld [vmem:[%s3148 + $0xc8] sm:$0xff]
      %v4052 = vld [vmem:[%s3148 + $0xd8] sm:$0xff]
      %v4053 = vld [vmem:[%s3148 + $0xe0] sm:$0xff]
      %v4054 = vld [vmem:[%s3148 + $0xf0] sm:$0xff]
      %v4055 = vld [vmem:[%s3148 + $0xf8] sm:$0xff]
      %v4056 = vld [vmem:[%s3148 + $0x108] sm:$0xff]
      %v4057 = vld [vmem:[%s3148 + $0x110] sm:$0xff]
      %v4058 = vld [vmem:[%s3148 + $0x120] sm:$0xff]
      %v4059 = vld [vmem:[%s3148 + $0x128] sm:$0xff]
      %v4060 = vld [vmem:[%s3148 + $0x138] sm:$0xff]
      %v4061 = vld [vmem:[%s3148 + $0x140] sm:$0xff]
      %v4062 = vld [vmem:[%s3148 + $0x150] sm:$0xff]
      %v4063 = vld [vmem:[%s3148 + $0x158] sm:$0xff]
      %v4064 = vld [vmem:[%s3148 + $0x168] sm:$0xff]
      %v4065 = vld [vmem:[%s3148 + $0x170] sm:$0xff]
      %v4066 = vpack.c.bf16 %v4035, %v4034
      %v4067 = vpack.c.bf16 %v4037, %v4036
      %v4068 = vpack.c.bf16 %v4039, %v4038
      %v4069 = vpack.c.bf16 %v4041, %v4040
      %v4070 = vpack.c.bf16 %v4043, %v4042
      %v4071 = vpack.c.bf16 %v4045, %v4044
      %v4072 = vpack.c.bf16 %v4047, %v4046
      %v4073 = vpack.c.bf16 %v4049, %v4048
      %v4074 = vpack.c.bf16 %v4051, %v4050
      %v4075 = vpack.c.bf16 %v4053, %v4052
      %v4076 = vpack.c.bf16 %v4055, %v4054
      %v4077 = vpack.c.bf16 %v4057, %v4056
      %v4078 = vpack.c.bf16 %v4059, %v4058
      %v4079 = vpack.c.bf16 %v4061, %v4060
      %v4080 = vpack.c.bf16 %v4063, %v4062
      %v4081 = vpack.c.bf16 %v4065, %v4064
      %s4082 = scalar_lea.vmem %s4, 192
      %v4083 = vld [vmem:[%s4082] sm:$0xf]
      %v4084 = vld [vmem:[%s4082 + $0x4] sm:$0xf]
      %v4085 = vld [vmem:[%s4082 + $0x8] sm:$0xf]
      %v4086 = vld [vmem:[%s4082 + $0xc] sm:$0xf]
      %v4087 = vld [vmem:[%s4082 + $0x10] sm:$0xf]
      %v4088 = vld [vmem:[%s4082 + $0x14] sm:$0xf]
      %v4089 = vld [vmem:[%s4082 + $0x18] sm:$0xf]
      %v4090 = vld [vmem:[%s4082 + $0x1c] sm:$0xf]
      %v4091 = vld [vmem:[%s4082 + $0x20] sm:$0xf]
      %v4092 = vld [vmem:[%s4082 + $0x24] sm:$0xf]
      %v4093 = vld [vmem:[%s4082 + $0x28] sm:$0xf]
      %v4094 = vld [vmem:[%s4082 + $0x2c] sm:$0xf]
      %v4095 = vld [vmem:[%s4082 + $0x30] sm:$0xf]
      %v4096 = vld [vmem:[%s4082 + $0x34] sm:$0xf]
      %v4097 = vld [vmem:[%s4082 + $0x38] sm:$0xf]
      %v4098 = vld [vmem:[%s4082 + $0x3c] sm:$0xf]
      %v4115 = vunpack.c.l.b16 %v4083
      %v4116 = vunpack.c.l.b16 %v4084
      %v4117 = vunpack.c.l.b16 %v4085
      %v4118 = vunpack.c.l.b16 %v4086
      %v4119 = vunpack.c.l.b16 %v4087
      %v4120 = vunpack.c.l.b16 %v4088
      %v4121 = vunpack.c.l.b16 %v4089
      %v4122 = vunpack.c.l.b16 %v4090
      %v4123 = vunpack.c.l.b16 %v4091
      %v4124 = vunpack.c.l.b16 %v4092
      %v4125 = vunpack.c.l.b16 %v4093
      %v4126 = vunpack.c.l.b16 %v4094
      %v4127 = vunpack.c.l.b16 %v4095
      %v4128 = vunpack.c.l.b16 %v4096
      %v4129 = vunpack.c.l.b16 %v4097
      %v4130 = vunpack.c.l.b16 %v4098
      %v4131 = vpack.c.b16 %v4116, %v4115
      %v4132 = vpack.c.b16 %v4118, %v4117
      %v4133 = vpack.c.b16 %v4120, %v4119
      %v4134 = vpack.c.b16 %v4122, %v4121
      %v4135 = vpack.c.b16 %v4124, %v4123
      %v4136 = vpack.c.b16 %v4126, %v4125
      %v4137 = vpack.c.b16 %v4128, %v4127
      %v4138 = vpack.c.b16 %v4130, %v4129
      %4147 = vmatprep.subr.bf16.mxu0 0
      %4148 = vmatpush1.bf16.msra.mxu0 %v4131
      %4149 = vmatprep.subr.bf16.mxu0 0
      %4150 = vmatpush1.bf16.msra.mxu0 %v4132
      %4151 = vmatprep.subr.bf16.mxu0 0
      %4152 = vmatpush1.bf16.msra.mxu0 %v4133
      %4153 = vmatprep.subr.bf16.mxu0 0
      %4154 = vmatpush1.bf16.msra.mxu0 %v4134
      %4155 = vmatprep.subr.bf16.mxu0 0
      %4156 = vmatpush1.bf16.msra.mxu0 %v4135
      %4157 = vmatprep.subr.bf16.mxu0 0
      %4158 = vmatpush1.bf16.msra.mxu0 %v4136
      %4159 = vmatprep.subr.bf16.mxu0 0
      %4160 = vmatpush1.bf16.msra.mxu0 %v4137
      %4161 = vmatprep.subr.bf16.mxu0 0
      %4162 = vmatpush1.bf16.msra.mxu0 %v4138
      %4163 = vmatprep.subr.bf16.mxu0 0
      %4164 = vmatpush1.bf16.msra.mxu0 0
      %4165 = vmatprep.subr.bf16.mxu0 0
      %4166 = vmatpush1.bf16.msra.mxu0 0
      %4167 = vmatprep.subr.bf16.mxu0 0
      %4168 = vmatpush1.bf16.msra.mxu0 0
      %4169 = vmatprep.subr.bf16.mxu0 0
      %4170 = vmatpush1.bf16.msra.mxu0 0
      %4171 = vmatprep.subr.bf16.mxu0 0
      %4172 = vmatpush1.bf16.msra.mxu0 0
      %4173 = vmatprep.subr.bf16.mxu0 0
      %4174 = vmatpush1.bf16.msra.mxu0 0
      %4175 = vmatprep.subr.bf16.mxu0 0
      %4176 = vmatpush1.bf16.msra.mxu0 0
      %4177 = vmatprep.subr.bf16.mxu0 0
      %4178 = vmatpush1.bf16.msra.mxu0 0
      %4179 = vmatprep.mubr.bf16.mxu0 0
      %4180 = vmatmul.mubr.bf16.gmra.mrb[0].mxu0 %v4066
      %v4181 = vpop.f32.mrb[0].mxu0
      %v4182 = vadd.f32 0.0, %v4181
      %v4183 = vpop.f32.mrb[0].mxu0
      %v4184 = vpop.f32.mrb[0].mxu0
      %v4185 = vadd.f32 0.0, %v4184
      %v4186 = vpop.f32.mrb[0].mxu0
      %4187 = vmatprep.mubr.bf16.mxu0 0
      %4188 = vmatmul.mubr.bf16.gmra.mrb[0].mxu0 %v4067
      %v4189 = vpop.f32.mrb[0].mxu0
      %v4190 = vadd.f32 0.0, %v4189
      %v4191 = vpop.f32.mrb[0].mxu0
      %v4192 = vpop.f32.mrb[0].mxu0
      %v4193 = vadd.f32 0.0, %v4192
      %v4194 = vpop.f32.mrb[0].mxu0
      %4195 = vmatprep.mubr.bf16.mxu0 0
      %4196 = vmatmul.mubr.bf16.gmra.mrb[0].mxu0 %v4068
      %v4197 = vpop.f32.mrb[0].mxu0
      %v4198 = vadd.f32 0.0, %v4197
      %v4199 = vpop.f32.mrb[0].mxu0
      %v4200 = vpop.f32.mrb[0].mxu0
      %v4201 = vadd.f32 0.0, %v4200
      %v4202 = vpop.f32.mrb[0].mxu0
      %4203 = vmatprep.mubr.bf16.mxu0 0
      %4204 = vmatmul.mubr.bf16.gmra.mrb[0].mxu0 %v4069
      %v4205 = vpop.f32.mrb[0].mxu0
      %v4206 = vadd.f32 0.0, %v4205
      %v4207 = vpop.f32.mrb[0].mxu0
      %v4208 = vpop.f32.mrb[0].mxu0
      %v4209 = vadd.f32 0.0, %v4208
      %v4210 = vpop.f32.mrb[0].mxu0
      %4211 = vmatprep.mubr.bf16.mxu0 0
      %4212 = vmatmul.mubr.bf16.gmra.mrb[0].mxu0 %v4070
      %v4213 = vpop.f32.mrb[0].mxu0
      %v4214 = vadd.f32 0.0, %v4213
      %v4215 = vpop.f32.mrb[0].mxu0
      %v4216 = vpop.f32.mrb[0].mxu0
      %v4217 = vadd.f32 0.0, %v4216
      %v4218 = vpop.f32.mrb[0].mxu0
      %4219 = vmatprep.mubr.bf16.mxu0 0
      %4220 = vmatmul.mubr.bf16.gmra.mrb[0].mxu0 %v4071
      %v4221 = vpop.f32.mrb[0].mxu0
      %v4222 = vadd.f32 0.0, %v4221
      %v4223 = vpop.f32.mrb[0].mxu0
      %v4224 = vpop.f32.mrb[0].mxu0
      %v4225 = vadd.f32 0.0, %v4224
      %v4226 = vpop.f32.mrb[0].mxu0
      %4227 = vmatprep.mubr.bf16.mxu0 0
      %4228 = vmatmul.mubr.bf16.gmra.mrb[0].mxu0 %v4072
      %v4229 = vpop.f32.mrb[0].mxu0
      %v4230 = vadd.f32 0.0, %v4229
      %v4231 = vpop.f32.mrb[0].mxu0
      %v4232 = vpop.f32.mrb[0].mxu0
      %v4233 = vadd.f32 0.0, %v4232
      %v4234 = vpop.f32.mrb[0].mxu0
      %4235 = vmatprep.mubr.bf16.mxu0 0
      %4236 = vmatmul.mubr.bf16.gmra.mrb[0].mxu0 %v4073
      %v4237 = vpop.f32.mrb[0].mxu0
      %v4238 = vadd.f32 0.0, %v4237
      %v4239 = vpop.f32.mrb[0].mxu0
      %v4240 = vpop.f32.mrb[0].mxu0
      %v4241 = vadd.f32 0.0, %v4240
      %v4242 = vpop.f32.mrb[0].mxu0
      %4243 = vmatprep.mubr.bf16.mxu0 0
      %4244 = vmatmul.mubr.bf16.gmra.mrb[0].mxu0 %v4074
      %v4245 = vpop.f32.mrb[0].mxu0
      %v4246 = vadd.f32 0.0, %v4245
      %v4247 = vpop.f32.mrb[0].mxu0
      %v4248 = vpop.f32.mrb[0].mxu0
      %v4249 = vadd.f32 0.0, %v4248
      %v4250 = vpop.f32.mrb[0].mxu0
      %4251 = vmatprep.mubr.bf16.mxu0 0
      %4252 = vmatmul.mubr.bf16.gmra.mrb[0].mxu0 %v4075
      %v4253 = vpop.f32.mrb[0].mxu0
      %v4254 = vadd.f32 0.0, %v4253
      %v4255 = vpop.f32.mrb[0].mxu0
      %v4256 = vpop.f32.mrb[0].mxu0
      %v4257 = vadd.f32 0.0, %v4256
      %v4258 = vpop.f32.mrb[0].mxu0
      %4259 = vmatprep.mubr.bf16.mxu0 0
      %4260 = vmatmul.mubr.bf16.gmra.mrb[0].mxu0 %v4076
      %v4261 = vpop.f32.mrb[0].mxu0
      %v4262 = vadd.f32 0.0, %v4261
      %v4263 = vpop.f32.mrb[0].mxu0
      %v4264 = vpop.f32.mrb[0].mxu0
      %v4265 = vadd.f32 0.0, %v4264
      %v4266 = vpop.f32.mrb[0].mxu0
      %4267 = vmatprep.mubr.bf16.mxu0 0
      %4268 = vmatmul.mubr.bf16.gmra.mrb[0].mxu0 %v4077
      %v4269 = vpop.f32.mrb[0].mxu0
      %v4270 = vadd.f32 0.0, %v4269
      %v4271 = vpop.f32.mrb[0].mxu0
      %v4272 = vpop.f32.mrb[0].mxu0
      %v4273 = vadd.f32 0.0, %v4272
      %v4274 = vpop.f32.mrb[0].mxu0
      %4275 = vmatprep.mubr.bf16.mxu0 0
      %4276 = vmatmul.mubr.bf16.gmra.mrb[0].mxu0 %v4078
      %v4277 = vpop.f32.mrb[0].mxu0
      %v4278 = vadd.f32 0.0, %v4277
      %v4279 = vpop.f32.mrb[0].mxu0
      %v4280 = vpop.f32.mrb[0].mxu0
      %v4281 = vadd.f32 0.0, %v4280
      %v4282 = vpop.f32.mrb[0].mxu0
      %4283 = vmatprep.mubr.bf16.mxu0 0
      %4284 = vmatmul.mubr.bf16.gmra.mrb[0].mxu0 %v4079
      %v4285 = vpop.f32.mrb[0].mxu0
      %v4286 = vadd.f32 0.0, %v4285
      %v4287 = vpop.f32.mrb[0].mxu0
      %v4288 = vpop.f32.mrb[0].mxu0
      %v4289 = vadd.f32 0.0, %v4288
      %v4290 = vpop.f32.mrb[0].mxu0
      %4291 = vmatprep.mubr.bf16.mxu0 0
      %4292 = vmatmul.mubr.bf16.gmra.mrb[0].mxu0 %v4080
      %v4293 = vpop.f32.mrb[0].mxu0
      %v4294 = vadd.f32 0.0, %v4293
      %v4295 = vpop.f32.mrb[0].mxu0
      %v4296 = vpop.f32.mrb[0].mxu0
      %v4297 = vadd.f32 0.0, %v4296
      %v4298 = vpop.f32.mrb[0].mxu0
      %4299 = vmatprep.mubr.bf16.mxu0 0
      %4300 = vmatmul.mubr.bf16.gmra.mrb[0].mxu0 %v4081
      %v4301 = vpop.f32.mrb[0].mxu0
      %v4302 = vadd.f32 0.0, %v4301
      %v4303 = vpop.f32.mrb[0].mxu0
      %v4304 = vpop.f32.mrb[0].mxu0
      %v4305 = vadd.f32 0.0, %v4304
      %v4306 = vpop.f32.mrb[0].mxu0
      %4307 = vdwg.mxu0
      %v4308 = vadd.f32 %v4002, %v4182
      %v4309 = vadd.f32 %v4003, %v4185
      %v4310 = vadd.f32 %v4004, %v4190
      %v4311 = vadd.f32 %v4005, %v4193
      %v4312 = vadd.f32 %v4006, %v4198
      %v4313 = vadd.f32 %v4007, %v4201
      %v4314 = vadd.f32 %v4008, %v4206
      %v4315 = vadd.f32 %v4009, %v4209
      %v4316 = vadd.f32 %v4010, %v4214
      %v4317 = vadd.f32 %v4011, %v4217
      %v4318 = vadd.f32 %v4012, %v4222
      %v4319 = vadd.f32 %v4013, %v4225
      %v4320 = vadd.f32 %v4014, %v4230
      %v4321 = vadd.f32 %v4015, %v4233
      %v4322 = vadd.f32 %v4016, %v4238
      %v4323 = vadd.f32 %v4017, %v4241
      %v4324 = vadd.f32 %v4018, %v4246
      %v4325 = vadd.f32 %v4019, %v4249
      %v4326 = vadd.f32 %v4020, %v4254
      %v4327 = vadd.f32 %v4021, %v4257
      %v4328 = vadd.f32 %v4022, %v4262
      %v4329 = vadd.f32 %v4023, %v4265
      %v4330 = vadd.f32 %v4024, %v4270
      %v4331 = vadd.f32 %v4025, %v4273
      %v4332 = vadd.f32 %v4026, %v4278
      %v4333 = vadd.f32 %v4027, %v4281
      %v4334 = vadd.f32 %v4028, %v4286
      %v4335 = vadd.f32 %v4029, %v4289
      %v4336 = vadd.f32 %v4030, %v4294
      %v4337 = vadd.f32 %v4031, %v4297
      %v4338 = vadd.f32 %v4032, %v4302
      %v4339 = vadd.f32 %v4033, %v4305
      %v4340 = vld [vmem:[%s3148 + $0x1] sm:$0xff]
      %v4341 = vld [vmem:[%s3148 + $0x9] sm:$0xff]
      %v4342 = vld [vmem:[%s3148 + $0x19] sm:$0xff]
      %v4343 = vld [vmem:[%s3148 + $0x21] sm:$0xff]
      %v4344 = vld [vmem:[%s3148 + $0x31] sm:$0xff]
      %v4345 = vld [vmem:[%s3148 + $0x39] sm:$0xff]
      %v4346 = vld [vmem:[%s3148 + $0x49] sm:$0xff]
      %v4347 = vld [vmem:[%s3148 + $0x51] sm:$0xff]
      %v4348 = vld [vmem:[%s3148 + $0x61] sm:$0xff]
      %v4349 = vld [vmem:[%s3148 + $0x69] sm:$0xff]
      %v4350 = vld [vmem:[%s3148 + $0x79] sm:$0xff]
      %v4351 = vld [vmem:[%s3148 + $0x81] sm:$0xff]
      %v4352 = vld [vmem:[%s3148 + $0x91] sm:$0xff]
      %v4353 = vld [vmem:[%s3148 + $0x99] sm:$0xff]
      %v4354 = vld [vmem:[%s3148 + $0xa9] sm:$0xff]
      %v4355 = vld [vmem:[%s3148 + $0xb1] sm:$0xff]
      %v4356 = vld [vmem:[%s3148 + $0xc1] sm:$0xff]
      %v4357 = vld [vmem:[%s3148 + $0xc9] sm:$0xff]
      %v4358 = vld [vmem:[%s3148 + $0xd9] sm:$0xff]
      %v4359 = vld [vmem:[%s3148 + $0xe1] sm:$0xff]
      %v4360 = vld [vmem:[%s3148 + $0xf1] sm:$0xff]
      %v4361 = vld [vmem:[%s3148 + $0xf9] sm:$0xff]
      %v4362 = vld [vmem:[%s3148 + $0x109] sm:$0xff]
      %v4363 = vld [vmem:[%s3148 + $0x111] sm:$0xff]
      %v4364 = vld [vmem:[%s3148 + $0x121] sm:$0xff]
      %v4365 = vld [vmem:[%s3148 + $0x129] sm:$0xff]
      %v4366 = vld [vmem:[%s3148 + $0x139] sm:$0xff]
      %v4367 = vld [vmem:[%s3148 + $0x141] sm:$0xff]
      %v4368 = vld [vmem:[%s3148 + $0x151] sm:$0xff]
      %v4369 = vld [vmem:[%s3148 + $0x159] sm:$0xff]
      %v4370 = vld [vmem:[%s3148 + $0x169] sm:$0xff]
      %v4371 = vld [vmem:[%s3148 + $0x171] sm:$0xff]
      %v4372 = vpack.c.bf16 %v4341, %v4340
      %v4373 = vpack.c.bf16 %v4343, %v4342
      %v4374 = vpack.c.bf16 %v4345, %v4344
      %v4375 = vpack.c.bf16 %v4347, %v4346
      %v4376 = vpack.c.bf16 %v4349, %v4348
      %v4377 = vpack.c.bf16 %v4351, %v4350
      %v4378 = vpack.c.bf16 %v4353, %v4352
      %v4379 = vpack.c.bf16 %v4355, %v4354
      %v4380 = vpack.c.bf16 %v4357, %v4356
      %v4381 = vpack.c.bf16 %v4359, %v4358
      %v4382 = vpack.c.bf16 %v4361, %v4360
      %v4383 = vpack.c.bf16 %v4363, %v4362
      %v4384 = vpack.c.bf16 %v4365, %v4364
      %v4385 = vpack.c.bf16 %v4367, %v4366
      %v4386 = vpack.c.bf16 %v4369, %v4368
      %v4387 = vpack.c.bf16 %v4371, %v4370
      %s4388 = scalar_lea.vmem %s4, 256
      %v4389 = vld [vmem:[%s4388] sm:$0xf]
      %v4390 = vld [vmem:[%s4388 + $0x4] sm:$0xf]
      %v4391 = vld [vmem:[%s4388 + $0x8] sm:$0xf]
      %v4392 = vld [vmem:[%s4388 + $0xc] sm:$0xf]
      %v4393 = vld [vmem:[%s4388 + $0x10] sm:$0xf]
      %v4394 = vld [vmem:[%s4388 + $0x14] sm:$0xf]
      %v4395 = vld [vmem:[%s4388 + $0x18] sm:$0xf]
      %v4396 = vld [vmem:[%s4388 + $0x1c] sm:$0xf]
      %v4397 = vld [vmem:[%s4388 + $0x20] sm:$0xf]
      %v4398 = vld [vmem:[%s4388 + $0x24] sm:$0xf]
      %v4399 = vld [vmem:[%s4388 + $0x28] sm:$0xf]
      %v4400 = vld [vmem:[%s4388 + $0x2c] sm:$0xf]
      %v4401 = vld [vmem:[%s4388 + $0x30] sm:$0xf]
      %v4402 = vld [vmem:[%s4388 + $0x34] sm:$0xf]
      %v4403 = vld [vmem:[%s4388 + $0x38] sm:$0xf]
      %v4404 = vld [vmem:[%s4388 + $0x3c] sm:$0xf]
      %v4421 = vunpack.c.l.b16 %v4389
      %v4422 = vunpack.c.l.b16 %v4390
      %v4423 = vunpack.c.l.b16 %v4391
      %v4424 = vunpack.c.l.b16 %v4392
      %v4425 = vunpack.c.l.b16 %v4393
      %v4426 = vunpack.c.l.b16 %v4394
      %v4427 = vunpack.c.l.b16 %v4395
      %v4428 = vunpack.c.l.b16 %v4396
      %v4429 = vunpack.c.l.b16 %v4397
      %v4430 = vunpack.c.l.b16 %v4398
      %v4431 = vunpack.c.l.b16 %v4399
      %v4432 = vunpack.c.l.b16 %v4400
      %v4433 = vunpack.c.l.b16 %v4401
      %v4434 = vunpack.c.l.b16 %v4402
      %v4435 = vunpack.c.l.b16 %v4403
      %v4436 = vunpack.c.l.b16 %v4404
      %v4437 = vpack.c.b16 %v4422, %v4421
      %v4438 = vpack.c.b16 %v4424, %v4423
      %v4439 = vpack.c.b16 %v4426, %v4425
      %v4440 = vpack.c.b16 %v4428, %v4427
      %v4441 = vpack.c.b16 %v4430, %v4429
      %v4442 = vpack.c.b16 %v4432, %v4431
      %v4443 = vpack.c.b16 %v4434, %v4433
      %v4444 = vpack.c.b16 %v4436, %v4435
      %4453 = vmatprep.subr.bf16.mxu0 0
      %4454 = vmatpush1.bf16.msra.mxu0 %v4437
      %4455 = vmatprep.subr.bf16.mxu0 0
      %4456 = vmatpush1.bf16.msra.mxu0 %v4438
      %4457 = vmatprep.subr.bf16.mxu0 0
      %4458 = vmatpush1.bf16.msra.mxu0 %v4439
      %4459 = vmatprep.subr.bf16.mxu0 0
      %4460 = vmatpush1.bf16.msra.mxu0 %v4440
      %4461 = vmatprep.subr.bf16.mxu0 0
      %4462 = vmatpush1.bf16.msra.mxu0 %v4441
      %4463 = vmatprep.subr.bf16.mxu0 0
      %4464 = vmatpush1.bf16.msra.mxu0 %v4442
      %4465 = vmatprep.subr.bf16.mxu0 0
      %4466 = vmatpush1.bf16.msra.mxu0 %v4443
      %4467 = vmatprep.subr.bf16.mxu0 0
      %4468 = vmatpush1.bf16.msra.mxu0 %v4444
      %4469 = vmatprep.subr.bf16.mxu0 0
      %4470 = vmatpush1.bf16.msra.mxu0 0
      %4471 = vmatprep.subr.bf16.mxu0 0
      %4472 = vmatpush1.bf16.msra.mxu0 0
      %4473 = vmatprep.subr.bf16.mxu0 0
      %4474 = vmatpush1.bf16.msra.mxu0 0
      %4475 = vmatprep.subr.bf16.mxu0 0
      %4476 = vmatpush1.bf16.msra.mxu0 0
      %4477 = vmatprep.subr.bf16.mxu0 0
      %4478 = vmatpush1.bf16.msra.mxu0 0
      %4479 = vmatprep.subr.bf16.mxu0 0
      %4480 = vmatpush1.bf16.msra.mxu0 0
      %4481 = vmatprep.subr.bf16.mxu0 0
      %4482 = vmatpush1.bf16.msra.mxu0 0
      %4483 = vmatprep.subr.bf16.mxu0 0
      %4484 = vmatpush1.bf16.msra.mxu0 0
      %4485 = vmatprep.mubr.bf16.mxu0 0
      %4486 = vmatmul.mubr.bf16.gmra.mrb[0].mxu0 %v4372
      %v4487 = vpop.f32.mrb[0].mxu0
      %v4488 = vadd.f32 0.0, %v4487
      %v4489 = vpop.f32.mrb[0].mxu0
      %v4490 = vpop.f32.mrb[0].mxu0
      %v4491 = vadd.f32 0.0, %v4490
      %v4492 = vpop.f32.mrb[0].mxu0
      %4493 = vmatprep.mubr.bf16.mxu0 0
      %4494 = vmatmul.mubr.bf16.gmra.mrb[0].mxu0 %v4373
      %v4495 = vpop.f32.mrb[0].mxu0
      %v4496 = vadd.f32 0.0, %v4495
      %v4497 = vpop.f32.mrb[0].mxu0
      %v4498 = vpop.f32.mrb[0].mxu0
      %v4499 = vadd.f32 0.0, %v4498
      %v4500 = vpop.f32.mrb[0].mxu0
      %4501 = vmatprep.mubr.bf16.mxu0 0
      %4502 = vmatmul.mubr.bf16.gmra.mrb[0].mxu0 %v4374
      %v4503 = vpop.f32.mrb[0].mxu0
      %v4504 = vadd.f32 0.0, %v4503
      %v4505 = vpop.f32.mrb[0].mxu0
      %v4506 = vpop.f32.mrb[0].mxu0
      %v4507 = vadd.f32 0.0, %v4506
      %v4508 = vpop.f32.mrb[0].mxu0
      %4509 = vmatprep.mubr.bf16.mxu0 0
      %4510 = vmatmul.mubr.bf16.gmra.mrb[0].mxu0 %v4375
      %v4511 = vpop.f32.mrb[0].mxu0
      %v4512 = vadd.f32 0.0, %v4511
      %v4513 = vpop.f32.mrb[0].mxu0
      %v4514 = vpop.f32.mrb[0].mxu0
      %v4515 = vadd.f32 0.0, %v4514
      %v4516 = vpop.f32.mrb[0].mxu0
      %4517 = vmatprep.mubr.bf16.mxu0 0
      %4518 = vmatmul.mubr.bf16.gmra.mrb[0].mxu0 %v4376
      %v4519 = vpop.f32.mrb[0].mxu0
      %v4520 = vadd.f32 0.0, %v4519
      %v4521 = vpop.f32.mrb[0].mxu0
      %v4522 = vpop.f32.mrb[0].mxu0
      %v4523 = vadd.f32 0.0, %v4522
      %v4524 = vpop.f32.mrb[0].mxu0
      %4525 = vmatprep.mubr.bf16.mxu0 0
      %4526 = vmatmul.mubr.bf16.gmra.mrb[0].mxu0 %v4377
      %v4527 = vpop.f32.mrb[0].mxu0
      %v4528 = vadd.f32 0.0, %v4527
      %v4529 = vpop.f32.mrb[0].mxu0
      %v4530 = vpop.f32.mrb[0].mxu0
      %v4531 = vadd.f32 0.0, %v4530
      %v4532 = vpop.f32.mrb[0].mxu0
      %4533 = vmatprep.mubr.bf16.mxu0 0
      %4534 = vmatmul.mubr.bf16.gmra.mrb[0].mxu0 %v4378
      %v4535 = vpop.f32.mrb[0].mxu0
      %v4536 = vadd.f32 0.0, %v4535
      %v4537 = vpop.f32.mrb[0].mxu0
      %v4538 = vpop.f32.mrb[0].mxu0
      %v4539 = vadd.f32 0.0, %v4538
      %v4540 = vpop.f32.mrb[0].mxu0
      %4541 = vmatprep.mubr.bf16.mxu0 0
      %4542 = vmatmul.mubr.bf16.gmra.mrb[0].mxu0 %v4379
      %v4543 = vpop.f32.mrb[0].mxu0
      %v4544 = vadd.f32 0.0, %v4543
      %v4545 = vpop.f32.mrb[0].mxu0
      %v4546 = vpop.f32.mrb[0].mxu0
      %v4547 = vadd.f32 0.0, %v4546
      %v4548 = vpop.f32.mrb[0].mxu0
      %4549 = vmatprep.mubr.bf16.mxu0 0
      %4550 = vmatmul.mubr.bf16.gmra.mrb[0].mxu0 %v4380
      %v4551 = vpop.f32.mrb[0].mxu0
      %v4552 = vadd.f32 0.0, %v4551
      %v4553 = vpop.f32.mrb[0].mxu0
      %v4554 = vpop.f32.mrb[0].mxu0
      %v4555 = vadd.f32 0.0, %v4554
      %v4556 = vpop.f32.mrb[0].mxu0
      %4557 = vmatprep.mubr.bf16.mxu0 0
      %4558 = vmatmul.mubr.bf16.gmra.mrb[0].mxu0 %v4381
      %v4559 = vpop.f32.mrb[0].mxu0
      %v4560 = vadd.f32 0.0, %v4559
      %v4561 = vpop.f32.mrb[0].mxu0
      %v4562 = vpop.f32.mrb[0].mxu0
      %v4563 = vadd.f32 0.0, %v4562
      %v4564 = vpop.f32.mrb[0].mxu0
      %4565 = vmatprep.mubr.bf16.mxu0 0
      %4566 = vmatmul.mubr.bf16.gmra.mrb[0].mxu0 %v4382
      %v4567 = vpop.f32.mrb[0].mxu0
      %v4568 = vadd.f32 0.0, %v4567
      %v4569 = vpop.f32.mrb[0].mxu0
      %v4570 = vpop.f32.mrb[0].mxu0
      %v4571 = vadd.f32 0.0, %v4570
      %v4572 = vpop.f32.mrb[0].mxu0
      %4573 = vmatprep.mubr.bf16.mxu0 0
      %4574 = vmatmul.mubr.bf16.gmra.mrb[0].mxu0 %v4383
      %v4575 = vpop.f32.mrb[0].mxu0
      %v4576 = vadd.f32 0.0, %v4575
      %v4577 = vpop.f32.mrb[0].mxu0
      %v4578 = vpop.f32.mrb[0].mxu0
      %v4579 = vadd.f32 0.0, %v4578
      %v4580 = vpop.f32.mrb[0].mxu0
      %4581 = vmatprep.mubr.bf16.mxu0 0
      %4582 = vmatmul.mubr.bf16.gmra.mrb[0].mxu0 %v4384
      %v4583 = vpop.f32.mrb[0].mxu0
      %v4584 = vadd.f32 0.0, %v4583
      %v4585 = vpop.f32.mrb[0].mxu0
      %v4586 = vpop.f32.mrb[0].mxu0
      %v4587 = vadd.f32 0.0, %v4586
      %v4588 = vpop.f32.mrb[0].mxu0
      %4589 = vmatprep.mubr.bf16.mxu0 0
      %4590 = vmatmul.mubr.bf16.gmra.mrb[0].mxu0 %v4385
      %v4591 = vpop.f32.mrb[0].mxu0
      %v4592 = vadd.f32 0.0, %v4591
      %v4593 = vpop.f32.mrb[0].mxu0
      %v4594 = vpop.f32.mrb[0].mxu0
      %v4595 = vadd.f32 0.0, %v4594
      %v4596 = vpop.f32.mrb[0].mxu0
      %4597 = vmatprep.mubr.bf16.mxu0 0
      %4598 = vmatmul.mubr.bf16.gmra.mrb[0].mxu0 %v4386
      %v4599 = vpop.f32.mrb[0].mxu0
      %v4600 = vadd.f32 0.0, %v4599
      %v4601 = vpop.f32.mrb[0].mxu0
      %v4602 = vpop.f32.mrb[0].mxu0
      %v4603 = vadd.f32 0.0, %v4602
      %v4604 = vpop.f32.mrb[0].mxu0
      %4605 = vmatprep.mubr.bf16.mxu0 0
      %4606 = vmatmul.mubr.bf16.gmra.mrb[0].mxu0 %v4387
      %v4607 = vpop.f32.mrb[0].mxu0
      %v4608 = vadd.f32 0.0, %v4607
      %v4609 = vpop.f32.mrb[0].mxu0
      %v4610 = vpop.f32.mrb[0].mxu0
      %v4611 = vadd.f32 0.0, %v4610
      %v4612 = vpop.f32.mrb[0].mxu0
      %4613 = vdwg.mxu0
      %v4614 = vadd.f32 %v4308, %v4488
      %v4615 = vadd.f32 %v4309, %v4491
      %v4616 = vadd.f32 %v4310, %v4496
      %v4617 = vadd.f32 %v4311, %v4499
      %v4618 = vadd.f32 %v4312, %v4504
      %v4619 = vadd.f32 %v4313, %v4507
      %v4620 = vadd.f32 %v4314, %v4512
      %v4621 = vadd.f32 %v4315, %v4515
      %v4622 = vadd.f32 %v4316, %v4520
      %v4623 = vadd.f32 %v4317, %v4523
      %v4624 = vadd.f32 %v4318, %v4528
      %v4625 = vadd.f32 %v4319, %v4531
      %v4626 = vadd.f32 %v4320, %v4536
      %v4627 = vadd.f32 %v4321, %v4539
      %v4628 = vadd.f32 %v4322, %v4544
      %v4629 = vadd.f32 %v4323, %v4547
      %v4630 = vadd.f32 %v4324, %v4552
      %v4631 = vadd.f32 %v4325, %v4555
      %v4632 = vadd.f32 %v4326, %v4560
      %v4633 = vadd.f32 %v4327, %v4563
      %v4634 = vadd.f32 %v4328, %v4568
      %v4635 = vadd.f32 %v4329, %v4571
      %v4636 = vadd.f32 %v4330, %v4576
      %v4637 = vadd.f32 %v4331, %v4579
      %v4638 = vadd.f32 %v4332, %v4584
      %v4639 = vadd.f32 %v4333, %v4587
      %v4640 = vadd.f32 %v4334, %v4592
      %v4641 = vadd.f32 %v4335, %v4595
      %v4642 = vadd.f32 %v4336, %v4600
      %v4643 = vadd.f32 %v4337, %v4603
      %v4644 = vadd.f32 %v4338, %v4608
      %v4645 = vadd.f32 %v4339, %v4611
      %v4646 = vld [vmem:[%s3148 + $0x2] sm:$0xff]
      %v4647 = vld [vmem:[%s3148 + $0xa] sm:$0xff]
      %v4648 = vld [vmem:[%s3148 + $0x1a] sm:$0xff]
      %v4649 = vld [vmem:[%s3148 + $0x22] sm:$0xff]
      %v4650 = vld [vmem:[%s3148 + $0x32] sm:$0xff]
      %v4651 = vld [vmem:[%s3148 + $0x3a] sm:$0xff]
      %v4652 = vld [vmem:[%s3148 + $0x4a] sm:$0xff]
      %v4653 = vld [vmem:[%s3148 + $0x52] sm:$0xff]
      %v4654 = vld [vmem:[%s3148 + $0x62] sm:$0xff]
      %v4655 = vld [vmem:[%s3148 + $0x6a] sm:$0xff]
      %v4656 = vld [vmem:[%s3148 + $0x7a] sm:$0xff]
      %v4657 = vld [vmem:[%s3148 + $0x82] sm:$0xff]
      %v4658 = vld [vmem:[%s3148 + $0x92] sm:$0xff]
      %v4659 = vld [vmem:[%s3148 + $0x9a] sm:$0xff]
      %v4660 = vld [vmem:[%s3148 + $0xaa] sm:$0xff]
      %v4661 = vld [vmem:[%s3148 + $0xb2] sm:$0xff]
      %v4662 = vld [vmem:[%s3148 + $0xc2] sm:$0xff]
      %v4663 = vld [vmem:[%s3148 + $0xca] sm:$0xff]
      %v4664 = vld [vmem:[%s3148 + $0xda] sm:$0xff]
      %v4665 = vld [vmem:[%s3148 + $0xe2] sm:$0xff]
      %v4666 = vld [vmem:[%s3148 + $0xf2] sm:$0xff]
      %v4667 = vld [vmem:[%s3148 + $0xfa] sm:$0xff]
      %v4668 = vld [vmem:[%s3148 + $0x10a] sm:$0xff]
      %v4669 = vld [vmem:[%s3148 + $0x112] sm:$0xff]
      %v4670 = vld [vmem:[%s3148 + $0x122] sm:$0xff]
      %v4671 = vld [vmem:[%s3148 + $0x12a] sm:$0xff]
      %v4672 = vld [vmem:[%s3148 + $0x13a] sm:$0xff]
      %v4673 = vld [vmem:[%s3148 + $0x142] sm:$0xff]
      %v4674 = vld [vmem:[%s3148 + $0x152] sm:$0xff]
      %v4675 = vld [vmem:[%s3148 + $0x15a] sm:$0xff]
      %v4676 = vld [vmem:[%s3148 + $0x16a] sm:$0xff]
      %v4677 = vld [vmem:[%s3148 + $0x172] sm:$0xff]
      %v4678 = vpack.c.bf16 %v4647, %v4646
      %v4679 = vpack.c.bf16 %v4649, %v4648
      %v4680 = vpack.c.bf16 %v4651, %v4650
      %v4681 = vpack.c.bf16 %v4653, %v4652
      %v4682 = vpack.c.bf16 %v4655, %v4654
      %v4683 = vpack.c.bf16 %v4657, %v4656
      %v4684 = vpack.c.bf16 %v4659, %v4658
      %v4685 = vpack.c.bf16 %v4661, %v4660
      %v4686 = vpack.c.bf16 %v4663, %v4662
      %v4687 = vpack.c.bf16 %v4665, %v4664
      %v4688 = vpack.c.bf16 %v4667, %v4666
      %v4689 = vpack.c.bf16 %v4669, %v4668
      %v4690 = vpack.c.bf16 %v4671, %v4670
      %v4691 = vpack.c.bf16 %v4673, %v4672
      %v4692 = vpack.c.bf16 %v4675, %v4674
      %v4693 = vpack.c.bf16 %v4677, %v4676
      %s4694 = scalar_lea.vmem %s4, 320
      %v4695 = vld [vmem:[%s4694] sm:$0xf]
      %v4696 = vld [vmem:[%s4694 + $0x4] sm:$0xf]
      %v4697 = vld [vmem:[%s4694 + $0x8] sm:$0xf]
      %v4698 = vld [vmem:[%s4694 + $0xc] sm:$0xf]
      %v4699 = vld [vmem:[%s4694 + $0x10] sm:$0xf]
      %v4700 = vld [vmem:[%s4694 + $0x14] sm:$0xf]
      %v4701 = vld [vmem:[%s4694 + $0x18] sm:$0xf]
      %v4702 = vld [vmem:[%s4694 + $0x1c] sm:$0xf]
      %v4703 = vld [vmem:[%s4694 + $0x20] sm:$0xf]
      %v4704 = vld [vmem:[%s4694 + $0x24] sm:$0xf]
      %v4705 = vld [vmem:[%s4694 + $0x28] sm:$0xf]
      %v4706 = vld [vmem:[%s4694 + $0x2c] sm:$0xf]
      %v4707 = vld [vmem:[%s4694 + $0x30] sm:$0xf]
      %v4708 = vld [vmem:[%s4694 + $0x34] sm:$0xf]
      %v4709 = vld [vmem:[%s4694 + $0x38] sm:$0xf]
      %v4710 = vld [vmem:[%s4694 + $0x3c] sm:$0xf]
      %v4727 = vunpack.c.l.b16 %v4695
      %v4728 = vunpack.c.l.b16 %v4696
      %v4729 = vunpack.c.l.b16 %v4697
      %v4730 = vunpack.c.l.b16 %v4698
      %v4731 = vunpack.c.l.b16 %v4699
      %v4732 = vunpack.c.l.b16 %v4700
      %v4733 = vunpack.c.l.b16 %v4701
      %v4734 = vunpack.c.l.b16 %v4702
      %v4735 = vunpack.c.l.b16 %v4703
      %v4736 = vunpack.c.l.b16 %v4704
      %v4737 = vunpack.c.l.b16 %v4705
      %v4738 = vunpack.c.l.b16 %v4706
      %v4739 = vunpack.c.l.b16 %v4707
      %v4740 = vunpack.c.l.b16 %v4708
      %v4741 = vunpack.c.l.b16 %v4709
      %v4742 = vunpack.c.l.b16 %v4710
      %v4743 = vpack.c.b16 %v4728, %v4727
      %v4744 = vpack.c.b16 %v4730, %v4729
      %v4745 = vpack.c.b16 %v4732, %v4731
      %v4746 = vpack.c.b16 %v4734, %v4733
      %v4747 = vpack.c.b16 %v4736, %v4735
      %v4748 = vpack.c.b16 %v4738, %v4737
      %v4749 = vpack.c.b16 %v4740, %v4739
      %v4750 = vpack.c.b16 %v4742, %v4741
      %4759 = vmatprep.subr.bf16.mxu0 0
      %4760 = vmatpush1.bf16.msra.mxu0 %v4743
      %4761 = vmatprep.subr.bf16.mxu0 0
      %4762 = vmatpush1.bf16.msra.mxu0 %v4744
      %4763 = vmatprep.subr.bf16.mxu0 0
      %4764 = vmatpush1.bf16.msra.mxu0 %v4745
      %4765 = vmatprep.subr.bf16.mxu0 0
      %4766 = vmatpush1.bf16.msra.mxu0 %v4746
      %4767 = vmatprep.subr.bf16.mxu0 0
      %4768 = vmatpush1.bf16.msra.mxu0 %v4747
      %4769 = vmatprep.subr.bf16.mxu0 0
      %4770 = vmatpush1.bf16.msra.mxu0 %v4748
      %4771 = vmatprep.subr.bf16.mxu0 0
      %4772 = vmatpush1.bf16.msra.mxu0 %v4749
      %4773 = vmatprep.subr.bf16.mxu0 0
      %4774 = vmatpush1.bf16.msra.mxu0 %v4750
      %4775 = vmatprep.subr.bf16.mxu0 0
      %4776 = vmatpush1.bf16.msra.mxu0 0
      %4777 = vmatprep.subr.bf16.mxu0 0
      %4778 = vmatpush1.bf16.msra.mxu0 0
      %4779 = vmatprep.subr.bf16.mxu0 0
      %4780 = vmatpush1.bf16.msra.mxu0 0
      %4781 = vmatprep.subr.bf16.mxu0 0
      %4782 = vmatpush1.bf16.msra.mxu0 0
      %4783 = vmatprep.subr.bf16.mxu0 0
      %4784 = vmatpush1.bf16.msra.mxu0 0
      %4785 = vmatprep.subr.bf16.mxu0 0
      %4786 = vmatpush1.bf16.msra.mxu0 0
      %4787 = vmatprep.subr.bf16.mxu0 0
      %4788 = vmatpush1.bf16.msra.mxu0 0
      %4789 = vmatprep.subr.bf16.mxu0 0
      %4790 = vmatpush1.bf16.msra.mxu0 0
      %4791 = vmatprep.mubr.bf16.mxu0 0
      %4792 = vmatmul.mubr.bf16.gmra.mrb[0].mxu0 %v4678
      %v4793 = vpop.f32.mrb[0].mxu0
      %v4794 = vadd.f32 0.0, %v4793
      %v4795 = vpop.f32.mrb[0].mxu0
      %v4796 = vpop.f32.mrb[0].mxu0
      %v4797 = vadd.f32 0.0, %v4796
      %v4798 = vpop.f32.mrb[0].mxu0
      %4799 = vmatprep.mubr.bf16.mxu0 0
      %4800 = vmatmul.mubr.bf16.gmra.mrb[0].mxu0 %v4679
      %v4801 = vpop.f32.mrb[0].mxu0
      %v4802 = vadd.f32 0.0, %v4801
      %v4803 = vpop.f32.mrb[0].mxu0
      %v4804 = vpop.f32.mrb[0].mxu0
      %v4805 = vadd.f32 0.0, %v4804
      %v4806 = vpop.f32.mrb[0].mxu0
      %4807 = vmatprep.mubr.bf16.mxu0 0
      %4808 = vmatmul.mubr.bf16.gmra.mrb[0].mxu0 %v4680
      %v4809 = vpop.f32.mrb[0].mxu0
      %v4810 = vadd.f32 0.0, %v4809
      %v4811 = vpop.f32.mrb[0].mxu0
      %v4812 = vpop.f32.mrb[0].mxu0
      %v4813 = vadd.f32 0.0, %v4812
      %v4814 = vpop.f32.mrb[0].mxu0
      %4815 = vmatprep.mubr.bf16.mxu0 0
      %4816 = vmatmul.mubr.bf16.gmra.mrb[0].mxu0 %v4681
      %v4817 = vpop.f32.mrb[0].mxu0
      %v4818 = vadd.f32 0.0, %v4817
      %v4819 = vpop.f32.mrb[0].mxu0
      %v4820 = vpop.f32.mrb[0].mxu0
      %v4821 = vadd.f32 0.0, %v4820
      %v4822 = vpop.f32.mrb[0].mxu0
      %4823 = vmatprep.mubr.bf16.mxu0 0
      %4824 = vmatmul.mubr.bf16.gmra.mrb[0].mxu0 %v4682
      %v4825 = vpop.f32.mrb[0].mxu0
      %v4826 = vadd.f32 0.0, %v4825
      %v4827 = vpop.f32.mrb[0].mxu0
      %v4828 = vpop.f32.mrb[0].mxu0
      %v4829 = vadd.f32 0.0, %v4828
      %v4830 = vpop.f32.mrb[0].mxu0
      %4831 = vmatprep.mubr.bf16.mxu0 0
      %4832 = vmatmul.mubr.bf16.gmra.mrb[0].mxu0 %v4683
      %v4833 = vpop.f32.mrb[0].mxu0
      %v4834 = vadd.f32 0.0, %v4833
      %v4835 = vpop.f32.mrb[0].mxu0
      %v4836 = vpop.f32.mrb[0].mxu0
      %v4837 = vadd.f32 0.0, %v4836
      %v4838 = vpop.f32.mrb[0].mxu0
      %4839 = vmatprep.mubr.bf16.mxu0 0
      %4840 = vmatmul.mubr.bf16.gmra.mrb[0].mxu0 %v4684
      %v4841 = vpop.f32.mrb[0].mxu0
      %v4842 = vadd.f32 0.0, %v4841
      %v4843 = vpop.f32.mrb[0].mxu0
      %v4844 = vpop.f32.mrb[0].mxu0
      %v4845 = vadd.f32 0.0, %v4844
      %v4846 = vpop.f32.mrb[0].mxu0
      %4847 = vmatprep.mubr.bf16.mxu0 0
      %4848 = vmatmul.mubr.bf16.gmra.mrb[0].mxu0 %v4685
      %v4849 = vpop.f32.mrb[0].mxu0
      %v4850 = vadd.f32 0.0, %v4849
      %v4851 = vpop.f32.mrb[0].mxu0
      %v4852 = vpop.f32.mrb[0].mxu0
      %v4853 = vadd.f32 0.0, %v4852
      %v4854 = vpop.f32.mrb[0].mxu0
      %4855 = vmatprep.mubr.bf16.mxu0 0
      %4856 = vmatmul.mubr.bf16.gmra.mrb[0].mxu0 %v4686
      %v4857 = vpop.f32.mrb[0].mxu0
      %v4858 = vadd.f32 0.0, %v4857
      %v4859 = vpop.f32.mrb[0].mxu0
      %v4860 = vpop.f32.mrb[0].mxu0
      %v4861 = vadd.f32 0.0, %v4860
      %v4862 = vpop.f32.mrb[0].mxu0
      %4863 = vmatprep.mubr.bf16.mxu0 0
      %4864 = vmatmul.mubr.bf16.gmra.mrb[0].mxu0 %v4687
      %v4865 = vpop.f32.mrb[0].mxu0
      %v4866 = vadd.f32 0.0, %v4865
      %v4867 = vpop.f32.mrb[0].mxu0
      %v4868 = vpop.f32.mrb[0].mxu0
      %v4869 = vadd.f32 0.0, %v4868
      %v4870 = vpop.f32.mrb[0].mxu0
      %4871 = vmatprep.mubr.bf16.mxu0 0
      %4872 = vmatmul.mubr.bf16.gmra.mrb[0].mxu0 %v4688
      %v4873 = vpop.f32.mrb[0].mxu0
      %v4874 = vadd.f32 0.0, %v4873
      %v4875 = vpop.f32.mrb[0].mxu0
      %v4876 = vpop.f32.mrb[0].mxu0
      %v4877 = vadd.f32 0.0, %v4876
      %v4878 = vpop.f32.mrb[0].mxu0
      %4879 = vmatprep.mubr.bf16.mxu0 0
      %4880 = vmatmul.mubr.bf16.gmra.mrb[0].mxu0 %v4689
      %v4881 = vpop.f32.mrb[0].mxu0
      %v4882 = vadd.f32 0.0, %v4881
      %v4883 = vpop.f32.mrb[0].mxu0
      %v4884 = vpop.f32.mrb[0].mxu0
      %v4885 = vadd.f32 0.0, %v4884
      %v4886 = vpop.f32.mrb[0].mxu0
      %4887 = vmatprep.mubr.bf16.mxu0 0
      %4888 = vmatmul.mubr.bf16.gmra.mrb[0].mxu0 %v4690
      %v4889 = vpop.f32.mrb[0].mxu0
      %v4890 = vadd.f32 0.0, %v4889
      %v4891 = vpop.f32.mrb[0].mxu0
      %v4892 = vpop.f32.mrb[0].mxu0
      %v4893 = vadd.f32 0.0, %v4892
      %v4894 = vpop.f32.mrb[0].mxu0
      %4895 = vmatprep.mubr.bf16.mxu0 0
      %4896 = vmatmul.mubr.bf16.gmra.mrb[0].mxu0 %v4691
      %v4897 = vpop.f32.mrb[0].mxu0
      %v4898 = vadd.f32 0.0, %v4897
      %v4899 = vpop.f32.mrb[0].mxu0
      %v4900 = vpop.f32.mrb[0].mxu0
      %v4901 = vadd.f32 0.0, %v4900
      %v4902 = vpop.f32.mrb[0].mxu0
      %4903 = vmatprep.mubr.bf16.mxu0 0
      %4904 = vmatmul.mubr.bf16.gmra.mrb[0].mxu0 %v4692
      %v4905 = vpop.f32.mrb[0].mxu0
      %v4906 = vadd.f32 0.0, %v4905
      %v4907 = vpop.f32.mrb[0].mxu0
      %v4908 = vpop.f32.mrb[0].mxu0
      %v4909 = vadd.f32 0.0, %v4908
      %v4910 = vpop.f32.mrb[0].mxu0
      %4911 = vmatprep.mubr.bf16.mxu0 0
      %4912 = vmatmul.mubr.bf16.gmra.mrb[0].mxu0 %v4693
      %v4913 = vpop.f32.mrb[0].mxu0
      %v4914 = vadd.f32 0.0, %v4913
      %v4915 = vpop.f32.mrb[0].mxu0
      %v4916 = vpop.f32.mrb[0].mxu0
      %v4917 = vadd.f32 0.0, %v4916
      %v4918 = vpop.f32.mrb[0].mxu0
      %4919 = vdwg.mxu0
      %v4920 = vadd.f32 %v4614, %v4794
      %v4921 = vadd.f32 %v4615, %v4797
      %v4922 = vadd.f32 %v4616, %v4802
      %v4923 = vadd.f32 %v4617, %v4805
      %v4924 = vadd.f32 %v4618, %v4810
      %v4925 = vadd.f32 %v4619, %v4813
      %v4926 = vadd.f32 %v4620, %v4818
      %v4927 = vadd.f32 %v4621, %v4821
      %v4928 = vadd.f32 %v4622, %v4826
      %v4929 = vadd.f32 %v4623, %v4829
      %v4930 = vadd.f32 %v4624, %v4834
      %v4931 = vadd.f32 %v4625, %v4837
      %v4932 = vadd.f32 %v4626, %v4842
      %v4933 = vadd.f32 %v4627, %v4845
      %v4934 = vadd.f32 %v4628, %v4850
      %v4935 = vadd.f32 %v4629, %v4853
      %v4936 = vadd.f32 %v4630, %v4858
      %v4937 = vadd.f32 %v4631, %v4861
      %v4938 = vadd.f32 %v4632, %v4866
      %v4939 = vadd.f32 %v4633, %v4869
      %v4940 = vadd.f32 %v4634, %v4874
      %v4941 = vadd.f32 %v4635, %v4877
      %v4942 = vadd.f32 %v4636, %v4882
      %v4943 = vadd.f32 %v4637, %v4885
      %v4944 = vadd.f32 %v4638, %v4890
      %v4945 = vadd.f32 %v4639, %v4893
      %v4946 = vadd.f32 %v4640, %v4898
      %v4947 = vadd.f32 %v4641, %v4901
      %v4948 = vadd.f32 %v4642, %v4906
      %v4949 = vadd.f32 %v4643, %v4909
      %v4950 = vadd.f32 %v4644, %v4914
      %v4951 = vadd.f32 %v4645, %v4917
      %s4952 = scalar_lea.vmem [#allocation3], 48
      %v4953 = vld [vmem:[%s4952] sm:$0xff]
      %v4954 = vld [vmem:[%s4952 + $0x8] sm:$0xff]
      %v4955 = vld [vmem:[%s4952 + $0x18] sm:$0xff]
      %v4956 = vld [vmem:[%s4952 + $0x20] sm:$0xff]
      %v4957 = vld [vmem:[%s4952 + $0x30] sm:$0xff]
      %v4958 = vld [vmem:[%s4952 + $0x38] sm:$0xff]
      %v4959 = vld [vmem:[%s4952 + $0x48] sm:$0xff]
      %v4960 = vld [vmem:[%s4952 + $0x50] sm:$0xff]
      %v4961 = vld [vmem:[%s4952 + $0x60] sm:$0xff]
      %v4962 = vld [vmem:[%s4952 + $0x68] sm:$0xff]
      %v4963 = vld [vmem:[%s4952 + $0x78] sm:$0xff]
      %v4964 = vld [vmem:[%s4952 + $0x80] sm:$0xff]
      %v4965 = vld [vmem:[%s4952 + $0x90] sm:$0xff]
      %v4966 = vld [vmem:[%s4952 + $0x98] sm:$0xff]
      %v4967 = vld [vmem:[%s4952 + $0xa8] sm:$0xff]
      %v4968 = vld [vmem:[%s4952 + $0xb0] sm:$0xff]
      %v4969 = vld [vmem:[%s4952 + $0xc0] sm:$0xff]
      %v4970 = vld [vmem:[%s4952 + $0xc8] sm:$0xff]
      %v4971 = vld [vmem:[%s4952 + $0xd8] sm:$0xff]
      %v4972 = vld [vmem:[%s4952 + $0xe0] sm:$0xff]
      %v4973 = vld [vmem:[%s4952 + $0xf0] sm:$0xff]
      %v4974 = vld [vmem:[%s4952 + $0xf8] sm:$0xff]
      %v4975 = vld [vmem:[%s4952 + $0x108] sm:$0xff]
      %v4976 = vld [vmem:[%s4952 + $0x110] sm:$0xff]
      %v4977 = vld [vmem:[%s4952 + $0x120] sm:$0xff]
      %v4978 = vld [vmem:[%s4952 + $0x128] sm:$0xff]
      %v4979 = vld [vmem:[%s4952 + $0x138] sm:$0xff]
      %v4980 = vld [vmem:[%s4952 + $0x140] sm:$0xff]
      %v4981 = vld [vmem:[%s4952 + $0x150] sm:$0xff]
      %v4982 = vld [vmem:[%s4952 + $0x158] sm:$0xff]
      %v4983 = vld [vmem:[%s4952 + $0x168] sm:$0xff]
      %v4984 = vld [vmem:[%s4952 + $0x170] sm:$0xff]
      %v4985 = vpack.c.bf16 %v4954, %v4953
      %v4986 = vpack.c.bf16 %v4956, %v4955
      %v4987 = vpack.c.bf16 %v4958, %v4957
      %v4988 = vpack.c.bf16 %v4960, %v4959
      %v4989 = vpack.c.bf16 %v4962, %v4961
      %v4990 = vpack.c.bf16 %v4964, %v4963
      %v4991 = vpack.c.bf16 %v4966, %v4965
      %v4992 = vpack.c.bf16 %v4968, %v4967
      %v4993 = vpack.c.bf16 %v4970, %v4969
      %v4994 = vpack.c.bf16 %v4972, %v4971
      %v4995 = vpack.c.bf16 %v4974, %v4973
      %v4996 = vpack.c.bf16 %v4976, %v4975
      %v4997 = vpack.c.bf16 %v4978, %v4977
      %v4998 = vpack.c.bf16 %v4980, %v4979
      %v4999 = vpack.c.bf16 %v4982, %v4981
      %v5000 = vpack.c.bf16 %v4984, %v4983
      %s5001 = scalar_lea.vmem %s4, 384
      %v5002 = vld [vmem:[%s5001] sm:$0xf]
      %v5003 = vld [vmem:[%s5001 + $0x4] sm:$0xf]
      %v5004 = vld [vmem:[%s5001 + $0x8] sm:$0xf]
      %v5005 = vld [vmem:[%s5001 + $0xc] sm:$0xf]
      %v5006 = vld [vmem:[%s5001 + $0x10] sm:$0xf]
      %v5007 = vld [vmem:[%s5001 + $0x14] sm:$0xf]
      %v5008 = vld [vmem:[%s5001 + $0x18] sm:$0xf]
      %v5009 = vld [vmem:[%s5001 + $0x1c] sm:$0xf]
      %v5010 = vld [vmem:[%s5001 + $0x20] sm:$0xf]
      %v5011 = vld [vmem:[%s5001 + $0x24] sm:$0xf]
      %v5012 = vld [vmem:[%s5001 + $0x28] sm:$0xf]
      %v5013 = vld [vmem:[%s5001 + $0x2c] sm:$0xf]
      %v5014 = vld [vmem:[%s5001 + $0x30] sm:$0xf]
      %v5015 = vld [vmem:[%s5001 + $0x34] sm:$0xf]
      %v5016 = vld [vmem:[%s5001 + $0x38] sm:$0xf]
      %v5017 = vld [vmem:[%s5001 + $0x3c] sm:$0xf]
      %v5034 = vunpack.c.l.b16 %v5002
      %v5035 = vunpack.c.l.b16 %v5003
      %v5036 = vunpack.c.l.b16 %v5004
      %v5037 = vunpack.c.l.b16 %v5005
      %v5038 = vunpack.c.l.b16 %v5006
      %v5039 = vunpack.c.l.b16 %v5007
      %v5040 = vunpack.c.l.b16 %v5008
      %v5041 = vunpack.c.l.b16 %v5009
      %v5042 = vunpack.c.l.b16 %v5010
      %v5043 = vunpack.c.l.b16 %v5011
      %v5044 = vunpack.c.l.b16 %v5012
      %v5045 = vunpack.c.l.b16 %v5013
      %v5046 = vunpack.c.l.b16 %v5014
      %v5047 = vunpack.c.l.b16 %v5015
      %v5048 = vunpack.c.l.b16 %v5016
      %v5049 = vunpack.c.l.b16 %v5017
      %v5050 = vpack.c.b16 %v5035, %v5034
      %v5051 = vpack.c.b16 %v5037, %v5036
      %v5052 = vpack.c.b16 %v5039, %v5038
      %v5053 = vpack.c.b16 %v5041, %v5040
      %v5054 = vpack.c.b16 %v5043, %v5042
      %v5055 = vpack.c.b16 %v5045, %v5044
      %v5056 = vpack.c.b16 %v5047, %v5046
      %v5057 = vpack.c.b16 %v5049, %v5048
      %5066 = vmatprep.subr.bf16.mxu0 0
      %5067 = vmatpush1.bf16.msra.mxu0 %v5050
      %5068 = vmatprep.subr.bf16.mxu0 0
      %5069 = vmatpush1.bf16.msra.mxu0 %v5051
      %5070 = vmatprep.subr.bf16.mxu0 0
      %5071 = vmatpush1.bf16.msra.mxu0 %v5052
      %5072 = vmatprep.subr.bf16.mxu0 0
      %5073 = vmatpush1.bf16.msra.mxu0 %v5053
      %5074 = vmatprep.subr.bf16.mxu0 0
      %5075 = vmatpush1.bf16.msra.mxu0 %v5054
      %5076 = vmatprep.subr.bf16.mxu0 0
      %5077 = vmatpush1.bf16.msra.mxu0 %v5055
      %5078 = vmatprep.subr.bf16.mxu0 0
      %5079 = vmatpush1.bf16.msra.mxu0 %v5056
      %5080 = vmatprep.subr.bf16.mxu0 0
      %5081 = vmatpush1.bf16.msra.mxu0 %v5057
      %5082 = vmatprep.subr.bf16.mxu0 0
      %5083 = vmatpush1.bf16.msra.mxu0 0
      %5084 = vmatprep.subr.bf16.mxu0 0
      %5085 = vmatpush1.bf16.msra.mxu0 0
      %5086 = vmatprep.subr.bf16.mxu0 0
      %5087 = vmatpush1.bf16.msra.mxu0 0
      %5088 = vmatprep.subr.bf16.mxu0 0
      %5089 = vmatpush1.bf16.msra.mxu0 0
      %5090 = vmatprep.subr.bf16.mxu0 0
      %5091 = vmatpush1.bf16.msra.mxu0 0
      %5092 = vmatprep.subr.bf16.mxu0 0
      %5093 = vmatpush1.bf16.msra.mxu0 0
      %5094 = vmatprep.subr.bf16.mxu0 0
      %5095 = vmatpush1.bf16.msra.mxu0 0
      %5096 = vmatprep.subr.bf16.mxu0 0
      %5097 = vmatpush1.bf16.msra.mxu0 0
      %5098 = vmatprep.mubr.bf16.mxu0 0
      %5099 = vmatmul.mubr.bf16.gmra.mrb[0].mxu0 %v4985
      %v5100 = vpop.f32.mrb[0].mxu0
      %v5101 = vadd.f32 0.0, %v5100
      %v5102 = vpop.f32.mrb[0].mxu0
      %v5103 = vpop.f32.mrb[0].mxu0
      %v5104 = vadd.f32 0.0, %v5103
      %v5105 = vpop.f32.mrb[0].mxu0
      %5106 = vmatprep.mubr.bf16.mxu0 0
      %5107 = vmatmul.mubr.bf16.gmra.mrb[0].mxu0 %v4986
      %v5108 = vpop.f32.mrb[0].mxu0
      %v5109 = vadd.f32 0.0, %v5108
      %v5110 = vpop.f32.mrb[0].mxu0
      %v5111 = vpop.f32.mrb[0].mxu0
      %v5112 = vadd.f32 0.0, %v5111
      %v5113 = vpop.f32.mrb[0].mxu0
      %5114 = vmatprep.mubr.bf16.mxu0 0
      %5115 = vmatmul.mubr.bf16.gmra.mrb[0].mxu0 %v4987
      %v5116 = vpop.f32.mrb[0].mxu0
      %v5117 = vadd.f32 0.0, %v5116
      %v5118 = vpop.f32.mrb[0].mxu0
      %v5119 = vpop.f32.mrb[0].mxu0
      %v5120 = vadd.f32 0.0, %v5119
      %v5121 = vpop.f32.mrb[0].mxu0
      %5122 = vmatprep.mubr.bf16.mxu0 0
      %5123 = vmatmul.mubr.bf16.gmra.mrb[0].mxu0 %v4988
      %v5124 = vpop.f32.mrb[0].mxu0
      %v5125 = vadd.f32 0.0, %v5124
      %v5126 = vpop.f32.mrb[0].mxu0
      %v5127 = vpop.f32.mrb[0].mxu0
      %v5128 = vadd.f32 0.0, %v5127
      %v5129 = vpop.f32.mrb[0].mxu0
      %5130 = vmatprep.mubr.bf16.mxu0 0
      %5131 = vmatmul.mubr.bf16.gmra.mrb[0].mxu0 %v4989
      %v5132 = vpop.f32.mrb[0].mxu0
      %v5133 = vadd.f32 0.0, %v5132
      %v5134 = vpop.f32.mrb[0].mxu0
      %v5135 = vpop.f32.mrb[0].mxu0
      %v5136 = vadd.f32 0.0, %v5135
      %v5137 = vpop.f32.mrb[0].mxu0
      %5138 = vmatprep.mubr.bf16.mxu0 0
      %5139 = vmatmul.mubr.bf16.gmra.mrb[0].mxu0 %v4990
      %v5140 = vpop.f32.mrb[0].mxu0
      %v5141 = vadd.f32 0.0, %v5140
      %v5142 = vpop.f32.mrb[0].mxu0
      %v5143 = vpop.f32.mrb[0].mxu0
      %v5144 = vadd.f32 0.0, %v5143
      %v5145 = vpop.f32.mrb[0].mxu0
      %5146 = vmatprep.mubr.bf16.mxu0 0
      %5147 = vmatmul.mubr.bf16.gmra.mrb[0].mxu0 %v4991
      %v5148 = vpop.f32.mrb[0].mxu0
      %v5149 = vadd.f32 0.0, %v5148
      %v5150 = vpop.f32.mrb[0].mxu0
      %v5151 = vpop.f32.mrb[0].mxu0
      %v5152 = vadd.f32 0.0, %v5151
      %v5153 = vpop.f32.mrb[0].mxu0
      %5154 = vmatprep.mubr.bf16.mxu0 0
      %5155 = vmatmul.mubr.bf16.gmra.mrb[0].mxu0 %v4992
      %v5156 = vpop.f32.mrb[0].mxu0
      %v5157 = vadd.f32 0.0, %v5156
      %v5158 = vpop.f32.mrb[0].mxu0
      %v5159 = vpop.f32.mrb[0].mxu0
      %v5160 = vadd.f32 0.0, %v5159
      %v5161 = vpop.f32.mrb[0].mxu0
      %5162 = vmatprep.mubr.bf16.mxu0 0
      %5163 = vmatmul.mubr.bf16.gmra.mrb[0].mxu0 %v4993
      %v5164 = vpop.f32.mrb[0].mxu0
      %v5165 = vadd.f32 0.0, %v5164
      %v5166 = vpop.f32.mrb[0].mxu0
      %v5167 = vpop.f32.mrb[0].mxu0
      %v5168 = vadd.f32 0.0, %v5167
      %v5169 = vpop.f32.mrb[0].mxu0
      %5170 = vmatprep.mubr.bf16.mxu0 0
      %5171 = vmatmul.mubr.bf16.gmra.mrb[0].mxu0 %v4994
      %v5172 = vpop.f32.mrb[0].mxu0
      %v5173 = vadd.f32 0.0, %v5172
      %v5174 = vpop.f32.mrb[0].mxu0
      %v5175 = vpop.f32.mrb[0].mxu0
      %v5176 = vadd.f32 0.0, %v5175
      %v5177 = vpop.f32.mrb[0].mxu0
      %5178 = vmatprep.mubr.bf16.mxu0 0
      %5179 = vmatmul.mubr.bf16.gmra.mrb[0].mxu0 %v4995
      %v5180 = vpop.f32.mrb[0].mxu0
      %v5181 = vadd.f32 0.0, %v5180
      %v5182 = vpop.f32.mrb[0].mxu0
      %v5183 = vpop.f32.mrb[0].mxu0
      %v5184 = vadd.f32 0.0, %v5183
      %v5185 = vpop.f32.mrb[0].mxu0
      %5186 = vmatprep.mubr.bf16.mxu0 0
      %5187 = vmatmul.mubr.bf16.gmra.mrb[0].mxu0 %v4996
      %v5188 = vpop.f32.mrb[0].mxu0
      %v5189 = vadd.f32 0.0, %v5188
      %v5190 = vpop.f32.mrb[0].mxu0
      %v5191 = vpop.f32.mrb[0].mxu0
      %v5192 = vadd.f32 0.0, %v5191
      %v5193 = vpop.f32.mrb[0].mxu0
      %5194 = vmatprep.mubr.bf16.mxu0 0
      %5195 = vmatmul.mubr.bf16.gmra.mrb[0].mxu0 %v4997
      %v5196 = vpop.f32.mrb[0].mxu0
      %v5197 = vadd.f32 0.0, %v5196
      %v5198 = vpop.f32.mrb[0].mxu0
      %v5199 = vpop.f32.mrb[0].mxu0
      %v5200 = vadd.f32 0.0, %v5199
      %v5201 = vpop.f32.mrb[0].mxu0
      %5202 = vmatprep.mubr.bf16.mxu0 0
      %5203 = vmatmul.mubr.bf16.gmra.mrb[0].mxu0 %v4998
      %v5204 = vpop.f32.mrb[0].mxu0
      %v5205 = vadd.f32 0.0, %v5204
      %v5206 = vpop.f32.mrb[0].mxu0
      %v5207 = vpop.f32.mrb[0].mxu0
      %v5208 = vadd.f32 0.0, %v5207
      %v5209 = vpop.f32.mrb[0].mxu0
      %5210 = vmatprep.mubr.bf16.mxu0 0
      %5211 = vmatmul.mubr.bf16.gmra.mrb[0].mxu0 %v4999
      %v5212 = vpop.f32.mrb[0].mxu0
      %v5213 = vadd.f32 0.0, %v5212
      %v5214 = vpop.f32.mrb[0].mxu0
      %v5215 = vpop.f32.mrb[0].mxu0
      %v5216 = vadd.f32 0.0, %v5215
      %v5217 = vpop.f32.mrb[0].mxu0
      %5218 = vmatprep.mubr.bf16.mxu0 0
      %5219 = vmatmul.mubr.bf16.gmra.mrb[0].mxu0 %v5000
      %v5220 = vpop.f32.mrb[0].mxu0
      %v5221 = vadd.f32 0.0, %v5220
      %v5222 = vpop.f32.mrb[0].mxu0
      %v5223 = vpop.f32.mrb[0].mxu0
      %v5224 = vadd.f32 0.0, %v5223
      %v5225 = vpop.f32.mrb[0].mxu0
      %5226 = vdwg.mxu0
      %v5227 = vadd.f32 %v4920, %v5101
      %v5228 = vadd.f32 %v4921, %v5104
      %v5229 = vadd.f32 %v4922, %v5109
      %v5230 = vadd.f32 %v4923, %v5112
      %v5231 = vadd.f32 %v4924, %v5117
      %v5232 = vadd.f32 %v4925, %v5120
      %v5233 = vadd.f32 %v4926, %v5125
      %v5234 = vadd.f32 %v4927, %v5128
      %v5235 = vadd.f32 %v4928, %v5133
      %v5236 = vadd.f32 %v4929, %v5136
      %v5237 = vadd.f32 %v4930, %v5141
      %v5238 = vadd.f32 %v4931, %v5144
      %v5239 = vadd.f32 %v4932, %v5149
      %v5240 = vadd.f32 %v4933, %v5152
      %v5241 = vadd.f32 %v4934, %v5157
      %v5242 = vadd.f32 %v4935, %v5160
      %v5243 = vadd.f32 %v4936, %v5165
      %v5244 = vadd.f32 %v4937, %v5168
      %v5245 = vadd.f32 %v4938, %v5173
      %v5246 = vadd.f32 %v4939, %v5176
      %v5247 = vadd.f32 %v4940, %v5181
      %v5248 = vadd.f32 %v4941, %v5184
      %v5249 = vadd.f32 %v4942, %v5189
      %v5250 = vadd.f32 %v4943, %v5192
      %v5251 = vadd.f32 %v4944, %v5197
      %v5252 = vadd.f32 %v4945, %v5200
      %v5253 = vadd.f32 %v4946, %v5205
      %v5254 = vadd.f32 %v4947, %v5208
      %v5255 = vadd.f32 %v4948, %v5213
      %v5256 = vadd.f32 %v4949, %v5216
      %v5257 = vadd.f32 %v4950, %v5221
      %v5258 = vadd.f32 %v4951, %v5224
      %v5259 = vld [vmem:[%s4952 + $0x1] sm:$0xff]
      %v5260 = vld [vmem:[%s4952 + $0x9] sm:$0xff]
      %v5261 = vld [vmem:[%s4952 + $0x19] sm:$0xff]
      %v5262 = vld [vmem:[%s4952 + $0x21] sm:$0xff]
      %v5263 = vld [vmem:[%s4952 + $0x31] sm:$0xff]
      %v5264 = vld [vmem:[%s4952 + $0x39] sm:$0xff]
      %v5265 = vld [vmem:[%s4952 + $0x49] sm:$0xff]
      %v5266 = vld [vmem:[%s4952 + $0x51] sm:$0xff]
      %v5267 = vld [vmem:[%s4952 + $0x61] sm:$0xff]
      %v5268 = vld [vmem:[%s4952 + $0x69] sm:$0xff]
      %v5269 = vld [vmem:[%s4952 + $0x79] sm:$0xff]
      %v5270 = vld [vmem:[%s4952 + $0x81] sm:$0xff]
      %v5271 = vld [vmem:[%s4952 + $0x91] sm:$0xff]
      %v5272 = vld [vmem:[%s4952 + $0x99] sm:$0xff]
      %v5273 = vld [vmem:[%s4952 + $0xa9] sm:$0xff]
      %v5274 = vld [vmem:[%s4952 + $0xb1] sm:$0xff]
      %v5275 = vld [vmem:[%s4952 + $0xc1] sm:$0xff]
      %v5276 = vld [vmem:[%s4952 + $0xc9] sm:$0xff]
      %v5277 = vld [vmem:[%s4952 + $0xd9] sm:$0xff]
      %v5278 = vld [vmem:[%s4952 + $0xe1] sm:$0xff]
      %v5279 = vld [vmem:[%s4952 + $0xf1] sm:$0xff]
      %v5280 = vld [vmem:[%s4952 + $0xf9] sm:$0xff]
      %v5281 = vld [vmem:[%s4952 + $0x109] sm:$0xff]
      %v5282 = vld [vmem:[%s4952 + $0x111] sm:$0xff]
      %v5283 = vld [vmem:[%s4952 + $0x121] sm:$0xff]
      %v5284 = vld [vmem:[%s4952 + $0x129] sm:$0xff]
      %v5285 = vld [vmem:[%s4952 + $0x139] sm:$0xff]
      %v5286 = vld [vmem:[%s4952 + $0x141] sm:$0xff]
      %v5287 = vld [vmem:[%s4952 + $0x151] sm:$0xff]
      %v5288 = vld [vmem:[%s4952 + $0x159] sm:$0xff]
      %v5289 = vld [vmem:[%s4952 + $0x169] sm:$0xff]
      %v5290 = vld [vmem:[%s4952 + $0x171] sm:$0xff]
      %v5291 = vpack.c.bf16 %v5260, %v5259
      %v5292 = vpack.c.bf16 %v5262, %v5261
      %v5293 = vpack.c.bf16 %v5264, %v5263
      %v5294 = vpack.c.bf16 %v5266, %v5265
      %v5295 = vpack.c.bf16 %v5268, %v5267
      %v5296 = vpack.c.bf16 %v5270, %v5269
      %v5297 = vpack.c.bf16 %v5272, %v5271
      %v5298 = vpack.c.bf16 %v5274, %v5273
      %v5299 = vpack.c.bf16 %v5276, %v5275
      %v5300 = vpack.c.bf16 %v5278, %v5277
      %v5301 = vpack.c.bf16 %v5280, %v5279
      %v5302 = vpack.c.bf16 %v5282, %v5281
      %v5303 = vpack.c.bf16 %v5284, %v5283
      %v5304 = vpack.c.bf16 %v5286, %v5285
      %v5305 = vpack.c.bf16 %v5288, %v5287
      %v5306 = vpack.c.bf16 %v5290, %v5289
      %s5307 = scalar_lea.vmem %s4, 448
      %v5308 = vld [vmem:[%s5307] sm:$0xf]
      %v5309 = vld [vmem:[%s5307 + $0x4] sm:$0xf]
      %v5310 = vld [vmem:[%s5307 + $0x8] sm:$0xf]
      %v5311 = vld [vmem:[%s5307 + $0xc] sm:$0xf]
      %v5312 = vld [vmem:[%s5307 + $0x10] sm:$0xf]
      %v5313 = vld [vmem:[%s5307 + $0x14] sm:$0xf]
      %v5314 = vld [vmem:[%s5307 + $0x18] sm:$0xf]
      %v5315 = vld [vmem:[%s5307 + $0x1c] sm:$0xf]
      %v5316 = vld [vmem:[%s5307 + $0x20] sm:$0xf]
      %v5317 = vld [vmem:[%s5307 + $0x24] sm:$0xf]
      %v5318 = vld [vmem:[%s5307 + $0x28] sm:$0xf]
      %v5319 = vld [vmem:[%s5307 + $0x2c] sm:$0xf]
      %v5320 = vld [vmem:[%s5307 + $0x30] sm:$0xf]
      %v5321 = vld [vmem:[%s5307 + $0x34] sm:$0xf]
      %v5322 = vld [vmem:[%s5307 + $0x38] sm:$0xf]
      %v5323 = vld [vmem:[%s5307 + $0x3c] sm:$0xf]
      %v5340 = vunpack.c.l.b16 %v5308
      %v5341 = vunpack.c.l.b16 %v5309
      %v5342 = vunpack.c.l.b16 %v5310
      %v5343 = vunpack.c.l.b16 %v5311
      %v5344 = vunpack.c.l.b16 %v5312
      %v5345 = vunpack.c.l.b16 %v5313
      %v5346 = vunpack.c.l.b16 %v5314
      %v5347 = vunpack.c.l.b16 %v5315
      %v5348 = vunpack.c.l.b16 %v5316
      %v5349 = vunpack.c.l.b16 %v5317
      %v5350 = vunpack.c.l.b16 %v5318
      %v5351 = vunpack.c.l.b16 %v5319
      %v5352 = vunpack.c.l.b16 %v5320
      %v5353 = vunpack.c.l.b16 %v5321
      %v5354 = vunpack.c.l.b16 %v5322
      %v5355 = vunpack.c.l.b16 %v5323
      %v5356 = vpack.c.b16 %v5341, %v5340
      %v5357 = vpack.c.b16 %v5343, %v5342
      %v5358 = vpack.c.b16 %v5345, %v5344
      %v5359 = vpack.c.b16 %v5347, %v5346
      %v5360 = vpack.c.b16 %v5349, %v5348
      %v5361 = vpack.c.b16 %v5351, %v5350
      %v5362 = vpack.c.b16 %v5353, %v5352
      %v5363 = vpack.c.b16 %v5355, %v5354
      %5372 = vmatprep.subr.bf16.mxu0 0
      %5373 = vmatpush1.bf16.msra.mxu0 %v5356
      %5374 = vmatprep.subr.bf16.mxu0 0
      %5375 = vmatpush1.bf16.msra.mxu0 %v5357
      %5376 = vmatprep.subr.bf16.mxu0 0
      %5377 = vmatpush1.bf16.msra.mxu0 %v5358
      %5378 = vmatprep.subr.bf16.mxu0 0
      %5379 = vmatpush1.bf16.msra.mxu0 %v5359
      %5380 = vmatprep.subr.bf16.mxu0 0
      %5381 = vmatpush1.bf16.msra.mxu0 %v5360
      %5382 = vmatprep.subr.bf16.mxu0 0
      %5383 = vmatpush1.bf16.msra.mxu0 %v5361
      %5384 = vmatprep.subr.bf16.mxu0 0
      %5385 = vmatpush1.bf16.msra.mxu0 %v5362
      %5386 = vmatprep.subr.bf16.mxu0 0
      %5387 = vmatpush1.bf16.msra.mxu0 %v5363
      %5388 = vmatprep.subr.bf16.mxu0 0
      %5389 = vmatpush1.bf16.msra.mxu0 0
      %5390 = vmatprep.subr.bf16.mxu0 0
      %5391 = vmatpush1.bf16.msra.mxu0 0
      %5392 = vmatprep.subr.bf16.mxu0 0
      %5393 = vmatpush1.bf16.msra.mxu0 0
      %5394 = vmatprep.subr.bf16.mxu0 0
      %5395 = vmatpush1.bf16.msra.mxu0 0
      %5396 = vmatprep.subr.bf16.mxu0 0
      %5397 = vmatpush1.bf16.msra.mxu0 0
      %5398 = vmatprep.subr.bf16.mxu0 0
      %5399 = vmatpush1.bf16.msra.mxu0 0
      %5400 = vmatprep.subr.bf16.mxu0 0
      %5401 = vmatpush1.bf16.msra.mxu0 0
      %5402 = vmatprep.subr.bf16.mxu0 0
      %5403 = vmatpush1.bf16.msra.mxu0 0
      %5404 = vmatprep.mubr.bf16.mxu0 0
      %5405 = vmatmul.mubr.bf16.gmra.mrb[0].mxu0 %v5291
      %v5406 = vpop.f32.mrb[0].mxu0
      %v5407 = vadd.f32 0.0, %v5406
      %v5408 = vpop.f32.mrb[0].mxu0
      %v5409 = vpop.f32.mrb[0].mxu0
      %v5410 = vadd.f32 0.0, %v5409
      %v5411 = vpop.f32.mrb[0].mxu0
      %5412 = vmatprep.mubr.bf16.mxu0 0
      %5413 = vmatmul.mubr.bf16.gmra.mrb[0].mxu0 %v5292
      %v5414 = vpop.f32.mrb[0].mxu0
      %v5415 = vadd.f32 0.0, %v5414
      %v5416 = vpop.f32.mrb[0].mxu0
      %v5417 = vpop.f32.mrb[0].mxu0
      %v5418 = vadd.f32 0.0, %v5417
      %v5419 = vpop.f32.mrb[0].mxu0
      %5420 = vmatprep.mubr.bf16.mxu0 0
      %5421 = vmatmul.mubr.bf16.gmra.mrb[0].mxu0 %v5293
      %v5422 = vpop.f32.mrb[0].mxu0
      %v5423 = vadd.f32 0.0, %v5422
      %v5424 = vpop.f32.mrb[0].mxu0
      %v5425 = vpop.f32.mrb[0].mxu0
      %v5426 = vadd.f32 0.0, %v5425
      %v5427 = vpop.f32.mrb[0].mxu0
      %5428 = vmatprep.mubr.bf16.mxu0 0
      %5429 = vmatmul.mubr.bf16.gmra.mrb[0].mxu0 %v5294
      %v5430 = vpop.f32.mrb[0].mxu0
      %v5431 = vadd.f32 0.0, %v5430
      %v5432 = vpop.f32.mrb[0].mxu0
      %v5433 = vpop.f32.mrb[0].mxu0
      %v5434 = vadd.f32 0.0, %v5433
      %v5435 = vpop.f32.mrb[0].mxu0
      %5436 = vmatprep.mubr.bf16.mxu0 0
      %5437 = vmatmul.mubr.bf16.gmra.mrb[0].mxu0 %v5295
      %v5438 = vpop.f32.mrb[0].mxu0
      %v5439 = vadd.f32 0.0, %v5438
      %v5440 = vpop.f32.mrb[0].mxu0
      %v5441 = vpop.f32.mrb[0].mxu0
      %v5442 = vadd.f32 0.0, %v5441
      %v5443 = vpop.f32.mrb[0].mxu0
      %5444 = vmatprep.mubr.bf16.mxu0 0
      %5445 = vmatmul.mubr.bf16.gmra.mrb[0].mxu0 %v5296
      %v5446 = vpop.f32.mrb[0].mxu0
      %v5447 = vadd.f32 0.0, %v5446
      %v5448 = vpop.f32.mrb[0].mxu0
      %v5449 = vpop.f32.mrb[0].mxu0
      %v5450 = vadd.f32 0.0, %v5449
      %v5451 = vpop.f32.mrb[0].mxu0
      %5452 = vmatprep.mubr.bf16.mxu0 0
      %5453 = vmatmul.mubr.bf16.gmra.mrb[0].mxu0 %v5297
      %v5454 = vpop.f32.mrb[0].mxu0
      %v5455 = vadd.f32 0.0, %v5454
      %v5456 = vpop.f32.mrb[0].mxu0
      %v5457 = vpop.f32.mrb[0].mxu0
      %v5458 = vadd.f32 0.0, %v5457
      %v5459 = vpop.f32.mrb[0].mxu0
      %5460 = vmatprep.mubr.bf16.mxu0 0
      %5461 = vmatmul.mubr.bf16.gmra.mrb[0].mxu0 %v5298
      %v5462 = vpop.f32.mrb[0].mxu0
      %v5463 = vadd.f32 0.0, %v5462
      %v5464 = vpop.f32.mrb[0].mxu0
      %v5465 = vpop.f32.mrb[0].mxu0
      %v5466 = vadd.f32 0.0, %v5465
      %v5467 = vpop.f32.mrb[0].mxu0
      %5468 = vmatprep.mubr.bf16.mxu0 0
      %5469 = vmatmul.mubr.bf16.gmra.mrb[0].mxu0 %v5299
      %v5470 = vpop.f32.mrb[0].mxu0
      %v5471 = vadd.f32 0.0, %v5470
      %v5472 = vpop.f32.mrb[0].mxu0
      %v5473 = vpop.f32.mrb[0].mxu0
      %v5474 = vadd.f32 0.0, %v5473
      %v5475 = vpop.f32.mrb[0].mxu0
      %5476 = vmatprep.mubr.bf16.mxu0 0
      %5477 = vmatmul.mubr.bf16.gmra.mrb[0].mxu0 %v5300
      %v5478 = vpop.f32.mrb[0].mxu0
      %v5479 = vadd.f32 0.0, %v5478
      %v5480 = vpop.f32.mrb[0].mxu0
      %v5481 = vpop.f32.mrb[0].mxu0
      %v5482 = vadd.f32 0.0, %v5481
      %v5483 = vpop.f32.mrb[0].mxu0
      %5484 = vmatprep.mubr.bf16.mxu0 0
      %5485 = vmatmul.mubr.bf16.gmra.mrb[0].mxu0 %v5301
      %v5486 = vpop.f32.mrb[0].mxu0
      %v5487 = vadd.f32 0.0, %v5486
      %v5488 = vpop.f32.mrb[0].mxu0
      %v5489 = vpop.f32.mrb[0].mxu0
      %v5490 = vadd.f32 0.0, %v5489
      %v5491 = vpop.f32.mrb[0].mxu0
      %5492 = vmatprep.mubr.bf16.mxu0 0
      %5493 = vmatmul.mubr.bf16.gmra.mrb[0].mxu0 %v5302
      %v5494 = vpop.f32.mrb[0].mxu0
      %v5495 = vadd.f32 0.0, %v5494
      %v5496 = vpop.f32.mrb[0].mxu0
      %v5497 = vpop.f32.mrb[0].mxu0
      %v5498 = vadd.f32 0.0, %v5497
      %v5499 = vpop.f32.mrb[0].mxu0
      %5500 = vmatprep.mubr.bf16.mxu0 0
      %5501 = vmatmul.mubr.bf16.gmra.mrb[0].mxu0 %v5303
      %v5502 = vpop.f32.mrb[0].mxu0
      %v5503 = vadd.f32 0.0, %v5502
      %v5504 = vpop.f32.mrb[0].mxu0
      %v5505 = vpop.f32.mrb[0].mxu0
      %v5506 = vadd.f32 0.0, %v5505
      %v5507 = vpop.f32.mrb[0].mxu0
      %5508 = vmatprep.mubr.bf16.mxu0 0
      %5509 = vmatmul.mubr.bf16.gmra.mrb[0].mxu0 %v5304
      %v5510 = vpop.f32.mrb[0].mxu0
      %v5511 = vadd.f32 0.0, %v5510
      %v5512 = vpop.f32.mrb[0].mxu0
      %v5513 = vpop.f32.mrb[0].mxu0
      %v5514 = vadd.f32 0.0, %v5513
      %v5515 = vpop.f32.mrb[0].mxu0
      %5516 = vmatprep.mubr.bf16.mxu0 0
      %5517 = vmatmul.mubr.bf16.gmra.mrb[0].mxu0 %v5305
      %v5518 = vpop.f32.mrb[0].mxu0
      %v5519 = vadd.f32 0.0, %v5518
      %v5520 = vpop.f32.mrb[0].mxu0
      %v5521 = vpop.f32.mrb[0].mxu0
      %v5522 = vadd.f32 0.0, %v5521
      %v5523 = vpop.f32.mrb[0].mxu0
      %5524 = vmatprep.mubr.bf16.mxu0 0
      %5525 = vmatmul.mubr.bf16.gmra.mrb[0].mxu0 %v5306
      %v5526 = vpop.f32.mrb[0].mxu0
      %v5527 = vadd.f32 0.0, %v5526
      %v5528 = vpop.f32.mrb[0].mxu0
      %v5529 = vpop.f32.mrb[0].mxu0
      %v5530 = vadd.f32 0.0, %v5529
      %v5531 = vpop.f32.mrb[0].mxu0
      %5532 = vdwg.mxu0
      %v5533 = vadd.f32 %v5227, %v5407
      %v5534 = vadd.f32 %v5228, %v5410
      %v5535 = vadd.f32 %v5229, %v5415
      %v5536 = vadd.f32 %v5230, %v5418
      %v5537 = vadd.f32 %v5231, %v5423
      %v5538 = vadd.f32 %v5232, %v5426
      %v5539 = vadd.f32 %v5233, %v5431
      %v5540 = vadd.f32 %v5234, %v5434
      %v5541 = vadd.f32 %v5235, %v5439
      %v5542 = vadd.f32 %v5236, %v5442
      %v5543 = vadd.f32 %v5237, %v5447
      %v5544 = vadd.f32 %v5238, %v5450
      %v5545 = vadd.f32 %v5239, %v5455
      %v5546 = vadd.f32 %v5240, %v5458
      %v5547 = vadd.f32 %v5241, %v5463
      %v5548 = vadd.f32 %v5242, %v5466
      %v5549 = vadd.f32 %v5243, %v5471
      %v5550 = vadd.f32 %v5244, %v5474
      %v5551 = vadd.f32 %v5245, %v5479
      %v5552 = vadd.f32 %v5246, %v5482
      %v5553 = vadd.f32 %v5247, %v5487
      %v5554 = vadd.f32 %v5248, %v5490
      %v5555 = vadd.f32 %v5249, %v5495
      %v5556 = vadd.f32 %v5250, %v5498
      %v5557 = vadd.f32 %v5251, %v5503
      %v5558 = vadd.f32 %v5252, %v5506
      %v5559 = vadd.f32 %v5253, %v5511
      %v5560 = vadd.f32 %v5254, %v5514
      %v5561 = vadd.f32 %v5255, %v5519
      %v5562 = vadd.f32 %v5256, %v5522
      %v5563 = vadd.f32 %v5257, %v5527
      %v5564 = vadd.f32 %v5258, %v5530
      %v5565 = vld [vmem:[%s4952 + $0x2] sm:$0xff]
      %v5566 = vld [vmem:[%s4952 + $0xa] sm:$0xff]
      %v5567 = vld [vmem:[%s4952 + $0x1a] sm:$0xff]
      %v5568 = vld [vmem:[%s4952 + $0x22] sm:$0xff]
      %v5569 = vld [vmem:[%s4952 + $0x32] sm:$0xff]
      %v5570 = vld [vmem:[%s4952 + $0x3a] sm:$0xff]
      %v5571 = vld [vmem:[%s4952 + $0x4a] sm:$0xff]
      %v5572 = vld [vmem:[%s4952 + $0x52] sm:$0xff]
      %v5573 = vld [vmem:[%s4952 + $0x62] sm:$0xff]
      %v5574 = vld [vmem:[%s4952 + $0x6a] sm:$0xff]
      %v5575 = vld [vmem:[%s4952 + $0x7a] sm:$0xff]
      %v5576 = vld [vmem:[%s4952 + $0x82] sm:$0xff]
      %v5577 = vld [vmem:[%s4952 + $0x92] sm:$0xff]
      %v5578 = vld [vmem:[%s4952 + $0x9a] sm:$0xff]
      %v5579 = vld [vmem:[%s4952 + $0xaa] sm:$0xff]
      %v5580 = vld [vmem:[%s4952 + $0xb2] sm:$0xff]
      %v5581 = vld [vmem:[%s4952 + $0xc2] sm:$0xff]
      %v5582 = vld [vmem:[%s4952 + $0xca] sm:$0xff]
      %v5583 = vld [vmem:[%s4952 + $0xda] sm:$0xff]
      %v5584 = vld [vmem:[%s4952 + $0xe2] sm:$0xff]
      %v5585 = vld [vmem:[%s4952 + $0xf2] sm:$0xff]
      %v5586 = vld [vmem:[%s4952 + $0xfa] sm:$0xff]
      %v5587 = vld [vmem:[%s4952 + $0x10a] sm:$0xff]
      %v5588 = vld [vmem:[%s4952 + $0x112] sm:$0xff]
      %v5589 = vld [vmem:[%s4952 + $0x122] sm:$0xff]
      %v5590 = vld [vmem:[%s4952 + $0x12a] sm:$0xff]
      %v5591 = vld [vmem:[%s4952 + $0x13a] sm:$0xff]
      %v5592 = vld [vmem:[%s4952 + $0x142] sm:$0xff]
      %v5593 = vld [vmem:[%s4952 + $0x152] sm:$0xff]
      %v5594 = vld [vmem:[%s4952 + $0x15a] sm:$0xff]
      %v5595 = vld [vmem:[%s4952 + $0x16a] sm:$0xff]
      %v5596 = vld [vmem:[%s4952 + $0x172] sm:$0xff]
      %v5597 = vpack.c.bf16 %v5566, %v5565
      %v5598 = vpack.c.bf16 %v5568, %v5567
      %v5599 = vpack.c.bf16 %v5570, %v5569
      %v5600 = vpack.c.bf16 %v5572, %v5571
      %v5601 = vpack.c.bf16 %v5574, %v5573
      %v5602 = vpack.c.bf16 %v5576, %v5575
      %v5603 = vpack.c.bf16 %v5578, %v5577
      %v5604 = vpack.c.bf16 %v5580, %v5579
      %v5605 = vpack.c.bf16 %v5582, %v5581
      %v5606 = vpack.c.bf16 %v5584, %v5583
      %v5607 = vpack.c.bf16 %v5586, %v5585
      %v5608 = vpack.c.bf16 %v5588, %v5587
      %v5609 = vpack.c.bf16 %v5590, %v5589
      %v5610 = vpack.c.bf16 %v5592, %v5591
      %v5611 = vpack.c.bf16 %v5594, %v5593
      %v5612 = vpack.c.bf16 %v5596, %v5595
      %s5613 = scalar_lea.vmem %s4, 512
      %v5614 = vld [vmem:[%s5613] sm:$0xf]
      %v5615 = vld [vmem:[%s5613 + $0x4] sm:$0xf]
      %v5616 = vld [vmem:[%s5613 + $0x8] sm:$0xf]
      %v5617 = vld [vmem:[%s5613 + $0xc] sm:$0xf]
      %v5618 = vld [vmem:[%s5613 + $0x10] sm:$0xf]
      %v5619 = vld [vmem:[%s5613 + $0x14] sm:$0xf]
      %v5620 = vld [vmem:[%s5613 + $0x18] sm:$0xf]
      %v5621 = vld [vmem:[%s5613 + $0x1c] sm:$0xf]
      %v5622 = vld [vmem:[%s5613 + $0x20] sm:$0xf]
      %v5623 = vld [vmem:[%s5613 + $0x24] sm:$0xf]
      %v5624 = vld [vmem:[%s5613 + $0x28] sm:$0xf]
      %v5625 = vld [vmem:[%s5613 + $0x2c] sm:$0xf]
      %v5626 = vld [vmem:[%s5613 + $0x30] sm:$0xf]
      %v5627 = vld [vmem:[%s5613 + $0x34] sm:$0xf]
      %v5628 = vld [vmem:[%s5613 + $0x38] sm:$0xf]
      %v5629 = vld [vmem:[%s5613 + $0x3c] sm:$0xf]
      %v5646 = vunpack.c.l.b16 %v5614
      %v5647 = vunpack.c.l.b16 %v5615
      %v5648 = vunpack.c.l.b16 %v5616
      %v5649 = vunpack.c.l.b16 %v5617
      %v5650 = vunpack.c.l.b16 %v5618
      %v5651 = vunpack.c.l.b16 %v5619
      %v5652 = vunpack.c.l.b16 %v5620
      %v5653 = vunpack.c.l.b16 %v5621
      %v5654 = vunpack.c.l.b16 %v5622
      %v5655 = vunpack.c.l.b16 %v5623
      %v5656 = vunpack.c.l.b16 %v5624
      %v5657 = vunpack.c.l.b16 %v5625
      %v5658 = vunpack.c.l.b16 %v5626
      %v5659 = vunpack.c.l.b16 %v5627
      %v5660 = vunpack.c.l.b16 %v5628
      %v5661 = vunpack.c.l.b16 %v5629
      %v5662 = vpack.c.b16 %v5647, %v5646
      %v5663 = vpack.c.b16 %v5649, %v5648
      %v5664 = vpack.c.b16 %v5651, %v5650
      %v5665 = vpack.c.b16 %v5653, %v5652
      %v5666 = vpack.c.b16 %v5655, %v5654
      %v5667 = vpack.c.b16 %v5657, %v5656
      %v5668 = vpack.c.b16 %v5659, %v5658
      %v5669 = vpack.c.b16 %v5661, %v5660
      %5678 = vmatprep.subr.bf16.mxu0 0
      %5679 = vmatpush1.bf16.msra.mxu0 %v5662
      %5680 = vmatprep.subr.bf16.mxu0 0
      %5681 = vmatpush1.bf16.msra.mxu0 %v5663
      %5682 = vmatprep.subr.bf16.mxu0 0
      %5683 = vmatpush1.bf16.msra.mxu0 %v5664
      %5684 = vmatprep.subr.bf16.mxu0 0
      %5685 = vmatpush1.bf16.msra.mxu0 %v5665
      %5686 = vmatprep.subr.bf16.mxu0 0
      %5687 = vmatpush1.bf16.msra.mxu0 %v5666
      %5688 = vmatprep.subr.bf16.mxu0 0
      %5689 = vmatpush1.bf16.msra.mxu0 %v5667
      %5690 = vmatprep.subr.bf16.mxu0 0
      %5691 = vmatpush1.bf16.msra.mxu0 %v5668
      %5692 = vmatprep.subr.bf16.mxu0 0
      %5693 = vmatpush1.bf16.msra.mxu0 %v5669
      %5694 = vmatprep.subr.bf16.mxu0 0
      %5695 = vmatpush1.bf16.msra.mxu0 0
      %5696 = vmatprep.subr.bf16.mxu0 0
      %5697 = vmatpush1.bf16.msra.mxu0 0
      %5698 = vmatprep.subr.bf16.mxu0 0
      %5699 = vmatpush1.bf16.msra.mxu0 0
      %5700 = vmatprep.subr.bf16.mxu0 0
      %5701 = vmatpush1.bf16.msra.mxu0 0
      %5702 = vmatprep.subr.bf16.mxu0 0
      %5703 = vmatpush1.bf16.msra.mxu0 0
      %5704 = vmatprep.subr.bf16.mxu0 0
      %5705 = vmatpush1.bf16.msra.mxu0 0
      %5706 = vmatprep.subr.bf16.mxu0 0
      %5707 = vmatpush1.bf16.msra.mxu0 0
      %5708 = vmatprep.subr.bf16.mxu0 0
      %5709 = vmatpush1.bf16.msra.mxu0 0
      %5710 = vmatprep.mubr.bf16.mxu0 0
      %5711 = vmatmul.mubr.bf16.gmra.mrb[0].mxu0 %v5597
      %v5712 = vpop.f32.mrb[0].mxu0
      %v5713 = vadd.f32 0.0, %v5712
      %v5714 = vpop.f32.mrb[0].mxu0
      %v5715 = vpop.f32.mrb[0].mxu0
      %v5716 = vadd.f32 0.0, %v5715
      %v5717 = vpop.f32.mrb[0].mxu0
      %5718 = vmatprep.mubr.bf16.mxu0 0
      %5719 = vmatmul.mubr.bf16.gmra.mrb[0].mxu0 %v5598
      %v5720 = vpop.f32.mrb[0].mxu0
      %v5721 = vadd.f32 0.0, %v5720
      %v5722 = vpop.f32.mrb[0].mxu0
      %v5723 = vpop.f32.mrb[0].mxu0
      %v5724 = vadd.f32 0.0, %v5723
      %v5725 = vpop.f32.mrb[0].mxu0
      %5726 = vmatprep.mubr.bf16.mxu0 0
      %5727 = vmatmul.mubr.bf16.gmra.mrb[0].mxu0 %v5599
      %v5728 = vpop.f32.mrb[0].mxu0
      %v5729 = vadd.f32 0.0, %v5728
      %v5730 = vpop.f32.mrb[0].mxu0
      %v5731 = vpop.f32.mrb[0].mxu0
      %v5732 = vadd.f32 0.0, %v5731
      %v5733 = vpop.f32.mrb[0].mxu0
      %5734 = vmatprep.mubr.bf16.mxu0 0
      %5735 = vmatmul.mubr.bf16.gmra.mrb[0].mxu0 %v5600
      %v5736 = vpop.f32.mrb[0].mxu0
      %v5737 = vadd.f32 0.0, %v5736
      %v5738 = vpop.f32.mrb[0].mxu0
      %v5739 = vpop.f32.mrb[0].mxu0
      %v5740 = vadd.f32 0.0, %v5739
      %v5741 = vpop.f32.mrb[0].mxu0
      %5742 = vmatprep.mubr.bf16.mxu0 0
      %5743 = vmatmul.mubr.bf16.gmra.mrb[0].mxu0 %v5601
      %v5744 = vpop.f32.mrb[0].mxu0
      %v5745 = vadd.f32 0.0, %v5744
      %v5746 = vpop.f32.mrb[0].mxu0
      %v5747 = vpop.f32.mrb[0].mxu0
      %v5748 = vadd.f32 0.0, %v5747
      %v5749 = vpop.f32.mrb[0].mxu0
      %5750 = vmatprep.mubr.bf16.mxu0 0
      %5751 = vmatmul.mubr.bf16.gmra.mrb[0].mxu0 %v5602
      %v5752 = vpop.f32.mrb[0].mxu0
      %v5753 = vadd.f32 0.0, %v5752
      %v5754 = vpop.f32.mrb[0].mxu0
      %v5755 = vpop.f32.mrb[0].mxu0
      %v5756 = vadd.f32 0.0, %v5755
      %v5757 = vpop.f32.mrb[0].mxu0
      %5758 = vmatprep.mubr.bf16.mxu0 0
      %5759 = vmatmul.mubr.bf16.gmra.mrb[0].mxu0 %v5603
      %v5760 = vpop.f32.mrb[0].mxu0
      %v5761 = vadd.f32 0.0, %v5760
      %v5762 = vpop.f32.mrb[0].mxu0
      %v5763 = vpop.f32.mrb[0].mxu0
      %v5764 = vadd.f32 0.0, %v5763
      %v5765 = vpop.f32.mrb[0].mxu0
      %5766 = vmatprep.mubr.bf16.mxu0 0
      %5767 = vmatmul.mubr.bf16.gmra.mrb[0].mxu0 %v5604
      %v5768 = vpop.f32.mrb[0].mxu0
      %v5769 = vadd.f32 0.0, %v5768
      %v5770 = vpop.f32.mrb[0].mxu0
      %v5771 = vpop.f32.mrb[0].mxu0
      %v5772 = vadd.f32 0.0, %v5771
      %v5773 = vpop.f32.mrb[0].mxu0
      %5774 = vmatprep.mubr.bf16.mxu0 0
      %5775 = vmatmul.mubr.bf16.gmra.mrb[0].mxu0 %v5605
      %v5776 = vpop.f32.mrb[0].mxu0
      %v5777 = vadd.f32 0.0, %v5776
      %v5778 = vpop.f32.mrb[0].mxu0
      %v5779 = vpop.f32.mrb[0].mxu0
      %v5780 = vadd.f32 0.0, %v5779
      %v5781 = vpop.f32.mrb[0].mxu0
      %5782 = vmatprep.mubr.bf16.mxu0 0
      %5783 = vmatmul.mubr.bf16.gmra.mrb[0].mxu0 %v5606
      %v5784 = vpop.f32.mrb[0].mxu0
      %v5785 = vadd.f32 0.0, %v5784
      %v5786 = vpop.f32.mrb[0].mxu0
      %v5787 = vpop.f32.mrb[0].mxu0
      %v5788 = vadd.f32 0.0, %v5787
      %v5789 = vpop.f32.mrb[0].mxu0
      %5790 = vmatprep.mubr.bf16.mxu0 0
      %5791 = vmatmul.mubr.bf16.gmra.mrb[0].mxu0 %v5607
      %v5792 = vpop.f32.mrb[0].mxu0
      %v5793 = vadd.f32 0.0, %v5792
      %v5794 = vpop.f32.mrb[0].mxu0
      %v5795 = vpop.f32.mrb[0].mxu0
      %v5796 = vadd.f32 0.0, %v5795
      %v5797 = vpop.f32.mrb[0].mxu0
      %5798 = vmatprep.mubr.bf16.mxu0 0
      %5799 = vmatmul.mubr.bf16.gmra.mrb[0].mxu0 %v5608
      %v5800 = vpop.f32.mrb[0].mxu0
      %v5801 = vadd.f32 0.0, %v5800
      %v5802 = vpop.f32.mrb[0].mxu0
      %v5803 = vpop.f32.mrb[0].mxu0
      %v5804 = vadd.f32 0.0, %v5803
      %v5805 = vpop.f32.mrb[0].mxu0
      %5806 = vmatprep.mubr.bf16.mxu0 0
      %5807 = vmatmul.mubr.bf16.gmra.mrb[0].mxu0 %v5609
      %v5808 = vpop.f32.mrb[0].mxu0
      %v5809 = vadd.f32 0.0, %v5808
      %v5810 = vpop.f32.mrb[0].mxu0
      %v5811 = vpop.f32.mrb[0].mxu0
      %v5812 = vadd.f32 0.0, %v5811
      %v5813 = vpop.f32.mrb[0].mxu0
      %5814 = vmatprep.mubr.bf16.mxu0 0
      %5815 = vmatmul.mubr.bf16.gmra.mrb[0].mxu0 %v5610
      %v5816 = vpop.f32.mrb[0].mxu0
      %v5817 = vadd.f32 0.0, %v5816
      %v5818 = vpop.f32.mrb[0].mxu0
      %v5819 = vpop.f32.mrb[0].mxu0
      %v5820 = vadd.f32 0.0, %v5819
      %v5821 = vpop.f32.mrb[0].mxu0
      %5822 = vmatprep.mubr.bf16.mxu0 0
      %5823 = vmatmul.mubr.bf16.gmra.mrb[0].mxu0 %v5611
      %v5824 = vpop.f32.mrb[0].mxu0
      %v5825 = vadd.f32 0.0, %v5824
      %v5826 = vpop.f32.mrb[0].mxu0
      %v5827 = vpop.f32.mrb[0].mxu0
      %v5828 = vadd.f32 0.0, %v5827
      %v5829 = vpop.f32.mrb[0].mxu0
      %5830 = vmatprep.mubr.bf16.mxu0 0
      %5831 = vmatmul.mubr.bf16.gmra.mrb[0].mxu0 %v5612
      %v5832 = vpop.f32.mrb[0].mxu0
      %v5833 = vadd.f32 0.0, %v5832
      %v5834 = vpop.f32.mrb[0].mxu0
      %v5835 = vpop.f32.mrb[0].mxu0
      %v5836 = vadd.f32 0.0, %v5835
      %v5837 = vpop.f32.mrb[0].mxu0
      %5838 = vdwg.mxu0
      %v5839 = vadd.f32 %v5533, %v5713
      %v5840 = vadd.f32 %v5534, %v5716
      %v5841 = vadd.f32 %v5535, %v5721
      %v5842 = vadd.f32 %v5536, %v5724
      %v5843 = vadd.f32 %v5537, %v5729
      %v5844 = vadd.f32 %v5538, %v5732
      %v5845 = vadd.f32 %v5539, %v5737
      %v5846 = vadd.f32 %v5540, %v5740
      %v5847 = vadd.f32 %v5541, %v5745
      %v5848 = vadd.f32 %v5542, %v5748
      %v5849 = vadd.f32 %v5543, %v5753
      %v5850 = vadd.f32 %v5544, %v5756
      %v5851 = vadd.f32 %v5545, %v5761
      %v5852 = vadd.f32 %v5546, %v5764
      %v5853 = vadd.f32 %v5547, %v5769
      %v5854 = vadd.f32 %v5548, %v5772
      %v5855 = vadd.f32 %v5549, %v5777
      %v5856 = vadd.f32 %v5550, %v5780
      %v5857 = vadd.f32 %v5551, %v5785
      %v5858 = vadd.f32 %v5552, %v5788
      %v5859 = vadd.f32 %v5553, %v5793
      %v5860 = vadd.f32 %v5554, %v5796
      %v5861 = vadd.f32 %v5555, %v5801
      %v5862 = vadd.f32 %v5556, %v5804
      %v5863 = vadd.f32 %v5557, %v5809
      %v5864 = vadd.f32 %v5558, %v5812
      %v5865 = vadd.f32 %v5559, %v5817
      %v5866 = vadd.f32 %v5560, %v5820
      %v5867 = vadd.f32 %v5561, %v5825
      %v5868 = vadd.f32 %v5562, %v5828
      %v5869 = vadd.f32 %v5563, %v5833
      %v5870 = vadd.f32 %v5564, %v5836
      %v5871 = vld [vmem:[%s5] sm:$0x1]
      %v5873 = vlaneseq
      %v5874 = vshrl.u32 %v5873, 7
      %v5875 = vsub.s32 0, %v5874
      %v5876 = vrot.slane %v5871, %v5875
      %v5878 = vmul.f32 %v5839, %v5876
      %v5879 = vmul.f32 %v5840, %v5876
      %v5880 = vmul.f32 %v5841, %v5876
      %v5881 = vmul.f32 %v5842, %v5876
      %v5882 = vmul.f32 %v5843, %v5876
      %v5883 = vmul.f32 %v5844, %v5876
      %v5884 = vmul.f32 %v5845, %v5876
      %v5885 = vmul.f32 %v5846, %v5876
      %v5886 = vmul.f32 %v5847, %v5876
      %v5887 = vmul.f32 %v5848, %v5876
      %v5888 = vmul.f32 %v5849, %v5876
      %v5889 = vmul.f32 %v5850, %v5876
      %v5890 = vmul.f32 %v5851, %v5876
      %v5891 = vmul.f32 %v5852, %v5876
      %v5892 = vmul.f32 %v5853, %v5876
      %v5893 = vmul.f32 %v5854, %v5876
      %v5894 = vmul.f32 %v5855, %v5876
      %v5895 = vmul.f32 %v5856, %v5876
      %v5896 = vmul.f32 %v5857, %v5876
      %v5897 = vmul.f32 %v5858, %v5876
      %v5898 = vmul.f32 %v5859, %v5876
      %v5899 = vmul.f32 %v5860, %v5876
      %v5900 = vmul.f32 %v5861, %v5876
      %v5901 = vmul.f32 %v5862, %v5876
      %v5902 = vmul.f32 %v5863, %v5876
      %v5903 = vmul.f32 %v5864, %v5876
      %v5904 = vmul.f32 %v5865, %v5876
      %v5905 = vmul.f32 %v5866, %v5876
      %v5906 = vmul.f32 %v5867, %v5876
      %v5907 = vmul.f32 %v5868, %v5876
      %v5908 = vmul.f32 %v5869, %v5876
      %v5909 = vmul.f32 %v5870, %v5876
      %v5910 = vld [vmem:[%s6] sm:$0x1]
      %v5912 = vlaneseq
      %v5913 = vshrl.u32 %v5912, 7
      %v5914 = vsub.s32 0, %v5913
      %v5915 = vrot.slane %v5910, %v5914
      %v5917 = vadd.f32 %v5878, %v5915
      %v5918 = vadd.f32 %v5879, %v5915
      %v5919 = vadd.f32 %v5880, %v5915
      %v5920 = vadd.f32 %v5881, %v5915
      %v5921 = vadd.f32 %v5882, %v5915
      %v5922 = vadd.f32 %v5883, %v5915
      %v5923 = vadd.f32 %v5884, %v5915
      %v5924 = vadd.f32 %v5885, %v5915
      %v5925 = vadd.f32 %v5886, %v5915
      %v5926 = vadd.f32 %v5887, %v5915
      %v5927 = vadd.f32 %v5888, %v5915
      %v5928 = vadd.f32 %v5889, %v5915
      %v5929 = vadd.f32 %v5890, %v5915
      %v5930 = vadd.f32 %v5891, %v5915
      %v5931 = vadd.f32 %v5892, %v5915
      %v5932 = vadd.f32 %v5893, %v5915
      %v5933 = vadd.f32 %v5894, %v5915
      %v5934 = vadd.f32 %v5895, %v5915
      %v5935 = vadd.f32 %v5896, %v5915
      %v5936 = vadd.f32 %v5897, %v5915
      %v5937 = vadd.f32 %v5898, %v5915
      %v5938 = vadd.f32 %v5899, %v5915
      %v5939 = vadd.f32 %v5900, %v5915
      %v5940 = vadd.f32 %v5901, %v5915
      %v5941 = vadd.f32 %v5902, %v5915
      %v5942 = vadd.f32 %v5903, %v5915
      %v5943 = vadd.f32 %v5904, %v5915
      %v5944 = vadd.f32 %v5905, %v5915
      %v5945 = vadd.f32 %v5906, %v5915
      %v5946 = vadd.f32 %v5907, %v5915
      %v5947 = vadd.f32 %v5908, %v5915
      %v5948 = vadd.f32 %v5909, %v5915
      %v5949 = vmax.f32 %v5917, 0.0
      %v5950 = vmax.f32 %v5918, 0.0
      %v5951 = vmax.f32 %v5919, 0.0
      %v5952 = vmax.f32 %v5920, 0.0
      %v5953 = vmax.f32 %v5921, 0.0
      %v5954 = vmax.f32 %v5922, 0.0
      %v5955 = vmax.f32 %v5923, 0.0
      %v5956 = vmax.f32 %v5924, 0.0
      %v5957 = vmax.f32 %v5925, 0.0
      %v5958 = vmax.f32 %v5926, 0.0
      %v5959 = vmax.f32 %v5927, 0.0
      %v5960 = vmax.f32 %v5928, 0.0
      %v5961 = vmax.f32 %v5929, 0.0
      %v5962 = vmax.f32 %v5930, 0.0
      %v5963 = vmax.f32 %v5931, 0.0
      %v5964 = vmax.f32 %v5932, 0.0
      %v5965 = vmax.f32 %v5933, 0.0
      %v5966 = vmax.f32 %v5934, 0.0
      %v5967 = vmax.f32 %v5935, 0.0
      %v5968 = vmax.f32 %v5936, 0.0
      %v5969 = vmax.f32 %v5937, 0.0
      %v5970 = vmax.f32 %v5938, 0.0
      %v5971 = vmax.f32 %v5939, 0.0
      %v5972 = vmax.f32 %v5940, 0.0
      %v5973 = vmax.f32 %v5941, 0.0
      %v5974 = vmax.f32 %v5942, 0.0
      %v5975 = vmax.f32 %v5943, 0.0
      %v5976 = vmax.f32 %v5944, 0.0
      %v5977 = vmax.f32 %v5945, 0.0
      %v5978 = vmax.f32 %v5946, 0.0
      %v5979 = vmax.f32 %v5947, 0.0
      %v5980 = vmax.f32 %v5948, 0.0
      %5981 = vst [vmem:[%s278] sm:$0xff] %v5949
      %5982 = vst [vmem:[%s278 + $0x8] sm:$0xff] %v5950
      %5983 = vst [vmem:[%s278 + $0x10] sm:$0xff] %v5951
      %5984 = vst [vmem:[%s278 + $0x18] sm:$0xff] %v5952
      %5985 = vst [vmem:[%s278 + $0x20] sm:$0xff] %v5953
      %5986 = vst [vmem:[%s278 + $0x28] sm:$0xff] %v5954
      %5987 = vst [vmem:[%s278 + $0x30] sm:$0xff] %v5955
      %5988 = vst [vmem:[%s278 + $0x38] sm:$0xff] %v5956
      %5989 = vst [vmem:[%s278 + $0x40] sm:$0xff] %v5957
      %5990 = vst [vmem:[%s278 + $0x48] sm:$0xff] %v5958
      %5991 = vst [vmem:[%s278 + $0x50] sm:$0xff] %v5959
      %5992 = vst [vmem:[%s278 + $0x58] sm:$0xff] %v5960
      %5993 = vst [vmem:[%s278 + $0x60] sm:$0xff] %v5961
      %5994 = vst [vmem:[%s278 + $0x68] sm:$0xff] %v5962
      %5995 = vst [vmem:[%s278 + $0x70] sm:$0xff] %v5963
      %5996 = vst [vmem:[%s278 + $0x78] sm:$0xff] %v5964
      %5997 = vst [vmem:[%s278 + $0x80] sm:$0xff] %v5965
      %5998 = vst [vmem:[%s278 + $0x88] sm:$0xff] %v5966
      %5999 = vst [vmem:[%s278 + $0x90] sm:$0xff] %v5967
      %6000 = vst [vmem:[%s278 + $0x98] sm:$0xff] %v5968
      %6001 = vst [vmem:[%s278 + $0xa0] sm:$0xff] %v5969
      %6002 = vst [vmem:[%s278 + $0xa8] sm:$0xff] %v5970
      %6003 = vst [vmem:[%s278 + $0xb0] sm:$0xff] %v5971
      %6004 = vst [vmem:[%s278 + $0xb8] sm:$0xff] %v5972
      %6005 = vst [vmem:[%s278 + $0xc0] sm:$0xff] %v5973
      %6006 = vst [vmem:[%s278 + $0xc8] sm:$0xff] %v5974
      %6007 = vst [vmem:[%s278 + $0xd0] sm:$0xff] %v5975
      %6008 = vst [vmem:[%s278 + $0xd8] sm:$0xff] %v5976
      %6009 = vst [vmem:[%s278 + $0xe0] sm:$0xff] %v5977
      %6010 = vst [vmem:[%s278 + $0xe8] sm:$0xff] %v5978
      %6011 = vst [vmem:[%s278 + $0xf0] sm:$0xff] %v5979
      %6012 = vst [vmem:[%s278 + $0xf8] sm:$0xff] %v5980
      %p6013 = scmp.lt.s32.totalorder %s18, 1
      %s6014 = scalar_select %p6013, %s18, 1
      %s6015 = smul.addr %s6014, 32
      %s6016 = smul.addr %s6015, 8
      %s6017 = scalar_lea.vmem %s7, %s6016
      // Predicated region
      $region49: #{_lambda_.1} parent=47 // pred_check
        %p6018 = pneg %p188
      $region50: #{_lambda_.1} parent=47 // pred_check_branch
        %6020 = sbr.rel (%p6018) target = $region52
      $region51: #{_lambda_.1} parent=47 // pred_region
        _
      $region52: #{_lambda_.1} parent=47 // pred_fallthru
        _
    $region48: #{_lambda_.1} parent=5 // pred_fallthru
      _
    %p6021 = scmp.le.s32.totalorder 2, %s13
    // Predicated region
    $region53: #{_lambda_.1} parent=5 // pred_check
      %p6022 = pneg %p6021
    $region54: #{_lambda_.1} parent=5 // pred_check_branch
      %6024 = sbr.rel (%p6022) target = $region56
    $region55: #{_lambda_.1} parent=5 // pred_region
      %s6025 = ssub.s32 %s13, 2
      // Predicated region
      $region57: #{_lambda_.1} parent=55 // pred_check
        %p6026 = pneg %p194
      $region58: #{_lambda_.1} parent=55 // pred_check_branch
        %6028 = sbr.rel (%p6026) target = $region60
      $region59: #{_lambda_.1} parent=55 // pred_region
        %p6029 = scmp.lt.s32.totalorder %s19, 1
        %s6030 = scalar_select %p6029, %s19, 1
        %s6031 = smul.addr %s6030, 32
        %s6032 = smul.addr %s6031, 8
        %s6033 = scalar_lea.vmem %s7, %s6032
      $region60: #{_lambda_.1} parent=55 // pred_fallthru
        _
    $region56: #{_lambda_.1} parent=5 // pred_fallthru
      _
  $region6: #{_lambda_.1} parent=0 // loop_footer
    %s17 = sadd.s32 1, %s13
  $region7: #{_lambda_.1} parent=0 // loop_footer_branch
    %12 = sbr.rel target = $region3
  $region8: #{_lambda_.1} parent=0 // loop_exit
    _

</llo_original>
